<compile_context>
chip_gen: v7x
topology: tpu7x:2x2x1
jax: 0.10.0
libtpu: 0.0.40
codegen_flags: <defaults>
</compile_context>

<pallas_src>
import math
import functools
import jax
import jax.numpy as jnp
from jax import lax
from jax.experimental import pallas as pl
from jax.experimental.pallas import tpu as pltpu


# ----------------------------- in-kernel helpers -----------------------------

def _mm(x, w):
    """bf16 x bf16 MXU matmul with f32 accumulation.  x: f32/bf16 (M,K), w: bf16 (K,N)."""
    return jnp.dot(x.astype(jnp.bfloat16), w, preferred_element_type=jnp.float32)


def _ln(x, gb):
    """LayerNorm in f32.  x: (M, C), gb: (2, C) [gamma; beta]."""
    mu = jnp.mean(x, axis=-1, keepdims=True)
    xc = x - mu
    var = jnp.mean(xc * xc, axis=-1, keepdims=True)
    return xc * lax.rsqrt(var + 1e-5) * gb[0:1, :] + gb[1:2, :]


def _mha(q_in, k_in, v_in, wq, bq, wk, bk, wv, bv, wo, bo, num_heads):
    """PyTorch nn.MultiheadAttention (dropout=0) on one batch element.

    Weights are pre-split on the host (no in-kernel weight slicing); q/k/v are cast to
    bf16 exactly once; heads are concatenated and go through a single out-proj matmul.

    TODO(synk): a fully head-batched einsum ('hqd,hkd->hqk') would remove the static head
    loop, but it needs an (L,H,Dh)->(H,L,Dh) sublane<->major relayout that is risky to
    lower for Dh=8; with H=4 the unrolled loop below is equivalent work on the MXU.
    """
    Lq, C = q_in.shape
    Dh = C // num_heads
    scale = Dh ** -0.5
    q = ((_mm(q_in, wq) + bq) * scale).astype(jnp.bfloat16)      # (Lq, C)
    k = (_mm(k_in, wk) + bk).astype(jnp.bfloat16)                # (Lk, C)
    v = (_mm(v_in, wv) + bv).astype(jnp.bfloat16)                # (Lk, C)

    heads = []
    for h in range(num_heads):                                   # static unroll (H small)
        lo = h * Dh
        qh = q[:, lo:lo + Dh]
        kh = k[:, lo:lo + Dh]
        vh = v[:, lo:lo + Dh]
        s = lax.dot_general(qh, kh, (((1,), (1,)), ((), ())),
                            preferred_element_type=jnp.float32)  # (Lq, Lk) f32
        s = s - jnp.max(s, axis=-1, keepdims=True)
        p = jnp.exp(s)
        p = p * pl.reciprocal(jnp.sum(p, axis=-1, keepdims=True), approx=True)
        heads.append(jnp.dot(p.astype(jnp.bfloat16), vh,
                             preferred_element_type=jnp.float32))  # (Lq, Dh)
    o = jnp.concatenate(heads, axis=-1)                          # (Lq, C)
    return _mm(o, wo) + bo                                       # single out-proj matmul


# ------------------------------ fused forward kernel --------------------------------

def _maskformer_fwd_kernel(
        # per-batch activations / inputs
        x_ref, pos_ref, qemb_ref, mfeat_ref,
        # input projection (1x1 conv)
        ipw_ref, ipb_ref,
        # encoder layers, stacked on leading layer axis
        e_wq_ref, e_bq_ref, e_wk_ref, e_bk_ref, e_wv_ref, e_bv_ref, e_wo_ref, e_bo_ref,
        e_ln1_ref, e_w1_ref, e_b1_ref, e_w2_ref, e_b2_ref, e_ln2_ref,
        # decoder layers, stacked on leading layer axis
        dsa_wq_ref, dsa_bq_ref, dsa_wk_ref, dsa_bk_ref, dsa_wv_ref, dsa_bv_ref,
        dsa_wo_ref, dsa_bo_ref, d_ln1_ref,
        dca_wq_ref, dca_bq_ref, dca_wk_ref, dca_bk_ref, dca_wv_ref, dca_bv_ref,
        dca_wo_ref, dca_bo_ref, d_ln2_ref,
        d_w1_ref, d_b1_ref, d_w2_ref, d_b2_ref, d_ln3_ref,
        dnorm_ref,
        # prediction heads
        clsw_ref, clsb_ref, m1w_ref, m1b_ref, m2w_ref, m2b_ref, m3w_ref, m3b_ref,
        # outputs
        logits_ref, seg_ref,
        *, num_heads, n_enc, n_dec):

    pos = pos_ref[0]                                   # (L, C)
    qemb = qemb_ref[...]                               # (Q, C)

    # input_proj: 1x1 conv == per-pixel linear over channels
    src = _mm(x_ref[0], ipw_ref[...]) + ipb_ref[...]   # (L, C) f32

    # ---- encoder (post-norm), statically unrolled over layers ----
    mem = src
    for l in range(n_enc):
        q_in = mem + pos
        attn = _mha(q_in, q_in, mem,
                    e_wq_ref[l], e_bq_ref[l], e_wk_ref[l], e_bk_ref[l],
                    e_wv_ref[l], e_bv_ref[l], e_wo_ref[l], e_bo_ref[l], num_heads)
        xe = _ln(mem + attn, e_ln1_ref[l])
        h = jnp.maximum(_mm(xe, e_w1_ref[l]) + e_b1_ref[l], 0.0)
        y = _mm(h, e_w2_ref[l]) + e_b2_ref[l]
        mem = _ln(xe + y, e_ln2_ref[l])

    mem_pos = mem + pos                                # hoisted cross-attn key input

    # ---- decoder (post-norm), intermediates kept for deep supervision ----
    tgt = jnp.zeros_like(qemb)
    hs_list = []
    for l in range(n_dec):
        q_in = tgt + qemb
        sa = _mha(q_in, q_in, tgt,
                  dsa_wq_ref[l], dsa_bq_ref[l], dsa_wk_ref[l], dsa_bk_ref[l],
                  dsa_wv_ref[l], dsa_bv_ref[l], dsa_wo_ref[l], dsa_bo_ref[l], num_heads)
        xd = _ln(tgt + sa, d_ln1_ref[l])
        ca = _mha(xd + qemb, mem_pos, mem,
                  dca_wq_ref[l], dca_bq_ref[l], dca_wk_ref[l], dca_bk_ref[l],
                  dca_wv_ref[l], dca_bv_ref[l], dca_wo_ref[l], dca_bo_ref[l], num_heads)
        xd = _ln(xd + ca, d_ln2_ref[l])
        h = jnp.maximum(_mm(xd, d_w1_ref[l]) + d_b1_ref[l], 0.0)
        y = _mm(h, d_w2_ref[l]) + d_b2_ref[l]
        tgt = _ln(xd + y, d_ln3_ref[l])
        hs_list.append(_ln(tgt, dnorm_ref[...]))       # shared decoder norm (intermediate)

    hs = jnp.concatenate(hs_list, axis=0)              # (n_dec*Q, C)

    # ---- prediction heads (class head pre-padded to 128 lanes -> unmasked stores) ----
    logits_ref[0] = _mm(hs, clsw_ref[...]) + clsb_ref[...]          # (n_dec*Q, 128)
    h = jnp.maximum(_mm(hs, m1w_ref[...]) + m1b_ref[...], 0.0)
    h = jnp.maximum(_mm(h, m2w_ref[...]) + m2b_ref[...], 0.0)
    memb = _mm(h, m3w_ref[...]) + m3b_ref[...]                      # (n_dec*Q, Cm)

    # ---- mask einsum 'lbqc,bchw->lbqhw' as (n_dec*Q, Cm) @ (Cm, HW); HW lane-dense ----
    seg_ref[0] = jnp.dot(memb.astype(jnp.bfloat16), mfeat_ref[0],
                         preferred_element_type=jnp.float32)


# ------------------------------ kernel wrapper --------------------------------

def _bcast_spec(shape):
    nd = len(shape)
    return pl.BlockSpec(tuple(shape), lambda b, _nd=nd: (0,) * _nd)


def _batch_spec(shape):
    nd = len(shape)
    return pl.BlockSpec((1,) + tuple(shape[1:]),
                        lambda b, _nd=nd: (b,) + (0,) * (_nd - 1))


def maskformer_forward(params, cfg, x, mask_features, pos):
    """x: (B, in_channels, H, W); mask_features: (B, mask_dim, Hm, Wm); mask=None."""
    B, Cin, H, W = x.shape
    C, nheads, Q = cfg['hidden_dim'], cfg['nheads'], cfg['num_queries']
    F = cfg['dim_feedforward']
    n_enc, n_dec = cfg['enc_layers'], cfg['dec_layers']
    NC = cfg['num_classes'] + 1
    L = H * W
    _, Cm, Hm, Wm = mask_features.shape
    HW = Hm * Wm
    NCpad = params['class_w'].shape[1]

    # layout plumbing done once in plain JAX (cheap at these sizes)
    x2 = jnp.transpose(x, (0, 2, 3, 1)).reshape(B, L, Cin)
    pos_seq = jnp.transpose(pos.reshape(B, C, L), (0, 2, 1))        # (B, HW, C)
    mfeat = mask_features.reshape(B, Cm, HW).astype(jnp.bfloat16)   # bf16 once

    args = [
        x2, pos_seq, params['query_embed'], mfeat,
        params['ip_w'], params['ip_b'],
        params['e_wq'], params['e_bq'], params['e_wk'], params['e_bk'],
        params['e_wv'], params['e_bv'], params['e_wo'], params['e_bo'],
        params['e_ln1'], params['e_w1'], params['e_b1'], params['e_w2'],
        params['e_b2'], params['e_ln2'],
        params['dsa_wq'], params['dsa_bq'], params['dsa_wk'], params['dsa_bk'],
        params['dsa_wv'], params['dsa_bv'], params['dsa_wo'], params['dsa_bo'],
        params['d_ln1'],
        params['dca_wq'], params['dca_bq'], params['dca_wk'], params['dca_bk'],
        params['dca_wv'], params['dca_bv'], params['dca_wo'], params['dca_bo'],
        params['d_ln2'],
        params['d_w1'], params['d_b1'], params['d_w2'], params['d_b2'],
        params['d_ln3'],
        params['dec_norm'],
        params['class_w'], params['class_b'],
        params['mask_w1'], params['mask_b1'], params['mask_w2'], params['mask_b2'],
        params['mask_w3'], params['mask_b3'],
    ]
    per_batch = {0, 1, 3}                               # x2, pos_seq, mfeat
    in_specs = [(_batch_spec(a.shape) if i in per_batch else _bcast_spec(a.shape))
                for i, a in enumerate(args)]

    kern = functools.partial(_maskformer_fwd_kernel,
                             num_heads=nheads, n_enc=n_enc, n_dec=n_dec)

    # rough roofline hint so XLA schedules surrounding reshapes around the custom call
    def _attn_flops(lq, lk):
        return 2 * (3 * lk * C * C + lq * C * C + 2 * lq * lk * C)
    flops = B * (2 * L * Cin * C
                 + n_enc * (_attn_flops(L, L) + 4 * L * C * F)
                 + n_dec * (_attn_flops(Q, Q) + _attn_flops(Q, L) + 4 * Q * C * F)
                 + n_dec * Q * 2 * (C * (NCpad + 2 * C + Cm) + Cm * HW))
    transcendentals = B * (n_enc * nheads * L * L + n_dec * nheads * (Q * Q + Q * L))
    bytes_accessed = (sum(int(a.size) * a.dtype.itemsize for a in args)
                      + B * n_dec * Q * (NCpad + HW) * 4)

    logits_pad, seg = pl.pallas_call(
        kern,
        out_shape=(jax.ShapeDtypeStruct((B, n_dec * Q, NCpad), jnp.float32),
                   jax.ShapeDtypeStruct((B, n_dec * Q, HW), jnp.float32)),
        grid=(B,),
        in_specs=in_specs,
        out_specs=(pl.BlockSpec((1, n_dec * Q, NCpad), lambda b: (b, 0, 0)),
                   pl.BlockSpec((1, n_dec * Q, HW), lambda b: (b, 0, 0))),
        compiler_params=pltpu.CompilerParams(dimension_semantics=("parallel",)),
        cost_estimate=pl.CostEstimate(flops=int(flops),
                                      transcendentals=int(transcendentals),
                                      bytes_accessed=int(bytes_accessed)),
    )(*args)

    # slice back the lane padding, restore reference layouts (tiny XLA ops)
    outputs_class = jnp.transpose(
        logits_pad[..., :NC].reshape(B, n_dec, Q, NC), (1, 0, 2, 3))       # (Ld,B,Q,NC)
    seg_masks = jnp.transpose(
        seg.reshape(B, n_dec, Q, Hm, Wm), (1, 0, 2, 3, 4))                 # (Ld,B,Q,Hm,Wm)

    out = {'pred_logits': outputs_class[-1], 'pred_masks': seg_masks[-1]}
    out['aux_outputs'] = [{'pred_logits': a, 'pred_masks': m}
                          for a, m in zip(outputs_class[:-1], seg_masks[:-1])]
    return out


# ------------------------------ plain-JAX glue ---------------------------------

def position_embedding_sine(B, H, W, num_pos_feats, temperature=10000.0):
    """PositionEmbeddingSine(normalize=True), mask=None. Returns (B, 2*num_pos_feats, H, W)."""
    scale = 2.0 * math.pi
    not_mask = jnp.ones((B, H, W), jnp.float32)
    y_embed = jnp.cumsum(not_mask, axis=1)
    x_embed = jnp.cumsum(not_mask, axis=2)
    eps = 1e-6
    y_embed = y_embed / (y_embed[:, -1:, :] + eps) * scale
    x_embed = x_embed / (x_embed[:, :, -1:] + eps) * scale
    dim_t = jnp.arange(num_pos_feats, dtype=jnp.float32)
    dim_t = temperature ** (2.0 * jnp.floor_divide(dim_t, 2.0) / num_pos_feats)
    pos_x = x_embed[:, :, :, None] / dim_t
    pos_y = y_embed[:, :, :, None] / dim_t
    pos_x = jnp.stack((jnp.sin(pos_x[:, :, :, 0::2]),
                       jnp.cos(pos_x[:, :, :, 1::2])), axis=4).reshape(B, H, W, num_pos_feats)
    pos_y = jnp.stack((jnp.sin(pos_y[:, :, :, 0::2]),
                       jnp.cos(pos_y[:, :, :, 1::2])), axis=4).reshape(B, H, W, num_pos_feats)
    pos = jnp.concatenate((pos_y, pos_x), axis=3)
    return jnp.transpose(pos, (0, 3, 1, 2))


# --------------------------- deterministic params -------------------------------

def init_params(key, cfg, in_channels):
    """PyTorch-convention parameters (Linear weights (out, in))."""
    C, F = cfg['hidden_dim'], cfg['dim_feedforward']
    keys = iter(jax.random.split(key, 512))

    def lin(out_d, in_d):
        w = 0.02 * jax.random.normal(next(keys), (out_d, in_d), jnp.float32)
        b = 0.02 * jax.random.normal(next(keys), (out_d,), jnp.float32)
        return w, b

    def mha():
        wq, bq = lin(C, C); wk, bk = lin(C, C); wv, bv = lin(C, C); ow, ob = lin(C, C)
        return {'in_proj_w': jnp.concatenate([wq, wk, wv], 0),
                'in_proj_b': jnp.concatenate([bq, bk, bv], 0),
                'out_proj_w': ow, 'out_proj_b': ob}

    def ln():
        return jnp.ones((C,), jnp.float32), jnp.zeros((C,), jnp.float32)

    params = {}
    params['input_proj_w'], params['input_proj_b'] = lin(C, in_channels)
    params['query_embed'] = jax.random.normal(next(keys), (cfg['num_queries'], C), jnp.float32)

    enc = []
    for _ in range(cfg['enc_layers']):
        l = {'self_attn': mha()}
        l['linear1_w'], l['linear1_b'] = lin(F, C)
        l['linear2_w'], l['linear2_b'] = lin(C, F)
        l['norm1_g'], l['norm1_b'] = ln()
        l['norm2_g'], l['norm2_b'] = ln()
        enc.append(l)
    params['encoder_layers'] = enc

    dec = []
    for _ in range(cfg['dec_layers']):
        l = {'self_attn': mha(), 'cross_attn': mha()}
        l['linear1_w'], l['linear1_b'] = lin(F, C)
        l['linear2_w'], l['linear2_b'] = lin(C, F)
        l['norm1_g'], l['norm1_b'] = ln()
        l['norm2_g'], l['norm2_b'] = ln()
        l['norm3_g'], l['norm3_b'] = ln()
        dec.append(l)
    params['decoder_layers'] = dec
    params['dec_norm_g'], params['dec_norm_b'] = ln()

    params['class_embed_w'], params['class_embed_b'] = lin(cfg['num_classes'] + 1, C)
    params['mask_embed'] = [lin(C, C), lin(C, C), lin(cfg['mask_dim'], C)]
    return params


def prepare_params(raw, cfg):
    """One-time host-side conversion: transpose Linear weights to (K,N) bf16, biases to
    (1,N) f32, LayerNorm (gamma,beta) packed as (2,C) f32, qkv pre-split, per-layer
    weights stacked on a leading layer axis, class head zero-padded to 128 lanes."""
    NC = cfg['num_classes'] + 1
    NCpad = ((NC + 127) // 128) * 128

    def wt(w): return jnp.transpose(w).astype(jnp.bfloat16)
    def bi(b): return b.reshape(1, -1).astype(jnp.float32)
    def ln(g, b): return jnp.stack([g, b], axis=0).astype(jnp.float32)

    def split_qkv(m):
        wq, wk, wv = jnp.split(m['in_proj_w'], 3, axis=0)
        bq, bk, bv = jnp.split(m['in_proj_b'], 3, axis=0)
        return (wt(wq), bi(bq), wt(wk), bi(bk), wt(wv), bi(bv),
                wt(m['out_proj_w']), bi(m['out_proj_b']))

    def stack(list_of_tuples):
        return [jnp.stack(t, axis=0) for t in zip(*list_of_tuples)]

    p = {'ip_w': wt(raw['input_proj_w']), 'ip_b': bi(raw['input_proj_b']),
         'query_embed': raw['query_embed'].astype(jnp.float32)}

    enc = []
    for l in raw['encoder_layers']:
        enc.append(split_qkv(l['self_attn'])
                   + (ln(l['norm1_g'], l['norm1_b']),
                      wt(l['linear1_w']), bi(l['linear1_b']),
                      wt(l['linear2_w']), bi(l['linear2_b']),
                      ln(l['norm2_g'], l['norm2_b'])))
    (p['e_wq'], p['e_bq'], p['e_wk'], p['e_bk'], p['e_wv'], p['e_bv'],
     p['e_wo'], p['e_bo'], p['e_ln1'], p['e_w1'], p['e_b1'], p['e_w2'],
     p['e_b2'], p['e_ln2']) = stack(enc)

    dec = []
    for l in raw['decoder_layers']:
        dec.append(split_qkv(l['self_attn'])
                   + (ln(l['norm1_g'], l['norm1_b']),)
                   + split_qkv(l['cross_attn'])
                   + (ln(l['norm2_g'], l['norm2_b']),
                      wt(l['linear1_w']), bi(l['linear1_b']),
                      wt(l['linear2_w']), bi(l['linear2_b']),
                      ln(l['norm3_g'], l['norm3_b'])))
    (p['dsa_wq'], p['dsa_bq'], p['dsa_wk'], p['dsa_bk'], p['dsa_wv'], p['dsa_bv'],
     p['dsa_wo'], p['dsa_bo'], p['d_ln1'],
     p['dca_wq'], p['dca_bq'], p['dca_wk'], p['dca_bk'], p['dca_wv'], p['dca_bv'],
     p['dca_wo'], p['dca_bo'], p['d_ln2'],
     p['d_w1'], p['d_b1'], p['d_w2'], p['d_b2'], p['d_ln3']) = stack(dec)

    p['dec_norm'] = ln(raw['dec_norm_g'], raw['dec_norm_b'])

    # class head padded to 128 output lanes (lane-dense stores); sliced back in JAX
    cw = jnp.transpose(raw['class_embed_w'])                      # (C, NC)
    cb = raw['class_embed_b']
    pad = NCpad - NC
    p['class_w'] = jnp.pad(cw, ((0, 0), (0, pad))).astype(jnp.bfloat16)
    p['class_b'] = jnp.pad(cb, (0, pad)).reshape(1, -1).astype(jnp.float32)

    (w1, b1), (w2, b2), (w3, b3) = raw['mask_embed']
    p['mask_w1'], p['mask_b1'] = wt(w1), bi(b1)
    p['mask_w2'], p['mask_b2'] = wt(w2), bi(b2)
    p['mask_w3'], p['mask_b3'] = wt(w3), bi(b3)
    return p


# ----------------------------------- main -----------------------------------

if __name__ == "__main__":
    cfg = dict(hidden_dim=32, num_queries=8, nheads=4, dim_feedforward=64,
               enc_layers=1, dec_layers=2, num_classes=5, mask_dim=16,
               dropout=0.0, pre_norm=False, deep_supervision=True)
    in_channels = 16
    B, H, W = 2, 8, 8
    Hm, Wm = 16, 16

    key = jax.random.PRNGKey(0)
    kx, km, kp = jax.random.split(key, 3)
    x = jax.random.normal(kx, (B, in_channels, H, W), jnp.float32)
    mask_features = jax.random.normal(km, (B, cfg['mask_dim'], Hm, Wm), jnp.float32)

    raw_params = init_params(kp, cfg, in_channels)
    params = prepare_params(raw_params, cfg)                      # transpose/split/pad once
    pos = position_embedding_sine(B, H, W, cfg['hidden_dim'] // 2)  # hoisted (static shapes)

    # TODO(synk): at production MaskFormer sizes (hidden 256, HW in the thousands) the
    # single-block-per-batch layout must become generation-aware: tile L/HW (v7x has
    # 64 MiB VMEM vs 128 MiB on v5e/v6e), set vmem_limit_bytes explicitly, and add a
    # second parallel grid axis so both v7x TensorCores stay busy at B=1.
    fwd = jax.jit(lambda p, xx, mf, pe: maskformer_forward(p, cfg, xx, mf, pe))

    out = fwd(params, x, mask_features, pos)
    jax.block_until_ready(out['pred_logits'])
    jax.block_until_ready(out['pred_masks'])

    assert out['pred_logits'].shape == (B, cfg['num_queries'], cfg['num_classes'] + 1)
    assert out['pred_masks'].shape == (B, cfg['num_queries'], Hm, Wm)
    assert len(out['aux_outputs']) == cfg['dec_layers'] - 1
    assert bool(jnp.all(jnp.isfinite(out['pred_logits'])))
    assert bool(jnp.all(jnp.isfinite(out['pred_masks'])))

    # TODO(synk): the optional `mask` argument (F.interpolate + key_padding_mask path)
    # is not exercised; forward uses mask=None exactly as the reference default.
    print("KERNEL_OK")
</pallas_src>

<mosaic_0001>
module attributes {stable_mosaic.version = 11 : i64} {
  func.func @_maskformer_fwd_kernel(%arg0: i32, %arg1: memref<1x64x16xf32, #tpu.memory_space<vmem>>, %arg2: memref<1x64x32xf32, #tpu.memory_space<vmem>>, %arg3: memref<8x32xf32, #tpu.memory_space<vmem>>, %arg4: memref<1x16x256xbf16, #tpu.memory_space<vmem>>, %arg5: memref<16x32xbf16, #tpu.memory_space<vmem>>, %arg6: memref<1x32xf32, #tpu.memory_space<vmem>>, %arg7: memref<1x32x32xbf16, #tpu.memory_space<vmem>>, %arg8: memref<1x1x32xf32, #tpu.memory_space<vmem>>, %arg9: memref<1x32x32xbf16, #tpu.memory_space<vmem>>, %arg10: memref<1x1x32xf32, #tpu.memory_space<vmem>>, %arg11: memref<1x32x32xbf16, #tpu.memory_space<vmem>>, %arg12: memref<1x1x32xf32, #tpu.memory_space<vmem>>, %arg13: memref<1x32x32xbf16, #tpu.memory_space<vmem>>, %arg14: memref<1x1x32xf32, #tpu.memory_space<vmem>>, %arg15: memref<1x2x32xf32, #tpu.memory_space<vmem>>, %arg16: memref<1x32x64xbf16, #tpu.memory_space<vmem>>, %arg17: memref<1x1x64xf32, #tpu.memory_space<vmem>>, %arg18: memref<1x64x32xbf16, #tpu.memory_space<vmem>>, %arg19: memref<1x1x32xf32, #tpu.memory_space<vmem>>, %arg20: memref<1x2x32xf32, #tpu.memory_space<vmem>>, %arg21: memref<2x32x32xbf16, #tpu.memory_space<vmem>>, %arg22: memref<2x1x32xf32, #tpu.memory_space<vmem>>, %arg23: memref<2x32x32xbf16, #tpu.memory_space<vmem>>, %arg24: memref<2x1x32xf32, #tpu.memory_space<vmem>>, %arg25: memref<2x32x32xbf16, #tpu.memory_space<vmem>>, %arg26: memref<2x1x32xf32, #tpu.memory_space<vmem>>, %arg27: memref<2x32x32xbf16, #tpu.memory_space<vmem>>, %arg28: memref<2x1x32xf32, #tpu.memory_space<vmem>>, %arg29: memref<2x2x32xf32, #tpu.memory_space<vmem>>, %arg30: memref<2x32x32xbf16, #tpu.memory_space<vmem>>, %arg31: memref<2x1x32xf32, #tpu.memory_space<vmem>>, %arg32: memref<2x32x32xbf16, #tpu.memory_space<vmem>>, %arg33: memref<2x1x32xf32, #tpu.memory_space<vmem>>, %arg34: memref<2x32x32xbf16, #tpu.memory_space<vmem>>, %arg35: memref<2x1x32xf32, #tpu.memory_space<vmem>>, %arg36: memref<2x32x32xbf16, #tpu.memory_space<vmem>>, %arg37: memref<2x1x32xf32, #tpu.memory_space<vmem>>, %arg38: memref<2x2x32xf32, #tpu.memory_space<vmem>>, %arg39: memref<2x32x64xbf16, #tpu.memory_space<vmem>>, %arg40: memref<2x1x64xf32, #tpu.memory_space<vmem>>, %arg41: memref<2x64x32xbf16, #tpu.memory_space<vmem>>, %arg42: memref<2x1x32xf32, #tpu.memory_space<vmem>>, %arg43: memref<2x2x32xf32, #tpu.memory_space<vmem>>, %arg44: memref<2x32xf32, #tpu.memory_space<vmem>>, %arg45: memref<32x128xbf16, #tpu.memory_space<vmem>>, %arg46: memref<1x128xf32, #tpu.memory_space<vmem>>, %arg47: memref<32x32xbf16, #tpu.memory_space<vmem>>, %arg48: memref<1x32xf32, #tpu.memory_space<vmem>>, %arg49: memref<32x32xbf16, #tpu.memory_space<vmem>>, %arg50: memref<1x32xf32, #tpu.memory_space<vmem>>, %arg51: memref<32x16xbf16, #tpu.memory_space<vmem>>, %arg52: memref<1x16xf32, #tpu.memory_space<vmem>>, %arg53: memref<1x16x128xf32, #tpu.memory_space<vmem>>, %arg54: memref<1x16x256xf32, #tpu.memory_space<vmem>>) attributes {dimension_semantics = [#tpu.dimension_semantics<parallel>], iteration_bounds = array<i64: 2>, scalar_prefetch = 0 : i64, scratch_operands = 0 : i64, tpu.core_type = #tpu.core_type<tc>, window_params = [{transform_indices = @transform_0, window_bounds = array<i64: 1, 64, 16>}, {transform_indices = @transform_1, window_bounds = array<i64: 1, 64, 32>}, {pipeline_mode = #tpu.pipeline_mode<synchronous>, transform_indices = @transform_2, window_bounds = array<i64: 8, 32>}, {transform_indices = @transform_3, window_bounds = array<i64: 1, 16, 256>}, {pipeline_mode = #tpu.pipeline_mode<synchronous>, transform_indices = @transform_4, window_bounds = array<i64: 16, 32>}, {pipeline_mode = #tpu.pipeline_mode<synchronous>, transform_indices = @transform_5, window_bounds = array<i64: 1, 32>}, {pipeline_mode = #tpu.pipeline_mode<synchronous>, transform_indices = @transform_6, window_bounds = array<i64: 1, 32, 32>}, {pipeline_mode = #tpu.pipeline_mode<synchronous>, transform_indices = @transform_7, window_bounds = array<i64: 1, 1, 32>}, {pipeline_mode = #tpu.pipeline_mode<synchronous>, transform_indices = @transform_8, window_bounds = array<i64: 1, 32, 32>}, {pipeline_mode = #tpu.pipeline_mode<synchronous>, transform_indices = @transform_9, window_bounds = array<i64: 1, 1, 32>}, {pipeline_mode = #tpu.pipeline_mode<synchronous>, transform_indices = @transform_10, window_bounds = array<i64: 1, 32, 32>}, {pipeline_mode = #tpu.pipeline_mode<synchronous>, transform_indices = @transform_11, window_bounds = array<i64: 1, 1, 32>}, {pipeline_mode = #tpu.pipeline_mode<synchronous>, transform_indices = @transform_12, window_bounds = array<i64: 1, 32, 32>}, {pipeline_mode = #tpu.pipeline_mode<synchronous>, transform_indices = @transform_13, window_bounds = array<i64: 1, 1, 32>}, {pipeline_mode = #tpu.pipeline_mode<synchronous>, transform_indices = @transform_14, window_bounds = array<i64: 1, 2, 32>}, {pipeline_mode = #tpu.pipeline_mode<synchronous>, transform_indices = @transform_15, window_bounds = array<i64: 1, 32, 64>}, {pipeline_mode = #tpu.pipeline_mode<synchronous>, transform_indices = @transform_16, window_bounds = array<i64: 1, 1, 64>}, {pipeline_mode = #tpu.pipeline_mode<synchronous>, transform_indices = @transform_17, window_bounds = array<i64: 1, 64, 32>}, {pipeline_mode = #tpu.pipeline_mode<synchronous>, transform_indices = @transform_18, window_bounds = array<i64: 1, 1, 32>}, {pipeline_mode = #tpu.pipeline_mode<synchronous>, transform_indices = @transform_19, window_bounds = array<i64: 1, 2, 32>}, {pipeline_mode = #tpu.pipeline_mode<synchronous>, transform_indices = @transform_20, window_bounds = array<i64: 2, 32, 32>}, {pipeline_mode = #tpu.pipeline_mode<synchronous>, transform_indices = @transform_21, window_bounds = array<i64: 2, 1, 32>}, {pipeline_mode = #tpu.pipeline_mode<synchronous>, transform_indices = @transform_22, window_bounds = array<i64: 2, 32, 32>}, {pipeline_mode = #tpu.pipeline_mode<synchronous>, transform_indices = @transform_23, window_bounds = array<i64: 2, 1, 32>}, {pipeline_mode = #tpu.pipeline_mode<synchronous>, transform_indices = @transform_24, window_bounds = array<i64: 2, 32, 32>}, {pipeline_mode = #tpu.pipeline_mode<synchronous>, transform_indices = @transform_25, window_bounds = array<i64: 2, 1, 32>}, {pipeline_mode = #tpu.pipeline_mode<synchronous>, transform_indices = @transform_26, window_bounds = array<i64: 2, 32, 32>}, {pipeline_mode = #tpu.pipeline_mode<synchronous>, transform_indices = @transform_27, window_bounds = array<i64: 2, 1, 32>}, {pipeline_mode = #tpu.pipeline_mode<synchronous>, transform_indices = @transform_28, window_bounds = array<i64: 2, 2, 32>}, {pipeline_mode = #tpu.pipeline_mode<synchronous>, transform_indices = @transform_29, window_bounds = array<i64: 2, 32, 32>}, {pipeline_mode = #tpu.pipeline_mode<synchronous>, transform_indices = @transform_30, window_bounds = array<i64: 2, 1, 32>}, {pipeline_mode = #tpu.pipeline_mode<synchronous>, transform_indices = @transform_31, window_bounds = array<i64: 2, 32, 32>}, {pipeline_mode = #tpu.pipeline_mode<synchronous>, transform_indices = @transform_32, window_bounds = array<i64: 2, 1, 32>}, {pipeline_mode = #tpu.pipeline_mode<synchronous>, transform_indices = @transform_33, window_bounds = array<i64: 2, 32, 32>}, {pipeline_mode = #tpu.pipeline_mode<synchronous>, transform_indices = @transform_34, window_bounds = array<i64: 2, 1, 32>}, {pipeline_mode = #tpu.pipeline_mode<synchronous>, transform_indices = @transform_35, window_bounds = array<i64: 2, 32, 32>}, {pipeline_mode = #tpu.pipeline_mode<synchronous>, transform_indices = @transform_36, window_bounds = array<i64: 2, 1, 32>}, {pipeline_mode = #tpu.pipeline_mode<synchronous>, transform_indices = @transform_37, window_bounds = array<i64: 2, 2, 32>}, {pipeline_mode = #tpu.pipeline_mode<synchronous>, transform_indices = @transform_38, window_bounds = array<i64: 2, 32, 64>}, {pipeline_mode = #tpu.pipeline_mode<synchronous>, transform_indices = @transform_39, window_bounds = array<i64: 2, 1, 64>}, {pipeline_mode = #tpu.pipeline_mode<synchronous>, transform_indices = @transform_40, window_bounds = array<i64: 2, 64, 32>}, {pipeline_mode = #tpu.pipeline_mode<synchronous>, transform_indices = @transform_41, window_bounds = array<i64: 2, 1, 32>}, {pipeline_mode = #tpu.pipeline_mode<synchronous>, transform_indices = @transform_42, window_bounds = array<i64: 2, 2, 32>}, {pipeline_mode = #tpu.pipeline_mode<synchronous>, transform_indices = @transform_43, window_bounds = array<i64: 2, 32>}, {pipeline_mode = #tpu.pipeline_mode<synchronous>, transform_indices = @transform_44, window_bounds = array<i64: 32, 128>}, {pipeline_mode = #tpu.pipeline_mode<synchronous>, transform_indices = @transform_45, window_bounds = array<i64: 1, 128>}, {pipeline_mode = #tpu.pipeline_mode<synchronous>, transform_indices = @transform_46, window_bounds = array<i64: 32, 32>}, {pipeline_mode = #tpu.pipeline_mode<synchronous>, transform_indices = @transform_47, window_bounds = array<i64: 1, 32>}, {pipeline_mode = #tpu.pipeline_mode<synchronous>, transform_indices = @transform_48, window_bounds = array<i64: 32, 32>}, {pipeline_mode = #tpu.pipeline_mode<synchronous>, transform_indices = @transform_49, window_bounds = array<i64: 1, 32>}, {pipeline_mode = #tpu.pipeline_mode<synchronous>, transform_indices = @transform_50, window_bounds = array<i64: 32, 16>}, {pipeline_mode = #tpu.pipeline_mode<synchronous>, transform_indices = @transform_51, window_bounds = array<i64: 1, 16>}, {transform_indices = @transform_52, window_bounds = array<i64: 1, 16, 128>}, {transform_indices = @transform_53, window_bounds = array<i64: 1, 16, 256>}]} {
    %c0 = arith.constant 0 : index
    %c0_0 = arith.constant 0 : index
    %c0_1 = arith.constant 0 : index
    %0 = vector.load %arg2[%c0, %c0_0, %c0_1] : memref<1x64x32xf32, #tpu.memory_space<vmem>>, vector<1x64x32xf32>
    %1 = vector.shape_cast %0 : vector<1x64x32xf32> to vector<64x32xf32>
    %c0_2 = arith.constant 0 : index
    %c0_3 = arith.constant 0 : index
    %2 = vector.load %arg3[%c0_2, %c0_3] : memref<8x32xf32, #tpu.memory_space<vmem>>, vector<8x32xf32>
    %c0_4 = arith.constant 0 : index
    %c0_5 = arith.constant 0 : index
    %c0_6 = arith.constant 0 : index
    %3 = vector.load %arg1[%c0_4, %c0_5, %c0_6] : memref<1x64x16xf32, #tpu.memory_space<vmem>>, vector<1x64x16xf32>
    %4 = vector.shape_cast %3 : vector<1x64x16xf32> to vector<64x16xf32>
    %c0_7 = arith.constant 0 : index
    %c0_8 = arith.constant 0 : index
    %5 = vector.load %arg5[%c0_7, %c0_8] : memref<16x32xbf16, #tpu.memory_space<vmem>>, vector<16x32xbf16>
    %6 = arith.truncf %4 : vector<64x16xf32> to vector<64x16xbf16>
    %cst = arith.constant dense<0.000000e+00> : vector<64x32xf32>
    %7 = tpu.matmul %6, %5, %cst {dimension_numbers = #tpu.dot_dimension_numbers<[1], [0], [0], [1], [0, 0, 1, 1], [], []>} : vector<64x16xbf16>, vector<16x32xbf16>, vector<64x32xf32> -> vector<64x32xf32>
    %c0_9 = arith.constant 0 : index
    %c0_10 = arith.constant 0 : index
    %8 = vector.load %arg6[%c0_9, %c0_10] : memref<1x32xf32, #tpu.memory_space<vmem>>, vector<1x32xf32>
    %9 = vector.broadcast %8 : vector<1x32xf32> to vector<64x32xf32>
    %10 = arith.addf %7, %9 : vector<64x32xf32>
    %11 = arith.addf %10, %1 : vector<64x32xf32>
    %c0_11 = arith.constant 0 : index
    %c0_12 = arith.constant 0 : index
    %c0_13 = arith.constant 0 : index
    %12 = vector.load %arg7[%c0_11, %c0_12, %c0_13] : memref<1x32x32xbf16, #tpu.memory_space<vmem>>, vector<1x32x32xbf16>
    %13 = vector.shape_cast %12 : vector<1x32x32xbf16> to vector<32x32xbf16>
    %c0_14 = arith.constant 0 : index
    %c0_15 = arith.constant 0 : index
    %c0_16 = arith.constant 0 : index
    %14 = vector.load %arg8[%c0_14, %c0_15, %c0_16] : memref<1x1x32xf32, #tpu.memory_space<vmem>>, vector<1x1x32xf32>
    %15 = vector.shape_cast %14 : vector<1x1x32xf32> to vector<1x32xf32>
    %c0_17 = arith.constant 0 : index
    %c0_18 = arith.constant 0 : index
    %c0_19 = arith.constant 0 : index
    %16 = vector.load %arg9[%c0_17, %c0_18, %c0_19] : memref<1x32x32xbf16, #tpu.memory_space<vmem>>, vector<1x32x32xbf16>
    %17 = vector.shape_cast %16 : vector<1x32x32xbf16> to vector<32x32xbf16>
    %c0_20 = arith.constant 0 : index
    %c0_21 = arith.constant 0 : index
    %c0_22 = arith.constant 0 : index
    %18 = vector.load %arg10[%c0_20, %c0_21, %c0_22] : memref<1x1x32xf32, #tpu.memory_space<vmem>>, vector<1x1x32xf32>
    %19 = vector.shape_cast %18 : vector<1x1x32xf32> to vector<1x32xf32>
    %c0_23 = arith.constant 0 : index
    %c0_24 = arith.constant 0 : index
    %c0_25 = arith.constant 0 : index
    %20 = vector.load %arg11[%c0_23, %c0_24, %c0_25] : memref<1x32x32xbf16, #tpu.memory_space<vmem>>, vector<1x32x32xbf16>
    %21 = vector.shape_cast %20 : vector<1x32x32xbf16> to vector<32x32xbf16>
    %c0_26 = arith.constant 0 : index
    %c0_27 = arith.constant 0 : index
    %c0_28 = arith.constant 0 : index
    %22 = vector.load %arg12[%c0_26, %c0_27, %c0_28] : memref<1x1x32xf32, #tpu.memory_space<vmem>>, vector<1x1x32xf32>
    %23 = vector.shape_cast %22 : vector<1x1x32xf32> to vector<1x32xf32>
    %c0_29 = arith.constant 0 : index
    %c0_30 = arith.constant 0 : index
    %c0_31 = arith.constant 0 : index
    %24 = vector.load %arg13[%c0_29, %c0_30, %c0_31] : memref<1x32x32xbf16, #tpu.memory_space<vmem>>, vector<1x32x32xbf16>
    %25 = vector.shape_cast %24 : vector<1x32x32xbf16> to vector<32x32xbf16>
    %c0_32 = arith.constant 0 : index
    %c0_33 = arith.constant 0 : index
    %c0_34 = arith.constant 0 : index
    %26 = vector.load %arg14[%c0_32, %c0_33, %c0_34] : memref<1x1x32xf32, #tpu.memory_space<vmem>>, vector<1x1x32xf32>
    %27 = vector.shape_cast %26 : vector<1x1x32xf32> to vector<1x32xf32>
    %28 = arith.truncf %11 : vector<64x32xf32> to vector<64x32xbf16>
    %cst_35 = arith.constant dense<0.000000e+00> : vector<64x32xf32>
    %29 = tpu.matmul %28, %13, %cst_35 {dimension_numbers = #tpu.dot_dimension_numbers<[1], [0], [0], [1], [0, 0, 1, 1], [], []>} : vector<64x32xbf16>, vector<32x32xbf16>, vector<64x32xf32> -> vector<64x32xf32>
    %30 = vector.broadcast %15 : vector<1x32xf32> to vector<64x32xf32>
    %31 = arith.addf %29, %30 : vector<64x32xf32>
    %cst_36 = arith.constant 0.353553385 : f32
    %32 = vector.broadcast %cst_36 : f32 to vector<64x32xf32>
    %33 = arith.mulf %31, %32 : vector<64x32xf32>
    %34 = arith.truncf %33 : vector<64x32xf32> to vector<64x32xbf16>
    %35 = arith.truncf %11 : vector<64x32xf32> to vector<64x32xbf16>
    %cst_37 = arith.constant dense<0.000000e+00> : vector<64x32xf32>
    %36 = tpu.matmul %35, %17, %cst_37 {dimension_numbers = #tpu.dot_dimension_numbers<[1], [0], [0], [1], [0, 0, 1, 1], [], []>} : vector<64x32xbf16>, vector<32x32xbf16>, vector<64x32xf32> -> vector<64x32xf32>
    %37 = vector.broadcast %19 : vector<1x32xf32> to vector<64x32xf32>
    %38 = arith.addf %36, %37 : vector<64x32xf32>
    %39 = arith.truncf %38 : vector<64x32xf32> to vector<64x32xbf16>
    %40 = arith.truncf %10 : vector<64x32xf32> to vector<64x32xbf16>
    %cst_38 = arith.constant dense<0.000000e+00> : vector<64x32xf32>
    %41 = tpu.matmul %40, %21, %cst_38 {dimension_numbers = #tpu.dot_dimension_numbers<[1], [0], [0], [1], [0, 0, 1, 1], [], []>} : vector<64x32xbf16>, vector<32x32xbf16>, vector<64x32xf32> -> vector<64x32xf32>
    %42 = vector.broadcast %23 : vector<1x32xf32> to vector<64x32xf32>
    %43 = arith.addf %41, %42 : vector<64x32xf32>
    %44 = arith.truncf %43 : vector<64x32xf32> to vector<64x32xbf16>
    %45 = vector.extract_strided_slice %34 {offsets = [0, 0], sizes = [64, 8], strides = [1, 1]} : vector<64x32xbf16> to vector<64x8xbf16>
    %46 = vector.extract_strided_slice %39 {offsets = [0, 0], sizes = [64, 8], strides = [1, 1]} : vector<64x32xbf16> to vector<64x8xbf16>
    %47 = vector.extract_strided_slice %44 {offsets = [0, 0], sizes = [64, 8], strides = [1, 1]} : vector<64x32xbf16> to vector<64x8xbf16>
    %cst_39 = arith.constant dense<0.000000e+00> : vector<64x64xf32>
    %48 = tpu.matmul %45, %46, %cst_39 {dimension_numbers = #tpu.dot_dimension_numbers<[1], [1], [0], [0], [0, 0, 1, 0], [], []>} : vector<64x8xbf16>, vector<64x8xbf16>, vector<64x64xf32> -> vector<64x64xf32>
    %cst_40 = arith.constant dense<0xFF800000> : vector<64xf32>
    %49 = vector.multi_reduction <maximumf>, %48, %cst_40 [1] : vector<64x64xf32> to vector<64xf32>
    %50 = vector.shape_cast %49 : vector<64xf32> to vector<64x1xf32>
    %51 = vector.broadcast %50 : vector<64x1xf32> to vector<64x64xf32>
    %52 = arith.subf %48, %51 : vector<64x64xf32>
    %53 = math.exp %52 : vector<64x64xf32>
    %cst_41 = arith.constant dense<0.000000e+00> : vector<64xf32>
    %54 = vector.multi_reduction <add>, %53, %cst_41 [1] : vector<64x64xf32> to vector<64xf32>
    %55 = vector.shape_cast %54 : vector<64xf32> to vector<64x1xf32>
    %56 = tpu.reciprocal %55 {approx = true} : vector<64x1xf32> -> vector<64x1xf32>
    %57 = vector.broadcast %56 : vector<64x1xf32> to vector<64x64xf32>
    %58 = arith.mulf %53, %57 : vector<64x64xf32>
    %59 = arith.truncf %58 : vector<64x64xf32> to vector<64x64xbf16>
    %cst_42 = arith.constant dense<0.000000e+00> : vector<64x8xf32>
    %60 = tpu.matmul %59, %47, %cst_42 {dimension_numbers = #tpu.dot_dimension_numbers<[1], [0], [0], [1], [0, 0, 1, 1], [], []>} : vector<64x64xbf16>, vector<64x8xbf16>, vector<64x8xf32> -> vector<64x8xf32>
    %61 = vector.extract_strided_slice %34 {offsets = [0, 8], sizes = [64, 8], strides = [1, 1]} : vector<64x32xbf16> to vector<64x8xbf16>
    %62 = vector.extract_strided_slice %39 {offsets = [0, 8], sizes = [64, 8], strides = [1, 1]} : vector<64x32xbf16> to vector<64x8xbf16>
    %63 = vector.extract_strided_slice %44 {offsets = [0, 8], sizes = [64, 8], strides = [1, 1]} : vector<64x32xbf16> to vector<64x8xbf16>
    %cst_43 = arith.constant dense<0.000000e+00> : vector<64x64xf32>
    %64 = tpu.matmul %61, %62, %cst_43 {dimension_numbers = #tpu.dot_dimension_numbers<[1], [1], [0], [0], [0, 0, 1, 0], [], []>} : vector<64x8xbf16>, vector<64x8xbf16>, vector<64x64xf32> -> vector<64x64xf32>
    %cst_44 = arith.constant dense<0xFF800000> : vector<64xf32>
    %65 = vector.multi_reduction <maximumf>, %64, %cst_44 [1] : vector<64x64xf32> to vector<64xf32>
    %66 = vector.shape_cast %65 : vector<64xf32> to vector<64x1xf32>
    %67 = vector.broadcast %66 : vector<64x1xf32> to vector<64x64xf32>
    %68 = arith.subf %64, %67 : vector<64x64xf32>
    %69 = math.exp %68 : vector<64x64xf32>
    %cst_45 = arith.constant dense<0.000000e+00> : vector<64xf32>
    %70 = vector.multi_reduction <add>, %69, %cst_45 [1] : vector<64x64xf32> to vector<64xf32>
    %71 = vector.shape_cast %70 : vector<64xf32> to vector<64x1xf32>
    %72 = tpu.reciprocal %71 {approx = true} : vector<64x1xf32> -> vector<64x1xf32>
    %73 = vector.broadcast %72 : vector<64x1xf32> to vector<64x64xf32>
    %74 = arith.mulf %69, %73 : vector<64x64xf32>
    %75 = arith.truncf %74 : vector<64x64xf32> to vector<64x64xbf16>
    %cst_46 = arith.constant dense<0.000000e+00> : vector<64x8xf32>
    %76 = tpu.matmul %75, %63, %cst_46 {dimension_numbers = #tpu.dot_dimension_numbers<[1], [0], [0], [1], [0, 0, 1, 1], [], []>} : vector<64x64xbf16>, vector<64x8xbf16>, vector<64x8xf32> -> vector<64x8xf32>
    %77 = vector.extract_strided_slice %34 {offsets = [0, 16], sizes = [64, 8], strides = [1, 1]} : vector<64x32xbf16> to vector<64x8xbf16>
    %78 = vector.extract_strided_slice %39 {offsets = [0, 16], sizes = [64, 8], strides = [1, 1]} : vector<64x32xbf16> to vector<64x8xbf16>
    %79 = vector.extract_strided_slice %44 {offsets = [0, 16], sizes = [64, 8], strides = [1, 1]} : vector<64x32xbf16> to vector<64x8xbf16>
    %cst_47 = arith.constant dense<0.000000e+00> : vector<64x64xf32>
    %80 = tpu.matmul %77, %78, %cst_47 {dimension_numbers = #tpu.dot_dimension_numbers<[1], [1], [0], [0], [0, 0, 1, 0], [], []>} : vector<64x8xbf16>, vector<64x8xbf16>, vector<64x64xf32> -> vector<64x64xf32>
    %cst_48 = arith.constant dense<0xFF800000> : vector<64xf32>
    %81 = vector.multi_reduction <maximumf>, %80, %cst_48 [1] : vector<64x64xf32> to vector<64xf32>
    %82 = vector.shape_cast %81 : vector<64xf32> to vector<64x1xf32>
    %83 = vector.broadcast %82 : vector<64x1xf32> to vector<64x64xf32>
    %84 = arith.subf %80, %83 : vector<64x64xf32>
    %85 = math.exp %84 : vector<64x64xf32>
    %cst_49 = arith.constant dense<0.000000e+00> : vector<64xf32>
    %86 = vector.multi_reduction <add>, %85, %cst_49 [1] : vector<64x64xf32> to vector<64xf32>
    %87 = vector.shape_cast %86 : vector<64xf32> to vector<64x1xf32>
    %88 = tpu.reciprocal %87 {approx = true} : vector<64x1xf32> -> vector<64x1xf32>
    %89 = vector.broadcast %88 : vector<64x1xf32> to vector<64x64xf32>
    %90 = arith.mulf %85, %89 : vector<64x64xf32>
    %91 = arith.truncf %90 : vector<64x64xf32> to vector<64x64xbf16>
    %cst_50 = arith.constant dense<0.000000e+00> : vector<64x8xf32>
    %92 = tpu.matmul %91, %79, %cst_50 {dimension_numbers = #tpu.dot_dimension_numbers<[1], [0], [0], [1], [0, 0, 1, 1], [], []>} : vector<64x64xbf16>, vector<64x8xbf16>, vector<64x8xf32> -> vector<64x8xf32>
    %93 = vector.extract_strided_slice %34 {offsets = [0, 24], sizes = [64, 8], strides = [1, 1]} : vector<64x32xbf16> to vector<64x8xbf16>
    %94 = vector.extract_strided_slice %39 {offsets = [0, 24], sizes = [64, 8], strides = [1, 1]} : vector<64x32xbf16> to vector<64x8xbf16>
    %95 = vector.extract_strided_slice %44 {offsets = [0, 24], sizes = [64, 8], strides = [1, 1]} : vector<64x32xbf16> to vector<64x8xbf16>
    %cst_51 = arith.constant dense<0.000000e+00> : vector<64x64xf32>
    %96 = tpu.matmul %93, %94, %cst_51 {dimension_numbers = #tpu.dot_dimension_numbers<[1], [1], [0], [0], [0, 0, 1, 0], [], []>} : vector<64x8xbf16>, vector<64x8xbf16>, vector<64x64xf32> -> vector<64x64xf32>
    %cst_52 = arith.constant dense<0xFF800000> : vector<64xf32>
    %97 = vector.multi_reduction <maximumf>, %96, %cst_52 [1] : vector<64x64xf32> to vector<64xf32>
    %98 = vector.shape_cast %97 : vector<64xf32> to vector<64x1xf32>
    %99 = vector.broadcast %98 : vector<64x1xf32> to vector<64x64xf32>
    %100 = arith.subf %96, %99 : vector<64x64xf32>
    %101 = math.exp %100 : vector<64x64xf32>
    %cst_53 = arith.constant dense<0.000000e+00> : vector<64xf32>
    %102 = vector.multi_reduction <add>, %101, %cst_53 [1] : vector<64x64xf32> to vector<64xf32>
    %103 = vector.shape_cast %102 : vector<64xf32> to vector<64x1xf32>
    %104 = tpu.reciprocal %103 {approx = true} : vector<64x1xf32> -> vector<64x1xf32>
    %105 = vector.broadcast %104 : vector<64x1xf32> to vector<64x64xf32>
    %106 = arith.mulf %101, %105 : vector<64x64xf32>
    %107 = arith.truncf %106 : vector<64x64xf32> to vector<64x64xbf16>
    %cst_54 = arith.constant dense<0.000000e+00> : vector<64x8xf32>
    %108 = tpu.matmul %107, %95, %cst_54 {dimension_numbers = #tpu.dot_dimension_numbers<[1], [0], [0], [1], [0, 0, 1, 1], [], []>} : vector<64x64xbf16>, vector<64x8xbf16>, vector<64x8xf32> -> vector<64x8xf32>
    %109 = tpu.concatenate %60, %76, %92, %108 in 1 : vector<64x8xf32>, vector<64x8xf32>, vector<64x8xf32>, vector<64x8xf32> -> vector<64x32xf32>
    %110 = arith.truncf %109 : vector<64x32xf32> to vector<64x32xbf16>
    %cst_55 = arith.constant dense<0.000000e+00> : vector<64x32xf32>
    %111 = tpu.matmul %110, %25, %cst_55 {dimension_numbers = #tpu.dot_dimension_numbers<[1], [0], [0], [1], [0, 0, 1, 1], [], []>} : vector<64x32xbf16>, vector<32x32xbf16>, vector<64x32xf32> -> vector<64x32xf32>
    %112 = vector.broadcast %27 : vector<1x32xf32> to vector<64x32xf32>
    %113 = arith.addf %111, %112 : vector<64x32xf32>
    %114 = arith.addf %10, %113 : vector<64x32xf32>
    %c0_56 = arith.constant 0 : index
    %c0_57 = arith.constant 0 : index
    %c0_58 = arith.constant 0 : index
    %115 = vector.load %arg15[%c0_56, %c0_57, %c0_58] : memref<1x2x32xf32, #tpu.memory_space<vmem>>, vector<1x2x32xf32>
    %116 = vector.shape_cast %115 : vector<1x2x32xf32> to vector<2x32xf32>
    %cst_59 = arith.constant dense<0.000000e+00> : vector<64xf32>
    %117 = vector.multi_reduction <add>, %114, %cst_59 [1] : vector<64x32xf32> to vector<64xf32>
    %118 = vector.shape_cast %117 : vector<64xf32> to vector<64x1xf32>
    %cst_60 = arith.constant 3.200000e+01 : f32
    %119 = vector.broadcast %cst_60 : f32 to vector<64x1xf32>
    %120 = arith.divf %118, %119 : vector<64x1xf32>
    %121 = vector.broadcast %120 : vector<64x1xf32> to vector<64x32xf32>
    %122 = arith.subf %114, %121 : vector<64x32xf32>
    %123 = arith.mulf %122, %122 : vector<64x32xf32>
    %cst_61 = arith.constant dense<0.000000e+00> : vector<64xf32>
    %124 = vector.multi_reduction <add>, %123, %cst_61 [1] : vector<64x32xf32> to vector<64xf32>
    %125 = vector.shape_cast %124 : vector<64xf32> to vector<64x1xf32>
    %cst_62 = arith.constant 3.200000e+01 : f32
    %126 = vector.broadcast %cst_62 : f32 to vector<64x1xf32>
    %127 = arith.divf %125, %126 : vector<64x1xf32>
    %cst_63 = arith.constant 9.99999974E-6 : f32
    %128 = vector.broadcast %cst_63 : f32 to vector<64x1xf32>
    %129 = arith.addf %127, %128 : vector<64x1xf32>
    %130 = math.rsqrt %129 : vector<64x1xf32>
    %131 = vector.broadcast %130 : vector<64x1xf32> to vector<64x32xf32>
    %132 = arith.mulf %122, %131 : vector<64x32xf32>
    %133 = vector.extract_strided_slice %116 {offsets = [0, 0], sizes = [1, 32], strides = [1, 1]} : vector<2x32xf32> to vector<1x32xf32>
    %134 = vector.broadcast %133 : vector<1x32xf32> to vector<64x32xf32>
    %135 = arith.mulf %132, %134 : vector<64x32xf32>
    %136 = vector.extract_strided_slice %116 {offsets = [1, 0], sizes = [1, 32], strides = [1, 1]} : vector<2x32xf32> to vector<1x32xf32>
    %137 = vector.broadcast %136 : vector<1x32xf32> to vector<64x32xf32>
    %138 = arith.addf %135, %137 : vector<64x32xf32>
    %c0_64 = arith.constant 0 : index
    %c0_65 = arith.constant 0 : index
    %c0_66 = arith.constant 0 : index
    %139 = vector.load %arg16[%c0_64, %c0_65, %c0_66] : memref<1x32x64xbf16, #tpu.memory_space<vmem>>, vector<1x32x64xbf16>
    %140 = vector.shape_cast %139 : vector<1x32x64xbf16> to vector<32x64xbf16>
    %141 = arith.truncf %138 : vector<64x32xf32> to vector<64x32xbf16>
    %cst_67 = arith.constant dense<0.000000e+00> : vector<64x64xf32>
    %142 = tpu.matmul %141, %140, %cst_67 {dimension_numbers = #tpu.dot_dimension_numbers<[1], [0], [0], [1], [0, 0, 1, 1], [], []>} : vector<64x32xbf16>, vector<32x64xbf16>, vector<64x64xf32> -> vector<64x64xf32>
    %c0_68 = arith.constant 0 : index
    %c0_69 = arith.constant 0 : index
    %c0_70 = arith.constant 0 : index
    %143 = vector.load %arg17[%c0_68, %c0_69, %c0_70] : memref<1x1x64xf32, #tpu.memory_space<vmem>>, vector<1x1x64xf32>
    %144 = vector.shape_cast %143 : vector<1x1x64xf32> to vector<1x64xf32>
    %145 = vector.broadcast %144 : vector<1x64xf32> to vector<64x64xf32>
    %146 = arith.addf %142, %145 : vector<64x64xf32>
    %cst_71 = arith.constant 0.000000e+00 : f32
    %147 = vector.broadcast %cst_71 : f32 to vector<64x64xf32>
    %148 = arith.maximumf %146, %147 : vector<64x64xf32>
    %c0_72 = arith.constant 0 : index
    %c0_73 = arith.constant 0 : index
    %c0_74 = arith.constant 0 : index
    %149 = vector.load %arg18[%c0_72, %c0_73, %c0_74] : memref<1x64x32xbf16, #tpu.memory_space<vmem>>, vector<1x64x32xbf16>
    %150 = vector.shape_cast %149 : vector<1x64x32xbf16> to vector<64x32xbf16>
    %151 = arith.truncf %148 : vector<64x64xf32> to vector<64x64xbf16>
    %cst_75 = arith.constant dense<0.000000e+00> : vector<64x32xf32>
    %152 = tpu.matmul %151, %150, %cst_75 {dimension_numbers = #tpu.dot_dimension_numbers<[1], [0], [0], [1], [0, 0, 1, 1], [], []>} : vector<64x64xbf16>, vector<64x32xbf16>, vector<64x32xf32> -> vector<64x32xf32>
    %c0_76 = arith.constant 0 : index
    %c0_77 = arith.constant 0 : index
    %c0_78 = arith.constant 0 : index
    %153 = vector.load %arg19[%c0_76, %c0_77, %c0_78] : memref<1x1x32xf32, #tpu.memory_space<vmem>>, vector<1x1x32xf32>
    %154 = vector.shape_cast %153 : vector<1x1x32xf32> to vector<1x32xf32>
    %155 = vector.broadcast %154 : vector<1x32xf32> to vector<64x32xf32>
    %156 = arith.addf %152, %155 : vector<64x32xf32>
    %157 = arith.addf %138, %156 : vector<64x32xf32>
    %c0_79 = arith.constant 0 : index
    %c0_80 = arith.constant 0 : index
    %c0_81 = arith.constant 0 : index
    %158 = vector.load %arg20[%c0_79, %c0_80, %c0_81] : memref<1x2x32xf32, #tpu.memory_space<vmem>>, vector<1x2x32xf32>
    %159 = vector.shape_cast %158 : vector<1x2x32xf32> to vector<2x32xf32>
    %cst_82 = arith.constant dense<0.000000e+00> : vector<64xf32>
    %160 = vector.multi_reduction <add>, %157, %cst_82 [1] : vector<64x32xf32> to vector<64xf32>
    %161 = vector.shape_cast %160 : vector<64xf32> to vector<64x1xf32>
    %cst_83 = arith.constant 3.200000e+01 : f32
    %162 = vector.broadcast %cst_83 : f32 to vector<64x1xf32>
    %163 = arith.divf %161, %162 : vector<64x1xf32>
    %164 = vector.broadcast %163 : vector<64x1xf32> to vector<64x32xf32>
    %165 = arith.subf %157, %164 : vector<64x32xf32>
    %166 = arith.mulf %165, %165 : vector<64x32xf32>
    %cst_84 = arith.constant dense<0.000000e+00> : vector<64xf32>
    %167 = vector.multi_reduction <add>, %166, %cst_84 [1] : vector<64x32xf32> to vector<64xf32>
    %168 = vector.shape_cast %167 : vector<64xf32> to vector<64x1xf32>
    %cst_85 = arith.constant 3.200000e+01 : f32
    %169 = vector.broadcast %cst_85 : f32 to vector<64x1xf32>
    %170 = arith.divf %168, %169 : vector<64x1xf32>
    %cst_86 = arith.constant 9.99999974E-6 : f32
    %171 = vector.broadcast %cst_86 : f32 to vector<64x1xf32>
    %172 = arith.addf %170, %171 : vector<64x1xf32>
    %173 = math.rsqrt %172 : vector<64x1xf32>
    %174 = vector.broadcast %173 : vector<64x1xf32> to vector<64x32xf32>
    %175 = arith.mulf %165, %174 : vector<64x32xf32>
    %176 = vector.extract_strided_slice %159 {offsets = [0, 0], sizes = [1, 32], strides = [1, 1]} : vector<2x32xf32> to vector<1x32xf32>
    %177 = vector.broadcast %176 : vector<1x32xf32> to vector<64x32xf32>
    %178 = arith.mulf %175, %177 : vector<64x32xf32>
    %179 = vector.extract_strided_slice %159 {offsets = [1, 0], sizes = [1, 32], strides = [1, 1]} : vector<2x32xf32> to vector<1x32xf32>
    %180 = vector.broadcast %179 : vector<1x32xf32> to vector<64x32xf32>
    %181 = arith.addf %178, %180 : vector<64x32xf32>
    %182 = arith.addf %181, %1 : vector<64x32xf32>
    %cst_87 = arith.constant 0.000000e+00 : f32
    %183 = vector.broadcast %cst_87 : f32 to vector<8x32xf32>
    %184 = arith.addf %183, %2 : vector<8x32xf32>
    %c0_88 = arith.constant 0 : index
    %c0_89 = arith.constant 0 : index
    %c0_90 = arith.constant 0 : index
    %185 = vector.load %arg21[%c0_88, %c0_89, %c0_90] : memref<2x32x32xbf16, #tpu.memory_space<vmem>>, vector<1x32x32xbf16>
    %186 = vector.shape_cast %185 : vector<1x32x32xbf16> to vector<32x32xbf16>
    %c0_91 = arith.constant 0 : index
    %c0_92 = arith.constant 0 : index
    %c0_93 = arith.constant 0 : index
    %187 = vector.load %arg22[%c0_91, %c0_92, %c0_93] : memref<2x1x32xf32, #tpu.memory_space<vmem>>, vector<1x1x32xf32>
    %188 = vector.shape_cast %187 : vector<1x1x32xf32> to vector<1x32xf32>
    %c0_94 = arith.constant 0 : index
    %c0_95 = arith.constant 0 : index
    %c0_96 = arith.constant 0 : index
    %189 = vector.load %arg23[%c0_94, %c0_95, %c0_96] : memref<2x32x32xbf16, #tpu.memory_space<vmem>>, vector<1x32x32xbf16>
    %190 = vector.shape_cast %189 : vector<1x32x32xbf16> to vector<32x32xbf16>
    %c0_97 = arith.constant 0 : index
    %c0_98 = arith.constant 0 : index
    %c0_99 = arith.constant 0 : index
    %191 = vector.load %arg24[%c0_97, %c0_98, %c0_99] : memref<2x1x32xf32, #tpu.memory_space<vmem>>, vector<1x1x32xf32>
    %192 = vector.shape_cast %191 : vector<1x1x32xf32> to vector<1x32xf32>
    %c0_100 = arith.constant 0 : index
    %c0_101 = arith.constant 0 : index
    %c0_102 = arith.constant 0 : index
    %193 = vector.load %arg25[%c0_100, %c0_101, %c0_102] : memref<2x32x32xbf16, #tpu.memory_space<vmem>>, vector<1x32x32xbf16>
    %194 = vector.shape_cast %193 : vector<1x32x32xbf16> to vector<32x32xbf16>
    %c0_103 = arith.constant 0 : index
    %c0_104 = arith.constant 0 : index
    %c0_105 = arith.constant 0 : index
    %195 = vector.load %arg26[%c0_103, %c0_104, %c0_105] : memref<2x1x32xf32, #tpu.memory_space<vmem>>, vector<1x1x32xf32>
    %196 = vector.shape_cast %195 : vector<1x1x32xf32> to vector<1x32xf32>
    %c0_106 = arith.constant 0 : index
    %c0_107 = arith.constant 0 : index
    %c0_108 = arith.constant 0 : index
    %197 = vector.load %arg27[%c0_106, %c0_107, %c0_108] : memref<2x32x32xbf16, #tpu.memory_space<vmem>>, vector<1x32x32xbf16>
    %198 = vector.shape_cast %197 : vector<1x32x32xbf16> to vector<32x32xbf16>
    %c0_109 = arith.constant 0 : index
    %c0_110 = arith.constant 0 : index
    %c0_111 = arith.constant 0 : index
    %199 = vector.load %arg28[%c0_109, %c0_110, %c0_111] : memref<2x1x32xf32, #tpu.memory_space<vmem>>, vector<1x1x32xf32>
    %200 = vector.shape_cast %199 : vector<1x1x32xf32> to vector<1x32xf32>
    %201 = arith.truncf %184 : vector<8x32xf32> to vector<8x32xbf16>
    %cst_112 = arith.constant dense<0.000000e+00> : vector<8x32xf32>
    %202 = tpu.matmul %201, %186, %cst_112 {dimension_numbers = #tpu.dot_dimension_numbers<[1], [0], [0], [1], [0, 0, 1, 1], [], []>} : vector<8x32xbf16>, vector<32x32xbf16>, vector<8x32xf32> -> vector<8x32xf32>
    %203 = vector.broadcast %188 : vector<1x32xf32> to vector<8x32xf32>
    %204 = arith.addf %202, %203 : vector<8x32xf32>
    %cst_113 = arith.constant 0.353553385 : f32
    %205 = vector.broadcast %cst_113 : f32 to vector<8x32xf32>
    %206 = arith.mulf %204, %205 : vector<8x32xf32>
    %207 = arith.truncf %206 : vector<8x32xf32> to vector<8x32xbf16>
    %208 = arith.truncf %184 : vector<8x32xf32> to vector<8x32xbf16>
    %cst_114 = arith.constant dense<0.000000e+00> : vector<8x32xf32>
    %209 = tpu.matmul %208, %190, %cst_114 {dimension_numbers = #tpu.dot_dimension_numbers<[1], [0], [0], [1], [0, 0, 1, 1], [], []>} : vector<8x32xbf16>, vector<32x32xbf16>, vector<8x32xf32> -> vector<8x32xf32>
    %210 = vector.broadcast %192 : vector<1x32xf32> to vector<8x32xf32>
    %211 = arith.addf %209, %210 : vector<8x32xf32>
    %212 = arith.truncf %211 : vector<8x32xf32> to vector<8x32xbf16>
    %213 = arith.truncf %183 : vector<8x32xf32> to vector<8x32xbf16>
    %cst_115 = arith.constant dense<0.000000e+00> : vector<8x32xf32>
    %214 = tpu.matmul %213, %194, %cst_115 {dimension_numbers = #tpu.dot_dimension_numbers<[1], [0], [0], [1], [0, 0, 1, 1], [], []>} : vector<8x32xbf16>, vector<32x32xbf16>, vector<8x32xf32> -> vector<8x32xf32>
    %215 = vector.broadcast %196 : vector<1x32xf32> to vector<8x32xf32>
    %216 = arith.addf %214, %215 : vector<8x32xf32>
    %217 = arith.truncf %216 : vector<8x32xf32> to vector<8x32xbf16>
    %218 = vector.extract_strided_slice %207 {offsets = [0, 0], sizes = [8, 8], strides = [1, 1]} : vector<8x32xbf16> to vector<8x8xbf16>
    %219 = vector.extract_strided_slice %212 {offsets = [0, 0], sizes = [8, 8], strides = [1, 1]} : vector<8x32xbf16> to vector<8x8xbf16>
    %220 = vector.extract_strided_slice %217 {offsets = [0, 0], sizes = [8, 8], strides = [1, 1]} : vector<8x32xbf16> to vector<8x8xbf16>
    %cst_116 = arith.constant dense<0.000000e+00> : vector<8x8xf32>
    %221 = tpu.matmul %218, %219, %cst_116 {dimension_numbers = #tpu.dot_dimension_numbers<[1], [1], [0], [0], [0, 0, 1, 0], [], []>} : vector<8x8xbf16>, vector<8x8xbf16>, vector<8x8xf32> -> vector<8x8xf32>
    %cst_117 = arith.constant dense<0xFF800000> : vector<8xf32>
    %222 = vector.multi_reduction <maximumf>, %221, %cst_117 [1] : vector<8x8xf32> to vector<8xf32>
    %223 = vector.shape_cast %222 : vector<8xf32> to vector<8x1xf32>
    %224 = vector.broadcast %223 : vector<8x1xf32> to vector<8x8xf32>
    %225 = arith.subf %221, %224 : vector<8x8xf32>
    %226 = math.exp %225 : vector<8x8xf32>
    %cst_118 = arith.constant dense<0.000000e+00> : vector<8xf32>
    %227 = vector.multi_reduction <add>, %226, %cst_118 [1] : vector<8x8xf32> to vector<8xf32>
    %228 = vector.shape_cast %227 : vector<8xf32> to vector<8x1xf32>
    %229 = tpu.reciprocal %228 {approx = true} : vector<8x1xf32> -> vector<8x1xf32>
    %230 = vector.broadcast %229 : vector<8x1xf32> to vector<8x8xf32>
    %231 = arith.mulf %226, %230 : vector<8x8xf32>
    %232 = arith.truncf %231 : vector<8x8xf32> to vector<8x8xbf16>
    %cst_119 = arith.constant dense<0.000000e+00> : vector<8x8xf32>
    %233 = tpu.matmul %232, %220, %cst_119 {dimension_numbers = #tpu.dot_dimension_numbers<[1], [0], [0], [1], [0, 0, 1, 1], [], []>} : vector<8x8xbf16>, vector<8x8xbf16>, vector<8x8xf32> -> vector<8x8xf32>
    %234 = vector.extract_strided_slice %207 {offsets = [0, 8], sizes = [8, 8], strides = [1, 1]} : vector<8x32xbf16> to vector<8x8xbf16>
    %235 = vector.extract_strided_slice %212 {offsets = [0, 8], sizes = [8, 8], strides = [1, 1]} : vector<8x32xbf16> to vector<8x8xbf16>
    %236 = vector.extract_strided_slice %217 {offsets = [0, 8], sizes = [8, 8], strides = [1, 1]} : vector<8x32xbf16> to vector<8x8xbf16>
    %cst_120 = arith.constant dense<0.000000e+00> : vector<8x8xf32>
    %237 = tpu.matmul %234, %235, %cst_120 {dimension_numbers = #tpu.dot_dimension_numbers<[1], [1], [0], [0], [0, 0, 1, 0], [], []>} : vector<8x8xbf16>, vector<8x8xbf16>, vector<8x8xf32> -> vector<8x8xf32>
    %cst_121 = arith.constant dense<0xFF800000> : vector<8xf32>
    %238 = vector.multi_reduction <maximumf>, %237, %cst_121 [1] : vector<8x8xf32> to vector<8xf32>
    %239 = vector.shape_cast %238 : vector<8xf32> to vector<8x1xf32>
    %240 = vector.broadcast %239 : vector<8x1xf32> to vector<8x8xf32>
    %241 = arith.subf %237, %240 : vector<8x8xf32>
    %242 = math.exp %241 : vector<8x8xf32>
    %cst_122 = arith.constant dense<0.000000e+00> : vector<8xf32>
    %243 = vector.multi_reduction <add>, %242, %cst_122 [1] : vector<8x8xf32> to vector<8xf32>
    %244 = vector.shape_cast %243 : vector<8xf32> to vector<8x1xf32>
    %245 = tpu.reciprocal %244 {approx = true} : vector<8x1xf32> -> vector<8x1xf32>
    %246 = vector.broadcast %245 : vector<8x1xf32> to vector<8x8xf32>
    %247 = arith.mulf %242, %246 : vector<8x8xf32>
    %248 = arith.truncf %247 : vector<8x8xf32> to vector<8x8xbf16>
    %cst_123 = arith.constant dense<0.000000e+00> : vector<8x8xf32>
    %249 = tpu.matmul %248, %236, %cst_123 {dimension_numbers = #tpu.dot_dimension_numbers<[1], [0], [0], [1], [0, 0, 1, 1], [], []>} : vector<8x8xbf16>, vector<8x8xbf16>, vector<8x8xf32> -> vector<8x8xf32>
    %250 = vector.extract_strided_slice %207 {offsets = [0, 16], sizes = [8, 8], strides = [1, 1]} : vector<8x32xbf16> to vector<8x8xbf16>
    %251 = vector.extract_strided_slice %212 {offsets = [0, 16], sizes = [8, 8], strides = [1, 1]} : vector<8x32xbf16> to vector<8x8xbf16>
    %252 = vector.extract_strided_slice %217 {offsets = [0, 16], sizes = [8, 8], strides = [1, 1]} : vector<8x32xbf16> to vector<8x8xbf16>
    %cst_124 = arith.constant dense<0.000000e+00> : vector<8x8xf32>
    %253 = tpu.matmul %250, %251, %cst_124 {dimension_numbers = #tpu.dot_dimension_numbers<[1], [1], [0], [0], [0, 0, 1, 0], [], []>} : vector<8x8xbf16>, vector<8x8xbf16>, vector<8x8xf32> -> vector<8x8xf32>
    %cst_125 = arith.constant dense<0xFF800000> : vector<8xf32>
    %254 = vector.multi_reduction <maximumf>, %253, %cst_125 [1] : vector<8x8xf32> to vector<8xf32>
    %255 = vector.shape_cast %254 : vector<8xf32> to vector<8x1xf32>
    %256 = vector.broadcast %255 : vector<8x1xf32> to vector<8x8xf32>
    %257 = arith.subf %253, %256 : vector<8x8xf32>
    %258 = math.exp %257 : vector<8x8xf32>
    %cst_126 = arith.constant dense<0.000000e+00> : vector<8xf32>
    %259 = vector.multi_reduction <add>, %258, %cst_126 [1] : vector<8x8xf32> to vector<8xf32>
    %260 = vector.shape_cast %259 : vector<8xf32> to vector<8x1xf32>
    %261 = tpu.reciprocal %260 {approx = true} : vector<8x1xf32> -> vector<8x1xf32>
    %262 = vector.broadcast %261 : vector<8x1xf32> to vector<8x8xf32>
    %263 = arith.mulf %258, %262 : vector<8x8xf32>
    %264 = arith.truncf %263 : vector<8x8xf32> to vector<8x8xbf16>
    %cst_127 = arith.constant dense<0.000000e+00> : vector<8x8xf32>
    %265 = tpu.matmul %264, %252, %cst_127 {dimension_numbers = #tpu.dot_dimension_numbers<[1], [0], [0], [1], [0, 0, 1, 1], [], []>} : vector<8x8xbf16>, vector<8x8xbf16>, vector<8x8xf32> -> vector<8x8xf32>
    %266 = vector.extract_strided_slice %207 {offsets = [0, 24], sizes = [8, 8], strides = [1, 1]} : vector<8x32xbf16> to vector<8x8xbf16>
    %267 = vector.extract_strided_slice %212 {offsets = [0, 24], sizes = [8, 8], strides = [1, 1]} : vector<8x32xbf16> to vector<8x8xbf16>
    %268 = vector.extract_strided_slice %217 {offsets = [0, 24], sizes = [8, 8], strides = [1, 1]} : vector<8x32xbf16> to vector<8x8xbf16>
    %cst_128 = arith.constant dense<0.000000e+00> : vector<8x8xf32>
    %269 = tpu.matmul %266, %267, %cst_128 {dimension_numbers = #tpu.dot_dimension_numbers<[1], [1], [0], [0], [0, 0, 1, 0], [], []>} : vector<8x8xbf16>, vector<8x8xbf16>, vector<8x8xf32> -> vector<8x8xf32>
    %cst_129 = arith.constant dense<0xFF800000> : vector<8xf32>
    %270 = vector.multi_reduction <maximumf>, %269, %cst_129 [1] : vector<8x8xf32> to vector<8xf32>
    %271 = vector.shape_cast %270 : vector<8xf32> to vector<8x1xf32>
    %272 = vector.broadcast %271 : vector<8x1xf32> to vector<8x8xf32>
    %273 = arith.subf %269, %272 : vector<8x8xf32>
    %274 = math.exp %273 : vector<8x8xf32>
    %cst_130 = arith.constant dense<0.000000e+00> : vector<8xf32>
    %275 = vector.multi_reduction <add>, %274, %cst_130 [1] : vector<8x8xf32> to vector<8xf32>
    %276 = vector.shape_cast %275 : vector<8xf32> to vector<8x1xf32>
    %277 = tpu.reciprocal %276 {approx = true} : vector<8x1xf32> -> vector<8x1xf32>
    %278 = vector.broadcast %277 : vector<8x1xf32> to vector<8x8xf32>
    %279 = arith.mulf %274, %278 : vector<8x8xf32>
    %280 = arith.truncf %279 : vector<8x8xf32> to vector<8x8xbf16>
    %cst_131 = arith.constant dense<0.000000e+00> : vector<8x8xf32>
    %281 = tpu.matmul %280, %268, %cst_131 {dimension_numbers = #tpu.dot_dimension_numbers<[1], [0], [0], [1], [0, 0, 1, 1], [], []>} : vector<8x8xbf16>, vector<8x8xbf16>, vector<8x8xf32> -> vector<8x8xf32>
    %282 = tpu.concatenate %233, %249, %265, %281 in 1 : vector<8x8xf32>, vector<8x8xf32>, vector<8x8xf32>, vector<8x8xf32> -> vector<8x32xf32>
    %283 = arith.truncf %282 : vector<8x32xf32> to vector<8x32xbf16>
    %cst_132 = arith.constant dense<0.000000e+00> : vector<8x32xf32>
    %284 = tpu.matmul %283, %198, %cst_132 {dimension_numbers = #tpu.dot_dimension_numbers<[1], [0], [0], [1], [0, 0, 1, 1], [], []>} : vector<8x32xbf16>, vector<32x32xbf16>, vector<8x32xf32> -> vector<8x32xf32>
    %285 = vector.broadcast %200 : vector<1x32xf32> to vector<8x32xf32>
    %286 = arith.addf %284, %285 : vector<8x32xf32>
    %287 = arith.addf %183, %286 : vector<8x32xf32>
    %c0_133 = arith.constant 0 : index
    %c0_134 = arith.constant 0 : index
    %c0_135 = arith.constant 0 : index
    %288 = vector.load %arg29[%c0_133, %c0_134, %c0_135] : memref<2x2x32xf32, #tpu.memory_space<vmem>>, vector<1x2x32xf32>
    %289 = vector.shape_cast %288 : vector<1x2x32xf32> to vector<2x32xf32>
    %cst_136 = arith.constant dense<0.000000e+00> : vector<8xf32>
    %290 = vector.multi_reduction <add>, %287, %cst_136 [1] : vector<8x32xf32> to vector<8xf32>
    %291 = vector.shape_cast %290 : vector<8xf32> to vector<8x1xf32>
    %cst_137 = arith.constant 3.200000e+01 : f32
    %292 = vector.broadcast %cst_137 : f32 to vector<8x1xf32>
    %293 = arith.divf %291, %292 : vector<8x1xf32>
    %294 = vector.broadcast %293 : vector<8x1xf32> to vector<8x32xf32>
    %295 = arith.subf %287, %294 : vector<8x32xf32>
    %296 = arith.mulf %295, %295 : vector<8x32xf32>
    %cst_138 = arith.constant dense<0.000000e+00> : vector<8xf32>
    %297 = vector.multi_reduction <add>, %296, %cst_138 [1] : vector<8x32xf32> to vector<8xf32>
    %298 = vector.shape_cast %297 : vector<8xf32> to vector<8x1xf32>
    %cst_139 = arith.constant 3.200000e+01 : f32
    %299 = vector.broadcast %cst_139 : f32 to vector<8x1xf32>
    %300 = arith.divf %298, %299 : vector<8x1xf32>
    %cst_140 = arith.constant 9.99999974E-6 : f32
    %301 = vector.broadcast %cst_140 : f32 to vector<8x1xf32>
    %302 = arith.addf %300, %301 : vector<8x1xf32>
    %303 = math.rsqrt %302 : vector<8x1xf32>
    %304 = vector.broadcast %303 : vector<8x1xf32> to vector<8x32xf32>
    %305 = arith.mulf %295, %304 : vector<8x32xf32>
    %306 = vector.extract_strided_slice %289 {offsets = [0, 0], sizes = [1, 32], strides = [1, 1]} : vector<2x32xf32> to vector<1x32xf32>
    %307 = vector.broadcast %306 : vector<1x32xf32> to vector<8x32xf32>
    %308 = arith.mulf %305, %307 : vector<8x32xf32>
    %309 = vector.extract_strided_slice %289 {offsets = [1, 0], sizes = [1, 32], strides = [1, 1]} : vector<2x32xf32> to vector<1x32xf32>
    %310 = vector.broadcast %309 : vector<1x32xf32> to vector<8x32xf32>
    %311 = arith.addf %308, %310 : vector<8x32xf32>
    %312 = arith.addf %311, %2 : vector<8x32xf32>
    %c0_141 = arith.constant 0 : index
    %c0_142 = arith.constant 0 : index
    %c0_143 = arith.constant 0 : index
    %313 = vector.load %arg30[%c0_141, %c0_142, %c0_143] : memref<2x32x32xbf16, #tpu.memory_space<vmem>>, vector<1x32x32xbf16>
    %314 = vector.shape_cast %313 : vector<1x32x32xbf16> to vector<32x32xbf16>
    %c0_144 = arith.constant 0 : index
    %c0_145 = arith.constant 0 : index
    %c0_146 = arith.constant 0 : index
    %315 = vector.load %arg31[%c0_144, %c0_145, %c0_146] : memref<2x1x32xf32, #tpu.memory_space<vmem>>, vector<1x1x32xf32>
    %316 = vector.shape_cast %315 : vector<1x1x32xf32> to vector<1x32xf32>
    %c0_147 = arith.constant 0 : index
    %c0_148 = arith.constant 0 : index
    %c0_149 = arith.constant 0 : index
    %317 = vector.load %arg32[%c0_147, %c0_148, %c0_149] : memref<2x32x32xbf16, #tpu.memory_space<vmem>>, vector<1x32x32xbf16>
    %318 = vector.shape_cast %317 : vector<1x32x32xbf16> to vector<32x32xbf16>
    %c0_150 = arith.constant 0 : index
    %c0_151 = arith.constant 0 : index
    %c0_152 = arith.constant 0 : index
    %319 = vector.load %arg33[%c0_150, %c0_151, %c0_152] : memref<2x1x32xf32, #tpu.memory_space<vmem>>, vector<1x1x32xf32>
    %320 = vector.shape_cast %319 : vector<1x1x32xf32> to vector<1x32xf32>
    %c0_153 = arith.constant 0 : index
    %c0_154 = arith.constant 0 : index
    %c0_155 = arith.constant 0 : index
    %321 = vector.load %arg34[%c0_153, %c0_154, %c0_155] : memref<2x32x32xbf16, #tpu.memory_space<vmem>>, vector<1x32x32xbf16>
    %322 = vector.shape_cast %321 : vector<1x32x32xbf16> to vector<32x32xbf16>
    %c0_156 = arith.constant 0 : index
    %c0_157 = arith.constant 0 : index
    %c0_158 = arith.constant 0 : index
    %323 = vector.load %arg35[%c0_156, %c0_157, %c0_158] : memref<2x1x32xf32, #tpu.memory_space<vmem>>, vector<1x1x32xf32>
    %324 = vector.shape_cast %323 : vector<1x1x32xf32> to vector<1x32xf32>
    %c0_159 = arith.constant 0 : index
    %c0_160 = arith.constant 0 : index
    %c0_161 = arith.constant 0 : index
    %325 = vector.load %arg36[%c0_159, %c0_160, %c0_161] : memref<2x32x32xbf16, #tpu.memory_space<vmem>>, vector<1x32x32xbf16>
    %326 = vector.shape_cast %325 : vector<1x32x32xbf16> to vector<32x32xbf16>
    %c0_162 = arith.constant 0 : index
    %c0_163 = arith.constant 0 : index
    %c0_164 = arith.constant 0 : index
    %327 = vector.load %arg37[%c0_162, %c0_163, %c0_164] : memref<2x1x32xf32, #tpu.memory_space<vmem>>, vector<1x1x32xf32>
    %328 = vector.shape_cast %327 : vector<1x1x32xf32> to vector<1x32xf32>
    %329 = arith.truncf %312 : vector<8x32xf32> to vector<8x32xbf16>
    %cst_165 = arith.constant dense<0.000000e+00> : vector<8x32xf32>
    %330 = tpu.matmul %329, %314, %cst_165 {dimension_numbers = #tpu.dot_dimension_numbers<[1], [0], [0], [1], [0, 0, 1, 1], [], []>} : vector<8x32xbf16>, vector<32x32xbf16>, vector<8x32xf32> -> vector<8x32xf32>
    %331 = vector.broadcast %316 : vector<1x32xf32> to vector<8x32xf32>
    %332 = arith.addf %330, %331 : vector<8x32xf32>
    %cst_166 = arith.constant 0.353553385 : f32
    %333 = vector.broadcast %cst_166 : f32 to vector<8x32xf32>
    %334 = arith.mulf %332, %333 : vector<8x32xf32>
    %335 = arith.truncf %334 : vector<8x32xf32> to vector<8x32xbf16>
    %336 = arith.truncf %182 : vector<64x32xf32> to vector<64x32xbf16>
    %cst_167 = arith.constant dense<0.000000e+00> : vector<64x32xf32>
    %337 = tpu.matmul %336, %318, %cst_167 {dimension_numbers = #tpu.dot_dimension_numbers<[1], [0], [0], [1], [0, 0, 1, 1], [], []>} : vector<64x32xbf16>, vector<32x32xbf16>, vector<64x32xf32> -> vector<64x32xf32>
    %338 = vector.broadcast %320 : vector<1x32xf32> to vector<64x32xf32>
    %339 = arith.addf %337, %338 : vector<64x32xf32>
    %340 = arith.truncf %339 : vector<64x32xf32> to vector<64x32xbf16>
    %341 = arith.truncf %181 : vector<64x32xf32> to vector<64x32xbf16>
    %cst_168 = arith.constant dense<0.000000e+00> : vector<64x32xf32>
    %342 = tpu.matmul %341, %322, %cst_168 {dimension_numbers = #tpu.dot_dimension_numbers<[1], [0], [0], [1], [0, 0, 1, 1], [], []>} : vector<64x32xbf16>, vector<32x32xbf16>, vector<64x32xf32> -> vector<64x32xf32>
    %343 = vector.broadcast %324 : vector<1x32xf32> to vector<64x32xf32>
    %344 = arith.addf %342, %343 : vector<64x32xf32>
    %345 = arith.truncf %344 : vector<64x32xf32> to vector<64x32xbf16>
    %346 = vector.extract_strided_slice %335 {offsets = [0, 0], sizes = [8, 8], strides = [1, 1]} : vector<8x32xbf16> to vector<8x8xbf16>
    %347 = vector.extract_strided_slice %340 {offsets = [0, 0], sizes = [64, 8], strides = [1, 1]} : vector<64x32xbf16> to vector<64x8xbf16>
    %348 = vector.extract_strided_slice %345 {offsets = [0, 0], sizes = [64, 8], strides = [1, 1]} : vector<64x32xbf16> to vector<64x8xbf16>
    %cst_169 = arith.constant dense<0.000000e+00> : vector<8x64xf32>
    %349 = tpu.matmul %346, %347, %cst_169 {dimension_numbers = #tpu.dot_dimension_numbers<[1], [1], [0], [0], [0, 0, 1, 0], [], []>} : vector<8x8xbf16>, vector<64x8xbf16>, vector<8x64xf32> -> vector<8x64xf32>
    %cst_170 = arith.constant dense<0xFF800000> : vector<8xf32>
    %350 = vector.multi_reduction <maximumf>, %349, %cst_170 [1] : vector<8x64xf32> to vector<8xf32>
    %351 = vector.shape_cast %350 : vector<8xf32> to vector<8x1xf32>
    %352 = vector.broadcast %351 : vector<8x1xf32> to vector<8x64xf32>
    %353 = arith.subf %349, %352 : vector<8x64xf32>
    %354 = math.exp %353 : vector<8x64xf32>
    %cst_171 = arith.constant dense<0.000000e+00> : vector<8xf32>
    %355 = vector.multi_reduction <add>, %354, %cst_171 [1] : vector<8x64xf32> to vector<8xf32>
    %356 = vector.shape_cast %355 : vector<8xf32> to vector<8x1xf32>
    %357 = tpu.reciprocal %356 {approx = true} : vector<8x1xf32> -> vector<8x1xf32>
    %358 = vector.broadcast %357 : vector<8x1xf32> to vector<8x64xf32>
    %359 = arith.mulf %354, %358 : vector<8x64xf32>
    %360 = arith.truncf %359 : vector<8x64xf32> to vector<8x64xbf16>
    %cst_172 = arith.constant dense<0.000000e+00> : vector<8x8xf32>
    %361 = tpu.matmul %360, %348, %cst_172 {dimension_numbers = #tpu.dot_dimension_numbers<[1], [0], [0], [1], [0, 0, 1, 1], [], []>} : vector<8x64xbf16>, vector<64x8xbf16>, vector<8x8xf32> -> vector<8x8xf32>
    %362 = vector.extract_strided_slice %335 {offsets = [0, 8], sizes = [8, 8], strides = [1, 1]} : vector<8x32xbf16> to vector<8x8xbf16>
    %363 = vector.extract_strided_slice %340 {offsets = [0, 8], sizes = [64, 8], strides = [1, 1]} : vector<64x32xbf16> to vector<64x8xbf16>
    %364 = vector.extract_strided_slice %345 {offsets = [0, 8], sizes = [64, 8], strides = [1, 1]} : vector<64x32xbf16> to vector<64x8xbf16>
    %cst_173 = arith.constant dense<0.000000e+00> : vector<8x64xf32>
    %365 = tpu.matmul %362, %363, %cst_173 {dimension_numbers = #tpu.dot_dimension_numbers<[1], [1], [0], [0], [0, 0, 1, 0], [], []>} : vector<8x8xbf16>, vector<64x8xbf16>, vector<8x64xf32> -> vector<8x64xf32>
    %cst_174 = arith.constant dense<0xFF800000> : vector<8xf32>
    %366 = vector.multi_reduction <maximumf>, %365, %cst_174 [1] : vector<8x64xf32> to vector<8xf32>
    %367 = vector.shape_cast %366 : vector<8xf32> to vector<8x1xf32>
    %368 = vector.broadcast %367 : vector<8x1xf32> to vector<8x64xf32>
    %369 = arith.subf %365, %368 : vector<8x64xf32>
    %370 = math.exp %369 : vector<8x64xf32>
    %cst_175 = arith.constant dense<0.000000e+00> : vector<8xf32>
    %371 = vector.multi_reduction <add>, %370, %cst_175 [1] : vector<8x64xf32> to vector<8xf32>
    %372 = vector.shape_cast %371 : vector<8xf32> to vector<8x1xf32>
    %373 = tpu.reciprocal %372 {approx = true} : vector<8x1xf32> -> vector<8x1xf32>
    %374 = vector.broadcast %373 : vector<8x1xf32> to vector<8x64xf32>
    %375 = arith.mulf %370, %374 : vector<8x64xf32>
    %376 = arith.truncf %375 : vector<8x64xf32> to vector<8x64xbf16>
    %cst_176 = arith.constant dense<0.000000e+00> : vector<8x8xf32>
    %377 = tpu.matmul %376, %364, %cst_176 {dimension_numbers = #tpu.dot_dimension_numbers<[1], [0], [0], [1], [0, 0, 1, 1], [], []>} : vector<8x64xbf16>, vector<64x8xbf16>, vector<8x8xf32> -> vector<8x8xf32>
    %378 = vector.extract_strided_slice %335 {offsets = [0, 16], sizes = [8, 8], strides = [1, 1]} : vector<8x32xbf16> to vector<8x8xbf16>
    %379 = vector.extract_strided_slice %340 {offsets = [0, 16], sizes = [64, 8], strides = [1, 1]} : vector<64x32xbf16> to vector<64x8xbf16>
    %380 = vector.extract_strided_slice %345 {offsets = [0, 16], sizes = [64, 8], strides = [1, 1]} : vector<64x32xbf16> to vector<64x8xbf16>
    %cst_177 = arith.constant dense<0.000000e+00> : vector<8x64xf32>
    %381 = tpu.matmul %378, %379, %cst_177 {dimension_numbers = #tpu.dot_dimension_numbers<[1], [1], [0], [0], [0, 0, 1, 0], [], []>} : vector<8x8xbf16>, vector<64x8xbf16>, vector<8x64xf32> -> vector<8x64xf32>
    %cst_178 = arith.constant dense<0xFF800000> : vector<8xf32>
    %382 = vector.multi_reduction <maximumf>, %381, %cst_178 [1] : vector<8x64xf32> to vector<8xf32>
    %383 = vector.shape_cast %382 : vector<8xf32> to vector<8x1xf32>
    %384 = vector.broadcast %383 : vector<8x1xf32> to vector<8x64xf32>
    %385 = arith.subf %381, %384 : vector<8x64xf32>
    %386 = math.exp %385 : vector<8x64xf32>
    %cst_179 = arith.constant dense<0.000000e+00> : vector<8xf32>
    %387 = vector.multi_reduction <add>, %386, %cst_179 [1] : vector<8x64xf32> to vector<8xf32>
    %388 = vector.shape_cast %387 : vector<8xf32> to vector<8x1xf32>
    %389 = tpu.reciprocal %388 {approx = true} : vector<8x1xf32> -> vector<8x1xf32>
    %390 = vector.broadcast %389 : vector<8x1xf32> to vector<8x64xf32>
    %391 = arith.mulf %386, %390 : vector<8x64xf32>
    %392 = arith.truncf %391 : vector<8x64xf32> to vector<8x64xbf16>
    %cst_180 = arith.constant dense<0.000000e+00> : vector<8x8xf32>
    %393 = tpu.matmul %392, %380, %cst_180 {dimension_numbers = #tpu.dot_dimension_numbers<[1], [0], [0], [1], [0, 0, 1, 1], [], []>} : vector<8x64xbf16>, vector<64x8xbf16>, vector<8x8xf32> -> vector<8x8xf32>
    %394 = vector.extract_strided_slice %335 {offsets = [0, 24], sizes = [8, 8], strides = [1, 1]} : vector<8x32xbf16> to vector<8x8xbf16>
    %395 = vector.extract_strided_slice %340 {offsets = [0, 24], sizes = [64, 8], strides = [1, 1]} : vector<64x32xbf16> to vector<64x8xbf16>
    %396 = vector.extract_strided_slice %345 {offsets = [0, 24], sizes = [64, 8], strides = [1, 1]} : vector<64x32xbf16> to vector<64x8xbf16>
    %cst_181 = arith.constant dense<0.000000e+00> : vector<8x64xf32>
    %397 = tpu.matmul %394, %395, %cst_181 {dimension_numbers = #tpu.dot_dimension_numbers<[1], [1], [0], [0], [0, 0, 1, 0], [], []>} : vector<8x8xbf16>, vector<64x8xbf16>, vector<8x64xf32> -> vector<8x64xf32>
    %cst_182 = arith.constant dense<0xFF800000> : vector<8xf32>
    %398 = vector.multi_reduction <maximumf>, %397, %cst_182 [1] : vector<8x64xf32> to vector<8xf32>
    %399 = vector.shape_cast %398 : vector<8xf32> to vector<8x1xf32>
    %400 = vector.broadcast %399 : vector<8x1xf32> to vector<8x64xf32>
    %401 = arith.subf %397, %400 : vector<8x64xf32>
    %402 = math.exp %401 : vector<8x64xf32>
    %cst_183 = arith.constant dense<0.000000e+00> : vector<8xf32>
    %403 = vector.multi_reduction <add>, %402, %cst_183 [1] : vector<8x64xf32> to vector<8xf32>
    %404 = vector.shape_cast %403 : vector<8xf32> to vector<8x1xf32>
    %405 = tpu.reciprocal %404 {approx = true} : vector<8x1xf32> -> vector<8x1xf32>
    %406 = vector.broadcast %405 : vector<8x1xf32> to vector<8x64xf32>
    %407 = arith.mulf %402, %406 : vector<8x64xf32>
    %408 = arith.truncf %407 : vector<8x64xf32> to vector<8x64xbf16>
    %cst_184 = arith.constant dense<0.000000e+00> : vector<8x8xf32>
    %409 = tpu.matmul %408, %396, %cst_184 {dimension_numbers = #tpu.dot_dimension_numbers<[1], [0], [0], [1], [0, 0, 1, 1], [], []>} : vector<8x64xbf16>, vector<64x8xbf16>, vector<8x8xf32> -> vector<8x8xf32>
    %410 = tpu.concatenate %361, %377, %393, %409 in 1 : vector<8x8xf32>, vector<8x8xf32>, vector<8x8xf32>, vector<8x8xf32> -> vector<8x32xf32>
    %411 = arith.truncf %410 : vector<8x32xf32> to vector<8x32xbf16>
    %cst_185 = arith.constant dense<0.000000e+00> : vector<8x32xf32>
    %412 = tpu.matmul %411, %326, %cst_185 {dimension_numbers = #tpu.dot_dimension_numbers<[1], [0], [0], [1], [0, 0, 1, 1], [], []>} : vector<8x32xbf16>, vector<32x32xbf16>, vector<8x32xf32> -> vector<8x32xf32>
    %413 = vector.broadcast %328 : vector<1x32xf32> to vector<8x32xf32>
    %414 = arith.addf %412, %413 : vector<8x32xf32>
    %415 = arith.addf %311, %414 : vector<8x32xf32>
    %c0_186 = arith.constant 0 : index
    %c0_187 = arith.constant 0 : index
    %c0_188 = arith.constant 0 : index
    %416 = vector.load %arg38[%c0_186, %c0_187, %c0_188] : memref<2x2x32xf32, #tpu.memory_space<vmem>>, vector<1x2x32xf32>
    %417 = vector.shape_cast %416 : vector<1x2x32xf32> to vector<2x32xf32>
    %cst_189 = arith.constant dense<0.000000e+00> : vector<8xf32>
    %418 = vector.multi_reduction <add>, %415, %cst_189 [1] : vector<8x32xf32> to vector<8xf32>
    %419 = vector.shape_cast %418 : vector<8xf32> to vector<8x1xf32>
    %cst_190 = arith.constant 3.200000e+01 : f32
    %420 = vector.broadcast %cst_190 : f32 to vector<8x1xf32>
    %421 = arith.divf %419, %420 : vector<8x1xf32>
    %422 = vector.broadcast %421 : vector<8x1xf32> to vector<8x32xf32>
    %423 = arith.subf %415, %422 : vector<8x32xf32>
    %424 = arith.mulf %423, %423 : vector<8x32xf32>
    %cst_191 = arith.constant dense<0.000000e+00> : vector<8xf32>
    %425 = vector.multi_reduction <add>, %424, %cst_191 [1] : vector<8x32xf32> to vector<8xf32>
    %426 = vector.shape_cast %425 : vector<8xf32> to vector<8x1xf32>
    %cst_192 = arith.constant 3.200000e+01 : f32
    %427 = vector.broadcast %cst_192 : f32 to vector<8x1xf32>
    %428 = arith.divf %426, %427 : vector<8x1xf32>
    %cst_193 = arith.constant 9.99999974E-6 : f32
    %429 = vector.broadcast %cst_193 : f32 to vector<8x1xf32>
    %430 = arith.addf %428, %429 : vector<8x1xf32>
    %431 = math.rsqrt %430 : vector<8x1xf32>
    %432 = vector.broadcast %431 : vector<8x1xf32> to vector<8x32xf32>
    %433 = arith.mulf %423, %432 : vector<8x32xf32>
    %434 = vector.extract_strided_slice %417 {offsets = [0, 0], sizes = [1, 32], strides = [1, 1]} : vector<2x32xf32> to vector<1x32xf32>
    %435 = vector.broadcast %434 : vector<1x32xf32> to vector<8x32xf32>
    %436 = arith.mulf %433, %435 : vector<8x32xf32>
    %437 = vector.extract_strided_slice %417 {offsets = [1, 0], sizes = [1, 32], strides = [1, 1]} : vector<2x32xf32> to vector<1x32xf32>
    %438 = vector.broadcast %437 : vector<1x32xf32> to vector<8x32xf32>
    %439 = arith.addf %436, %438 : vector<8x32xf32>
    %c0_194 = arith.constant 0 : index
    %c0_195 = arith.constant 0 : index
    %c0_196 = arith.constant 0 : index
    %440 = vector.load %arg39[%c0_194, %c0_195, %c0_196] : memref<2x32x64xbf16, #tpu.memory_space<vmem>>, vector<1x32x64xbf16>
    %441 = vector.shape_cast %440 : vector<1x32x64xbf16> to vector<32x64xbf16>
    %442 = arith.truncf %439 : vector<8x32xf32> to vector<8x32xbf16>
    %cst_197 = arith.constant dense<0.000000e+00> : vector<8x64xf32>
    %443 = tpu.matmul %442, %441, %cst_197 {dimension_numbers = #tpu.dot_dimension_numbers<[1], [0], [0], [1], [0, 0, 1, 1], [], []>} : vector<8x32xbf16>, vector<32x64xbf16>, vector<8x64xf32> -> vector<8x64xf32>
    %c0_198 = arith.constant 0 : index
    %c0_199 = arith.constant 0 : index
    %c0_200 = arith.constant 0 : index
    %444 = vector.load %arg40[%c0_198, %c0_199, %c0_200] : memref<2x1x64xf32, #tpu.memory_space<vmem>>, vector<1x1x64xf32>
    %445 = vector.shape_cast %444 : vector<1x1x64xf32> to vector<1x64xf32>
    %446 = vector.broadcast %445 : vector<1x64xf32> to vector<8x64xf32>
    %447 = arith.addf %443, %446 : vector<8x64xf32>
    %cst_201 = arith.constant 0.000000e+00 : f32
    %448 = vector.broadcast %cst_201 : f32 to vector<8x64xf32>
    %449 = arith.maximumf %447, %448 : vector<8x64xf32>
    %c0_202 = arith.constant 0 : index
    %c0_203 = arith.constant 0 : index
    %c0_204 = arith.constant 0 : index
    %450 = vector.load %arg41[%c0_202, %c0_203, %c0_204] : memref<2x64x32xbf16, #tpu.memory_space<vmem>>, vector<1x64x32xbf16>
    %451 = vector.shape_cast %450 : vector<1x64x32xbf16> to vector<64x32xbf16>
    %452 = arith.truncf %449 : vector<8x64xf32> to vector<8x64xbf16>
    %cst_205 = arith.constant dense<0.000000e+00> : vector<8x32xf32>
    %453 = tpu.matmul %452, %451, %cst_205 {dimension_numbers = #tpu.dot_dimension_numbers<[1], [0], [0], [1], [0, 0, 1, 1], [], []>} : vector<8x64xbf16>, vector<64x32xbf16>, vector<8x32xf32> -> vector<8x32xf32>
    %c0_206 = arith.constant 0 : index
    %c0_207 = arith.constant 0 : index
    %c0_208 = arith.constant 0 : index
    %454 = vector.load %arg42[%c0_206, %c0_207, %c0_208] : memref<2x1x32xf32, #tpu.memory_space<vmem>>, vector<1x1x32xf32>
    %455 = vector.shape_cast %454 : vector<1x1x32xf32> to vector<1x32xf32>
    %456 = vector.broadcast %455 : vector<1x32xf32> to vector<8x32xf32>
    %457 = arith.addf %453, %456 : vector<8x32xf32>
    %458 = arith.addf %439, %457 : vector<8x32xf32>
    %c0_209 = arith.constant 0 : index
    %c0_210 = arith.constant 0 : index
    %c0_211 = arith.constant 0 : index
    %459 = vector.load %arg43[%c0_209, %c0_210, %c0_211] : memref<2x2x32xf32, #tpu.memory_space<vmem>>, vector<1x2x32xf32>
    %460 = vector.shape_cast %459 : vector<1x2x32xf32> to vector<2x32xf32>
    %cst_212 = arith.constant dense<0.000000e+00> : vector<8xf32>
    %461 = vector.multi_reduction <add>, %458, %cst_212 [1] : vector<8x32xf32> to vector<8xf32>
    %462 = vector.shape_cast %461 : vector<8xf32> to vector<8x1xf32>
    %cst_213 = arith.constant 3.200000e+01 : f32
    %463 = vector.broadcast %cst_213 : f32 to vector<8x1xf32>
    %464 = arith.divf %462, %463 : vector<8x1xf32>
    %465 = vector.broadcast %464 : vector<8x1xf32> to vector<8x32xf32>
    %466 = arith.subf %458, %465 : vector<8x32xf32>
    %467 = arith.mulf %466, %466 : vector<8x32xf32>
    %cst_214 = arith.constant dense<0.000000e+00> : vector<8xf32>
    %468 = vector.multi_reduction <add>, %467, %cst_214 [1] : vector<8x32xf32> to vector<8xf32>
    %469 = vector.shape_cast %468 : vector<8xf32> to vector<8x1xf32>
    %cst_215 = arith.constant 3.200000e+01 : f32
    %470 = vector.broadcast %cst_215 : f32 to vector<8x1xf32>
    %471 = arith.divf %469, %470 : vector<8x1xf32>
    %cst_216 = arith.constant 9.99999974E-6 : f32
    %472 = vector.broadcast %cst_216 : f32 to vector<8x1xf32>
    %473 = arith.addf %471, %472 : vector<8x1xf32>
    %474 = math.rsqrt %473 : vector<8x1xf32>
    %475 = vector.broadcast %474 : vector<8x1xf32> to vector<8x32xf32>
    %476 = arith.mulf %466, %475 : vector<8x32xf32>
    %477 = vector.extract_strided_slice %460 {offsets = [0, 0], sizes = [1, 32], strides = [1, 1]} : vector<2x32xf32> to vector<1x32xf32>
    %478 = vector.broadcast %477 : vector<1x32xf32> to vector<8x32xf32>
    %479 = arith.mulf %476, %478 : vector<8x32xf32>
    %480 = vector.extract_strided_slice %460 {offsets = [1, 0], sizes = [1, 32], strides = [1, 1]} : vector<2x32xf32> to vector<1x32xf32>
    %481 = vector.broadcast %480 : vector<1x32xf32> to vector<8x32xf32>
    %482 = arith.addf %479, %481 : vector<8x32xf32>
    %c0_217 = arith.constant 0 : index
    %c0_218 = arith.constant 0 : index
    %483 = vector.load %arg44[%c0_217, %c0_218] : memref<2x32xf32, #tpu.memory_space<vmem>>, vector<2x32xf32>
    %cst_219 = arith.constant dense<0.000000e+00> : vector<8xf32>
    %484 = vector.multi_reduction <add>, %482, %cst_219 [1] : vector<8x32xf32> to vector<8xf32>
    %485 = vector.shape_cast %484 : vector<8xf32> to vector<8x1xf32>
    %cst_220 = arith.constant 3.200000e+01 : f32
    %486 = vector.broadcast %cst_220 : f32 to vector<8x1xf32>
    %487 = arith.divf %485, %486 : vector<8x1xf32>
    %488 = vector.broadcast %487 : vector<8x1xf32> to vector<8x32xf32>
    %489 = arith.subf %482, %488 : vector<8x32xf32>
    %490 = arith.mulf %489, %489 : vector<8x32xf32>
    %cst_221 = arith.constant dense<0.000000e+00> : vector<8xf32>
    %491 = vector.multi_reduction <add>, %490, %cst_221 [1] : vector<8x32xf32> to vector<8xf32>
    %492 = vector.shape_cast %491 : vector<8xf32> to vector<8x1xf32>
    %cst_222 = arith.constant 3.200000e+01 : f32
    %493 = vector.broadcast %cst_222 : f32 to vector<8x1xf32>
    %494 = arith.divf %492, %493 : vector<8x1xf32>
    %cst_223 = arith.constant 9.99999974E-6 : f32
    %495 = vector.broadcast %cst_223 : f32 to vector<8x1xf32>
    %496 = arith.addf %494, %495 : vector<8x1xf32>
    %497 = math.rsqrt %496 : vector<8x1xf32>
    %498 = vector.broadcast %497 : vector<8x1xf32> to vector<8x32xf32>
    %499 = arith.mulf %489, %498 : vector<8x32xf32>
    %500 = vector.extract_strided_slice %483 {offsets = [0, 0], sizes = [1, 32], strides = [1, 1]} : vector<2x32xf32> to vector<1x32xf32>
    %501 = vector.broadcast %500 : vector<1x32xf32> to vector<8x32xf32>
    %502 = arith.mulf %499, %501 : vector<8x32xf32>
    %503 = vector.extract_strided_slice %483 {offsets = [1, 0], sizes = [1, 32], strides = [1, 1]} : vector<2x32xf32> to vector<1x32xf32>
    %504 = vector.broadcast %503 : vector<1x32xf32> to vector<8x32xf32>
    %505 = arith.addf %502, %504 : vector<8x32xf32>
    %506 = arith.addf %482, %2 : vector<8x32xf32>
    %c1 = arith.constant 1 : index
    %c0_224 = arith.constant 0 : index
    %c0_225 = arith.constant 0 : index
    %507 = vector.load %arg21[%c1, %c0_224, %c0_225] : memref<2x32x32xbf16, #tpu.memory_space<vmem>>, vector<1x32x32xbf16>
    %508 = vector.shape_cast %507 : vector<1x32x32xbf16> to vector<32x32xbf16>
    %c1_226 = arith.constant 1 : index
    %c0_227 = arith.constant 0 : index
    %c0_228 = arith.constant 0 : index
    %509 = vector.load %arg22[%c1_226, %c0_227, %c0_228] : memref<2x1x32xf32, #tpu.memory_space<vmem>>, vector<1x1x32xf32>
    %510 = vector.shape_cast %509 : vector<1x1x32xf32> to vector<1x32xf32>
    %c1_229 = arith.constant 1 : index
    %c0_230 = arith.constant 0 : index
    %c0_231 = arith.constant 0 : index
    %511 = vector.load %arg23[%c1_229, %c0_230, %c0_231] : memref<2x32x32xbf16, #tpu.memory_space<vmem>>, vector<1x32x32xbf16>
    %512 = vector.shape_cast %511 : vector<1x32x32xbf16> to vector<32x32xbf16>
    %c1_232 = arith.constant 1 : index
    %c0_233 = arith.constant 0 : index
    %c0_234 = arith.constant 0 : index
    %513 = vector.load %arg24[%c1_232, %c0_233, %c0_234] : memref<2x1x32xf32, #tpu.memory_space<vmem>>, vector<1x1x32xf32>
    %514 = vector.shape_cast %513 : vector<1x1x32xf32> to vector<1x32xf32>
    %c1_235 = arith.constant 1 : index
    %c0_236 = arith.constant 0 : index
    %c0_237 = arith.constant 0 : index
    %515 = vector.load %arg25[%c1_235, %c0_236, %c0_237] : memref<2x32x32xbf16, #tpu.memory_space<vmem>>, vector<1x32x32xbf16>
    %516 = vector.shape_cast %515 : vector<1x32x32xbf16> to vector<32x32xbf16>
    %c1_238 = arith.constant 1 : index
    %c0_239 = arith.constant 0 : index
    %c0_240 = arith.constant 0 : index
    %517 = vector.load %arg26[%c1_238, %c0_239, %c0_240] : memref<2x1x32xf32, #tpu.memory_space<vmem>>, vector<1x1x32xf32>
    %518 = vector.shape_cast %517 : vector<1x1x32xf32> to vector<1x32xf32>
    %c1_241 = arith.constant 1 : index
    %c0_242 = arith.constant 0 : index
    %c0_243 = arith.constant 0 : index
    %519 = vector.load %arg27[%c1_241, %c0_242, %c0_243] : memref<2x32x32xbf16, #tpu.memory_space<vmem>>, vector<1x32x32xbf16>
    %520 = vector.shape_cast %519 : vector<1x32x32xbf16> to vector<32x32xbf16>
    %c1_244 = arith.constant 1 : index
    %c0_245 = arith.constant 0 : index
    %c0_246 = arith.constant 0 : index
    %521 = vector.load %arg28[%c1_244, %c0_245, %c0_246] : memref<2x1x32xf32, #tpu.memory_space<vmem>>, vector<1x1x32xf32>
    %522 = vector.shape_cast %521 : vector<1x1x32xf32> to vector<1x32xf32>
    %523 = arith.truncf %506 : vector<8x32xf32> to vector<8x32xbf16>
    %cst_247 = arith.constant dense<0.000000e+00> : vector<8x32xf32>
    %524 = tpu.matmul %523, %508, %cst_247 {dimension_numbers = #tpu.dot_dimension_numbers<[1], [0], [0], [1], [0, 0, 1, 1], [], []>} : vector<8x32xbf16>, vector<32x32xbf16>, vector<8x32xf32> -> vector<8x32xf32>
    %525 = vector.broadcast %510 : vector<1x32xf32> to vector<8x32xf32>
    %526 = arith.addf %524, %525 : vector<8x32xf32>
    %cst_248 = arith.constant 0.353553385 : f32
    %527 = vector.broadcast %cst_248 : f32 to vector<8x32xf32>
    %528 = arith.mulf %526, %527 : vector<8x32xf32>
    %529 = arith.truncf %528 : vector<8x32xf32> to vector<8x32xbf16>
    %530 = arith.truncf %506 : vector<8x32xf32> to vector<8x32xbf16>
    %cst_249 = arith.constant dense<0.000000e+00> : vector<8x32xf32>
    %531 = tpu.matmul %530, %512, %cst_249 {dimension_numbers = #tpu.dot_dimension_numbers<[1], [0], [0], [1], [0, 0, 1, 1], [], []>} : vector<8x32xbf16>, vector<32x32xbf16>, vector<8x32xf32> -> vector<8x32xf32>
    %532 = vector.broadcast %514 : vector<1x32xf32> to vector<8x32xf32>
    %533 = arith.addf %531, %532 : vector<8x32xf32>
    %534 = arith.truncf %533 : vector<8x32xf32> to vector<8x32xbf16>
    %535 = arith.truncf %482 : vector<8x32xf32> to vector<8x32xbf16>
    %cst_250 = arith.constant dense<0.000000e+00> : vector<8x32xf32>
    %536 = tpu.matmul %535, %516, %cst_250 {dimension_numbers = #tpu.dot_dimension_numbers<[1], [0], [0], [1], [0, 0, 1, 1], [], []>} : vector<8x32xbf16>, vector<32x32xbf16>, vector<8x32xf32> -> vector<8x32xf32>
    %537 = vector.broadcast %518 : vector<1x32xf32> to vector<8x32xf32>
    %538 = arith.addf %536, %537 : vector<8x32xf32>
    %539 = arith.truncf %538 : vector<8x32xf32> to vector<8x32xbf16>
    %540 = vector.extract_strided_slice %529 {offsets = [0, 0], sizes = [8, 8], strides = [1, 1]} : vector<8x32xbf16> to vector<8x8xbf16>
    %541 = vector.extract_strided_slice %534 {offsets = [0, 0], sizes = [8, 8], strides = [1, 1]} : vector<8x32xbf16> to vector<8x8xbf16>
    %542 = vector.extract_strided_slice %539 {offsets = [0, 0], sizes = [8, 8], strides = [1, 1]} : vector<8x32xbf16> to vector<8x8xbf16>
    %cst_251 = arith.constant dense<0.000000e+00> : vector<8x8xf32>
    %543 = tpu.matmul %540, %541, %cst_251 {dimension_numbers = #tpu.dot_dimension_numbers<[1], [1], [0], [0], [0, 0, 1, 0], [], []>} : vector<8x8xbf16>, vector<8x8xbf16>, vector<8x8xf32> -> vector<8x8xf32>
    %cst_252 = arith.constant dense<0xFF800000> : vector<8xf32>
    %544 = vector.multi_reduction <maximumf>, %543, %cst_252 [1] : vector<8x8xf32> to vector<8xf32>
    %545 = vector.shape_cast %544 : vector<8xf32> to vector<8x1xf32>
    %546 = vector.broadcast %545 : vector<8x1xf32> to vector<8x8xf32>
    %547 = arith.subf %543, %546 : vector<8x8xf32>
    %548 = math.exp %547 : vector<8x8xf32>
    %cst_253 = arith.constant dense<0.000000e+00> : vector<8xf32>
    %549 = vector.multi_reduction <add>, %548, %cst_253 [1] : vector<8x8xf32> to vector<8xf32>
    %550 = vector.shape_cast %549 : vector<8xf32> to vector<8x1xf32>
    %551 = tpu.reciprocal %550 {approx = true} : vector<8x1xf32> -> vector<8x1xf32>
    %552 = vector.broadcast %551 : vector<8x1xf32> to vector<8x8xf32>
    %553 = arith.mulf %548, %552 : vector<8x8xf32>
    %554 = arith.truncf %553 : vector<8x8xf32> to vector<8x8xbf16>
    %cst_254 = arith.constant dense<0.000000e+00> : vector<8x8xf32>
    %555 = tpu.matmul %554, %542, %cst_254 {dimension_numbers = #tpu.dot_dimension_numbers<[1], [0], [0], [1], [0, 0, 1, 1], [], []>} : vector<8x8xbf16>, vector<8x8xbf16>, vector<8x8xf32> -> vector<8x8xf32>
    %556 = vector.extract_strided_slice %529 {offsets = [0, 8], sizes = [8, 8], strides = [1, 1]} : vector<8x32xbf16> to vector<8x8xbf16>
    %557 = vector.extract_strided_slice %534 {offsets = [0, 8], sizes = [8, 8], strides = [1, 1]} : vector<8x32xbf16> to vector<8x8xbf16>
    %558 = vector.extract_strided_slice %539 {offsets = [0, 8], sizes = [8, 8], strides = [1, 1]} : vector<8x32xbf16> to vector<8x8xbf16>
    %cst_255 = arith.constant dense<0.000000e+00> : vector<8x8xf32>
    %559 = tpu.matmul %556, %557, %cst_255 {dimension_numbers = #tpu.dot_dimension_numbers<[1], [1], [0], [0], [0, 0, 1, 0], [], []>} : vector<8x8xbf16>, vector<8x8xbf16>, vector<8x8xf32> -> vector<8x8xf32>
    %cst_256 = arith.constant dense<0xFF800000> : vector<8xf32>
    %560 = vector.multi_reduction <maximumf>, %559, %cst_256 [1] : vector<8x8xf32> to vector<8xf32>
    %561 = vector.shape_cast %560 : vector<8xf32> to vector<8x1xf32>
    %562 = vector.broadcast %561 : vector<8x1xf32> to vector<8x8xf32>
    %563 = arith.subf %559, %562 : vector<8x8xf32>
    %564 = math.exp %563 : vector<8x8xf32>
    %cst_257 = arith.constant dense<0.000000e+00> : vector<8xf32>
    %565 = vector.multi_reduction <add>, %564, %cst_257 [1] : vector<8x8xf32> to vector<8xf32>
    %566 = vector.shape_cast %565 : vector<8xf32> to vector<8x1xf32>
    %567 = tpu.reciprocal %566 {approx = true} : vector<8x1xf32> -> vector<8x1xf32>
    %568 = vector.broadcast %567 : vector<8x1xf32> to vector<8x8xf32>
    %569 = arith.mulf %564, %568 : vector<8x8xf32>
    %570 = arith.truncf %569 : vector<8x8xf32> to vector<8x8xbf16>
    %cst_258 = arith.constant dense<0.000000e+00> : vector<8x8xf32>
    %571 = tpu.matmul %570, %558, %cst_258 {dimension_numbers = #tpu.dot_dimension_numbers<[1], [0], [0], [1], [0, 0, 1, 1], [], []>} : vector<8x8xbf16>, vector<8x8xbf16>, vector<8x8xf32> -> vector<8x8xf32>
    %572 = vector.extract_strided_slice %529 {offsets = [0, 16], sizes = [8, 8], strides = [1, 1]} : vector<8x32xbf16> to vector<8x8xbf16>
    %573 = vector.extract_strided_slice %534 {offsets = [0, 16], sizes = [8, 8], strides = [1, 1]} : vector<8x32xbf16> to vector<8x8xbf16>
    %574 = vector.extract_strided_slice %539 {offsets = [0, 16], sizes = [8, 8], strides = [1, 1]} : vector<8x32xbf16> to vector<8x8xbf16>
    %cst_259 = arith.constant dense<0.000000e+00> : vector<8x8xf32>
    %575 = tpu.matmul %572, %573, %cst_259 {dimension_numbers = #tpu.dot_dimension_numbers<[1], [1], [0], [0], [0, 0, 1, 0], [], []>} : vector<8x8xbf16>, vector<8x8xbf16>, vector<8x8xf32> -> vector<8x8xf32>
    %cst_260 = arith.constant dense<0xFF800000> : vector<8xf32>
    %576 = vector.multi_reduction <maximumf>, %575, %cst_260 [1] : vector<8x8xf32> to vector<8xf32>
    %577 = vector.shape_cast %576 : vector<8xf32> to vector<8x1xf32>
    %578 = vector.broadcast %577 : vector<8x1xf32> to vector<8x8xf32>
    %579 = arith.subf %575, %578 : vector<8x8xf32>
    %580 = math.exp %579 : vector<8x8xf32>
    %cst_261 = arith.constant dense<0.000000e+00> : vector<8xf32>
    %581 = vector.multi_reduction <add>, %580, %cst_261 [1] : vector<8x8xf32> to vector<8xf32>
    %582 = vector.shape_cast %581 : vector<8xf32> to vector<8x1xf32>
    %583 = tpu.reciprocal %582 {approx = true} : vector<8x1xf32> -> vector<8x1xf32>
    %584 = vector.broadcast %583 : vector<8x1xf32> to vector<8x8xf32>
    %585 = arith.mulf %580, %584 : vector<8x8xf32>
    %586 = arith.truncf %585 : vector<8x8xf32> to vector<8x8xbf16>
    %cst_262 = arith.constant dense<0.000000e+00> : vector<8x8xf32>
    %587 = tpu.matmul %586, %574, %cst_262 {dimension_numbers = #tpu.dot_dimension_numbers<[1], [0], [0], [1], [0, 0, 1, 1], [], []>} : vector<8x8xbf16>, vector<8x8xbf16>, vector<8x8xf32> -> vector<8x8xf32>
    %588 = vector.extract_strided_slice %529 {offsets = [0, 24], sizes = [8, 8], strides = [1, 1]} : vector<8x32xbf16> to vector<8x8xbf16>
    %589 = vector.extract_strided_slice %534 {offsets = [0, 24], sizes = [8, 8], strides = [1, 1]} : vector<8x32xbf16> to vector<8x8xbf16>
    %590 = vector.extract_strided_slice %539 {offsets = [0, 24], sizes = [8, 8], strides = [1, 1]} : vector<8x32xbf16> to vector<8x8xbf16>
    %cst_263 = arith.constant dense<0.000000e+00> : vector<8x8xf32>
    %591 = tpu.matmul %588, %589, %cst_263 {dimension_numbers = #tpu.dot_dimension_numbers<[1], [1], [0], [0], [0, 0, 1, 0], [], []>} : vector<8x8xbf16>, vector<8x8xbf16>, vector<8x8xf32> -> vector<8x8xf32>
    %cst_264 = arith.constant dense<0xFF800000> : vector<8xf32>
    %592 = vector.multi_reduction <maximumf>, %591, %cst_264 [1] : vector<8x8xf32> to vector<8xf32>
    %593 = vector.shape_cast %592 : vector<8xf32> to vector<8x1xf32>
    %594 = vector.broadcast %593 : vector<8x1xf32> to vector<8x8xf32>
    %595 = arith.subf %591, %594 : vector<8x8xf32>
    %596 = math.exp %595 : vector<8x8xf32>
    %cst_265 = arith.constant dense<0.000000e+00> : vector<8xf32>
    %597 = vector.multi_reduction <add>, %596, %cst_265 [1] : vector<8x8xf32> to vector<8xf32>
    %598 = vector.shape_cast %597 : vector<8xf32> to vector<8x1xf32>
    %599 = tpu.reciprocal %598 {approx = true} : vector<8x1xf32> -> vector<8x1xf32>
    %600 = vector.broadcast %599 : vector<8x1xf32> to vector<8x8xf32>
    %601 = arith.mulf %596, %600 : vector<8x8xf32>
    %602 = arith.truncf %601 : vector<8x8xf32> to vector<8x8xbf16>
    %cst_266 = arith.constant dense<0.000000e+00> : vector<8x8xf32>
    %603 = tpu.matmul %602, %590, %cst_266 {dimension_numbers = #tpu.dot_dimension_numbers<[1], [0], [0], [1], [0, 0, 1, 1], [], []>} : vector<8x8xbf16>, vector<8x8xbf16>, vector<8x8xf32> -> vector<8x8xf32>
    %604 = tpu.concatenate %555, %571, %587, %603 in 1 : vector<8x8xf32>, vector<8x8xf32>, vector<8x8xf32>, vector<8x8xf32> -> vector<8x32xf32>
    %605 = arith.truncf %604 : vector<8x32xf32> to vector<8x32xbf16>
    %cst_267 = arith.constant dense<0.000000e+00> : vector<8x32xf32>
    %606 = tpu.matmul %605, %520, %cst_267 {dimension_numbers = #tpu.dot_dimension_numbers<[1], [0], [0], [1], [0, 0, 1, 1], [], []>} : vector<8x32xbf16>, vector<32x32xbf16>, vector<8x32xf32> -> vector<8x32xf32>
    %607 = vector.broadcast %522 : vector<1x32xf32> to vector<8x32xf32>
    %608 = arith.addf %606, %607 : vector<8x32xf32>
    %609 = arith.addf %482, %608 : vector<8x32xf32>
    %c1_268 = arith.constant 1 : index
    %c0_269 = arith.constant 0 : index
    %c0_270 = arith.constant 0 : index
    %610 = vector.load %arg29[%c1_268, %c0_269, %c0_270] : memref<2x2x32xf32, #tpu.memory_space<vmem>>, vector<1x2x32xf32>
    %611 = vector.shape_cast %610 : vector<1x2x32xf32> to vector<2x32xf32>
    %cst_271 = arith.constant dense<0.000000e+00> : vector<8xf32>
    %612 = vector.multi_reduction <add>, %609, %cst_271 [1] : vector<8x32xf32> to vector<8xf32>
    %613 = vector.shape_cast %612 : vector<8xf32> to vector<8x1xf32>
    %cst_272 = arith.constant 3.200000e+01 : f32
    %614 = vector.broadcast %cst_272 : f32 to vector<8x1xf32>
    %615 = arith.divf %613, %614 : vector<8x1xf32>
    %616 = vector.broadcast %615 : vector<8x1xf32> to vector<8x32xf32>
    %617 = arith.subf %609, %616 : vector<8x32xf32>
    %618 = arith.mulf %617, %617 : vector<8x32xf32>
    %cst_273 = arith.constant dense<0.000000e+00> : vector<8xf32>
    %619 = vector.multi_reduction <add>, %618, %cst_273 [1] : vector<8x32xf32> to vector<8xf32>
    %620 = vector.shape_cast %619 : vector<8xf32> to vector<8x1xf32>
    %cst_274 = arith.constant 3.200000e+01 : f32
    %621 = vector.broadcast %cst_274 : f32 to vector<8x1xf32>
    %622 = arith.divf %620, %621 : vector<8x1xf32>
    %cst_275 = arith.constant 9.99999974E-6 : f32
    %623 = vector.broadcast %cst_275 : f32 to vector<8x1xf32>
    %624 = arith.addf %622, %623 : vector<8x1xf32>
    %625 = math.rsqrt %624 : vector<8x1xf32>
    %626 = vector.broadcast %625 : vector<8x1xf32> to vector<8x32xf32>
    %627 = arith.mulf %617, %626 : vector<8x32xf32>
    %628 = vector.extract_strided_slice %611 {offsets = [0, 0], sizes = [1, 32], strides = [1, 1]} : vector<2x32xf32> to vector<1x32xf32>
    %629 = vector.broadcast %628 : vector<1x32xf32> to vector<8x32xf32>
    %630 = arith.mulf %627, %629 : vector<8x32xf32>
    %631 = vector.extract_strided_slice %611 {offsets = [1, 0], sizes = [1, 32], strides = [1, 1]} : vector<2x32xf32> to vector<1x32xf32>
    %632 = vector.broadcast %631 : vector<1x32xf32> to vector<8x32xf32>
    %633 = arith.addf %630, %632 : vector<8x32xf32>
    %634 = arith.addf %633, %2 : vector<8x32xf32>
    %c1_276 = arith.constant 1 : index
    %c0_277 = arith.constant 0 : index
    %c0_278 = arith.constant 0 : index
    %635 = vector.load %arg30[%c1_276, %c0_277, %c0_278] : memref<2x32x32xbf16, #tpu.memory_space<vmem>>, vector<1x32x32xbf16>
    %636 = vector.shape_cast %635 : vector<1x32x32xbf16> to vector<32x32xbf16>
    %c1_279 = arith.constant 1 : index
    %c0_280 = arith.constant 0 : index
    %c0_281 = arith.constant 0 : index
    %637 = vector.load %arg31[%c1_279, %c0_280, %c0_281] : memref<2x1x32xf32, #tpu.memory_space<vmem>>, vector<1x1x32xf32>
    %638 = vector.shape_cast %637 : vector<1x1x32xf32> to vector<1x32xf32>
    %c1_282 = arith.constant 1 : index
    %c0_283 = arith.constant 0 : index
    %c0_284 = arith.constant 0 : index
    %639 = vector.load %arg32[%c1_282, %c0_283, %c0_284] : memref<2x32x32xbf16, #tpu.memory_space<vmem>>, vector<1x32x32xbf16>
    %640 = vector.shape_cast %639 : vector<1x32x32xbf16> to vector<32x32xbf16>
    %c1_285 = arith.constant 1 : index
    %c0_286 = arith.constant 0 : index
    %c0_287 = arith.constant 0 : index
    %641 = vector.load %arg33[%c1_285, %c0_286, %c0_287] : memref<2x1x32xf32, #tpu.memory_space<vmem>>, vector<1x1x32xf32>
    %642 = vector.shape_cast %641 : vector<1x1x32xf32> to vector<1x32xf32>
    %c1_288 = arith.constant 1 : index
    %c0_289 = arith.constant 0 : index
    %c0_290 = arith.constant 0 : index
    %643 = vector.load %arg34[%c1_288, %c0_289, %c0_290] : memref<2x32x32xbf16, #tpu.memory_space<vmem>>, vector<1x32x32xbf16>
    %644 = vector.shape_cast %643 : vector<1x32x32xbf16> to vector<32x32xbf16>
    %c1_291 = arith.constant 1 : index
    %c0_292 = arith.constant 0 : index
    %c0_293 = arith.constant 0 : index
    %645 = vector.load %arg35[%c1_291, %c0_292, %c0_293] : memref<2x1x32xf32, #tpu.memory_space<vmem>>, vector<1x1x32xf32>
    %646 = vector.shape_cast %645 : vector<1x1x32xf32> to vector<1x32xf32>
    %c1_294 = arith.constant 1 : index
    %c0_295 = arith.constant 0 : index
    %c0_296 = arith.constant 0 : index
    %647 = vector.load %arg36[%c1_294, %c0_295, %c0_296] : memref<2x32x32xbf16, #tpu.memory_space<vmem>>, vector<1x32x32xbf16>
    %648 = vector.shape_cast %647 : vector<1x32x32xbf16> to vector<32x32xbf16>
    %c1_297 = arith.constant 1 : index
    %c0_298 = arith.constant 0 : index
    %c0_299 = arith.constant 0 : index
    %649 = vector.load %arg37[%c1_297, %c0_298, %c0_299] : memref<2x1x32xf32, #tpu.memory_space<vmem>>, vector<1x1x32xf32>
    %650 = vector.shape_cast %649 : vector<1x1x32xf32> to vector<1x32xf32>
    %651 = arith.truncf %634 : vector<8x32xf32> to vector<8x32xbf16>
    %cst_300 = arith.constant dense<0.000000e+00> : vector<8x32xf32>
    %652 = tpu.matmul %651, %636, %cst_300 {dimension_numbers = #tpu.dot_dimension_numbers<[1], [0], [0], [1], [0, 0, 1, 1], [], []>} : vector<8x32xbf16>, vector<32x32xbf16>, vector<8x32xf32> -> vector<8x32xf32>
    %653 = vector.broadcast %638 : vector<1x32xf32> to vector<8x32xf32>
    %654 = arith.addf %652, %653 : vector<8x32xf32>
    %cst_301 = arith.constant 0.353553385 : f32
    %655 = vector.broadcast %cst_301 : f32 to vector<8x32xf32>
    %656 = arith.mulf %654, %655 : vector<8x32xf32>
    %657 = arith.truncf %656 : vector<8x32xf32> to vector<8x32xbf16>
    %658 = arith.truncf %182 : vector<64x32xf32> to vector<64x32xbf16>
    %cst_302 = arith.constant dense<0.000000e+00> : vector<64x32xf32>
    %659 = tpu.matmul %658, %640, %cst_302 {dimension_numbers = #tpu.dot_dimension_numbers<[1], [0], [0], [1], [0, 0, 1, 1], [], []>} : vector<64x32xbf16>, vector<32x32xbf16>, vector<64x32xf32> -> vector<64x32xf32>
    %660 = vector.broadcast %642 : vector<1x32xf32> to vector<64x32xf32>
    %661 = arith.addf %659, %660 : vector<64x32xf32>
    %662 = arith.truncf %661 : vector<64x32xf32> to vector<64x32xbf16>
    %663 = arith.truncf %181 : vector<64x32xf32> to vector<64x32xbf16>
    %cst_303 = arith.constant dense<0.000000e+00> : vector<64x32xf32>
    %664 = tpu.matmul %663, %644, %cst_303 {dimension_numbers = #tpu.dot_dimension_numbers<[1], [0], [0], [1], [0, 0, 1, 1], [], []>} : vector<64x32xbf16>, vector<32x32xbf16>, vector<64x32xf32> -> vector<64x32xf32>
    %665 = vector.broadcast %646 : vector<1x32xf32> to vector<64x32xf32>
    %666 = arith.addf %664, %665 : vector<64x32xf32>
    %667 = arith.truncf %666 : vector<64x32xf32> to vector<64x32xbf16>
    %668 = vector.extract_strided_slice %657 {offsets = [0, 0], sizes = [8, 8], strides = [1, 1]} : vector<8x32xbf16> to vector<8x8xbf16>
    %669 = vector.extract_strided_slice %662 {offsets = [0, 0], sizes = [64, 8], strides = [1, 1]} : vector<64x32xbf16> to vector<64x8xbf16>
    %670 = vector.extract_strided_slice %667 {offsets = [0, 0], sizes = [64, 8], strides = [1, 1]} : vector<64x32xbf16> to vector<64x8xbf16>
    %cst_304 = arith.constant dense<0.000000e+00> : vector<8x64xf32>
    %671 = tpu.matmul %668, %669, %cst_304 {dimension_numbers = #tpu.dot_dimension_numbers<[1], [1], [0], [0], [0, 0, 1, 0], [], []>} : vector<8x8xbf16>, vector<64x8xbf16>, vector<8x64xf32> -> vector<8x64xf32>
    %cst_305 = arith.constant dense<0xFF800000> : vector<8xf32>
    %672 = vector.multi_reduction <maximumf>, %671, %cst_305 [1] : vector<8x64xf32> to vector<8xf32>
    %673 = vector.shape_cast %672 : vector<8xf32> to vector<8x1xf32>
    %674 = vector.broadcast %673 : vector<8x1xf32> to vector<8x64xf32>
    %675 = arith.subf %671, %674 : vector<8x64xf32>
    %676 = math.exp %675 : vector<8x64xf32>
    %cst_306 = arith.constant dense<0.000000e+00> : vector<8xf32>
    %677 = vector.multi_reduction <add>, %676, %cst_306 [1] : vector<8x64xf32> to vector<8xf32>
    %678 = vector.shape_cast %677 : vector<8xf32> to vector<8x1xf32>
    %679 = tpu.reciprocal %678 {approx = true} : vector<8x1xf32> -> vector<8x1xf32>
    %680 = vector.broadcast %679 : vector<8x1xf32> to vector<8x64xf32>
    %681 = arith.mulf %676, %680 : vector<8x64xf32>
    %682 = arith.truncf %681 : vector<8x64xf32> to vector<8x64xbf16>
    %cst_307 = arith.constant dense<0.000000e+00> : vector<8x8xf32>
    %683 = tpu.matmul %682, %670, %cst_307 {dimension_numbers = #tpu.dot_dimension_numbers<[1], [0], [0], [1], [0, 0, 1, 1], [], []>} : vector<8x64xbf16>, vector<64x8xbf16>, vector<8x8xf32> -> vector<8x8xf32>
    %684 = vector.extract_strided_slice %657 {offsets = [0, 8], sizes = [8, 8], strides = [1, 1]} : vector<8x32xbf16> to vector<8x8xbf16>
    %685 = vector.extract_strided_slice %662 {offsets = [0, 8], sizes = [64, 8], strides = [1, 1]} : vector<64x32xbf16> to vector<64x8xbf16>
    %686 = vector.extract_strided_slice %667 {offsets = [0, 8], sizes = [64, 8], strides = [1, 1]} : vector<64x32xbf16> to vector<64x8xbf16>
    %cst_308 = arith.constant dense<0.000000e+00> : vector<8x64xf32>
    %687 = tpu.matmul %684, %685, %cst_308 {dimension_numbers = #tpu.dot_dimension_numbers<[1], [1], [0], [0], [0, 0, 1, 0], [], []>} : vector<8x8xbf16>, vector<64x8xbf16>, vector<8x64xf32> -> vector<8x64xf32>
    %cst_309 = arith.constant dense<0xFF800000> : vector<8xf32>
    %688 = vector.multi_reduction <maximumf>, %687, %cst_309 [1] : vector<8x64xf32> to vector<8xf32>
    %689 = vector.shape_cast %688 : vector<8xf32> to vector<8x1xf32>
    %690 = vector.broadcast %689 : vector<8x1xf32> to vector<8x64xf32>
    %691 = arith.subf %687, %690 : vector<8x64xf32>
    %692 = math.exp %691 : vector<8x64xf32>
    %cst_310 = arith.constant dense<0.000000e+00> : vector<8xf32>
    %693 = vector.multi_reduction <add>, %692, %cst_310 [1] : vector<8x64xf32> to vector<8xf32>
    %694 = vector.shape_cast %693 : vector<8xf32> to vector<8x1xf32>
    %695 = tpu.reciprocal %694 {approx = true} : vector<8x1xf32> -> vector<8x1xf32>
    %696 = vector.broadcast %695 : vector<8x1xf32> to vector<8x64xf32>
    %697 = arith.mulf %692, %696 : vector<8x64xf32>
    %698 = arith.truncf %697 : vector<8x64xf32> to vector<8x64xbf16>
    %cst_311 = arith.constant dense<0.000000e+00> : vector<8x8xf32>
    %699 = tpu.matmul %698, %686, %cst_311 {dimension_numbers = #tpu.dot_dimension_numbers<[1], [0], [0], [1], [0, 0, 1, 1], [], []>} : vector<8x64xbf16>, vector<64x8xbf16>, vector<8x8xf32> -> vector<8x8xf32>
    %700 = vector.extract_strided_slice %657 {offsets = [0, 16], sizes = [8, 8], strides = [1, 1]} : vector<8x32xbf16> to vector<8x8xbf16>
    %701 = vector.extract_strided_slice %662 {offsets = [0, 16], sizes = [64, 8], strides = [1, 1]} : vector<64x32xbf16> to vector<64x8xbf16>
    %702 = vector.extract_strided_slice %667 {offsets = [0, 16], sizes = [64, 8], strides = [1, 1]} : vector<64x32xbf16> to vector<64x8xbf16>
    %cst_312 = arith.constant dense<0.000000e+00> : vector<8x64xf32>
    %703 = tpu.matmul %700, %701, %cst_312 {dimension_numbers = #tpu.dot_dimension_numbers<[1], [1], [0], [0], [0, 0, 1, 0], [], []>} : vector<8x8xbf16>, vector<64x8xbf16>, vector<8x64xf32> -> vector<8x64xf32>
    %cst_313 = arith.constant dense<0xFF800000> : vector<8xf32>
    %704 = vector.multi_reduction <maximumf>, %703, %cst_313 [1] : vector<8x64xf32> to vector<8xf32>
    %705 = vector.shape_cast %704 : vector<8xf32> to vector<8x1xf32>
    %706 = vector.broadcast %705 : vector<8x1xf32> to vector<8x64xf32>
    %707 = arith.subf %703, %706 : vector<8x64xf32>
    %708 = math.exp %707 : vector<8x64xf32>
    %cst_314 = arith.constant dense<0.000000e+00> : vector<8xf32>
    %709 = vector.multi_reduction <add>, %708, %cst_314 [1] : vector<8x64xf32> to vector<8xf32>
    %710 = vector.shape_cast %709 : vector<8xf32> to vector<8x1xf32>
    %711 = tpu.reciprocal %710 {approx = true} : vector<8x1xf32> -> vector<8x1xf32>
    %712 = vector.broadcast %711 : vector<8x1xf32> to vector<8x64xf32>
    %713 = arith.mulf %708, %712 : vector<8x64xf32>
    %714 = arith.truncf %713 : vector<8x64xf32> to vector<8x64xbf16>
    %cst_315 = arith.constant dense<0.000000e+00> : vector<8x8xf32>
    %715 = tpu.matmul %714, %702, %cst_315 {dimension_numbers = #tpu.dot_dimension_numbers<[1], [0], [0], [1], [0, 0, 1, 1], [], []>} : vector<8x64xbf16>, vector<64x8xbf16>, vector<8x8xf32> -> vector<8x8xf32>
    %716 = vector.extract_strided_slice %657 {offsets = [0, 24], sizes = [8, 8], strides = [1, 1]} : vector<8x32xbf16> to vector<8x8xbf16>
    %717 = vector.extract_strided_slice %662 {offsets = [0, 24], sizes = [64, 8], strides = [1, 1]} : vector<64x32xbf16> to vector<64x8xbf16>
    %718 = vector.extract_strided_slice %667 {offsets = [0, 24], sizes = [64, 8], strides = [1, 1]} : vector<64x32xbf16> to vector<64x8xbf16>
    %cst_316 = arith.constant dense<0.000000e+00> : vector<8x64xf32>
    %719 = tpu.matmul %716, %717, %cst_316 {dimension_numbers = #tpu.dot_dimension_numbers<[1], [1], [0], [0], [0, 0, 1, 0], [], []>} : vector<8x8xbf16>, vector<64x8xbf16>, vector<8x64xf32> -> vector<8x64xf32>
    %cst_317 = arith.constant dense<0xFF800000> : vector<8xf32>
    %720 = vector.multi_reduction <maximumf>, %719, %cst_317 [1] : vector<8x64xf32> to vector<8xf32>
    %721 = vector.shape_cast %720 : vector<8xf32> to vector<8x1xf32>
    %722 = vector.broadcast %721 : vector<8x1xf32> to vector<8x64xf32>
    %723 = arith.subf %719, %722 : vector<8x64xf32>
    %724 = math.exp %723 : vector<8x64xf32>
    %cst_318 = arith.constant dense<0.000000e+00> : vector<8xf32>
    %725 = vector.multi_reduction <add>, %724, %cst_318 [1] : vector<8x64xf32> to vector<8xf32>
    %726 = vector.shape_cast %725 : vector<8xf32> to vector<8x1xf32>
    %727 = tpu.reciprocal %726 {approx = true} : vector<8x1xf32> -> vector<8x1xf32>
    %728 = vector.broadcast %727 : vector<8x1xf32> to vector<8x64xf32>
    %729 = arith.mulf %724, %728 : vector<8x64xf32>
    %730 = arith.truncf %729 : vector<8x64xf32> to vector<8x64xbf16>
    %cst_319 = arith.constant dense<0.000000e+00> : vector<8x8xf32>
    %731 = tpu.matmul %730, %718, %cst_319 {dimension_numbers = #tpu.dot_dimension_numbers<[1], [0], [0], [1], [0, 0, 1, 1], [], []>} : vector<8x64xbf16>, vector<64x8xbf16>, vector<8x8xf32> -> vector<8x8xf32>
    %732 = tpu.concatenate %683, %699, %715, %731 in 1 : vector<8x8xf32>, vector<8x8xf32>, vector<8x8xf32>, vector<8x8xf32> -> vector<8x32xf32>
    %733 = arith.truncf %732 : vector<8x32xf32> to vector<8x32xbf16>
    %cst_320 = arith.constant dense<0.000000e+00> : vector<8x32xf32>
    %734 = tpu.matmul %733, %648, %cst_320 {dimension_numbers = #tpu.dot_dimension_numbers<[1], [0], [0], [1], [0, 0, 1, 1], [], []>} : vector<8x32xbf16>, vector<32x32xbf16>, vector<8x32xf32> -> vector<8x32xf32>
    %735 = vector.broadcast %650 : vector<1x32xf32> to vector<8x32xf32>
    %736 = arith.addf %734, %735 : vector<8x32xf32>
    %737 = arith.addf %633, %736 : vector<8x32xf32>
    %c1_321 = arith.constant 1 : index
    %c0_322 = arith.constant 0 : index
    %c0_323 = arith.constant 0 : index
    %738 = vector.load %arg38[%c1_321, %c0_322, %c0_323] : memref<2x2x32xf32, #tpu.memory_space<vmem>>, vector<1x2x32xf32>
    %739 = vector.shape_cast %738 : vector<1x2x32xf32> to vector<2x32xf32>
    %cst_324 = arith.constant dense<0.000000e+00> : vector<8xf32>
    %740 = vector.multi_reduction <add>, %737, %cst_324 [1] : vector<8x32xf32> to vector<8xf32>
    %741 = vector.shape_cast %740 : vector<8xf32> to vector<8x1xf32>
    %cst_325 = arith.constant 3.200000e+01 : f32
    %742 = vector.broadcast %cst_325 : f32 to vector<8x1xf32>
    %743 = arith.divf %741, %742 : vector<8x1xf32>
    %744 = vector.broadcast %743 : vector<8x1xf32> to vector<8x32xf32>
    %745 = arith.subf %737, %744 : vector<8x32xf32>
    %746 = arith.mulf %745, %745 : vector<8x32xf32>
    %cst_326 = arith.constant dense<0.000000e+00> : vector<8xf32>
    %747 = vector.multi_reduction <add>, %746, %cst_326 [1] : vector<8x32xf32> to vector<8xf32>
    %748 = vector.shape_cast %747 : vector<8xf32> to vector<8x1xf32>
    %cst_327 = arith.constant 3.200000e+01 : f32
    %749 = vector.broadcast %cst_327 : f32 to vector<8x1xf32>
    %750 = arith.divf %748, %749 : vector<8x1xf32>
    %cst_328 = arith.constant 9.99999974E-6 : f32
    %751 = vector.broadcast %cst_328 : f32 to vector<8x1xf32>
    %752 = arith.addf %750, %751 : vector<8x1xf32>
    %753 = math.rsqrt %752 : vector<8x1xf32>
    %754 = vector.broadcast %753 : vector<8x1xf32> to vector<8x32xf32>
    %755 = arith.mulf %745, %754 : vector<8x32xf32>
    %756 = vector.extract_strided_slice %739 {offsets = [0, 0], sizes = [1, 32], strides = [1, 1]} : vector<2x32xf32> to vector<1x32xf32>
    %757 = vector.broadcast %756 : vector<1x32xf32> to vector<8x32xf32>
    %758 = arith.mulf %755, %757 : vector<8x32xf32>
    %759 = vector.extract_strided_slice %739 {offsets = [1, 0], sizes = [1, 32], strides = [1, 1]} : vector<2x32xf32> to vector<1x32xf32>
    %760 = vector.broadcast %759 : vector<1x32xf32> to vector<8x32xf32>
    %761 = arith.addf %758, %760 : vector<8x32xf32>
    %c1_329 = arith.constant 1 : index
    %c0_330 = arith.constant 0 : index
    %c0_331 = arith.constant 0 : index
    %762 = vector.load %arg39[%c1_329, %c0_330, %c0_331] : memref<2x32x64xbf16, #tpu.memory_space<vmem>>, vector<1x32x64xbf16>
    %763 = vector.shape_cast %762 : vector<1x32x64xbf16> to vector<32x64xbf16>
    %764 = arith.truncf %761 : vector<8x32xf32> to vector<8x32xbf16>
    %cst_332 = arith.constant dense<0.000000e+00> : vector<8x64xf32>
    %765 = tpu.matmul %764, %763, %cst_332 {dimension_numbers = #tpu.dot_dimension_numbers<[1], [0], [0], [1], [0, 0, 1, 1], [], []>} : vector<8x32xbf16>, vector<32x64xbf16>, vector<8x64xf32> -> vector<8x64xf32>
    %c1_333 = arith.constant 1 : index
    %c0_334 = arith.constant 0 : index
    %c0_335 = arith.constant 0 : index
    %766 = vector.load %arg40[%c1_333, %c0_334, %c0_335] : memref<2x1x64xf32, #tpu.memory_space<vmem>>, vector<1x1x64xf32>
    %767 = vector.shape_cast %766 : vector<1x1x64xf32> to vector<1x64xf32>
    %768 = vector.broadcast %767 : vector<1x64xf32> to vector<8x64xf32>
    %769 = arith.addf %765, %768 : vector<8x64xf32>
    %cst_336 = arith.constant 0.000000e+00 : f32
    %770 = vector.broadcast %cst_336 : f32 to vector<8x64xf32>
    %771 = arith.maximumf %769, %770 : vector<8x64xf32>
    %c1_337 = arith.constant 1 : index
    %c0_338 = arith.constant 0 : index
    %c0_339 = arith.constant 0 : index
    %772 = vector.load %arg41[%c1_337, %c0_338, %c0_339] : memref<2x64x32xbf16, #tpu.memory_space<vmem>>, vector<1x64x32xbf16>
    %773 = vector.shape_cast %772 : vector<1x64x32xbf16> to vector<64x32xbf16>
    %774 = arith.truncf %771 : vector<8x64xf32> to vector<8x64xbf16>
    %cst_340 = arith.constant dense<0.000000e+00> : vector<8x32xf32>
    %775 = tpu.matmul %774, %773, %cst_340 {dimension_numbers = #tpu.dot_dimension_numbers<[1], [0], [0], [1], [0, 0, 1, 1], [], []>} : vector<8x64xbf16>, vector<64x32xbf16>, vector<8x32xf32> -> vector<8x32xf32>
    %c1_341 = arith.constant 1 : index
    %c0_342 = arith.constant 0 : index
    %c0_343 = arith.constant 0 : index
    %776 = vector.load %arg42[%c1_341, %c0_342, %c0_343] : memref<2x1x32xf32, #tpu.memory_space<vmem>>, vector<1x1x32xf32>
    %777 = vector.shape_cast %776 : vector<1x1x32xf32> to vector<1x32xf32>
    %778 = vector.broadcast %777 : vector<1x32xf32> to vector<8x32xf32>
    %779 = arith.addf %775, %778 : vector<8x32xf32>
    %780 = arith.addf %761, %779 : vector<8x32xf32>
    %c1_344 = arith.constant 1 : index
    %c0_345 = arith.constant 0 : index
    %c0_346 = arith.constant 0 : index
    %781 = vector.load %arg43[%c1_344, %c0_345, %c0_346] : memref<2x2x32xf32, #tpu.memory_space<vmem>>, vector<1x2x32xf32>
    %782 = vector.shape_cast %781 : vector<1x2x32xf32> to vector<2x32xf32>
    %cst_347 = arith.constant dense<0.000000e+00> : vector<8xf32>
    %783 = vector.multi_reduction <add>, %780, %cst_347 [1] : vector<8x32xf32> to vector<8xf32>
    %784 = vector.shape_cast %783 : vector<8xf32> to vector<8x1xf32>
    %cst_348 = arith.constant 3.200000e+01 : f32
    %785 = vector.broadcast %cst_348 : f32 to vector<8x1xf32>
    %786 = arith.divf %784, %785 : vector<8x1xf32>
    %787 = vector.broadcast %786 : vector<8x1xf32> to vector<8x32xf32>
    %788 = arith.subf %780, %787 : vector<8x32xf32>
    %789 = arith.mulf %788, %788 : vector<8x32xf32>
    %cst_349 = arith.constant dense<0.000000e+00> : vector<8xf32>
    %790 = vector.multi_reduction <add>, %789, %cst_349 [1] : vector<8x32xf32> to vector<8xf32>
    %791 = vector.shape_cast %790 : vector<8xf32> to vector<8x1xf32>
    %cst_350 = arith.constant 3.200000e+01 : f32
    %792 = vector.broadcast %cst_350 : f32 to vector<8x1xf32>
    %793 = arith.divf %791, %792 : vector<8x1xf32>
    %cst_351 = arith.constant 9.99999974E-6 : f32
    %794 = vector.broadcast %cst_351 : f32 to vector<8x1xf32>
    %795 = arith.addf %793, %794 : vector<8x1xf32>
    %796 = math.rsqrt %795 : vector<8x1xf32>
    %797 = vector.broadcast %796 : vector<8x1xf32> to vector<8x32xf32>
    %798 = arith.mulf %788, %797 : vector<8x32xf32>
    %799 = vector.extract_strided_slice %782 {offsets = [0, 0], sizes = [1, 32], strides = [1, 1]} : vector<2x32xf32> to vector<1x32xf32>
    %800 = vector.broadcast %799 : vector<1x32xf32> to vector<8x32xf32>
    %801 = arith.mulf %798, %800 : vector<8x32xf32>
    %802 = vector.extract_strided_slice %782 {offsets = [1, 0], sizes = [1, 32], strides = [1, 1]} : vector<2x32xf32> to vector<1x32xf32>
    %803 = vector.broadcast %802 : vector<1x32xf32> to vector<8x32xf32>
    %804 = arith.addf %801, %803 : vector<8x32xf32>
    %c0_352 = arith.constant 0 : index
    %c0_353 = arith.constant 0 : index
    %805 = vector.load %arg44[%c0_352, %c0_353] : memref<2x32xf32, #tpu.memory_space<vmem>>, vector<2x32xf32>
    %cst_354 = arith.constant dense<0.000000e+00> : vector<8xf32>
    %806 = vector.multi_reduction <add>, %804, %cst_354 [1] : vector<8x32xf32> to vector<8xf32>
    %807 = vector.shape_cast %806 : vector<8xf32> to vector<8x1xf32>
    %cst_355 = arith.constant 3.200000e+01 : f32
    %808 = vector.broadcast %cst_355 : f32 to vector<8x1xf32>
    %809 = arith.divf %807, %808 : vector<8x1xf32>
    %810 = vector.broadcast %809 : vector<8x1xf32> to vector<8x32xf32>
    %811 = arith.subf %804, %810 : vector<8x32xf32>
    %812 = arith.mulf %811, %811 : vector<8x32xf32>
    %cst_356 = arith.constant dense<0.000000e+00> : vector<8xf32>
    %813 = vector.multi_reduction <add>, %812, %cst_356 [1] : vector<8x32xf32> to vector<8xf32>
    %814 = vector.shape_cast %813 : vector<8xf32> to vector<8x1xf32>
    %cst_357 = arith.constant 3.200000e+01 : f32
    %815 = vector.broadcast %cst_357 : f32 to vector<8x1xf32>
    %816 = arith.divf %814, %815 : vector<8x1xf32>
    %cst_358 = arith.constant 9.99999974E-6 : f32
    %817 = vector.broadcast %cst_358 : f32 to vector<8x1xf32>
    %818 = arith.addf %816, %817 : vector<8x1xf32>
    %819 = math.rsqrt %818 : vector<8x1xf32>
    %820 = vector.broadcast %819 : vector<8x1xf32> to vector<8x32xf32>
    %821 = arith.mulf %811, %820 : vector<8x32xf32>
    %822 = vector.extract_strided_slice %805 {offsets = [0, 0], sizes = [1, 32], strides = [1, 1]} : vector<2x32xf32> to vector<1x32xf32>
    %823 = vector.broadcast %822 : vector<1x32xf32> to vector<8x32xf32>
    %824 = arith.mulf %821, %823 : vector<8x32xf32>
    %825 = vector.extract_strided_slice %805 {offsets = [1, 0], sizes = [1, 32], strides = [1, 1]} : vector<2x32xf32> to vector<1x32xf32>
    %826 = vector.broadcast %825 : vector<1x32xf32> to vector<8x32xf32>
    %827 = arith.addf %824, %826 : vector<8x32xf32>
    %828 = tpu.concatenate %505, %827 in 0 : vector<8x32xf32>, vector<8x32xf32> -> vector<16x32xf32>
    %c0_359 = arith.constant 0 : index
    %c0_360 = arith.constant 0 : index
    %829 = vector.load %arg45[%c0_359, %c0_360] : memref<32x128xbf16, #tpu.memory_space<vmem>>, vector<32x128xbf16>
    %830 = arith.truncf %828 : vector<16x32xf32> to vector<16x32xbf16>
    %cst_361 = arith.constant dense<0.000000e+00> : vector<16x128xf32>
    %831 = tpu.matmul %830, %829, %cst_361 {dimension_numbers = #tpu.dot_dimension_numbers<[1], [0], [0], [1], [0, 0, 1, 1], [], []>} : vector<16x32xbf16>, vector<32x128xbf16>, vector<16x128xf32> -> vector<16x128xf32>
    %c0_362 = arith.constant 0 : index
    %c0_363 = arith.constant 0 : index
    %832 = vector.load %arg46[%c0_362, %c0_363] : memref<1x128xf32, #tpu.memory_space<vmem>>, vector<1x128xf32>
    %833 = vector.broadcast %832 : vector<1x128xf32> to vector<16x128xf32>
    %834 = arith.addf %831, %833 : vector<16x128xf32>
    %c0_364 = arith.constant 0 : index
    %c0_365 = arith.constant 0 : index
    %c0_366 = arith.constant 0 : index
    %835 = vector.load %arg53[%c0_364, %c0_365, %c0_366] : memref<1x16x128xf32, #tpu.memory_space<vmem>>, vector<1x16x128xf32>
    %836 = vector.shape_cast %835 : vector<1x16x128xf32> to vector<16x128xf32>
    %837 = vector.shape_cast %834 : vector<16x128xf32> to vector<1x16x128xf32>
    tpu.vector_store %arg53[%c0_364, %c0_365, %c0_366], %837 {strides = array<i32>} : memref<1x16x128xf32, #tpu.memory_space<vmem>>, vector<1x16x128xf32>,
    %c0_367 = arith.constant 0 : index
    %c0_368 = arith.constant 0 : index
    %838 = vector.load %arg47[%c0_367, %c0_368] : memref<32x32xbf16, #tpu.memory_space<vmem>>, vector<32x32xbf16>
    %839 = arith.truncf %828 : vector<16x32xf32> to vector<16x32xbf16>
    %cst_369 = arith.constant dense<0.000000e+00> : vector<16x32xf32>
    %840 = tpu.matmul %839, %838, %cst_369 {dimension_numbers = #tpu.dot_dimension_numbers<[1], [0], [0], [1], [0, 0, 1, 1], [], []>} : vector<16x32xbf16>, vector<32x32xbf16>, vector<16x32xf32> -> vector<16x32xf32>
    %c0_370 = arith.constant 0 : index
    %c0_371 = arith.constant 0 : index
    %841 = vector.load %arg48[%c0_370, %c0_371] : memref<1x32xf32, #tpu.memory_space<vmem>>, vector<1x32xf32>
    %842 = vector.broadcast %841 : vector<1x32xf32> to vector<16x32xf32>
    %843 = arith.addf %840, %842 : vector<16x32xf32>
    %cst_372 = arith.constant 0.000000e+00 : f32
    %844 = vector.broadcast %cst_372 : f32 to vector<16x32xf32>
    %845 = arith.maximumf %843, %844 : vector<16x32xf32>
    %c0_373 = arith.constant 0 : index
    %c0_374 = arith.constant 0 : index
    %846 = vector.load %arg49[%c0_373, %c0_374] : memref<32x32xbf16, #tpu.memory_space<vmem>>, vector<32x32xbf16>
    %847 = arith.truncf %845 : vector<16x32xf32> to vector<16x32xbf16>
    %cst_375 = arith.constant dense<0.000000e+00> : vector<16x32xf32>
    %848 = tpu.matmul %847, %846, %cst_375 {dimension_numbers = #tpu.dot_dimension_numbers<[1], [0], [0], [1], [0, 0, 1, 1], [], []>} : vector<16x32xbf16>, vector<32x32xbf16>, vector<16x32xf32> -> vector<16x32xf32>
    %c0_376 = arith.constant 0 : index
    %c0_377 = arith.constant 0 : index
    %849 = vector.load %arg50[%c0_376, %c0_377] : memref<1x32xf32, #tpu.memory_space<vmem>>, vector<1x32xf32>
    %850 = vector.broadcast %849 : vector<1x32xf32> to vector<16x32xf32>
    %851 = arith.addf %848, %850 : vector<16x32xf32>
    %cst_378 = arith.constant 0.000000e+00 : f32
    %852 = vector.broadcast %cst_378 : f32 to vector<16x32xf32>
    %853 = arith.maximumf %851, %852 : vector<16x32xf32>
    %c0_379 = arith.constant 0 : index
    %c0_380 = arith.constant 0 : index
    %854 = vector.load %arg51[%c0_379, %c0_380] : memref<32x16xbf16, #tpu.memory_space<vmem>>, vector<32x16xbf16>
    %855 = arith.truncf %853 : vector<16x32xf32> to vector<16x32xbf16>
    %cst_381 = arith.constant dense<0.000000e+00> : vector<16x16xf32>
    %856 = tpu.matmul %855, %854, %cst_381 {dimension_numbers = #tpu.dot_dimension_numbers<[1], [0], [0], [1], [0, 0, 1, 1], [], []>} : vector<16x32xbf16>, vector<32x16xbf16>, vector<16x16xf32> -> vector<16x16xf32>
    %c0_382 = arith.constant 0 : index
    %c0_383 = arith.constant 0 : index
    %857 = vector.load %arg52[%c0_382, %c0_383] : memref<1x16xf32, #tpu.memory_space<vmem>>, vector<1x16xf32>
    %858 = vector.broadcast %857 : vector<1x16xf32> to vector<16x16xf32>
    %859 = arith.addf %856, %858 : vector<16x16xf32>
    %860 = arith.truncf %859 : vector<16x16xf32> to vector<16x16xbf16>
    %c0_384 = arith.constant 0 : index
    %c0_385 = arith.constant 0 : index
    %c0_386 = arith.constant 0 : index
    %861 = vector.load %arg4[%c0_384, %c0_385, %c0_386] : memref<1x16x256xbf16, #tpu.memory_space<vmem>>, vector<1x16x256xbf16>
    %862 = vector.shape_cast %861 : vector<1x16x256xbf16> to vector<16x256xbf16>
    %cst_387 = arith.constant dense<0.000000e+00> : vector<16x256xf32>
    %863 = tpu.matmul %860, %862, %cst_387 {dimension_numbers = #tpu.dot_dimension_numbers<[1], [0], [0], [1], [0, 0, 1, 1], [], []>} : vector<16x16xbf16>, vector<16x256xbf16>, vector<16x256xf32> -> vector<16x256xf32>
    %c0_388 = arith.constant 0 : index
    %c0_389 = arith.constant 0 : index
    %c0_390 = arith.constant 0 : index
    %864 = vector.load %arg54[%c0_388, %c0_389, %c0_390] : memref<1x16x256xf32, #tpu.memory_space<vmem>>, vector<1x16x256xf32>
    %865 = vector.shape_cast %864 : vector<1x16x256xf32> to vector<16x256xf32>
    %866 = vector.shape_cast %863 : vector<16x256xf32> to vector<1x16x256xf32>
    tpu.vector_store %arg54[%c0_388, %c0_389, %c0_390], %866 {strides = array<i32>} : memref<1x16x256xf32, #tpu.memory_space<vmem>>, vector<1x16x256xf32>,
    return
  }
  func.func @transform_0(%arg0: i32) -> (i32, i32, i32) {
    %c0_i32 = arith.constant 0 : i32
    %c0_i32_0 = arith.constant 0 : i32
    %c0_i32_1 = arith.constant 0 : i32
    return %arg0, %c0_i32, %c0_i32_0 : i32, i32, i32
  }
  func.func @transform_1(%arg0: i32) -> (i32, i32, i32) {
    %c0_i32 = arith.constant 0 : i32
    %c0_i32_0 = arith.constant 0 : i32
    %c0_i32_1 = arith.constant 0 : i32
    return %arg0, %c0_i32, %c0_i32_0 : i32, i32, i32
  }
  func.func @transform_2(%arg0: i32) -> (i32, i32) {
    %c0_i32 = arith.constant 0 : i32
    %c0_i32_0 = arith.constant 0 : i32
    %c0_i32_1 = arith.constant 0 : i32
    return %c0_i32, %c0_i32_0 : i32, i32
  }
  func.func @transform_3(%arg0: i32) -> (i32, i32, i32) {
    %c0_i32 = arith.constant 0 : i32
    %c0_i32_0 = arith.constant 0 : i32
    %c0_i32_1 = arith.constant 0 : i32
    return %arg0, %c0_i32, %c0_i32_0 : i32, i32, i32
  }
  func.func @transform_4(%arg0: i32) -> (i32, i32) {
    %c0_i32 = arith.constant 0 : i32
    %c0_i32_0 = arith.constant 0 : i32
    %c0_i32_1 = arith.constant 0 : i32
    return %c0_i32, %c0_i32_0 : i32, i32
  }
  func.func @transform_5(%arg0: i32) -> (i32, i32) {
    %c0_i32 = arith.constant 0 : i32
    %c0_i32_0 = arith.constant 0 : i32
    %c0_i32_1 = arith.constant 0 : i32
    return %c0_i32, %c0_i32_0 : i32, i32
  }
  func.func @transform_6(%arg0: i32) -> (i32, i32, i32) {
    %c0_i32 = arith.constant 0 : i32
    %c0_i32_0 = arith.constant 0 : i32
    %c0_i32_1 = arith.constant 0 : i32
    %c0_i32_2 = arith.constant 0 : i32
    return %c0_i32, %c0_i32_0, %c0_i32_1 : i32, i32, i32
  }
  func.func @transform_7(%arg0: i32) -> (i32, i32, i32) {
    %c0_i32 = arith.constant 0 : i32
    %c0_i32_0 = arith.constant 0 : i32
    %c0_i32_1 = arith.constant 0 : i32
    %c0_i32_2 = arith.constant 0 : i32
    return %c0_i32, %c0_i32_0, %c0_i32_1 : i32, i32, i32
  }
  func.func @transform_8(%arg0: i32) -> (i32, i32, i32) {
    %c0_i32 = arith.constant 0 : i32
    %c0_i32_0 = arith.constant 0 : i32
    %c0_i32_1 = arith.constant 0 : i32
    %c0_i32_2 = arith.constant 0 : i32
    return %c0_i32, %c0_i32_0, %c0_i32_1 : i32, i32, i32
  }
  func.func @transform_9(%arg0: i32) -> (i32, i32, i32) {
    %c0_i32 = arith.constant 0 : i32
    %c0_i32_0 = arith.constant 0 : i32
    %c0_i32_1 = arith.constant 0 : i32
    %c0_i32_2 = arith.constant 0 : i32
    return %c0_i32, %c0_i32_0, %c0_i32_1 : i32, i32, i32
  }
  func.func @transform_10(%arg0: i32) -> (i32, i32, i32) {
    %c0_i32 = arith.constant 0 : i32
    %c0_i32_0 = arith.constant 0 : i32
    %c0_i32_1 = arith.constant 0 : i32
    %c0_i32_2 = arith.constant 0 : i32
    return %c0_i32, %c0_i32_0, %c0_i32_1 : i32, i32, i32
  }
  func.func @transform_11(%arg0: i32) -> (i32, i32, i32) {
    %c0_i32 = arith.constant 0 : i32
    %c0_i32_0 = arith.constant 0 : i32
    %c0_i32_1 = arith.constant 0 : i32
    %c0_i32_2 = arith.constant 0 : i32
    return %c0_i32, %c0_i32_0, %c0_i32_1 : i32, i32, i32
  }
  func.func @transform_12(%arg0: i32) -> (i32, i32, i32) {
    %c0_i32 = arith.constant 0 : i32
    %c0_i32_0 = arith.constant 0 : i32
    %c0_i32_1 = arith.constant 0 : i32
    %c0_i32_2 = arith.constant 0 : i32
    return %c0_i32, %c0_i32_0, %c0_i32_1 : i32, i32, i32
  }
  func.func @transform_13(%arg0: i32) -> (i32, i32, i32) {
    %c0_i32 = arith.constant 0 : i32
    %c0_i32_0 = arith.constant 0 : i32
    %c0_i32_1 = arith.constant 0 : i32
    %c0_i32_2 = arith.constant 0 : i32
    return %c0_i32, %c0_i32_0, %c0_i32_1 : i32, i32, i32
  }
  func.func @transform_14(%arg0: i32) -> (i32, i32, i32) {
    %c0_i32 = arith.constant 0 : i32
    %c0_i32_0 = arith.constant 0 : i32
    %c0_i32_1 = arith.constant 0 : i32
    %c0_i32_2 = arith.constant 0 : i32
    return %c0_i32, %c0_i32_0, %c0_i32_1 : i32, i32, i32
  }
  func.func @transform_15(%arg0: i32) -> (i32, i32, i32) {
    %c0_i32 = arith.constant 0 : i32
    %c0_i32_0 = arith.constant 0 : i32
    %c0_i32_1 = arith.constant 0 : i32
    %c0_i32_2 = arith.constant 0 : i32
    return %c0_i32, %c0_i32_0, %c0_i32_1 : i32, i32, i32
  }
  func.func @transform_16(%arg0: i32) -> (i32, i32, i32) {
    %c0_i32 = arith.constant 0 : i32
    %c0_i32_0 = arith.constant 0 : i32
    %c0_i32_1 = arith.constant 0 : i32
    %c0_i32_2 = arith.constant 0 : i32
    return %c0_i32, %c0_i32_0, %c0_i32_1 : i32, i32, i32
  }
  func.func @transform_17(%arg0: i32) -> (i32, i32, i32) {
    %c0_i32 = arith.constant 0 : i32
    %c0_i32_0 = arith.constant 0 : i32
    %c0_i32_1 = arith.constant 0 : i32
    %c0_i32_2 = arith.constant 0 : i32
    return %c0_i32, %c0_i32_0, %c0_i32_1 : i32, i32, i32
  }
  func.func @transform_18(%arg0: i32) -> (i32, i32, i32) {
    %c0_i32 = arith.constant 0 : i32
    %c0_i32_0 = arith.constant 0 : i32
    %c0_i32_1 = arith.constant 0 : i32
    %c0_i32_2 = arith.constant 0 : i32
    return %c0_i32, %c0_i32_0, %c0_i32_1 : i32, i32, i32
  }
  func.func @transform_19(%arg0: i32) -> (i32, i32, i32) {
    %c0_i32 = arith.constant 0 : i32
    %c0_i32_0 = arith.constant 0 : i32
    %c0_i32_1 = arith.constant 0 : i32
    %c0_i32_2 = arith.constant 0 : i32
    return %c0_i32, %c0_i32_0, %c0_i32_1 : i32, i32, i32
  }
  func.func @transform_20(%arg0: i32) -> (i32, i32, i32) {
    %c0_i32 = arith.constant 0 : i32
    %c0_i32_0 = arith.constant 0 : i32
    %c0_i32_1 = arith.constant 0 : i32
    %c0_i32_2 = arith.constant 0 : i32
    return %c0_i32, %c0_i32_0, %c0_i32_1 : i32, i32, i32
  }
  func.func @transform_21(%arg0: i32) -> (i32, i32, i32) {
    %c0_i32 = arith.constant 0 : i32
    %c0_i32_0 = arith.constant 0 : i32
    %c0_i32_1 = arith.constant 0 : i32
    %c0_i32_2 = arith.constant 0 : i32
    return %c0_i32, %c0_i32_0, %c0_i32_1 : i32, i32, i32
  }
  func.func @transform_22(%arg0: i32) -> (i32, i32, i32) {
    %c0_i32 = arith.constant 0 : i32
    %c0_i32_0 = arith.constant 0 : i32
    %c0_i32_1 = arith.constant 0 : i32
    %c0_i32_2 = arith.constant 0 : i32
    return %c0_i32, %c0_i32_0, %c0_i32_1 : i32, i32, i32
  }
  func.func @transform_23(%arg0: i32) -> (i32, i32, i32) {
    %c0_i32 = arith.constant 0 : i32
    %c0_i32_0 = arith.constant 0 : i32
    %c0_i32_1 = arith.constant 0 : i32
    %c0_i32_2 = arith.constant 0 : i32
    return %c0_i32, %c0_i32_0, %c0_i32_1 : i32, i32, i32
  }
  func.func @transform_24(%arg0: i32) -> (i32, i32, i32) {
    %c0_i32 = arith.constant 0 : i32
    %c0_i32_0 = arith.constant 0 : i32
    %c0_i32_1 = arith.constant 0 : i32
    %c0_i32_2 = arith.constant 0 : i32
    return %c0_i32, %c0_i32_0, %c0_i32_1 : i32, i32, i32
  }
  func.func @transform_25(%arg0: i32) -> (i32, i32, i32) {
    %c0_i32 = arith.constant 0 : i32
    %c0_i32_0 = arith.constant 0 : i32
    %c0_i32_1 = arith.constant 0 : i32
    %c0_i32_2 = arith.constant 0 : i32
    return %c0_i32, %c0_i32_0, %c0_i32_1 : i32, i32, i32
  }
  func.func @transform_26(%arg0: i32) -> (i32, i32, i32) {
    %c0_i32 = arith.constant 0 : i32
    %c0_i32_0 = arith.constant 0 : i32
    %c0_i32_1 = arith.constant 0 : i32
    %c0_i32_2 = arith.constant 0 : i32
    return %c0_i32, %c0_i32_0, %c0_i32_1 : i32, i32, i32
  }
  func.func @transform_27(%arg0: i32) -> (i32, i32, i32) {
    %c0_i32 = arith.constant 0 : i32
    %c0_i32_0 = arith.constant 0 : i32
    %c0_i32_1 = arith.constant 0 : i32
    %c0_i32_2 = arith.constant 0 : i32
    return %c0_i32, %c0_i32_0, %c0_i32_1 : i32, i32, i32
  }
  func.func @transform_28(%arg0: i32) -> (i32, i32, i32) {
    %c0_i32 = arith.constant 0 : i32
    %c0_i32_0 = arith.constant 0 : i32
    %c0_i32_1 = arith.constant 0 : i32
    %c0_i32_2 = arith.constant 0 : i32
    return %c0_i32, %c0_i32_0, %c0_i32_1 : i32, i32, i32
  }
  func.func @transform_29(%arg0: i32) -> (i32, i32, i32) {
    %c0_i32 = arith.constant 0 : i32
    %c0_i32_0 = arith.constant 0 : i32
    %c0_i32_1 = arith.constant 0 : i32
    %c0_i32_2 = arith.constant 0 : i32
    return %c0_i32, %c0_i32_0, %c0_i32_1 : i32, i32, i32
  }
  func.func @transform_30(%arg0: i32) -> (i32, i32, i32) {
    %c0_i32 = arith.constant 0 : i32
    %c0_i32_0 = arith.constant 0 : i32
    %c0_i32_1 = arith.constant 0 : i32
    %c0_i32_2 = arith.constant 0 : i32
    return %c0_i32, %c0_i32_0, %c0_i32_1 : i32, i32, i32
  }
  func.func @transform_31(%arg0: i32) -> (i32, i32, i32) {
    %c0_i32 = arith.constant 0 : i32
    %c0_i32_0 = arith.constant 0 : i32
    %c0_i32_1 = arith.constant 0 : i32
    %c0_i32_2 = arith.constant 0 : i32
    return %c0_i32, %c0_i32_0, %c0_i32_1 : i32, i32, i32
  }
  func.func @transform_32(%arg0: i32) -> (i32, i32, i32) {
    %c0_i32 = arith.constant 0 : i32
    %c0_i32_0 = arith.constant 0 : i32
    %c0_i32_1 = arith.constant 0 : i32
    %c0_i32_2 = arith.constant 0 : i32
    return %c0_i32, %c0_i32_0, %c0_i32_1 : i32, i32, i32
  }
  func.func @transform_33(%arg0: i32) -> (i32, i32, i32) {
    %c0_i32 = arith.constant 0 : i32
    %c0_i32_0 = arith.constant 0 : i32
    %c0_i32_1 = arith.constant 0 : i32
    %c0_i32_2 = arith.constant 0 : i32
    return %c0_i32, %c0_i32_0, %c0_i32_1 : i32, i32, i32
  }
  func.func @transform_34(%arg0: i32) -> (i32, i32, i32) {
    %c0_i32 = arith.constant 0 : i32
    %c0_i32_0 = arith.constant 0 : i32
    %c0_i32_1 = arith.constant 0 : i32
    %c0_i32_2 = arith.constant 0 : i32
    return %c0_i32, %c0_i32_0, %c0_i32_1 : i32, i32, i32
  }
  func.func @transform_35(%arg0: i32) -> (i32, i32, i32) {
    %c0_i32 = arith.constant 0 : i32
    %c0_i32_0 = arith.constant 0 : i32
    %c0_i32_1 = arith.constant 0 : i32
    %c0_i32_2 = arith.constant 0 : i32
    return %c0_i32, %c0_i32_0, %c0_i32_1 : i32, i32, i32
  }
  func.func @transform_36(%arg0: i32) -> (i32, i32, i32) {
    %c0_i32 = arith.constant 0 : i32
    %c0_i32_0 = arith.constant 0 : i32
    %c0_i32_1 = arith.constant 0 : i32
    %c0_i32_2 = arith.constant 0 : i32
    return %c0_i32, %c0_i32_0, %c0_i32_1 : i32, i32, i32
  }
  func.func @transform_37(%arg0: i32) -> (i32, i32, i32) {
    %c0_i32 = arith.constant 0 : i32
    %c0_i32_0 = arith.constant 0 : i32
    %c0_i32_1 = arith.constant 0 : i32
    %c0_i32_2 = arith.constant 0 : i32
    return %c0_i32, %c0_i32_0, %c0_i32_1 : i32, i32, i32
  }
  func.func @transform_38(%arg0: i32) -> (i32, i32, i32) {
    %c0_i32 = arith.constant 0 : i32
    %c0_i32_0 = arith.constant 0 : i32
    %c0_i32_1 = arith.constant 0 : i32
    %c0_i32_2 = arith.constant 0 : i32
    return %c0_i32, %c0_i32_0, %c0_i32_1 : i32, i32, i32
  }
  func.func @transform_39(%arg0: i32) -> (i32, i32, i32) {
    %c0_i32 = arith.constant 0 : i32
    %c0_i32_0 = arith.constant 0 : i32
    %c0_i32_1 = arith.constant 0 : i32
    %c0_i32_2 = arith.constant 0 : i32
    return %c0_i32, %c0_i32_0, %c0_i32_1 : i32, i32, i32
  }
  func.func @transform_40(%arg0: i32) -> (i32, i32, i32) {
    %c0_i32 = arith.constant 0 : i32
    %c0_i32_0 = arith.constant 0 : i32
    %c0_i32_1 = arith.constant 0 : i32
    %c0_i32_2 = arith.constant 0 : i32
    return %c0_i32, %c0_i32_0, %c0_i32_1 : i32, i32, i32
  }
  func.func @transform_41(%arg0: i32) -> (i32, i32, i32) {
    %c0_i32 = arith.constant 0 : i32
    %c0_i32_0 = arith.constant 0 : i32
    %c0_i32_1 = arith.constant 0 : i32
    %c0_i32_2 = arith.constant 0 : i32
    return %c0_i32, %c0_i32_0, %c0_i32_1 : i32, i32, i32
  }
  func.func @transform_42(%arg0: i32) -> (i32, i32, i32) {
    %c0_i32 = arith.constant 0 : i32
    %c0_i32_0 = arith.constant 0 : i32
    %c0_i32_1 = arith.constant 0 : i32
    %c0_i32_2 = arith.constant 0 : i32
    return %c0_i32, %c0_i32_0, %c0_i32_1 : i32, i32, i32
  }
  func.func @transform_43(%arg0: i32) -> (i32, i32) {
    %c0_i32 = arith.constant 0 : i32
    %c0_i32_0 = arith.constant 0 : i32
    %c0_i32_1 = arith.constant 0 : i32
    return %c0_i32, %c0_i32_0 : i32, i32
  }
  func.func @transform_44(%arg0: i32) -> (i32, i32) {
    %c0_i32 = arith.constant 0 : i32
    %c0_i32_0 = arith.constant 0 : i32
    %c0_i32_1 = arith.constant 0 : i32
    return %c0_i32, %c0_i32_0 : i32, i32
  }
  func.func @transform_45(%arg0: i32) -> (i32, i32) {
    %c0_i32 = arith.constant 0 : i32
    %c0_i32_0 = arith.constant 0 : i32
    %c0_i32_1 = arith.constant 0 : i32
    return %c0_i32, %c0_i32_0 : i32, i32
  }
  func.func @transform_46(%arg0: i32) -> (i32, i32) {
    %c0_i32 = arith.constant 0 : i32
    %c0_i32_0 = arith.constant 0 : i32
    %c0_i32_1 = arith.constant 0 : i32
    return %c0_i32, %c0_i32_0 : i32, i32
  }
  func.func @transform_47(%arg0: i32) -> (i32, i32) {
    %c0_i32 = arith.constant 0 : i32
    %c0_i32_0 = arith.constant 0 : i32
    %c0_i32_1 = arith.constant 0 : i32
    return %c0_i32, %c0_i32_0 : i32, i32
  }
  func.func @transform_48(%arg0: i32) -> (i32, i32) {
    %c0_i32 = arith.constant 0 : i32
    %c0_i32_0 = arith.constant 0 : i32
    %c0_i32_1 = arith.constant 0 : i32
    return %c0_i32, %c0_i32_0 : i32, i32
  }
  func.func @transform_49(%arg0: i32) -> (i32, i32) {
    %c0_i32 = arith.constant 0 : i32
    %c0_i32_0 = arith.constant 0 : i32
    %c0_i32_1 = arith.constant 0 : i32
    return %c0_i32, %c0_i32_0 : i32, i32
  }
  func.func @transform_50(%arg0: i32) -> (i32, i32) {
    %c0_i32 = arith.constant 0 : i32
    %c0_i32_0 = arith.constant 0 : i32
    %c0_i32_1 = arith.constant 0 : i32
    return %c0_i32, %c0_i32_0 : i32, i32
  }
  func.func @transform_51(%arg0: i32) -> (i32, i32) {
    %c0_i32 = arith.constant 0 : i32
    %c0_i32_0 = arith.constant 0 : i32
    %c0_i32_1 = arith.constant 0 : i32
    return %c0_i32, %c0_i32_0 : i32, i32
  }
  func.func @transform_52(%arg0: i32) -> (i32, i32, i32) {
    %c0_i32 = arith.constant 0 : i32
    %c0_i32_0 = arith.constant 0 : i32
    %c0_i32_1 = arith.constant 0 : i32
    return %arg0, %c0_i32, %c0_i32_0 : i32, i32, i32
  }
  func.func @transform_53(%arg0: i32) -> (i32, i32, i32) {
    %c0_i32 = arith.constant 0 : i32
    %c0_i32_0 = arith.constant 0 : i32
    %c0_i32_1 = arith.constant 0 : i32
    return %arg0, %c0_i32, %c0_i32_0 : i32, i32, i32
  }
}

</mosaic_0001>

<llo_original>
// kernel: _lambda_.1
$region0: #{_lambda_.1}
  #allocation0 [shape = 'u32[]', space=smem, size = 0x4, offset = 0x4, fixed_abs, tag = 'smem constant byte address 0x4 - core index']
  #allocation1 [shape = 'u32[144,128]{1,0:T(1,128)}', space=vmem, size = 0x12000, scoped, tag = 'internal scratch']
  %s0 = inlined_call_operand.smem [shape: u32[54], index: -1, kind: input, shape index: {}]
  %s1 = sld [smem:[%s0]]
  %s2 = scalar_lea.smem %s0, 1
  %s3 = sld [smem:[%s2]]
  %s4 = scalar_lea.smem %s0, 2
  %s5 = sld [smem:[%s4]]
  %s6 = scalar_lea.smem %s0, 3
  %s7 = sld [smem:[%s6]]
  %s8 = scalar_lea.smem %s0, 4
  %s9 = sld [smem:[%s8]]
  %s10 = scalar_lea.smem %s0, 5
  %s11 = sld [smem:[%s10]]
  %s12 = scalar_lea.smem %s0, 6
  %s13 = sld [smem:[%s12]]
  %s14 = scalar_lea.smem %s0, 7
  %s15 = sld [smem:[%s14]]
  %s16 = scalar_lea.smem %s0, 8
  %s17 = sld [smem:[%s16]]
  %s18 = scalar_lea.smem %s0, 9
  %s19 = sld [smem:[%s18]]
  %s20 = scalar_lea.smem %s0, 10
  %s21 = sld [smem:[%s20]]
  %s22 = scalar_lea.smem %s0, 11
  %s23 = sld [smem:[%s22]]
  %s24 = scalar_lea.smem %s0, 12
  %s25 = sld [smem:[%s24]]
  %s26 = scalar_lea.smem %s0, 13
  %s27 = sld [smem:[%s26]]
  %s28 = scalar_lea.smem %s0, 14
  %s29 = sld [smem:[%s28]]
  %s30 = scalar_lea.smem %s0, 15
  %s31 = sld [smem:[%s30]]
  %s32 = scalar_lea.smem %s0, 16
  %s33 = sld [smem:[%s32]]
  %s34 = scalar_lea.smem %s0, 17
  %s35 = sld [smem:[%s34]]
  %s36 = scalar_lea.smem %s0, 18
  %s37 = sld [smem:[%s36]]
  %s38 = scalar_lea.smem %s0, 19
  %s39 = sld [smem:[%s38]]
  %s40 = scalar_lea.smem %s0, 20
  %s41 = sld [smem:[%s40]]
  %s42 = scalar_lea.smem %s0, 21
  %s43 = sld [smem:[%s42]]
  %s44 = scalar_lea.smem %s0, 22
  %s45 = sld [smem:[%s44]]
  %s46 = scalar_lea.smem %s0, 23
  %s47 = sld [smem:[%s46]]
  %s48 = scalar_lea.smem %s0, 24
  %s49 = sld [smem:[%s48]]
  %s50 = scalar_lea.smem %s0, 25
  %s51 = sld [smem:[%s50]]
  %s52 = scalar_lea.smem %s0, 26
  %s53 = sld [smem:[%s52]]
  %s54 = scalar_lea.smem %s0, 27
  %s55 = sld [smem:[%s54]]
  %s56 = scalar_lea.smem %s0, 28
  %s57 = sld [smem:[%s56]]
  %s58 = scalar_lea.smem %s0, 29
  %s59 = sld [smem:[%s58]]
  %s60 = scalar_lea.smem %s0, 30
  %s61 = sld [smem:[%s60]]
  %s62 = scalar_lea.smem %s0, 31
  %s63 = sld [smem:[%s62]]
  %s64 = scalar_lea.smem %s0, 32
  %s65 = sld [smem:[%s64]]
  %s66 = scalar_lea.smem %s0, 33
  %s67 = sld [smem:[%s66]]
  %s68 = scalar_lea.smem %s0, 34
  %s69 = sld [smem:[%s68]]
  %s70 = scalar_lea.smem %s0, 35
  %s71 = sld [smem:[%s70]]
  %s72 = scalar_lea.smem %s0, 36
  %s73 = sld [smem:[%s72]]
  %s74 = scalar_lea.smem %s0, 37
  %s75 = sld [smem:[%s74]]
  %s76 = scalar_lea.smem %s0, 38
  %s77 = sld [smem:[%s76]]
  %s78 = scalar_lea.smem %s0, 39
  %s79 = sld [smem:[%s78]]
  %s80 = scalar_lea.smem %s0, 40
  %s81 = sld [smem:[%s80]]
  %s82 = scalar_lea.smem %s0, 41
  %s83 = sld [smem:[%s82]]
  %s84 = scalar_lea.smem %s0, 42
  %s85 = sld [smem:[%s84]]
  %s86 = scalar_lea.smem %s0, 43
  %s87 = sld [smem:[%s86]]
  %s88 = scalar_lea.smem %s0, 44
  %s89 = sld [smem:[%s88]]
  %s90 = scalar_lea.smem %s0, 45
  %s91 = sld [smem:[%s90]]
  %s92 = scalar_lea.smem %s0, 46
  %s93 = sld [smem:[%s92]]
  %s94 = scalar_lea.smem %s0, 47
  %s95 = sld [smem:[%s94]]
  %s96 = scalar_lea.smem %s0, 48
  %s97 = sld [smem:[%s96]]
  %s98 = scalar_lea.smem %s0, 49
  %s99 = sld [smem:[%s98]]
  %s100 = scalar_lea.smem %s0, 50
  %s101 = sld [smem:[%s100]]
  %s102 = scalar_lea.smem %s0, 51
  %s103 = sld [smem:[%s102]]
  %s104 = scalar_lea.smem %s0, 52
  %s105 = sld [smem:[%s104]]
  %s106 = scalar_lea.smem %s0, 53
  %s107 = sld [smem:[%s106]]
  %108 = xla_tuple %s105, %s107
  %s109 = sld [smem:[#allocation0]]
  $region285: #{_lambda_.1} parent=0
    _
  %s111 = ssub.s32 1, %s109
  %s112 = scalar_select 0, %s111, %s109
  $region1: #{_lambda_.1} parent=0
    #allocation2 [shape = 'u8[512]{0}', space=vmem, size = 0x400, scoped, tag = 'input window, operand 9, single buffered']
    #allocation3 [shape = 's32[2]{0}', space=sflag, size = 0x8, scoped, tag = 'scoped memory for _lambda_.1']
    #allocation4 [shape = 'u8[512]{0}', space=vmem, size = 0x400, scoped, tag = 'input window, operand 11, single buffered']
    #allocation5 [shape = 's32[1]{0}', space=sflag, size = 0x4, scoped, tag = 'scoped memory for _lambda_.1']
    #allocation6 [shape = 'u8[512]{0}', space=vmem, size = 0x400, scoped, tag = 'input window, operand 13, single buffered']
    #allocation7 [shape = 'u8[512]{0}', space=vmem, size = 0x400, scoped, tag = 'input window, operand 16, single buffered']
    #allocation8 [shape = 's32[1]{0}', space=sflag, size = 0x4, scoped, tag = 'scoped memory for _lambda_.1']
    #allocation9 [shape = 'u8[512]{0}', space=vmem, size = 0x400, scoped, tag = 'input window, operand 18, single buffered']
    #allocation10 [shape = 'u8[512]{0}', space=vmem, size = 0x400, scoped, tag = 'input window, operand 45, single buffered']
    #allocation11 [shape = 's32[1]{0}', space=sflag, size = 0x4, scoped, tag = 'scoped memory for _lambda_.1']
    #allocation12 [shape = 'u8[512]{0}', space=vmem, size = 0x400, scoped, tag = 'input window, operand 47, single buffered']
    #allocation13 [shape = 'u8[512]{0}', space=vmem, size = 0x400, scoped, tag = 'input window, operand 49, single buffered']
    #allocation14 [shape = 's32[1]{0}', space=sflag, size = 0x4, scoped, tag = 'scoped memory for _lambda_.1']
    #allocation15 [shape = 'u8[512]{0}', space=vmem, size = 0x400, scoped, tag = 'input window, operand 51, single buffered']
    %113 = vsyncpa [#allocation3], 0
    %114 = vsyncpa [#allocation5], 0
    %115 = vsyncpa [#allocation8], 0
    %116 = vsyncpa [#allocation11], 0
    %117 = vsyncpa [#allocation14], 0
    loop: start=0, step=1, limit=4
    $region2: #{_lambda_.1} parent=1 // loop_pre_header
      _
    $region3: #{_lambda_.1} parent=1 // loop_header
      %s119 = sphi 0, %s123
      %p120 = scmp.ge.s32.totalorder %s119, 4
      %s129 = sphi 0, %s131
      %s132 = sphi 0, %s129
      %s133 = sphi 0, %s132
      %s149 = sphi 0, %s133
      %s155 = sphi 0, %s157
      %s158 = sphi 0, %s155
      %s159 = sphi 0, %s158
      %s175 = sphi 0, %s159
      %s179 = sphi 0, %s179
      %s181 = sphi 0, %s179
      %s182 = sphi 0, %s181
      %s196 = sphi 0, %s182
      %s202 = sphi 0, %s204
      %s205 = sphi 0, %s202
      %s206 = sphi 0, %s205
      %s222 = sphi 0, %s206
      %s226 = sphi 0, %s226
      %s228 = sphi 0, %s226
      %s229 = sphi 0, %s228
      %s243 = sphi 0, %s229
      %s247 = sphi 0, %s247
      %s249 = sphi 0, %s247
      %s250 = sphi 0, %s249
      %s264 = sphi 0, %s250
      %s268 = sphi 0, %s268
      %s270 = sphi 0, %s268
      %s271 = sphi 0, %s270
      %s285 = sphi 0, %s271
      %s289 = sphi 0, %s289
      %s291 = sphi 0, %s289
      %s292 = sphi 0, %s291
      %s306 = sphi 0, %s292
      %s310 = sphi 0, %s310
      %s312 = sphi 0, %s310
      %s313 = sphi 0, %s312
      %s327 = sphi 0, %s313
      %s331 = sphi 0, %s331
      %s333 = sphi 0, %s331
      %s334 = sphi 0, %s333
      %s348 = sphi 0, %s334
      %s352 = sphi 0, %s352
      %s354 = sphi 0, %s352
      %s355 = sphi 0, %s354
      %s369 = sphi 0, %s355
      %s373 = sphi 0, %s373
      %s375 = sphi 0, %s373
      %s376 = sphi 0, %s375
      %s390 = sphi 0, %s376
      %s394 = sphi 0, %s394
      %s396 = sphi 0, %s394
      %s397 = sphi 0, %s396
      %s411 = sphi 0, %s397
      %s415 = sphi 0, %s415
      %s417 = sphi 0, %s415
      %s418 = sphi 0, %s417
      %s432 = sphi 0, %s418
      %s436 = sphi 0, %s436
      %s438 = sphi 0, %s436
      %s439 = sphi 0, %s438
      %s453 = sphi 0, %s439
      %s457 = sphi 0, %s457
      %s459 = sphi 0, %s457
      %s460 = sphi 0, %s459
      %s474 = sphi 0, %s460
      %s478 = sphi 0, %s478
      %s480 = sphi 0, %s478
      %s481 = sphi 0, %s480
      %s495 = sphi 0, %s481
      %s499 = sphi 0, %s499
      %s501 = sphi 0, %s499
      %s502 = sphi 0, %s501
      %s516 = sphi 0, %s502
      %s520 = sphi 0, %s520
      %s522 = sphi 0, %s520
      %s523 = sphi 0, %s522
      %s537 = sphi 0, %s523
      %s541 = sphi 0, %s541
      %s543 = sphi 0, %s541
      %s544 = sphi 0, %s543
      %s558 = sphi 0, %s544
      %s562 = sphi 0, %s562
      %s564 = sphi 0, %s562
      %s565 = sphi 0, %s564
      %s579 = sphi 0, %s565
      %s583 = sphi 0, %s583
      %s585 = sphi 0, %s583
      %s586 = sphi 0, %s585
      %s600 = sphi 0, %s586
      %s604 = sphi 0, %s604
      %s606 = sphi 0, %s604
      %s607 = sphi 0, %s606
      %s621 = sphi 0, %s607
      %s625 = sphi 0, %s625
      %s627 = sphi 0, %s625
      %s628 = sphi 0, %s627
      %s642 = sphi 0, %s628
      %s646 = sphi 0, %s646
      %s648 = sphi 0, %s646
      %s649 = sphi 0, %s648
      %s663 = sphi 0, %s649
      %s667 = sphi 0, %s667
      %s669 = sphi 0, %s667
      %s670 = sphi 0, %s669
      %s684 = sphi 0, %s670
      %s688 = sphi 0, %s688
      %s690 = sphi 0, %s688
      %s691 = sphi 0, %s690
      %s705 = sphi 0, %s691
      %s709 = sphi 0, %s709
      %s711 = sphi 0, %s709
      %s712 = sphi 0, %s711
      %s726 = sphi 0, %s712
      %s730 = sphi 0, %s730
      %s732 = sphi 0, %s730
      %s733 = sphi 0, %s732
      %s747 = sphi 0, %s733
      %s751 = sphi 0, %s751
      %s753 = sphi 0, %s751
      %s754 = sphi 0, %s753
      %s768 = sphi 0, %s754
      %s772 = sphi 0, %s772
      %s774 = sphi 0, %s772
      %s775 = sphi 0, %s774
      %s789 = sphi 0, %s775
      %s793 = sphi 0, %s793
      %s795 = sphi 0, %s793
      %s796 = sphi 0, %s795
      %s810 = sphi 0, %s796
      %s814 = sphi 0, %s814
      %s816 = sphi 0, %s814
      %s817 = sphi 0, %s816
      %s831 = sphi 0, %s817
      %s835 = sphi 0, %s835
      %s837 = sphi 0, %s835
      %s838 = sphi 0, %s837
      %s852 = sphi 0, %s838
      %s856 = sphi 0, %s856
      %s858 = sphi 0, %s856
      %s859 = sphi 0, %s858
      %s873 = sphi 0, %s859
      %s877 = sphi 0, %s877
      %s879 = sphi 0, %s877
      %s880 = sphi 0, %s879
      %s894 = sphi 0, %s880
      %s898 = sphi 0, %s898
      %s900 = sphi 0, %s898
      %s901 = sphi 0, %s900
      %s915 = sphi 0, %s901
      %s919 = sphi 0, %s919
      %s921 = sphi 0, %s919
      %s922 = sphi 0, %s921
      %s936 = sphi 0, %s922
      %s940 = sphi 0, %s940
      %s942 = sphi 0, %s940
      %s943 = sphi 0, %s942
      %s957 = sphi 0, %s943
      %s961 = sphi 0, %s961
      %s963 = sphi 0, %s961
      %s964 = sphi 0, %s963
      %s978 = sphi 0, %s964
      %s982 = sphi 0, %s982
      %s984 = sphi 0, %s982
      %s985 = sphi 0, %s984
      %s999 = sphi 0, %s985
      %s1003 = sphi 0, %s1003
      %s1005 = sphi 0, %s1003
      %s1006 = sphi 0, %s1005
      %s1020 = sphi 0, %s1006
      %s1024 = sphi 0, %s1024
      %s1026 = sphi 0, %s1024
      %s1027 = sphi 0, %s1026
      %s1041 = sphi 0, %s1027
      %s1045 = sphi 0, %s1045
      %s1047 = sphi 0, %s1045
      %s1048 = sphi 0, %s1047
      %s1062 = sphi 0, %s1048
      %s1066 = sphi 0, %s1066
      %s1068 = sphi 0, %s1066
      %s1069 = sphi 0, %s1068
      %s1083 = sphi 0, %s1069
      %s1087 = sphi 0, %s1087
      %s1089 = sphi 0, %s1087
      %s1090 = sphi 0, %s1089
      %s1104 = sphi 0, %s1090
      %s1108 = sphi 0, %s1108
      %s1110 = sphi 0, %s1108
      %s1111 = sphi 0, %s1110
      %s1125 = sphi 0, %s1111
      %s1129 = sphi 0, %s1129
      %s1131 = sphi 0, %s1129
      %s1132 = sphi 0, %s1131
      %s1146 = sphi 0, %s1132
      %s1150 = sphi 0, %s1150
      %s1152 = sphi 0, %s1150
      %s1153 = sphi 0, %s1152
      %s1167 = sphi 0, %s1153
      %s1171 = sphi 0, %s1171
      %s1173 = sphi 0, %s1171
      %s1174 = sphi 0, %s1173
      %s1188 = sphi 0, %s1174
      %s1192 = sphi 0, %s1192
      %s1194 = sphi 0, %s1192
      %s1195 = sphi 0, %s1194
      %s1209 = sphi 0, %s1195
      %s1213 = sphi 0, %s1213
      %s1215 = sphi 0, %s1213
      %s1216 = sphi 0, %s1215
      %s1230 = sphi 0, %s1216
      %s1236 = sphi 0, %s1238
      %s1239 = sphi 0, %s1236
      %s1240 = sphi 0, %s1239
      %s1256 = sphi 0, %s1240
      %s1262 = sphi 0, %s1264
      %s1265 = sphi 0, %s1262
      %s1266 = sphi 0, %s1265
      %s1282 = sphi 0, %s1266
    $region4: #{_lambda_.1} parent=1 // loop_header_branch
      %122 = sbr.rel (%p120) target = $region8
    $region5: #{_lambda_.1} parent=1 // loop_body
      %s124 = ssub.s32 %s119, 1
      %s125 = ssub.s32 %s119, 2
      %s126 = sadd.s32 %s119, 1
      %s127 = ssub.s32 %s119, %s126
      %p128 = scmp.eq.s32.totalorder %s127, 0
      %s130 = sadd.s32 %s129, 1
      %s131 = scalar_select %p128, %s129, %s130
      %p134 = pneg %p128
      %p135 = scmp.eq.s32.totalorder %s119, 1
      %p136 = por %p134, %p135
      %p137 = scmp.ne.s32.totalorder %s129, %s132
      %p138 = scmp.eq.s32.totalorder %s119, 0
      %p139 = por %p137, %p138
      %p140 = scmp.ne.s32.totalorder %s129, %s132
      %p141 = scmp.eq.s32.totalorder %s124, 1
      %p142 = por %p140, %p141
      %p143 = scmp.ne.s32.totalorder %s132, %s133
      %p144 = scmp.eq.s32.totalorder %s124, 0
      %p145 = por %p143, %p144
      %p146 = scmp.ne.s32.totalorder %s132, %s133
      %p147 = scmp.eq.s32.totalorder %s125, 1
      %p148 = por %p146, %p147
      %p150 = scmp.ne.s32.totalorder %s133, %s149
      %p151 = scmp.eq.s32.totalorder %s125, 0
      %p152 = por %p150, %p151
      %s153 = ssub.s32 %s119, %s126
      %p154 = scmp.eq.s32.totalorder %s153, 0
      %s156 = sadd.s32 %s155, 1
      %s157 = scalar_select %p154, %s155, %s156
      %p160 = pneg %p154
      %p161 = scmp.eq.s32.totalorder %s119, 1
      %p162 = por %p160, %p161
      %p163 = scmp.ne.s32.totalorder %s155, %s158
      %p164 = scmp.eq.s32.totalorder %s119, 0
      %p165 = por %p163, %p164
      %p166 = scmp.ne.s32.totalorder %s155, %s158
      %p167 = scmp.eq.s32.totalorder %s124, 1
      %p168 = por %p166, %p167
      %p169 = scmp.ne.s32.totalorder %s158, %s159
      %p170 = scmp.eq.s32.totalorder %s124, 0
      %p171 = por %p169, %p170
      %p172 = scmp.ne.s32.totalorder %s158, %s159
      %p173 = scmp.eq.s32.totalorder %s125, 1
      %p174 = por %p172, %p173
      %p176 = scmp.ne.s32.totalorder %s159, %s175
      %p177 = scmp.eq.s32.totalorder %s125, 0
      %p178 = por %p176, %p177
      %s180 = sadd.s32 %s179, 1
      %p183 = scmp.eq.s32.totalorder %s119, 1
      %p184 = scmp.ne.s32.totalorder %s179, %s181
      %p185 = scmp.eq.s32.totalorder %s119, 0
      %p186 = por %p184, %p185
      %p187 = scmp.ne.s32.totalorder %s179, %s181
      %p188 = scmp.eq.s32.totalorder %s124, 1
      %p189 = por %p187, %p188
      %p190 = scmp.ne.s32.totalorder %s181, %s182
      %p191 = scmp.eq.s32.totalorder %s124, 0
      %p192 = por %p190, %p191
      %p193 = scmp.ne.s32.totalorder %s181, %s182
      %p194 = scmp.eq.s32.totalorder %s125, 1
      %p195 = por %p193, %p194
      %p197 = scmp.ne.s32.totalorder %s182, %s196
      %p198 = scmp.eq.s32.totalorder %s125, 0
      %p199 = por %p197, %p198
      %s200 = ssub.s32 %s119, %s126
      %p201 = scmp.eq.s32.totalorder %s200, 0
      %s203 = sadd.s32 %s202, 1
      %s204 = scalar_select %p201, %s202, %s203
      %p207 = pneg %p201
      %p208 = scmp.eq.s32.totalorder %s119, 1
      %p209 = por %p207, %p208
      %p210 = scmp.ne.s32.totalorder %s202, %s205
      %p211 = scmp.eq.s32.totalorder %s119, 0
      %p212 = por %p210, %p211
      %p213 = scmp.ne.s32.totalorder %s202, %s205
      %p214 = scmp.eq.s32.totalorder %s124, 1
      %p215 = por %p213, %p214
      %p216 = scmp.ne.s32.totalorder %s205, %s206
      %p217 = scmp.eq.s32.totalorder %s124, 0
      %p218 = por %p216, %p217
      %p219 = scmp.ne.s32.totalorder %s205, %s206
      %p220 = scmp.eq.s32.totalorder %s125, 1
      %p221 = por %p219, %p220
      %p223 = scmp.ne.s32.totalorder %s206, %s222
      %p224 = scmp.eq.s32.totalorder %s125, 0
      %p225 = por %p223, %p224
      %s227 = sadd.s32 %s226, 1
      %p230 = scmp.eq.s32.totalorder %s119, 1
      %p231 = scmp.ne.s32.totalorder %s226, %s228
      %p232 = scmp.eq.s32.totalorder %s119, 0
      %p233 = por %p231, %p232
      %p234 = scmp.ne.s32.totalorder %s226, %s228
      %p235 = scmp.eq.s32.totalorder %s124, 1
      %p236 = por %p234, %p235
      %p237 = scmp.ne.s32.totalorder %s228, %s229
      %p238 = scmp.eq.s32.totalorder %s124, 0
      %p239 = por %p237, %p238
      %p240 = scmp.ne.s32.totalorder %s228, %s229
      %p241 = scmp.eq.s32.totalorder %s125, 1
      %p242 = por %p240, %p241
      %p244 = scmp.ne.s32.totalorder %s229, %s243
      %p245 = scmp.eq.s32.totalorder %s125, 0
      %p246 = por %p244, %p245
      %s248 = sadd.s32 %s247, 1
      %p251 = scmp.eq.s32.totalorder %s119, 1
      %p252 = scmp.ne.s32.totalorder %s247, %s249
      %p253 = scmp.eq.s32.totalorder %s119, 0
      %p254 = por %p252, %p253
      %p255 = scmp.ne.s32.totalorder %s247, %s249
      %p256 = scmp.eq.s32.totalorder %s124, 1
      %p257 = por %p255, %p256
      %p258 = scmp.ne.s32.totalorder %s249, %s250
      %p259 = scmp.eq.s32.totalorder %s124, 0
      %p260 = por %p258, %p259
      %p261 = scmp.ne.s32.totalorder %s249, %s250
      %p262 = scmp.eq.s32.totalorder %s125, 1
      %p263 = por %p261, %p262
      %p265 = scmp.ne.s32.totalorder %s250, %s264
      %p266 = scmp.eq.s32.totalorder %s125, 0
      %p267 = por %p265, %p266
      %s269 = sadd.s32 %s268, 1
      %p272 = scmp.eq.s32.totalorder %s119, 1
      %p273 = scmp.ne.s32.totalorder %s268, %s270
      %p274 = scmp.eq.s32.totalorder %s119, 0
      %p275 = por %p273, %p274
      %p276 = scmp.ne.s32.totalorder %s268, %s270
      %p277 = scmp.eq.s32.totalorder %s124, 1
      %p278 = por %p276, %p277
      %p279 = scmp.ne.s32.totalorder %s270, %s271
      %p280 = scmp.eq.s32.totalorder %s124, 0
      %p281 = por %p279, %p280
      %p282 = scmp.ne.s32.totalorder %s270, %s271
      %p283 = scmp.eq.s32.totalorder %s125, 1
      %p284 = por %p282, %p283
      %p286 = scmp.ne.s32.totalorder %s271, %s285
      %p287 = scmp.eq.s32.totalorder %s125, 0
      %p288 = por %p286, %p287
      %s290 = sadd.s32 %s289, 1
      %p293 = scmp.eq.s32.totalorder %s119, 1
      %p294 = scmp.ne.s32.totalorder %s289, %s291
      %p295 = scmp.eq.s32.totalorder %s119, 0
      %p296 = por %p294, %p295
      %p297 = scmp.ne.s32.totalorder %s289, %s291
      %p298 = scmp.eq.s32.totalorder %s124, 1
      %p299 = por %p297, %p298
      %p300 = scmp.ne.s32.totalorder %s291, %s292
      %p301 = scmp.eq.s32.totalorder %s124, 0
      %p302 = por %p300, %p301
      %p303 = scmp.ne.s32.totalorder %s291, %s292
      %p304 = scmp.eq.s32.totalorder %s125, 1
      %p305 = por %p303, %p304
      %p307 = scmp.ne.s32.totalorder %s292, %s306
      %p308 = scmp.eq.s32.totalorder %s125, 0
      %p309 = por %p307, %p308
      %s311 = sadd.s32 %s310, 1
      %p314 = scmp.eq.s32.totalorder %s119, 1
      %p315 = scmp.ne.s32.totalorder %s310, %s312
      %p316 = scmp.eq.s32.totalorder %s119, 0
      %p317 = por %p315, %p316
      %p318 = scmp.ne.s32.totalorder %s310, %s312
      %p319 = scmp.eq.s32.totalorder %s124, 1
      %p320 = por %p318, %p319
      %p321 = scmp.ne.s32.totalorder %s312, %s313
      %p322 = scmp.eq.s32.totalorder %s124, 0
      %p323 = por %p321, %p322
      %p324 = scmp.ne.s32.totalorder %s312, %s313
      %p325 = scmp.eq.s32.totalorder %s125, 1
      %p326 = por %p324, %p325
      %p328 = scmp.ne.s32.totalorder %s313, %s327
      %p329 = scmp.eq.s32.totalorder %s125, 0
      %p330 = por %p328, %p329
      %s332 = sadd.s32 %s331, 1
      %p335 = scmp.eq.s32.totalorder %s119, 1
      %p336 = scmp.ne.s32.totalorder %s331, %s333
      %p337 = scmp.eq.s32.totalorder %s119, 0
      %p338 = por %p336, %p337
      %p339 = scmp.ne.s32.totalorder %s331, %s333
      %p340 = scmp.eq.s32.totalorder %s124, 1
      %p341 = por %p339, %p340
      %p342 = scmp.ne.s32.totalorder %s333, %s334
      %p343 = scmp.eq.s32.totalorder %s124, 0
      %p344 = por %p342, %p343
      %p345 = scmp.ne.s32.totalorder %s333, %s334
      %p346 = scmp.eq.s32.totalorder %s125, 1
      %p347 = por %p345, %p346
      %p349 = scmp.ne.s32.totalorder %s334, %s348
      %p350 = scmp.eq.s32.totalorder %s125, 0
      %p351 = por %p349, %p350
      %s353 = sadd.s32 %s352, 1
      %p356 = scmp.eq.s32.totalorder %s119, 1
      %p357 = scmp.ne.s32.totalorder %s352, %s354
      %p358 = scmp.eq.s32.totalorder %s119, 0
      %p359 = por %p357, %p358
      %p360 = scmp.ne.s32.totalorder %s352, %s354
      %p361 = scmp.eq.s32.totalorder %s124, 1
      %p362 = por %p360, %p361
      %p363 = scmp.ne.s32.totalorder %s354, %s355
      %p364 = scmp.eq.s32.totalorder %s124, 0
      %p365 = por %p363, %p364
      %p366 = scmp.ne.s32.totalorder %s354, %s355
      %p367 = scmp.eq.s32.totalorder %s125, 1
      %p368 = por %p366, %p367
      %p370 = scmp.ne.s32.totalorder %s355, %s369
      %p371 = scmp.eq.s32.totalorder %s125, 0
      %p372 = por %p370, %p371
      %s374 = sadd.s32 %s373, 1
      %p377 = scmp.eq.s32.totalorder %s119, 1
      %p378 = scmp.ne.s32.totalorder %s373, %s375
      %p379 = scmp.eq.s32.totalorder %s119, 0
      %p380 = por %p378, %p379
      %p381 = scmp.ne.s32.totalorder %s373, %s375
      %p382 = scmp.eq.s32.totalorder %s124, 1
      %p383 = por %p381, %p382
      %p384 = scmp.ne.s32.totalorder %s375, %s376
      %p385 = scmp.eq.s32.totalorder %s124, 0
      %p386 = por %p384, %p385
      %p387 = scmp.ne.s32.totalorder %s375, %s376
      %p388 = scmp.eq.s32.totalorder %s125, 1
      %p389 = por %p387, %p388
      %p391 = scmp.ne.s32.totalorder %s376, %s390
      %p392 = scmp.eq.s32.totalorder %s125, 0
      %p393 = por %p391, %p392
      %s395 = sadd.s32 %s394, 1
      %p398 = scmp.eq.s32.totalorder %s119, 1
      %p399 = scmp.ne.s32.totalorder %s394, %s396
      %p400 = scmp.eq.s32.totalorder %s119, 0
      %p401 = por %p399, %p400
      %p402 = scmp.ne.s32.totalorder %s394, %s396
      %p403 = scmp.eq.s32.totalorder %s124, 1
      %p404 = por %p402, %p403
      %p405 = scmp.ne.s32.totalorder %s396, %s397
      %p406 = scmp.eq.s32.totalorder %s124, 0
      %p407 = por %p405, %p406
      %p408 = scmp.ne.s32.totalorder %s396, %s397
      %p409 = scmp.eq.s32.totalorder %s125, 1
      %p410 = por %p408, %p409
      %p412 = scmp.ne.s32.totalorder %s397, %s411
      %p413 = scmp.eq.s32.totalorder %s125, 0
      %p414 = por %p412, %p413
      %s416 = sadd.s32 %s415, 1
      %p419 = scmp.eq.s32.totalorder %s119, 1
      %p420 = scmp.ne.s32.totalorder %s415, %s417
      %p421 = scmp.eq.s32.totalorder %s119, 0
      %p422 = por %p420, %p421
      %p423 = scmp.ne.s32.totalorder %s415, %s417
      %p424 = scmp.eq.s32.totalorder %s124, 1
      %p425 = por %p423, %p424
      %p426 = scmp.ne.s32.totalorder %s417, %s418
      %p427 = scmp.eq.s32.totalorder %s124, 0
      %p428 = por %p426, %p427
      %p429 = scmp.ne.s32.totalorder %s417, %s418
      %p430 = scmp.eq.s32.totalorder %s125, 1
      %p431 = por %p429, %p430
      %p433 = scmp.ne.s32.totalorder %s418, %s432
      %p434 = scmp.eq.s32.totalorder %s125, 0
      %p435 = por %p433, %p434
      %s437 = sadd.s32 %s436, 1
      %p440 = scmp.eq.s32.totalorder %s119, 1
      %p441 = scmp.ne.s32.totalorder %s436, %s438
      %p442 = scmp.eq.s32.totalorder %s119, 0
      %p443 = por %p441, %p442
      %p444 = scmp.ne.s32.totalorder %s436, %s438
      %p445 = scmp.eq.s32.totalorder %s124, 1
      %p446 = por %p444, %p445
      %p447 = scmp.ne.s32.totalorder %s438, %s439
      %p448 = scmp.eq.s32.totalorder %s124, 0
      %p449 = por %p447, %p448
      %p450 = scmp.ne.s32.totalorder %s438, %s439
      %p451 = scmp.eq.s32.totalorder %s125, 1
      %p452 = por %p450, %p451
      %p454 = scmp.ne.s32.totalorder %s439, %s453
      %p455 = scmp.eq.s32.totalorder %s125, 0
      %p456 = por %p454, %p455
      %s458 = sadd.s32 %s457, 1
      %p461 = scmp.eq.s32.totalorder %s119, 1
      %p462 = scmp.ne.s32.totalorder %s457, %s459
      %p463 = scmp.eq.s32.totalorder %s119, 0
      %p464 = por %p462, %p463
      %p465 = scmp.ne.s32.totalorder %s457, %s459
      %p466 = scmp.eq.s32.totalorder %s124, 1
      %p467 = por %p465, %p466
      %p468 = scmp.ne.s32.totalorder %s459, %s460
      %p469 = scmp.eq.s32.totalorder %s124, 0
      %p470 = por %p468, %p469
      %p471 = scmp.ne.s32.totalorder %s459, %s460
      %p472 = scmp.eq.s32.totalorder %s125, 1
      %p473 = por %p471, %p472
      %p475 = scmp.ne.s32.totalorder %s460, %s474
      %p476 = scmp.eq.s32.totalorder %s125, 0
      %p477 = por %p475, %p476
      %s479 = sadd.s32 %s478, 1
      %p482 = scmp.eq.s32.totalorder %s119, 1
      %p483 = scmp.ne.s32.totalorder %s478, %s480
      %p484 = scmp.eq.s32.totalorder %s119, 0
      %p485 = por %p483, %p484
      %p486 = scmp.ne.s32.totalorder %s478, %s480
      %p487 = scmp.eq.s32.totalorder %s124, 1
      %p488 = por %p486, %p487
      %p489 = scmp.ne.s32.totalorder %s480, %s481
      %p490 = scmp.eq.s32.totalorder %s124, 0
      %p491 = por %p489, %p490
      %p492 = scmp.ne.s32.totalorder %s480, %s481
      %p493 = scmp.eq.s32.totalorder %s125, 1
      %p494 = por %p492, %p493
      %p496 = scmp.ne.s32.totalorder %s481, %s495
      %p497 = scmp.eq.s32.totalorder %s125, 0
      %p498 = por %p496, %p497
      %s500 = sadd.s32 %s499, 1
      %p503 = scmp.eq.s32.totalorder %s119, 1
      %p504 = scmp.ne.s32.totalorder %s499, %s501
      %p505 = scmp.eq.s32.totalorder %s119, 0
      %p506 = por %p504, %p505
      %p507 = scmp.ne.s32.totalorder %s499, %s501
      %p508 = scmp.eq.s32.totalorder %s124, 1
      %p509 = por %p507, %p508
      %p510 = scmp.ne.s32.totalorder %s501, %s502
      %p511 = scmp.eq.s32.totalorder %s124, 0
      %p512 = por %p510, %p511
      %p513 = scmp.ne.s32.totalorder %s501, %s502
      %p514 = scmp.eq.s32.totalorder %s125, 1
      %p515 = por %p513, %p514
      %p517 = scmp.ne.s32.totalorder %s502, %s516
      %p518 = scmp.eq.s32.totalorder %s125, 0
      %p519 = por %p517, %p518
      %s521 = sadd.s32 %s520, 1
      %p524 = scmp.eq.s32.totalorder %s119, 1
      %p525 = scmp.ne.s32.totalorder %s520, %s522
      %p526 = scmp.eq.s32.totalorder %s119, 0
      %p527 = por %p525, %p526
      %p528 = scmp.ne.s32.totalorder %s520, %s522
      %p529 = scmp.eq.s32.totalorder %s124, 1
      %p530 = por %p528, %p529
      %p531 = scmp.ne.s32.totalorder %s522, %s523
      %p532 = scmp.eq.s32.totalorder %s124, 0
      %p533 = por %p531, %p532
      %p534 = scmp.ne.s32.totalorder %s522, %s523
      %p535 = scmp.eq.s32.totalorder %s125, 1
      %p536 = por %p534, %p535
      %p538 = scmp.ne.s32.totalorder %s523, %s537
      %p539 = scmp.eq.s32.totalorder %s125, 0
      %p540 = por %p538, %p539
      %s542 = sadd.s32 %s541, 1
      %p545 = scmp.eq.s32.totalorder %s119, 1
      %p546 = scmp.ne.s32.totalorder %s541, %s543
      %p547 = scmp.eq.s32.totalorder %s119, 0
      %p548 = por %p546, %p547
      %p549 = scmp.ne.s32.totalorder %s541, %s543
      %p550 = scmp.eq.s32.totalorder %s124, 1
      %p551 = por %p549, %p550
      %p552 = scmp.ne.s32.totalorder %s543, %s544
      %p553 = scmp.eq.s32.totalorder %s124, 0
      %p554 = por %p552, %p553
      %p555 = scmp.ne.s32.totalorder %s543, %s544
      %p556 = scmp.eq.s32.totalorder %s125, 1
      %p557 = por %p555, %p556
      %p559 = scmp.ne.s32.totalorder %s544, %s558
      %p560 = scmp.eq.s32.totalorder %s125, 0
      %p561 = por %p559, %p560
      %s563 = sadd.s32 %s562, 1
      %p566 = scmp.eq.s32.totalorder %s119, 1
      %p567 = scmp.ne.s32.totalorder %s562, %s564
      %p568 = scmp.eq.s32.totalorder %s119, 0
      %p569 = por %p567, %p568
      %p570 = scmp.ne.s32.totalorder %s562, %s564
      %p571 = scmp.eq.s32.totalorder %s124, 1
      %p572 = por %p570, %p571
      %p573 = scmp.ne.s32.totalorder %s564, %s565
      %p574 = scmp.eq.s32.totalorder %s124, 0
      %p575 = por %p573, %p574
      %p576 = scmp.ne.s32.totalorder %s564, %s565
      %p577 = scmp.eq.s32.totalorder %s125, 1
      %p578 = por %p576, %p577
      %p580 = scmp.ne.s32.totalorder %s565, %s579
      %p581 = scmp.eq.s32.totalorder %s125, 0
      %p582 = por %p580, %p581
      %s584 = sadd.s32 %s583, 1
      %p587 = scmp.eq.s32.totalorder %s119, 1
      %p588 = scmp.ne.s32.totalorder %s583, %s585
      %p589 = scmp.eq.s32.totalorder %s119, 0
      %p590 = por %p588, %p589
      %p591 = scmp.ne.s32.totalorder %s583, %s585
      %p592 = scmp.eq.s32.totalorder %s124, 1
      %p593 = por %p591, %p592
      %p594 = scmp.ne.s32.totalorder %s585, %s586
      %p595 = scmp.eq.s32.totalorder %s124, 0
      %p596 = por %p594, %p595
      %p597 = scmp.ne.s32.totalorder %s585, %s586
      %p598 = scmp.eq.s32.totalorder %s125, 1
      %p599 = por %p597, %p598
      %p601 = scmp.ne.s32.totalorder %s586, %s600
      %p602 = scmp.eq.s32.totalorder %s125, 0
      %p603 = por %p601, %p602
      %s605 = sadd.s32 %s604, 1
      %p608 = scmp.eq.s32.totalorder %s119, 1
      %p609 = scmp.ne.s32.totalorder %s604, %s606
      %p610 = scmp.eq.s32.totalorder %s119, 0
      %p611 = por %p609, %p610
      %p612 = scmp.ne.s32.totalorder %s604, %s606
      %p613 = scmp.eq.s32.totalorder %s124, 1
      %p614 = por %p612, %p613
      %p615 = scmp.ne.s32.totalorder %s606, %s607
      %p616 = scmp.eq.s32.totalorder %s124, 0
      %p617 = por %p615, %p616
      %p618 = scmp.ne.s32.totalorder %s606, %s607
      %p619 = scmp.eq.s32.totalorder %s125, 1
      %p620 = por %p618, %p619
      %p622 = scmp.ne.s32.totalorder %s607, %s621
      %p623 = scmp.eq.s32.totalorder %s125, 0
      %p624 = por %p622, %p623
      %s626 = sadd.s32 %s625, 1
      %p629 = scmp.eq.s32.totalorder %s119, 1
      %p630 = scmp.ne.s32.totalorder %s625, %s627
      %p631 = scmp.eq.s32.totalorder %s119, 0
      %p632 = por %p630, %p631
      %p633 = scmp.ne.s32.totalorder %s625, %s627
      %p634 = scmp.eq.s32.totalorder %s124, 1
      %p635 = por %p633, %p634
      %p636 = scmp.ne.s32.totalorder %s627, %s628
      %p637 = scmp.eq.s32.totalorder %s124, 0
      %p638 = por %p636, %p637
      %p639 = scmp.ne.s32.totalorder %s627, %s628
      %p640 = scmp.eq.s32.totalorder %s125, 1
      %p641 = por %p639, %p640
      %p643 = scmp.ne.s32.totalorder %s628, %s642
      %p644 = scmp.eq.s32.totalorder %s125, 0
      %p645 = por %p643, %p644
      %s647 = sadd.s32 %s646, 1
      %p650 = scmp.eq.s32.totalorder %s119, 1
      %p651 = scmp.ne.s32.totalorder %s646, %s648
      %p652 = scmp.eq.s32.totalorder %s119, 0
      %p653 = por %p651, %p652
      %p654 = scmp.ne.s32.totalorder %s646, %s648
      %p655 = scmp.eq.s32.totalorder %s124, 1
      %p656 = por %p654, %p655
      %p657 = scmp.ne.s32.totalorder %s648, %s649
      %p658 = scmp.eq.s32.totalorder %s124, 0
      %p659 = por %p657, %p658
      %p660 = scmp.ne.s32.totalorder %s648, %s649
      %p661 = scmp.eq.s32.totalorder %s125, 1
      %p662 = por %p660, %p661
      %p664 = scmp.ne.s32.totalorder %s649, %s663
      %p665 = scmp.eq.s32.totalorder %s125, 0
      %p666 = por %p664, %p665
      %s668 = sadd.s32 %s667, 1
      %p671 = scmp.eq.s32.totalorder %s119, 1
      %p672 = scmp.ne.s32.totalorder %s667, %s669
      %p673 = scmp.eq.s32.totalorder %s119, 0
      %p674 = por %p672, %p673
      %p675 = scmp.ne.s32.totalorder %s667, %s669
      %p676 = scmp.eq.s32.totalorder %s124, 1
      %p677 = por %p675, %p676
      %p678 = scmp.ne.s32.totalorder %s669, %s670
      %p679 = scmp.eq.s32.totalorder %s124, 0
      %p680 = por %p678, %p679
      %p681 = scmp.ne.s32.totalorder %s669, %s670
      %p682 = scmp.eq.s32.totalorder %s125, 1
      %p683 = por %p681, %p682
      %p685 = scmp.ne.s32.totalorder %s670, %s684
      %p686 = scmp.eq.s32.totalorder %s125, 0
      %p687 = por %p685, %p686
      %s689 = sadd.s32 %s688, 1
      %p692 = scmp.eq.s32.totalorder %s119, 1
      %p693 = scmp.ne.s32.totalorder %s688, %s690
      %p694 = scmp.eq.s32.totalorder %s119, 0
      %p695 = por %p693, %p694
      %p696 = scmp.ne.s32.totalorder %s688, %s690
      %p697 = scmp.eq.s32.totalorder %s124, 1
      %p698 = por %p696, %p697
      %p699 = scmp.ne.s32.totalorder %s690, %s691
      %p700 = scmp.eq.s32.totalorder %s124, 0
      %p701 = por %p699, %p700
      %p702 = scmp.ne.s32.totalorder %s690, %s691
      %p703 = scmp.eq.s32.totalorder %s125, 1
      %p704 = por %p702, %p703
      %p706 = scmp.ne.s32.totalorder %s691, %s705
      %p707 = scmp.eq.s32.totalorder %s125, 0
      %p708 = por %p706, %p707
      %s710 = sadd.s32 %s709, 1
      %p713 = scmp.eq.s32.totalorder %s119, 1
      %p714 = scmp.ne.s32.totalorder %s709, %s711
      %p715 = scmp.eq.s32.totalorder %s119, 0
      %p716 = por %p714, %p715
      %p717 = scmp.ne.s32.totalorder %s709, %s711
      %p718 = scmp.eq.s32.totalorder %s124, 1
      %p719 = por %p717, %p718
      %p720 = scmp.ne.s32.totalorder %s711, %s712
      %p721 = scmp.eq.s32.totalorder %s124, 0
      %p722 = por %p720, %p721
      %p723 = scmp.ne.s32.totalorder %s711, %s712
      %p724 = scmp.eq.s32.totalorder %s125, 1
      %p725 = por %p723, %p724
      %p727 = scmp.ne.s32.totalorder %s712, %s726
      %p728 = scmp.eq.s32.totalorder %s125, 0
      %p729 = por %p727, %p728
      %s731 = sadd.s32 %s730, 1
      %p734 = scmp.eq.s32.totalorder %s119, 1
      %p735 = scmp.ne.s32.totalorder %s730, %s732
      %p736 = scmp.eq.s32.totalorder %s119, 0
      %p737 = por %p735, %p736
      %p738 = scmp.ne.s32.totalorder %s730, %s732
      %p739 = scmp.eq.s32.totalorder %s124, 1
      %p740 = por %p738, %p739
      %p741 = scmp.ne.s32.totalorder %s732, %s733
      %p742 = scmp.eq.s32.totalorder %s124, 0
      %p743 = por %p741, %p742
      %p744 = scmp.ne.s32.totalorder %s732, %s733
      %p745 = scmp.eq.s32.totalorder %s125, 1
      %p746 = por %p744, %p745
      %p748 = scmp.ne.s32.totalorder %s733, %s747
      %p749 = scmp.eq.s32.totalorder %s125, 0
      %p750 = por %p748, %p749
      %s752 = sadd.s32 %s751, 1
      %p755 = scmp.eq.s32.totalorder %s119, 1
      %p756 = scmp.ne.s32.totalorder %s751, %s753
      %p757 = scmp.eq.s32.totalorder %s119, 0
      %p758 = por %p756, %p757
      %p759 = scmp.ne.s32.totalorder %s751, %s753
      %p760 = scmp.eq.s32.totalorder %s124, 1
      %p761 = por %p759, %p760
      %p762 = scmp.ne.s32.totalorder %s753, %s754
      %p763 = scmp.eq.s32.totalorder %s124, 0
      %p764 = por %p762, %p763
      %p765 = scmp.ne.s32.totalorder %s753, %s754
      %p766 = scmp.eq.s32.totalorder %s125, 1
      %p767 = por %p765, %p766
      %p769 = scmp.ne.s32.totalorder %s754, %s768
      %p770 = scmp.eq.s32.totalorder %s125, 0
      %p771 = por %p769, %p770
      %s773 = sadd.s32 %s772, 1
      %p776 = scmp.eq.s32.totalorder %s119, 1
      %p777 = scmp.ne.s32.totalorder %s772, %s774
      %p778 = scmp.eq.s32.totalorder %s119, 0
      %p779 = por %p777, %p778
      %p780 = scmp.ne.s32.totalorder %s772, %s774
      %p781 = scmp.eq.s32.totalorder %s124, 1
      %p782 = por %p780, %p781
      %p783 = scmp.ne.s32.totalorder %s774, %s775
      %p784 = scmp.eq.s32.totalorder %s124, 0
      %p785 = por %p783, %p784
      %p786 = scmp.ne.s32.totalorder %s774, %s775
      %p787 = scmp.eq.s32.totalorder %s125, 1
      %p788 = por %p786, %p787
      %p790 = scmp.ne.s32.totalorder %s775, %s789
      %p791 = scmp.eq.s32.totalorder %s125, 0
      %p792 = por %p790, %p791
      %s794 = sadd.s32 %s793, 1
      %p797 = scmp.eq.s32.totalorder %s119, 1
      %p798 = scmp.ne.s32.totalorder %s793, %s795
      %p799 = scmp.eq.s32.totalorder %s119, 0
      %p800 = por %p798, %p799
      %p801 = scmp.ne.s32.totalorder %s793, %s795
      %p802 = scmp.eq.s32.totalorder %s124, 1
      %p803 = por %p801, %p802
      %p804 = scmp.ne.s32.totalorder %s795, %s796
      %p805 = scmp.eq.s32.totalorder %s124, 0
      %p806 = por %p804, %p805
      %p807 = scmp.ne.s32.totalorder %s795, %s796
      %p808 = scmp.eq.s32.totalorder %s125, 1
      %p809 = por %p807, %p808
      %p811 = scmp.ne.s32.totalorder %s796, %s810
      %p812 = scmp.eq.s32.totalorder %s125, 0
      %p813 = por %p811, %p812
      %s815 = sadd.s32 %s814, 1
      %p818 = scmp.eq.s32.totalorder %s119, 1
      %p819 = scmp.ne.s32.totalorder %s814, %s816
      %p820 = scmp.eq.s32.totalorder %s119, 0
      %p821 = por %p819, %p820
      %p822 = scmp.ne.s32.totalorder %s814, %s816
      %p823 = scmp.eq.s32.totalorder %s124, 1
      %p824 = por %p822, %p823
      %p825 = scmp.ne.s32.totalorder %s816, %s817
      %p826 = scmp.eq.s32.totalorder %s124, 0
      %p827 = por %p825, %p826
      %p828 = scmp.ne.s32.totalorder %s816, %s817
      %p829 = scmp.eq.s32.totalorder %s125, 1
      %p830 = por %p828, %p829
      %p832 = scmp.ne.s32.totalorder %s817, %s831
      %p833 = scmp.eq.s32.totalorder %s125, 0
      %p834 = por %p832, %p833
      %s836 = sadd.s32 %s835, 1
      %p839 = scmp.eq.s32.totalorder %s119, 1
      %p840 = scmp.ne.s32.totalorder %s835, %s837
      %p841 = scmp.eq.s32.totalorder %s119, 0
      %p842 = por %p840, %p841
      %p843 = scmp.ne.s32.totalorder %s835, %s837
      %p844 = scmp.eq.s32.totalorder %s124, 1
      %p845 = por %p843, %p844
      %p846 = scmp.ne.s32.totalorder %s837, %s838
      %p847 = scmp.eq.s32.totalorder %s124, 0
      %p848 = por %p846, %p847
      %p849 = scmp.ne.s32.totalorder %s837, %s838
      %p850 = scmp.eq.s32.totalorder %s125, 1
      %p851 = por %p849, %p850
      %p853 = scmp.ne.s32.totalorder %s838, %s852
      %p854 = scmp.eq.s32.totalorder %s125, 0
      %p855 = por %p853, %p854
      %s857 = sadd.s32 %s856, 1
      %p860 = scmp.eq.s32.totalorder %s119, 1
      %p861 = scmp.ne.s32.totalorder %s856, %s858
      %p862 = scmp.eq.s32.totalorder %s119, 0
      %p863 = por %p861, %p862
      %p864 = scmp.ne.s32.totalorder %s856, %s858
      %p865 = scmp.eq.s32.totalorder %s124, 1
      %p866 = por %p864, %p865
      %p867 = scmp.ne.s32.totalorder %s858, %s859
      %p868 = scmp.eq.s32.totalorder %s124, 0
      %p869 = por %p867, %p868
      %p870 = scmp.ne.s32.totalorder %s858, %s859
      %p871 = scmp.eq.s32.totalorder %s125, 1
      %p872 = por %p870, %p871
      %p874 = scmp.ne.s32.totalorder %s859, %s873
      %p875 = scmp.eq.s32.totalorder %s125, 0
      %p876 = por %p874, %p875
      %s878 = sadd.s32 %s877, 1
      %p881 = scmp.eq.s32.totalorder %s119, 1
      %p882 = scmp.ne.s32.totalorder %s877, %s879
      %p883 = scmp.eq.s32.totalorder %s119, 0
      %p884 = por %p882, %p883
      %p885 = scmp.ne.s32.totalorder %s877, %s879
      %p886 = scmp.eq.s32.totalorder %s124, 1
      %p887 = por %p885, %p886
      %p888 = scmp.ne.s32.totalorder %s879, %s880
      %p889 = scmp.eq.s32.totalorder %s124, 0
      %p890 = por %p888, %p889
      %p891 = scmp.ne.s32.totalorder %s879, %s880
      %p892 = scmp.eq.s32.totalorder %s125, 1
      %p893 = por %p891, %p892
      %p895 = scmp.ne.s32.totalorder %s880, %s894
      %p896 = scmp.eq.s32.totalorder %s125, 0
      %p897 = por %p895, %p896
      %s899 = sadd.s32 %s898, 1
      %p902 = scmp.eq.s32.totalorder %s119, 1
      %p903 = scmp.ne.s32.totalorder %s898, %s900
      %p904 = scmp.eq.s32.totalorder %s119, 0
      %p905 = por %p903, %p904
      %p906 = scmp.ne.s32.totalorder %s898, %s900
      %p907 = scmp.eq.s32.totalorder %s124, 1
      %p908 = por %p906, %p907
      %p909 = scmp.ne.s32.totalorder %s900, %s901
      %p910 = scmp.eq.s32.totalorder %s124, 0
      %p911 = por %p909, %p910
      %p912 = scmp.ne.s32.totalorder %s900, %s901
      %p913 = scmp.eq.s32.totalorder %s125, 1
      %p914 = por %p912, %p913
      %p916 = scmp.ne.s32.totalorder %s901, %s915
      %p917 = scmp.eq.s32.totalorder %s125, 0
      %p918 = por %p916, %p917
      %s920 = sadd.s32 %s919, 1
      %p923 = scmp.eq.s32.totalorder %s119, 1
      %p924 = scmp.ne.s32.totalorder %s919, %s921
      %p925 = scmp.eq.s32.totalorder %s119, 0
      %p926 = por %p924, %p925
      %p927 = scmp.ne.s32.totalorder %s919, %s921
      %p928 = scmp.eq.s32.totalorder %s124, 1
      %p929 = por %p927, %p928
      %p930 = scmp.ne.s32.totalorder %s921, %s922
      %p931 = scmp.eq.s32.totalorder %s124, 0
      %p932 = por %p930, %p931
      %p933 = scmp.ne.s32.totalorder %s921, %s922
      %p934 = scmp.eq.s32.totalorder %s125, 1
      %p935 = por %p933, %p934
      %p937 = scmp.ne.s32.totalorder %s922, %s936
      %p938 = scmp.eq.s32.totalorder %s125, 0
      %p939 = por %p937, %p938
      %s941 = sadd.s32 %s940, 1
      %p944 = scmp.eq.s32.totalorder %s119, 1
      %p945 = scmp.ne.s32.totalorder %s940, %s942
      %p946 = scmp.eq.s32.totalorder %s119, 0
      %p947 = por %p945, %p946
      %p948 = scmp.ne.s32.totalorder %s940, %s942
      %p949 = scmp.eq.s32.totalorder %s124, 1
      %p950 = por %p948, %p949
      %p951 = scmp.ne.s32.totalorder %s942, %s943
      %p952 = scmp.eq.s32.totalorder %s124, 0
      %p953 = por %p951, %p952
      %p954 = scmp.ne.s32.totalorder %s942, %s943
      %p955 = scmp.eq.s32.totalorder %s125, 1
      %p956 = por %p954, %p955
      %p958 = scmp.ne.s32.totalorder %s943, %s957
      %p959 = scmp.eq.s32.totalorder %s125, 0
      %p960 = por %p958, %p959
      %s962 = sadd.s32 %s961, 1
      %p965 = scmp.eq.s32.totalorder %s119, 1
      %p966 = scmp.ne.s32.totalorder %s961, %s963
      %p967 = scmp.eq.s32.totalorder %s119, 0
      %p968 = por %p966, %p967
      %p969 = scmp.ne.s32.totalorder %s961, %s963
      %p970 = scmp.eq.s32.totalorder %s124, 1
      %p971 = por %p969, %p970
      %p972 = scmp.ne.s32.totalorder %s963, %s964
      %p973 = scmp.eq.s32.totalorder %s124, 0
      %p974 = por %p972, %p973
      %p975 = scmp.ne.s32.totalorder %s963, %s964
      %p976 = scmp.eq.s32.totalorder %s125, 1
      %p977 = por %p975, %p976
      %p979 = scmp.ne.s32.totalorder %s964, %s978
      %p980 = scmp.eq.s32.totalorder %s125, 0
      %p981 = por %p979, %p980
      %s983 = sadd.s32 %s982, 1
      %p986 = scmp.eq.s32.totalorder %s119, 1
      %p987 = scmp.ne.s32.totalorder %s982, %s984
      %p988 = scmp.eq.s32.totalorder %s119, 0
      %p989 = por %p987, %p988
      %p990 = scmp.ne.s32.totalorder %s982, %s984
      %p991 = scmp.eq.s32.totalorder %s124, 1
      %p992 = por %p990, %p991
      %p993 = scmp.ne.s32.totalorder %s984, %s985
      %p994 = scmp.eq.s32.totalorder %s124, 0
      %p995 = por %p993, %p994
      %p996 = scmp.ne.s32.totalorder %s984, %s985
      %p997 = scmp.eq.s32.totalorder %s125, 1
      %p998 = por %p996, %p997
      %p1000 = scmp.ne.s32.totalorder %s985, %s999
      %p1001 = scmp.eq.s32.totalorder %s125, 0
      %p1002 = por %p1000, %p1001
      %s1004 = sadd.s32 %s1003, 1
      %p1007 = scmp.eq.s32.totalorder %s119, 1
      %p1008 = scmp.ne.s32.totalorder %s1003, %s1005
      %p1009 = scmp.eq.s32.totalorder %s119, 0
      %p1010 = por %p1008, %p1009
      %p1011 = scmp.ne.s32.totalorder %s1003, %s1005
      %p1012 = scmp.eq.s32.totalorder %s124, 1
      %p1013 = por %p1011, %p1012
      %p1014 = scmp.ne.s32.totalorder %s1005, %s1006
      %p1015 = scmp.eq.s32.totalorder %s124, 0
      %p1016 = por %p1014, %p1015
      %p1017 = scmp.ne.s32.totalorder %s1005, %s1006
      %p1018 = scmp.eq.s32.totalorder %s125, 1
      %p1019 = por %p1017, %p1018
      %p1021 = scmp.ne.s32.totalorder %s1006, %s1020
      %p1022 = scmp.eq.s32.totalorder %s125, 0
      %p1023 = por %p1021, %p1022
      %s1025 = sadd.s32 %s1024, 1
      %p1028 = scmp.eq.s32.totalorder %s119, 1
      %p1029 = scmp.ne.s32.totalorder %s1024, %s1026
      %p1030 = scmp.eq.s32.totalorder %s119, 0
      %p1031 = por %p1029, %p1030
      %p1032 = scmp.ne.s32.totalorder %s1024, %s1026
      %p1033 = scmp.eq.s32.totalorder %s124, 1
      %p1034 = por %p1032, %p1033
      %p1035 = scmp.ne.s32.totalorder %s1026, %s1027
      %p1036 = scmp.eq.s32.totalorder %s124, 0
      %p1037 = por %p1035, %p1036
      %p1038 = scmp.ne.s32.totalorder %s1026, %s1027
      %p1039 = scmp.eq.s32.totalorder %s125, 1
      %p1040 = por %p1038, %p1039
      %p1042 = scmp.ne.s32.totalorder %s1027, %s1041
      %p1043 = scmp.eq.s32.totalorder %s125, 0
      %p1044 = por %p1042, %p1043
      %s1046 = sadd.s32 %s1045, 1
      %p1049 = scmp.eq.s32.totalorder %s119, 1
      %p1050 = scmp.ne.s32.totalorder %s1045, %s1047
      %p1051 = scmp.eq.s32.totalorder %s119, 0
      %p1052 = por %p1050, %p1051
      %p1053 = scmp.ne.s32.totalorder %s1045, %s1047
      %p1054 = scmp.eq.s32.totalorder %s124, 1
      %p1055 = por %p1053, %p1054
      %p1056 = scmp.ne.s32.totalorder %s1047, %s1048
      %p1057 = scmp.eq.s32.totalorder %s124, 0
      %p1058 = por %p1056, %p1057
      %p1059 = scmp.ne.s32.totalorder %s1047, %s1048
      %p1060 = scmp.eq.s32.totalorder %s125, 1
      %p1061 = por %p1059, %p1060
      %p1063 = scmp.ne.s32.totalorder %s1048, %s1062
      %p1064 = scmp.eq.s32.totalorder %s125, 0
      %p1065 = por %p1063, %p1064
      %s1067 = sadd.s32 %s1066, 1
      %p1070 = scmp.eq.s32.totalorder %s119, 1
      %p1071 = scmp.ne.s32.totalorder %s1066, %s1068
      %p1072 = scmp.eq.s32.totalorder %s119, 0
      %p1073 = por %p1071, %p1072
      %p1074 = scmp.ne.s32.totalorder %s1066, %s1068
      %p1075 = scmp.eq.s32.totalorder %s124, 1
      %p1076 = por %p1074, %p1075
      %p1077 = scmp.ne.s32.totalorder %s1068, %s1069
      %p1078 = scmp.eq.s32.totalorder %s124, 0
      %p1079 = por %p1077, %p1078
      %p1080 = scmp.ne.s32.totalorder %s1068, %s1069
      %p1081 = scmp.eq.s32.totalorder %s125, 1
      %p1082 = por %p1080, %p1081
      %p1084 = scmp.ne.s32.totalorder %s1069, %s1083
      %p1085 = scmp.eq.s32.totalorder %s125, 0
      %p1086 = por %p1084, %p1085
      %s1088 = sadd.s32 %s1087, 1
      %p1091 = scmp.eq.s32.totalorder %s119, 1
      %p1092 = scmp.ne.s32.totalorder %s1087, %s1089
      %p1093 = scmp.eq.s32.totalorder %s119, 0
      %p1094 = por %p1092, %p1093
      %p1095 = scmp.ne.s32.totalorder %s1087, %s1089
      %p1096 = scmp.eq.s32.totalorder %s124, 1
      %p1097 = por %p1095, %p1096
      %p1098 = scmp.ne.s32.totalorder %s1089, %s1090
      %p1099 = scmp.eq.s32.totalorder %s124, 0
      %p1100 = por %p1098, %p1099
      %p1101 = scmp.ne.s32.totalorder %s1089, %s1090
      %p1102 = scmp.eq.s32.totalorder %s125, 1
      %p1103 = por %p1101, %p1102
      %p1105 = scmp.ne.s32.totalorder %s1090, %s1104
      %p1106 = scmp.eq.s32.totalorder %s125, 0
      %p1107 = por %p1105, %p1106
      %s1109 = sadd.s32 %s1108, 1
      %p1112 = scmp.eq.s32.totalorder %s119, 1
      %p1113 = scmp.ne.s32.totalorder %s1108, %s1110
      %p1114 = scmp.eq.s32.totalorder %s119, 0
      %p1115 = por %p1113, %p1114
      %p1116 = scmp.ne.s32.totalorder %s1108, %s1110
      %p1117 = scmp.eq.s32.totalorder %s124, 1
      %p1118 = por %p1116, %p1117
      %p1119 = scmp.ne.s32.totalorder %s1110, %s1111
      %p1120 = scmp.eq.s32.totalorder %s124, 0
      %p1121 = por %p1119, %p1120
      %p1122 = scmp.ne.s32.totalorder %s1110, %s1111
      %p1123 = scmp.eq.s32.totalorder %s125, 1
      %p1124 = por %p1122, %p1123
      %p1126 = scmp.ne.s32.totalorder %s1111, %s1125
      %p1127 = scmp.eq.s32.totalorder %s125, 0
      %p1128 = por %p1126, %p1127
      %s1130 = sadd.s32 %s1129, 1
      %p1133 = scmp.eq.s32.totalorder %s119, 1
      %p1134 = scmp.ne.s32.totalorder %s1129, %s1131
      %p1135 = scmp.eq.s32.totalorder %s119, 0
      %p1136 = por %p1134, %p1135
      %p1137 = scmp.ne.s32.totalorder %s1129, %s1131
      %p1138 = scmp.eq.s32.totalorder %s124, 1
      %p1139 = por %p1137, %p1138
      %p1140 = scmp.ne.s32.totalorder %s1131, %s1132
      %p1141 = scmp.eq.s32.totalorder %s124, 0
      %p1142 = por %p1140, %p1141
      %p1143 = scmp.ne.s32.totalorder %s1131, %s1132
      %p1144 = scmp.eq.s32.totalorder %s125, 1
      %p1145 = por %p1143, %p1144
      %p1147 = scmp.ne.s32.totalorder %s1132, %s1146
      %p1148 = scmp.eq.s32.totalorder %s125, 0
      %p1149 = por %p1147, %p1148
      %s1151 = sadd.s32 %s1150, 1
      %p1154 = scmp.eq.s32.totalorder %s119, 1
      %p1155 = scmp.ne.s32.totalorder %s1150, %s1152
      %p1156 = scmp.eq.s32.totalorder %s119, 0
      %p1157 = por %p1155, %p1156
      %p1158 = scmp.ne.s32.totalorder %s1150, %s1152
      %p1159 = scmp.eq.s32.totalorder %s124, 1
      %p1160 = por %p1158, %p1159
      %p1161 = scmp.ne.s32.totalorder %s1152, %s1153
      %p1162 = scmp.eq.s32.totalorder %s124, 0
      %p1163 = por %p1161, %p1162
      %p1164 = scmp.ne.s32.totalorder %s1152, %s1153
      %p1165 = scmp.eq.s32.totalorder %s125, 1
      %p1166 = por %p1164, %p1165
      %p1168 = scmp.ne.s32.totalorder %s1153, %s1167
      %p1169 = scmp.eq.s32.totalorder %s125, 0
      %p1170 = por %p1168, %p1169
      %s1172 = sadd.s32 %s1171, 1
      %p1175 = scmp.eq.s32.totalorder %s119, 1
      %p1176 = scmp.ne.s32.totalorder %s1171, %s1173
      %p1177 = scmp.eq.s32.totalorder %s119, 0
      %p1178 = por %p1176, %p1177
      %p1179 = scmp.ne.s32.totalorder %s1171, %s1173
      %p1180 = scmp.eq.s32.totalorder %s124, 1
      %p1181 = por %p1179, %p1180
      %p1182 = scmp.ne.s32.totalorder %s1173, %s1174
      %p1183 = scmp.eq.s32.totalorder %s124, 0
      %p1184 = por %p1182, %p1183
      %p1185 = scmp.ne.s32.totalorder %s1173, %s1174
      %p1186 = scmp.eq.s32.totalorder %s125, 1
      %p1187 = por %p1185, %p1186
      %p1189 = scmp.ne.s32.totalorder %s1174, %s1188
      %p1190 = scmp.eq.s32.totalorder %s125, 0
      %p1191 = por %p1189, %p1190
      %s1193 = sadd.s32 %s1192, 1
      %p1196 = scmp.eq.s32.totalorder %s119, 1
      %p1197 = scmp.ne.s32.totalorder %s1192, %s1194
      %p1198 = scmp.eq.s32.totalorder %s119, 0
      %p1199 = por %p1197, %p1198
      %p1200 = scmp.ne.s32.totalorder %s1192, %s1194
      %p1201 = scmp.eq.s32.totalorder %s124, 1
      %p1202 = por %p1200, %p1201
      %p1203 = scmp.ne.s32.totalorder %s1194, %s1195
      %p1204 = scmp.eq.s32.totalorder %s124, 0
      %p1205 = por %p1203, %p1204
      %p1206 = scmp.ne.s32.totalorder %s1194, %s1195
      %p1207 = scmp.eq.s32.totalorder %s125, 1
      %p1208 = por %p1206, %p1207
      %p1210 = scmp.ne.s32.totalorder %s1195, %s1209
      %p1211 = scmp.eq.s32.totalorder %s125, 0
      %p1212 = por %p1210, %p1211
      %s1214 = sadd.s32 %s1213, 1
      %p1217 = scmp.eq.s32.totalorder %s119, 1
      %p1218 = scmp.ne.s32.totalorder %s1213, %s1215
      %p1219 = scmp.eq.s32.totalorder %s119, 0
      %p1220 = por %p1218, %p1219
      %p1221 = scmp.ne.s32.totalorder %s1213, %s1215
      %p1222 = scmp.eq.s32.totalorder %s124, 1
      %p1223 = por %p1221, %p1222
      %p1224 = scmp.ne.s32.totalorder %s1215, %s1216
      %p1225 = scmp.eq.s32.totalorder %s124, 0
      %p1226 = por %p1224, %p1225
      %p1227 = scmp.ne.s32.totalorder %s1215, %s1216
      %p1228 = scmp.eq.s32.totalorder %s125, 1
      %p1229 = por %p1227, %p1228
      %p1231 = scmp.ne.s32.totalorder %s1216, %s1230
      %p1232 = scmp.eq.s32.totalorder %s125, 0
      %p1233 = por %p1231, %p1232
      %s1234 = ssub.s32 %s119, %s126
      %p1235 = scmp.eq.s32.totalorder %s1234, 0
      %s1237 = sadd.s32 %s1236, 1
      %s1238 = scalar_select %p1235, %s1236, %s1237
      %p1241 = pneg %p1235
      %p1242 = scmp.eq.s32.totalorder %s119, 1
      %p1243 = por %p1241, %p1242
      %p1244 = scmp.ne.s32.totalorder %s1236, %s1239
      %p1245 = scmp.eq.s32.totalorder %s119, 0
      %p1246 = por %p1244, %p1245
      %p1247 = scmp.ne.s32.totalorder %s1236, %s1239
      %p1248 = scmp.eq.s32.totalorder %s124, 1
      %p1249 = por %p1247, %p1248
      %p1250 = scmp.ne.s32.totalorder %s1239, %s1240
      %p1251 = scmp.eq.s32.totalorder %s124, 0
      %p1252 = por %p1250, %p1251
      %p1253 = scmp.ne.s32.totalorder %s1239, %s1240
      %p1254 = scmp.eq.s32.totalorder %s125, 1
      %p1255 = por %p1253, %p1254
      %p1257 = scmp.ne.s32.totalorder %s1240, %s1256
      %p1258 = scmp.eq.s32.totalorder %s125, 0
      %p1259 = por %p1257, %p1258
      %s1260 = ssub.s32 %s119, %s126
      %p1261 = scmp.eq.s32.totalorder %s1260, 0
      %s1263 = sadd.s32 %s1262, 1
      %s1264 = scalar_select %p1261, %s1262, %s1263
      %p1267 = pneg %p1261
      %p1268 = scmp.eq.s32.totalorder %s119, 1
      %p1269 = por %p1267, %p1268
      %p1270 = scmp.ne.s32.totalorder %s1262, %s1265
      %p1271 = scmp.eq.s32.totalorder %s119, 0
      %p1272 = por %p1270, %p1271
      %p1273 = scmp.ne.s32.totalorder %s1262, %s1265
      %p1274 = scmp.eq.s32.totalorder %s124, 1
      %p1275 = por %p1273, %p1274
      %p1276 = scmp.ne.s32.totalorder %s1265, %s1266
      %p1277 = scmp.eq.s32.totalorder %s124, 0
      %p1278 = por %p1276, %p1277
      %p1279 = scmp.ne.s32.totalorder %s1265, %s1266
      %p1280 = scmp.eq.s32.totalorder %s125, 1
      %p1281 = por %p1279, %p1280
      %p1283 = scmp.ne.s32.totalorder %s1266, %s1282
      %p1284 = scmp.eq.s32.totalorder %s125, 0
      %p1285 = por %p1283, %p1284
      %p1286 = scmp.le.s32.totalorder 1, %s119
      %p1287 = scmp.lt.s32.totalorder %s119, 3
      %p1288 = pnand %p1286, %p1287
      %p1289 = pneg %p1288
      // Predicated region
      $region9: #{_lambda_.1} parent=5 // pred_check
        _
      $region10: #{_lambda_.1} parent=5 // pred_check_branch
        %1291 = sbr.rel (%p1288) target = $region12
      $region11: #{_lambda_.1} parent=5 // pred_region
        %s1292 = ssub.s32 %s119, 1
        // Predicated region
        $region13: #{_lambda_.1} parent=11 // pred_check
          %p1293 = pneg %p192
        $region14: #{_lambda_.1} parent=11 // pred_check_branch
          %1295 = sbr.rel (%p1293) target = $region16
        $region15: #{_lambda_.1} parent=11 // pred_region
          _
        $region16: #{_lambda_.1} parent=11 // pred_fallthru
          _
        // Predicated region
        $region17: #{_lambda_.1} parent=11 // pred_check
          %p1296 = pneg %p239
        $region18: #{_lambda_.1} parent=11 // pred_check_branch
          %1298 = sbr.rel (%p1296) target = $region20
        $region19: #{_lambda_.1} parent=11 // pred_region
          _
        $region20: #{_lambda_.1} parent=11 // pred_fallthru
          _
        // Predicated region
        $region21: #{_lambda_.1} parent=11 // pred_check
          %p1299 = pneg %p260
        $region22: #{_lambda_.1} parent=11 // pred_check_branch
          %1301 = sbr.rel (%p1299) target = $region24
        $region23: #{_lambda_.1} parent=11 // pred_region
          _
        $region24: #{_lambda_.1} parent=11 // pred_fallthru
          _
        // Predicated region
        $region25: #{_lambda_.1} parent=11 // pred_check
          %p1302 = pneg %p281
        $region26: #{_lambda_.1} parent=11 // pred_check_branch
          %1304 = sbr.rel (%p1302) target = $region28
        $region27: #{_lambda_.1} parent=11 // pred_region
          _
        $region28: #{_lambda_.1} parent=11 // pred_fallthru
          _
        // Predicated region
        $region29: #{_lambda_.1} parent=11 // pred_check
          %p1305 = pneg %p302
        $region30: #{_lambda_.1} parent=11 // pred_check_branch
          %1307 = sbr.rel (%p1305) target = $region32
        $region31: #{_lambda_.1} parent=11 // pred_region
          _
        $region32: #{_lambda_.1} parent=11 // pred_fallthru
          _
        // Predicated region
        $region33: #{_lambda_.1} parent=11 // pred_check
          %p1308 = pneg %p323
        $region34: #{_lambda_.1} parent=11 // pred_check_branch
          %1310 = sbr.rel (%p1308) target = $region36
        $region35: #{_lambda_.1} parent=11 // pred_region
          _
        $region36: #{_lambda_.1} parent=11 // pred_fallthru
          _
        // Predicated region
        $region37: #{_lambda_.1} parent=11 // pred_check
          %p1311 = pneg %p344
        $region38: #{_lambda_.1} parent=11 // pred_check_branch
          %1313 = sbr.rel (%p1311) target = $region40
        $region39: #{_lambda_.1} parent=11 // pred_region
          %s1315 = ssub.s32 16, 16
          %1316 = vsyncadd [#allocation3], %s1315
          %s1318 = sshll.u32 [#allocation2], 4
          %s1319 = int_to_ptr.vmem [resolvable:$true] %s1318
          %1321 = dma.hbm_to_vmem [thread:$0]  %s19, 16, %s1319, [#allocation3]
        $region40: #{_lambda_.1} parent=11 // pred_fallthru
          _
        // Predicated region
        $region41: #{_lambda_.1} parent=11 // pred_check
          %p1322 = pneg %p365
        $region42: #{_lambda_.1} parent=11 // pred_check_branch
          %1324 = sbr.rel (%p1322) target = $region44
        $region43: #{_lambda_.1} parent=11 // pred_region
          _
        $region44: #{_lambda_.1} parent=11 // pred_fallthru
          _
        // Predicated region
        $region45: #{_lambda_.1} parent=11 // pred_check
          %p1325 = pneg %p386
        $region46: #{_lambda_.1} parent=11 // pred_check_branch
          %1327 = sbr.rel (%p1325) target = $region48
        $region47: #{_lambda_.1} parent=11 // pred_region
          %s1329 = ssub.s32 16, 16
          %1330 = vsyncadd [#allocation5], %s1329
          %s1332 = sshll.u32 [#allocation4], 4
          %s1333 = int_to_ptr.vmem [resolvable:$true] %s1332
          %1335 = dma.hbm_to_vmem [thread:$0]  %s23, 16, %s1333, [#allocation5]
        $region48: #{_lambda_.1} parent=11 // pred_fallthru
          _
        // Predicated region
        $region49: #{_lambda_.1} parent=11 // pred_check
          %p1336 = pneg %p407
        $region50: #{_lambda_.1} parent=11 // pred_check_branch
          %1338 = sbr.rel (%p1336) target = $region52
        $region51: #{_lambda_.1} parent=11 // pred_region
          _
        $region52: #{_lambda_.1} parent=11 // pred_fallthru
          _
        // Predicated region
        $region53: #{_lambda_.1} parent=11 // pred_check
          %p1339 = pneg %p428
        $region54: #{_lambda_.1} parent=11 // pred_check_branch
          %1341 = sbr.rel (%p1339) target = $region56
        $region55: #{_lambda_.1} parent=11 // pred_region
          %s1343 = ssub.s32 16, 16
          %1344 = vsyncadd [#allocation5], %s1343
          %s1346 = sshll.u32 [#allocation6], 4
          %s1347 = int_to_ptr.vmem [resolvable:$true] %s1346
          %1349 = dma.hbm_to_vmem [thread:$0]  %s27, 16, %s1347, [#allocation5]
        $region56: #{_lambda_.1} parent=11 // pred_fallthru
          _
        // Predicated region
        $region57: #{_lambda_.1} parent=11 // pred_check
          %p1350 = pneg %p449
        $region58: #{_lambda_.1} parent=11 // pred_check_branch
          %1352 = sbr.rel (%p1350) target = $region60
        $region59: #{_lambda_.1} parent=11 // pred_region
          _
        $region60: #{_lambda_.1} parent=11 // pred_fallthru
          _
        // Predicated region
        $region61: #{_lambda_.1} parent=11 // pred_check
          %p1353 = pneg %p470
        $region62: #{_lambda_.1} parent=11 // pred_check_branch
          %1355 = sbr.rel (%p1353) target = $region64
        $region63: #{_lambda_.1} parent=11 // pred_region
          _
        $region64: #{_lambda_.1} parent=11 // pred_fallthru
          _
        // Predicated region
        $region65: #{_lambda_.1} parent=11 // pred_check
          %p1356 = pneg %p491
        $region66: #{_lambda_.1} parent=11 // pred_check_branch
          %1358 = sbr.rel (%p1356) target = $region68
        $region67: #{_lambda_.1} parent=11 // pred_region
          %s1360 = ssub.s32 16, 16
          %1361 = vsyncadd [#allocation8], %s1360
          %s1363 = sshll.u32 [#allocation7], 4
          %s1364 = int_to_ptr.vmem [resolvable:$true] %s1363
          %1366 = dma.hbm_to_vmem [thread:$0]  %s33, 16, %s1364, [#allocation8]
        $region68: #{_lambda_.1} parent=11 // pred_fallthru
          _
        // Predicated region
        $region69: #{_lambda_.1} parent=11 // pred_check
          %p1367 = pneg %p512
        $region70: #{_lambda_.1} parent=11 // pred_check_branch
          %1369 = sbr.rel (%p1367) target = $region72
        $region71: #{_lambda_.1} parent=11 // pred_region
          _
        $region72: #{_lambda_.1} parent=11 // pred_fallthru
          _
        // Predicated region
        $region73: #{_lambda_.1} parent=11 // pred_check
          %p1370 = pneg %p533
        $region74: #{_lambda_.1} parent=11 // pred_check_branch
          %1372 = sbr.rel (%p1370) target = $region76
        $region75: #{_lambda_.1} parent=11 // pred_region
          %s1374 = ssub.s32 16, 16
          %1375 = vsyncadd [#allocation8], %s1374
          %s1377 = sshll.u32 [#allocation9], 4
          %s1378 = int_to_ptr.vmem [resolvable:$true] %s1377
          %1380 = dma.hbm_to_vmem [thread:$0]  %s37, 16, %s1378, [#allocation8]
        $region76: #{_lambda_.1} parent=11 // pred_fallthru
          _
        // Predicated region
        $region77: #{_lambda_.1} parent=11 // pred_check
          %p1381 = pneg %p554
        $region78: #{_lambda_.1} parent=11 // pred_check_branch
          %1383 = sbr.rel (%p1381) target = $region80
        $region79: #{_lambda_.1} parent=11 // pred_region
          _
        $region80: #{_lambda_.1} parent=11 // pred_fallthru
          _
        // Predicated region
        $region81: #{_lambda_.1} parent=11 // pred_check
          %p1384 = pneg %p575
        $region82: #{_lambda_.1} parent=11 // pred_check_branch
          %1386 = sbr.rel (%p1384) target = $region84
        $region83: #{_lambda_.1} parent=11 // pred_region
          _
        $region84: #{_lambda_.1} parent=11 // pred_fallthru
          _
        // Predicated region
        $region85: #{_lambda_.1} parent=11 // pred_check
          %p1387 = pneg %p596
        $region86: #{_lambda_.1} parent=11 // pred_check_branch
          %1389 = sbr.rel (%p1387) target = $region88
        $region87: #{_lambda_.1} parent=11 // pred_region
          _
        $region88: #{_lambda_.1} parent=11 // pred_fallthru
          _
        // Predicated region
        $region89: #{_lambda_.1} parent=11 // pred_check
          %p1390 = pneg %p617
        $region90: #{_lambda_.1} parent=11 // pred_check_branch
          %1392 = sbr.rel (%p1390) target = $region92
        $region91: #{_lambda_.1} parent=11 // pred_region
          _
        $region92: #{_lambda_.1} parent=11 // pred_fallthru
          _
        // Predicated region
        $region93: #{_lambda_.1} parent=11 // pred_check
          %p1393 = pneg %p638
        $region94: #{_lambda_.1} parent=11 // pred_check_branch
          %1395 = sbr.rel (%p1393) target = $region96
        $region95: #{_lambda_.1} parent=11 // pred_region
          _
        $region96: #{_lambda_.1} parent=11 // pred_fallthru
          _
        // Predicated region
        $region97: #{_lambda_.1} parent=11 // pred_check
          %p1396 = pneg %p659
        $region98: #{_lambda_.1} parent=11 // pred_check_branch
          %1398 = sbr.rel (%p1396) target = $region100
        $region99: #{_lambda_.1} parent=11 // pred_region
          _
        $region100: #{_lambda_.1} parent=11 // pred_fallthru
          _
        // Predicated region
        $region101: #{_lambda_.1} parent=11 // pred_check
          %p1399 = pneg %p680
        $region102: #{_lambda_.1} parent=11 // pred_check_branch
          %1401 = sbr.rel (%p1399) target = $region104
        $region103: #{_lambda_.1} parent=11 // pred_region
          _
        $region104: #{_lambda_.1} parent=11 // pred_fallthru
          _
        // Predicated region
        $region105: #{_lambda_.1} parent=11 // pred_check
          %p1402 = pneg %p701
        $region106: #{_lambda_.1} parent=11 // pred_check_branch
          %1404 = sbr.rel (%p1402) target = $region108
        $region107: #{_lambda_.1} parent=11 // pred_region
          _
        $region108: #{_lambda_.1} parent=11 // pred_fallthru
          _
        // Predicated region
        $region109: #{_lambda_.1} parent=11 // pred_check
          %p1405 = pneg %p722
        $region110: #{_lambda_.1} parent=11 // pred_check_branch
          %1407 = sbr.rel (%p1405) target = $region112
        $region111: #{_lambda_.1} parent=11 // pred_region
          _
        $region112: #{_lambda_.1} parent=11 // pred_fallthru
          _
        // Predicated region
        $region113: #{_lambda_.1} parent=11 // pred_check
          %p1408 = pneg %p743
        $region114: #{_lambda_.1} parent=11 // pred_check_branch
          %1410 = sbr.rel (%p1408) target = $region116
        $region115: #{_lambda_.1} parent=11 // pred_region
          _
        $region116: #{_lambda_.1} parent=11 // pred_fallthru
          _
        // Predicated region
        $region117: #{_lambda_.1} parent=11 // pred_check
          %p1411 = pneg %p764
        $region118: #{_lambda_.1} parent=11 // pred_check_branch
          %1413 = sbr.rel (%p1411) target = $region120
        $region119: #{_lambda_.1} parent=11 // pred_region
          _
        $region120: #{_lambda_.1} parent=11 // pred_fallthru
          _
        // Predicated region
        $region121: #{_lambda_.1} parent=11 // pred_check
          %p1414 = pneg %p785
        $region122: #{_lambda_.1} parent=11 // pred_check_branch
          %1416 = sbr.rel (%p1414) target = $region124
        $region123: #{_lambda_.1} parent=11 // pred_region
          _
        $region124: #{_lambda_.1} parent=11 // pred_fallthru
          _
        // Predicated region
        $region125: #{_lambda_.1} parent=11 // pred_check
          %p1417 = pneg %p806
        $region126: #{_lambda_.1} parent=11 // pred_check_branch
          %1419 = sbr.rel (%p1417) target = $region128
        $region127: #{_lambda_.1} parent=11 // pred_region
          _
        $region128: #{_lambda_.1} parent=11 // pred_fallthru
          _
        // Predicated region
        $region129: #{_lambda_.1} parent=11 // pred_check
          %p1420 = pneg %p827
        $region130: #{_lambda_.1} parent=11 // pred_check_branch
          %1422 = sbr.rel (%p1420) target = $region132
        $region131: #{_lambda_.1} parent=11 // pred_region
          _
        $region132: #{_lambda_.1} parent=11 // pred_fallthru
          _
        // Predicated region
        $region133: #{_lambda_.1} parent=11 // pred_check
          %p1423 = pneg %p848
        $region134: #{_lambda_.1} parent=11 // pred_check_branch
          %1425 = sbr.rel (%p1423) target = $region136
        $region135: #{_lambda_.1} parent=11 // pred_region
          _
        $region136: #{_lambda_.1} parent=11 // pred_fallthru
          _
        // Predicated region
        $region137: #{_lambda_.1} parent=11 // pred_check
          %p1426 = pneg %p869
        $region138: #{_lambda_.1} parent=11 // pred_check_branch
          %1428 = sbr.rel (%p1426) target = $region140
        $region139: #{_lambda_.1} parent=11 // pred_region
          _
        $region140: #{_lambda_.1} parent=11 // pred_fallthru
          _
        // Predicated region
        $region141: #{_lambda_.1} parent=11 // pred_check
          %p1429 = pneg %p890
        $region142: #{_lambda_.1} parent=11 // pred_check_branch
          %1431 = sbr.rel (%p1429) target = $region144
        $region143: #{_lambda_.1} parent=11 // pred_region
          _
        $region144: #{_lambda_.1} parent=11 // pred_fallthru
          _
        // Predicated region
        $region145: #{_lambda_.1} parent=11 // pred_check
          %p1432 = pneg %p911
        $region146: #{_lambda_.1} parent=11 // pred_check_branch
          %1434 = sbr.rel (%p1432) target = $region148
        $region147: #{_lambda_.1} parent=11 // pred_region
          _
        $region148: #{_lambda_.1} parent=11 // pred_fallthru
          _
        // Predicated region
        $region149: #{_lambda_.1} parent=11 // pred_check
          %p1435 = pneg %p932
        $region150: #{_lambda_.1} parent=11 // pred_check_branch
          %1437 = sbr.rel (%p1435) target = $region152
        $region151: #{_lambda_.1} parent=11 // pred_region
          _
        $region152: #{_lambda_.1} parent=11 // pred_fallthru
          _
        // Predicated region
        $region153: #{_lambda_.1} parent=11 // pred_check
          %p1438 = pneg %p953
        $region154: #{_lambda_.1} parent=11 // pred_check_branch
          %1440 = sbr.rel (%p1438) target = $region156
        $region155: #{_lambda_.1} parent=11 // pred_region
          _
        $region156: #{_lambda_.1} parent=11 // pred_fallthru
          _
        // Predicated region
        $region157: #{_lambda_.1} parent=11 // pred_check
          %p1441 = pneg %p974
        $region158: #{_lambda_.1} parent=11 // pred_check_branch
          %1443 = sbr.rel (%p1441) target = $region160
        $region159: #{_lambda_.1} parent=11 // pred_region
          _
        $region160: #{_lambda_.1} parent=11 // pred_fallthru
          _
        // Predicated region
        $region161: #{_lambda_.1} parent=11 // pred_check
          %p1444 = pneg %p995
        $region162: #{_lambda_.1} parent=11 // pred_check_branch
          %1446 = sbr.rel (%p1444) target = $region164
        $region163: #{_lambda_.1} parent=11 // pred_region
          _
        $region164: #{_lambda_.1} parent=11 // pred_fallthru
          _
        // Predicated region
        $region165: #{_lambda_.1} parent=11 // pred_check
          %p1447 = pneg %p1016
        $region166: #{_lambda_.1} parent=11 // pred_check_branch
          %1449 = sbr.rel (%p1447) target = $region168
        $region167: #{_lambda_.1} parent=11 // pred_region
          _
        $region168: #{_lambda_.1} parent=11 // pred_fallthru
          _
        // Predicated region
        $region169: #{_lambda_.1} parent=11 // pred_check
          %p1450 = pneg %p1037
        $region170: #{_lambda_.1} parent=11 // pred_check_branch
          %1452 = sbr.rel (%p1450) target = $region172
        $region171: #{_lambda_.1} parent=11 // pred_region
          _
        $region172: #{_lambda_.1} parent=11 // pred_fallthru
          _
        // Predicated region
        $region173: #{_lambda_.1} parent=11 // pred_check
          %p1453 = pneg %p1058
        $region174: #{_lambda_.1} parent=11 // pred_check_branch
          %1455 = sbr.rel (%p1453) target = $region176
        $region175: #{_lambda_.1} parent=11 // pred_region
          _
        $region176: #{_lambda_.1} parent=11 // pred_fallthru
          _
        // Predicated region
        $region177: #{_lambda_.1} parent=11 // pred_check
          %p1456 = pneg %p1079
        $region178: #{_lambda_.1} parent=11 // pred_check_branch
          %1458 = sbr.rel (%p1456) target = $region180
        $region179: #{_lambda_.1} parent=11 // pred_region
          _
        $region180: #{_lambda_.1} parent=11 // pred_fallthru
          _
        // Predicated region
        $region181: #{_lambda_.1} parent=11 // pred_check
          %p1459 = pneg %p1100
        $region182: #{_lambda_.1} parent=11 // pred_check_branch
          %1461 = sbr.rel (%p1459) target = $region184
        $region183: #{_lambda_.1} parent=11 // pred_region
          %s1463 = ssub.s32 16, 16
          %1464 = vsyncadd [#allocation11], %s1463
          %s1466 = sshll.u32 [#allocation10], 4
          %s1467 = int_to_ptr.vmem [resolvable:$true] %s1466
          %1469 = dma.hbm_to_vmem [thread:$0]  %s91, 16, %s1467, [#allocation11]
        $region184: #{_lambda_.1} parent=11 // pred_fallthru
          _
        // Predicated region
        $region185: #{_lambda_.1} parent=11 // pred_check
          %p1470 = pneg %p1121
        $region186: #{_lambda_.1} parent=11 // pred_check_branch
          %1472 = sbr.rel (%p1470) target = $region188
        $region187: #{_lambda_.1} parent=11 // pred_region
          _
        $region188: #{_lambda_.1} parent=11 // pred_fallthru
          _
        // Predicated region
        $region189: #{_lambda_.1} parent=11 // pred_check
          %p1473 = pneg %p1142
        $region190: #{_lambda_.1} parent=11 // pred_check_branch
          %1475 = sbr.rel (%p1473) target = $region192
        $region191: #{_lambda_.1} parent=11 // pred_region
          %s1477 = ssub.s32 16, 16
          %1478 = vsyncadd [#allocation11], %s1477
          %s1480 = sshll.u32 [#allocation12], 4
          %s1481 = int_to_ptr.vmem [resolvable:$true] %s1480
          %1483 = dma.hbm_to_vmem [thread:$0]  %s95, 16, %s1481, [#allocation11]
        $region192: #{_lambda_.1} parent=11 // pred_fallthru
          _
        // Predicated region
        $region193: #{_lambda_.1} parent=11 // pred_check
          %p1484 = pneg %p1163
        $region194: #{_lambda_.1} parent=11 // pred_check_branch
          %1486 = sbr.rel (%p1484) target = $region196
        $region195: #{_lambda_.1} parent=11 // pred_region
          _
        $region196: #{_lambda_.1} parent=11 // pred_fallthru
          _
        // Predicated region
        $region197: #{_lambda_.1} parent=11 // pred_check
          %p1487 = pneg %p1184
        $region198: #{_lambda_.1} parent=11 // pred_check_branch
          %1489 = sbr.rel (%p1487) target = $region200
        $region199: #{_lambda_.1} parent=11 // pred_region
          %s1491 = ssub.s32 16, 16
          %1492 = vsyncadd [#allocation14], %s1491
          %s1494 = sshll.u32 [#allocation13], 4
          %s1495 = int_to_ptr.vmem [resolvable:$true] %s1494
          %1497 = dma.hbm_to_vmem [thread:$0]  %s99, 16, %s1495, [#allocation14]
        $region200: #{_lambda_.1} parent=11 // pred_fallthru
          _
        // Predicated region
        $region201: #{_lambda_.1} parent=11 // pred_check
          %p1498 = pneg %p1205
        $region202: #{_lambda_.1} parent=11 // pred_check_branch
          %1500 = sbr.rel (%p1498) target = $region204
        $region203: #{_lambda_.1} parent=11 // pred_region
          _
        $region204: #{_lambda_.1} parent=11 // pred_fallthru
          _
        // Predicated region
        $region205: #{_lambda_.1} parent=11 // pred_check
          %p1501 = pneg %p1226
        $region206: #{_lambda_.1} parent=11 // pred_check_branch
          %1503 = sbr.rel (%p1501) target = $region208
        $region207: #{_lambda_.1} parent=11 // pred_region
          %s1505 = ssub.s32 16, 16
          %1506 = vsyncadd [#allocation14], %s1505
          %s1508 = sshll.u32 [#allocation15], 4
          %s1509 = int_to_ptr.vmem [resolvable:$true] %s1508
          %1511 = dma.hbm_to_vmem [thread:$0]  %s103, 16, %s1509, [#allocation14]
        $region208: #{_lambda_.1} parent=11 // pred_fallthru
          _
      $region12: #{_lambda_.1} parent=5 // pred_fallthru
        _
      %p1512 = scmp.lt.s32.totalorder %s119, 2
      // Predicated region
      $region209: #{_lambda_.1} parent=5 // pred_check
        %p1513 = pneg %p1512
      $region210: #{_lambda_.1} parent=5 // pred_check_branch
        %1515 = sbr.rel (%p1513) target = $region212
      $region211: #{_lambda_.1} parent=5 // pred_region
        // Predicated region
        $region213: #{_lambda_.1} parent=211 // pred_check
          %p1516 = pneg %p139
        $region214: #{_lambda_.1} parent=211 // pred_check_branch
          %1518 = sbr.rel (%p1516) target = $region216
        $region215: #{_lambda_.1} parent=211 // pred_region
          %p1519 = scmp.lt.s32.totalorder %s119, 1
          %s1520 = scalar_select %p1519, %s119, 1
          %s1521 = smul.addr %s1520, 8
          %s1522 = smul.addr %s1521, 8
          %s1523 = scalar_lea.vmem %s1, %s1522
        $region216: #{_lambda_.1} parent=211 // pred_fallthru
          _
        // Predicated region
        $region217: #{_lambda_.1} parent=211 // pred_check
          %p1524 = pneg %p165
        $region218: #{_lambda_.1} parent=211 // pred_check_branch
          %1526 = sbr.rel (%p1524) target = $region220
        $region219: #{_lambda_.1} parent=211 // pred_region
          %p1527 = scmp.lt.s32.totalorder %s119, 1
          %s1528 = scalar_select %p1527, %s119, 1
          %s1529 = smul.addr %s1528, 8
          %s1530 = smul.addr %s1529, 8
          %s1531 = scalar_lea.vmem %s3, %s1530
        $region220: #{_lambda_.1} parent=211 // pred_fallthru
          _
        // Predicated region
        $region221: #{_lambda_.1} parent=211 // pred_check
          %p1532 = pneg %p212
        $region222: #{_lambda_.1} parent=211 // pred_check_branch
          %1534 = sbr.rel (%p1532) target = $region224
        $region223: #{_lambda_.1} parent=211 // pred_region
          %p1535 = scmp.lt.s32.totalorder %s119, 1
          %s1536 = scalar_select %p1535, %s119, 1
          %s1537 = smul.addr %s1536, 4
          %s1538 = smul.addr %s1537, 4
          %s1539 = scalar_lea.vmem %s7, %s1538
        $region224: #{_lambda_.1} parent=211 // pred_fallthru
          _
      $region212: #{_lambda_.1} parent=5 // pred_fallthru
        _
      %p1540 = scmp.le.s32.totalorder 1, %s119
      %p1541 = scmp.lt.s32.totalorder %s119, 3
      %p1542 = pnand %p1540, %p1541
      %p1543 = pneg %p1542
      // Predicated region
      $region225: #{_lambda_.1} parent=5 // pred_check
        _
      $region226: #{_lambda_.1} parent=5 // pred_check_branch
        %1545 = sbr.rel (%p1542) target = $region228
      $region227: #{_lambda_.1} parent=5 // pred_region
        %s1546 = ssub.s32 %s119, 1
        // Predicated region
        $region229: #{_lambda_.1} parent=227 // pred_check
          %p1547 = pneg %p344
        $region230: #{_lambda_.1} parent=227 // pred_check_branch
          %1549 = sbr.rel (%p1547) target = $region232
        $region231: #{_lambda_.1} parent=227 // pred_region
          %1550 = dma.done [#allocation3], 16
        $region232: #{_lambda_.1} parent=227 // pred_fallthru
          _
        // Predicated region
        $region233: #{_lambda_.1} parent=227 // pred_check
          %p1551 = pneg %p386
        $region234: #{_lambda_.1} parent=227 // pred_check_branch
          %1553 = sbr.rel (%p1551) target = $region236
        $region235: #{_lambda_.1} parent=227 // pred_region
          %1554 = dma.done [#allocation5], 16
        $region236: #{_lambda_.1} parent=227 // pred_fallthru
          _
        // Predicated region
        $region237: #{_lambda_.1} parent=227 // pred_check
          %p1555 = pneg %p428
        $region238: #{_lambda_.1} parent=227 // pred_check_branch
          %1557 = sbr.rel (%p1555) target = $region240
        $region239: #{_lambda_.1} parent=227 // pred_region
          %1558 = dma.done [#allocation5], 16
        $region240: #{_lambda_.1} parent=227 // pred_fallthru
          _
        // Predicated region
        $region241: #{_lambda_.1} parent=227 // pred_check
          %p1559 = pneg %p491
        $region242: #{_lambda_.1} parent=227 // pred_check_branch
          %1561 = sbr.rel (%p1559) target = $region244
        $region243: #{_lambda_.1} parent=227 // pred_region
          %1562 = dma.done [#allocation8], 16
        $region244: #{_lambda_.1} parent=227 // pred_fallthru
          _
        // Predicated region
        $region245: #{_lambda_.1} parent=227 // pred_check
          %p1563 = pneg %p533
        $region246: #{_lambda_.1} parent=227 // pred_check_branch
          %1565 = sbr.rel (%p1563) target = $region248
        $region247: #{_lambda_.1} parent=227 // pred_region
          %1566 = dma.done [#allocation8], 16
        $region248: #{_lambda_.1} parent=227 // pred_fallthru
          _
        // Predicated region
        $region249: #{_lambda_.1} parent=227 // pred_check
          %p1567 = pneg %p1100
        $region250: #{_lambda_.1} parent=227 // pred_check_branch
          %1569 = sbr.rel (%p1567) target = $region252
        $region251: #{_lambda_.1} parent=227 // pred_region
          %1570 = dma.done [#allocation11], 16
        $region252: #{_lambda_.1} parent=227 // pred_fallthru
          _
        // Predicated region
        $region253: #{_lambda_.1} parent=227 // pred_check
          %p1571 = pneg %p1142
        $region254: #{_lambda_.1} parent=227 // pred_check_branch
          %1573 = sbr.rel (%p1571) target = $region256
        $region255: #{_lambda_.1} parent=227 // pred_region
          %1574 = dma.done [#allocation11], 16
        $region256: #{_lambda_.1} parent=227 // pred_fallthru
          _
        // Predicated region
        $region257: #{_lambda_.1} parent=227 // pred_check
          %p1575 = pneg %p1184
        $region258: #{_lambda_.1} parent=227 // pred_check_branch
          %1577 = sbr.rel (%p1575) target = $region260
        $region259: #{_lambda_.1} parent=227 // pred_region
          %1578 = dma.done [#allocation14], 16
        $region260: #{_lambda_.1} parent=227 // pred_fallthru
          _
        // Predicated region
        $region261: #{_lambda_.1} parent=227 // pred_check
          %p1579 = pneg %p1226
        $region262: #{_lambda_.1} parent=227 // pred_check_branch
          %1581 = sbr.rel (%p1579) target = $region264
        $region263: #{_lambda_.1} parent=227 // pred_region
          %1582 = dma.done [#allocation14], 16
        $region264: #{_lambda_.1} parent=227 // pred_fallthru
          _
        %p1583 = scmp.lt.s32.totalorder %s124, 1
        %s1584 = scalar_select %p1583, %s124, 1
        %s1585 = smul.addr %s1584, 8
        %s1586 = smul.addr %s1585, 8
        %s1587 = scalar_lea.vmem %s1, %s1586
        %p1588 = pneg %p145
        %p1589 = pneg %p142
        %p1590 = scmp.lt.s32.totalorder %s124, 1
        %s1591 = scalar_select %p1590, %s124, 1
        %s1592 = smul.addr %s1591, 8
        %s1593 = smul.addr %s1592, 8
        %s1594 = scalar_lea.vmem %s3, %s1593
        %p1595 = pneg %p171
        %p1596 = pneg %p168
        %p1597 = pneg %p192
        %p1598 = pneg %p189
        %p1599 = scmp.lt.s32.totalorder %s124, 1
        %s1600 = scalar_select %p1599, %s124, 1
        %s1601 = smul.addr %s1600, 4
        %s1602 = smul.addr %s1601, 4
        %s1603 = scalar_lea.vmem %s7, %s1602
        %p1604 = pneg %p218
        %p1605 = pneg %p215
        %p1606 = pneg %p239
        %p1607 = pneg %p236
        %p1608 = pneg %p260
        %p1609 = pneg %p257
        %p1610 = pneg %p281
        %p1611 = pneg %p278
        %p1612 = pneg %p302
        %p1613 = pneg %p299
        %p1614 = pneg %p323
        %p1615 = pneg %p320
        %p1616 = pneg %p344
        %p1617 = pneg %p341
        %p1618 = pneg %p365
        %p1619 = pneg %p362
        %p1620 = pneg %p386
        %p1621 = pneg %p383
        %p1622 = pneg %p407
        %p1623 = pneg %p404
        %p1624 = pneg %p428
        %p1625 = pneg %p425
        %p1626 = pneg %p449
        %p1627 = pneg %p446
        %p1628 = pneg %p470
        %p1629 = pneg %p467
        %p1630 = pneg %p491
        %p1631 = pneg %p488
        %p1632 = pneg %p512
        %p1633 = pneg %p509
        %p1634 = pneg %p533
        %p1635 = pneg %p530
        %p1636 = pneg %p554
        %p1637 = pneg %p551
        %p1638 = pneg %p575
        %p1639 = pneg %p572
        %p1640 = pneg %p596
        %p1641 = pneg %p593
        %p1642 = pneg %p617
        %p1643 = pneg %p614
        %p1644 = pneg %p638
        %p1645 = pneg %p635
        %p1646 = pneg %p659
        %p1647 = pneg %p656
        %p1648 = pneg %p680
        %p1649 = pneg %p677
        %p1650 = pneg %p701
        %p1651 = pneg %p698
        %p1652 = pneg %p722
        %p1653 = pneg %p719
        %p1654 = pneg %p743
        %p1655 = pneg %p740
        %p1656 = pneg %p764
        %p1657 = pneg %p761
        %p1658 = pneg %p785
        %p1659 = pneg %p782
        %p1660 = pneg %p806
        %p1661 = pneg %p803
        %p1662 = pneg %p827
        %p1663 = pneg %p824
        %p1664 = pneg %p848
        %p1665 = pneg %p845
        %p1666 = pneg %p869
        %p1667 = pneg %p866
        %p1668 = pneg %p890
        %p1669 = pneg %p887
        %p1670 = pneg %p911
        %p1671 = pneg %p908
        %p1672 = pneg %p932
        %p1673 = pneg %p929
        %p1674 = pneg %p953
        %p1675 = pneg %p950
        %p1676 = pneg %p974
        %p1677 = pneg %p971
        %p1678 = pneg %p995
        %p1679 = pneg %p992
        %p1680 = pneg %p1016
        %p1681 = pneg %p1013
        %p1682 = pneg %p1037
        %p1683 = pneg %p1034
        %p1684 = pneg %p1058
        %p1685 = pneg %p1055
        %p1686 = pneg %p1079
        %p1687 = pneg %p1076
        %p1688 = pneg %p1100
        %p1689 = pneg %p1097
        %p1690 = pneg %p1121
        %p1691 = pneg %p1118
        %p1692 = pneg %p1142
        %p1693 = pneg %p1139
        %p1694 = pneg %p1163
        %p1695 = pneg %p1160
        %p1696 = pneg %p1184
        %p1697 = pneg %p1181
        %p1698 = pneg %p1205
        %p1699 = pneg %p1202
        %p1700 = pneg %p1226
        %p1701 = pneg %p1223
        %p1702 = pneg %p1252
        %p1703 = pneg %p1249
        %p1704 = scmp.lt.s32.totalorder %s124, 1
        %s1705 = scalar_select %p1704, %s124, 1
        %s1706 = smul.addr %s1705, 2
        %s1707 = smul.addr %s1706, 8
        %s1708 = scalar_lea.vmem %s105, %s1707
        %p1709 = pneg %p1278
        %p1710 = pneg %p1275
        %p1711 = scmp.lt.s32.totalorder %s124, 1
        %s1712 = scalar_select %p1711, %s124, 1
        %s1713 = smul.addr %s1712, 4
        %s1714 = smul.addr %s1713, 8
        %s1715 = scalar_lea.vmem %s107, %s1714
        %p1716 = scmp.lt.s32.totalorder %s124, 1
        %s1717 = scalar_select %p1716, %s124, 1
        %s1718 = smul.addr %s1717, 8
        %s1719 = smul.addr %s1718, 8
        %s1720 = scalar_lea.vmem %s1, %s1719
        %p1721 = scmp.lt.s32.totalorder %s124, 1
        %s1722 = scalar_select %p1721, %s124, 1
        %s1723 = smul.addr %s1722, 8
        %s1724 = smul.addr %s1723, 8
        %s1725 = scalar_lea.vmem %s3, %s1724
        %p1726 = scmp.lt.s32.totalorder %s124, 1
        %s1727 = scalar_select %p1726, %s124, 1
        %s1728 = smul.addr %s1727, 4
        %s1729 = smul.addr %s1728, 4
        %s1730 = scalar_lea.vmem %s7, %s1729
        %p1731 = scmp.lt.s32.totalorder %s124, 1
        %s1732 = scalar_select %p1731, %s124, 1
        %s1733 = smul.addr %s1732, 2
        %s1734 = smul.addr %s1733, 8
        %s1735 = scalar_lea.vmem %s105, %s1734
        %p1736 = scmp.lt.s32.totalorder %s124, 1
        %s1737 = scalar_select %p1736, %s124, 1
        %s1738 = smul.addr %s1737, 4
        %s1739 = smul.addr %s1738, 8
        %s1740 = scalar_lea.vmem %s107, %s1739
        %v1742 = vld [vmem:[%s1725] sm:$0xff]
        %v1743 = vld [vmem:[%s1725 + $0x8] sm:$0xff]
        %v1744 = vld [vmem:[%s1725 + $0x10] sm:$0xff]
        %v1745 = vld [vmem:[%s1725 + $0x18] sm:$0xff]
        %v1746 = vld [vmem:[%s1725 + $0x20] sm:$0xff]
        %v1747 = vld [vmem:[%s1725 + $0x28] sm:$0xff]
        %v1748 = vld [vmem:[%s1725 + $0x30] sm:$0xff]
        %v1749 = vld [vmem:[%s1725 + $0x38] sm:$0xff]
        %v1750 = vld [vmem:[%s5] sm:$0xff]
        %v1751 = vld [vmem:[%s1720] sm:$0xff]
        %v1752 = vld [vmem:[%s1720 + $0x8] sm:$0xff]
        %v1753 = vld [vmem:[%s1720 + $0x10] sm:$0xff]
        %v1754 = vld [vmem:[%s1720 + $0x18] sm:$0xff]
        %v1755 = vld [vmem:[%s1720 + $0x20] sm:$0xff]
        %v1756 = vld [vmem:[%s1720 + $0x28] sm:$0xff]
        %v1757 = vld [vmem:[%s1720 + $0x30] sm:$0xff]
        %v1758 = vld [vmem:[%s1720 + $0x38] sm:$0xff]
        %v1759 = vld [vmem:[%s9] sm:$0xf]
        %v1760 = vld [vmem:[%s9 + $0x4] sm:$0xf]
        %v1761 = vpack.c.bf16 %v1752, %v1751
        %v1762 = vpack.c.bf16 %v1754, %v1753
        %v1763 = vpack.c.bf16 %v1756, %v1755
        %v1764 = vpack.c.bf16 %v1758, %v1757
        %v1765 = vld [vmem:[%s11] sm:$0x1]
        %v1767 = vlaneseq
        %v1768 = vshrl.u32 %v1767, 7
        %v1769 = vsub.s32 0, %v1768
        %v1770 = vrot.slane %v1765, %v1769
        %v1774 = vunpack.c.l.b16 %v1759
        %v1775 = vunpack.c.l.b16 %v1760
        %v1776 = vpack.c.b16 %v1775, %v1774
        %vm1778 = vcmask 130048
        %v1780 = vsel %vm1778, %v1761, 0
        %v1783 = vsel %vm1778, %v1762, 0
        %v1786 = vsel %vm1778, %v1763, 0
        %v1789 = vsel %vm1778, %v1764, 0
        %1791 = vmatprep.subr.bf16.mxu0 0
        %1792 = vmatpush1.bf16.msra.mxu0 %v1776
        %1793 = vmatprep.subr.bf16.mxu0 0
        %1794 = vmatpush1.bf16.msra.mxu0 0
        %1795 = vmatprep.subr.bf16.mxu0 0
        %1796 = vmatpush1.bf16.msra.mxu0 0
        %1797 = vmatprep.subr.bf16.mxu0 0
        %1798 = vmatpush1.bf16.msra.mxu0 0
        %1799 = vmatprep.subr.bf16.mxu0 0
        %1800 = vmatpush1.bf16.msra.mxu0 0
        %1801 = vmatprep.subr.bf16.mxu0 0
        %1802 = vmatpush1.bf16.msra.mxu0 0
        %1803 = vmatprep.subr.bf16.mxu0 0
        %1804 = vmatpush1.bf16.msra.mxu0 0
        %1805 = vmatprep.subr.bf16.mxu0 0
        %1806 = vmatpush1.bf16.msra.mxu0 0
        %1807 = vmatprep.subr.bf16.mxu0 0
        %1808 = vmatpush1.bf16.msra.mxu0 0
        %1809 = vmatprep.subr.bf16.mxu0 0
        %1810 = vmatpush1.bf16.msra.mxu0 0
        %1811 = vmatprep.subr.bf16.mxu0 0
        %1812 = vmatpush1.bf16.msra.mxu0 0
        %1813 = vmatprep.subr.bf16.mxu0 0
        %1814 = vmatpush1.bf16.msra.mxu0 0
        %1815 = vmatprep.subr.bf16.mxu0 0
        %1816 = vmatpush1.bf16.msra.mxu0 0
        %1817 = vmatprep.subr.bf16.mxu0 0
        %1818 = vmatpush1.bf16.msra.mxu0 0
        %1819 = vmatprep.subr.bf16.mxu0 0
        %1820 = vmatpush1.bf16.msra.mxu0 0
        %1821 = vmatprep.subr.bf16.mxu0 0
        %1822 = vmatpush1.bf16.msra.mxu0 0
        %1823 = vmatprep.mubr.bf16.mxu0 0
        %1824 = vmatmul.mubr.bf16.gmra.mrb[0].mxu0 %v1780
        %v1825 = vpop.f32.mrb[0].mxu0
        %v1826 = vadd.f32 %v1770, %v1825
        %v1827 = vpop.f32.mrb[0].mxu0
        %v1828 = vpop.f32.mrb[0].mxu0
        %v1829 = vadd.f32 %v1770, %v1828
        %v1830 = vpop.f32.mrb[0].mxu0
        %1831 = vmatprep.mubr.bf16.mxu0 0
        %1832 = vmatmul.mubr.bf16.gmra.mrb[0].mxu0 %v1783
        %v1833 = vpop.f32.mrb[0].mxu0
        %v1834 = vadd.f32 %v1770, %v1833
        %v1835 = vpop.f32.mrb[0].mxu0
        %v1836 = vpop.f32.mrb[0].mxu0
        %v1837 = vadd.f32 %v1770, %v1836
        %v1838 = vpop.f32.mrb[0].mxu0
        %1839 = vmatprep.mubr.bf16.mxu0 0
        %1840 = vmatmul.mubr.bf16.gmra.mrb[0].mxu0 %v1786
        %v1841 = vpop.f32.mrb[0].mxu0
        %v1842 = vadd.f32 %v1770, %v1841
        %v1843 = vpop.f32.mrb[0].mxu0
        %v1844 = vpop.f32.mrb[0].mxu0
        %v1845 = vadd.f32 %v1770, %v1844
        %v1846 = vpop.f32.mrb[0].mxu0
        %1847 = vmatprep.mubr.bf16.mxu0 0
        %1848 = vmatmul.mubr.bf16.gmra.mrb[0].mxu0 %v1789
        %v1849 = vpop.f32.mrb[0].mxu0
        %v1850 = vadd.f32 %v1770, %v1849
        %v1851 = vpop.f32.mrb[0].mxu0
        %v1852 = vpop.f32.mrb[0].mxu0
        %v1853 = vadd.f32 %v1770, %v1852
        %v1854 = vpop.f32.mrb[0].mxu0
        %1855 = vdwg.mxu0
        %v1856 = vadd.f32 %v1826, %v1742
        %v1857 = vadd.f32 %v1829, %v1743
        %v1858 = vadd.f32 %v1834, %v1744
        %v1859 = vadd.f32 %v1837, %v1745
        %v1860 = vadd.f32 %v1842, %v1746
        %v1861 = vadd.f32 %v1845, %v1747
        %v1862 = vadd.f32 %v1850, %v1748
        %v1863 = vadd.f32 %v1853, %v1749
        %v1864 = vld [vmem:[%s13] sm:$0xf]
        %v1865 = vld [vmem:[%s13 + $0x4] sm:$0xf]
        %v1866 = vld [vmem:[%s13 + $0x8] sm:$0xf]
        %v1867 = vld [vmem:[%s13 + $0xc] sm:$0xf]
        %v1868 = vld [vmem:[%s15] sm:$0x1]
        %v1869 = vld [vmem:[%s17] sm:$0xf]
        %v1870 = vld [vmem:[%s17 + $0x4] sm:$0xf]
        %v1871 = vld [vmem:[%s17 + $0x8] sm:$0xf]
        %v1872 = vld [vmem:[%s17 + $0xc] sm:$0xf]
        %v1873 = vld [vmem:[#allocation2] sm:$0x1]
        %v1874 = vld [vmem:[%s21] sm:$0xf]
        %v1875 = vld [vmem:[%s21 + $0x4] sm:$0xf]
        %v1876 = vld [vmem:[%s21 + $0x8] sm:$0xf]
        %v1877 = vld [vmem:[%s21 + $0xc] sm:$0xf]
        %v1878 = vld [vmem:[#allocation4] sm:$0x1]
        %v1879 = vld [vmem:[%s25] sm:$0xf]
        %v1880 = vld [vmem:[%s25 + $0x4] sm:$0xf]
        %v1881 = vld [vmem:[%s25 + $0x8] sm:$0xf]
        %v1882 = vld [vmem:[%s25 + $0xc] sm:$0xf]
        %v1883 = vld [vmem:[#allocation6] sm:$0x1]
        %v1884 = vpack.c.bf16 %v1857, %v1856
        %v1885 = vpack.c.bf16 %v1859, %v1858
        %v1886 = vpack.c.bf16 %v1861, %v1860
        %v1887 = vpack.c.bf16 %v1863, %v1862
        %v1889 = vlaneseq
        %v1890 = vshrl.u32 %v1889, 7
        %v1891 = vsub.s32 0, %v1890
        %v1892 = vrot.slane %v1868, %v1891
        %v1898 = vunpack.c.l.b16 %v1864
        %v1899 = vunpack.c.l.b16 %v1865
        %v1900 = vunpack.c.l.b16 %v1866
        %v1901 = vunpack.c.l.b16 %v1867
        %v1902 = vpack.c.b16 %v1899, %v1898
        %v1903 = vpack.c.b16 %v1901, %v1900
        %vm1906 = vcmask 261120
        %v1908 = vsel %vm1906, %v1884, 0
        %v1911 = vsel %vm1906, %v1885, 0
        %v1914 = vsel %vm1906, %v1886, 0
        %v1917 = vsel %vm1906, %v1887, 0
        %1919 = vmatprep.subr.bf16.mxu0 0
        %1920 = vmatpush1.bf16.msra.mxu0 %v1902
        %1921 = vmatprep.subr.bf16.mxu0 0
        %1922 = vmatpush1.bf16.msra.mxu0 %v1903
        %1923 = vmatprep.subr.bf16.mxu0 0
        %1924 = vmatpush1.bf16.msra.mxu0 0
        %1925 = vmatprep.subr.bf16.mxu0 0
        %1926 = vmatpush1.bf16.msra.mxu0 0
        %1927 = vmatprep.subr.bf16.mxu0 0
        %1928 = vmatpush1.bf16.msra.mxu0 0
        %1929 = vmatprep.subr.bf16.mxu0 0
        %1930 = vmatpush1.bf16.msra.mxu0 0
        %1931 = vmatprep.subr.bf16.mxu0 0
        %1932 = vmatpush1.bf16.msra.mxu0 0
        %1933 = vmatprep.subr.bf16.mxu0 0
        %1934 = vmatpush1.bf16.msra.mxu0 0
        %1935 = vmatprep.subr.bf16.mxu0 0
        %1936 = vmatpush1.bf16.msra.mxu0 0
        %1937 = vmatprep.subr.bf16.mxu0 0
        %1938 = vmatpush1.bf16.msra.mxu0 0
        %1939 = vmatprep.subr.bf16.mxu0 0
        %1940 = vmatpush1.bf16.msra.mxu0 0
        %1941 = vmatprep.subr.bf16.mxu0 0
        %1942 = vmatpush1.bf16.msra.mxu0 0
        %1943 = vmatprep.subr.bf16.mxu0 0
        %1944 = vmatpush1.bf16.msra.mxu0 0
        %1945 = vmatprep.subr.bf16.mxu0 0
        %1946 = vmatpush1.bf16.msra.mxu0 0
        %1947 = vmatprep.subr.bf16.mxu0 0
        %1948 = vmatpush1.bf16.msra.mxu0 0
        %1949 = vmatprep.subr.bf16.mxu0 0
        %1950 = vmatpush1.bf16.msra.mxu0 0
        %1951 = vmatprep.mubr.bf16.mxu0 0
        %1952 = vmatmul.mubr.bf16.gmra.mrb[0].mxu0 %v1908
        %v1953 = vpop.f32.mrb[0].mxu0
        %v1954 = vadd.f32 %v1892, %v1953
        %v1955 = vpop.f32.mrb[0].mxu0
        %v1956 = vpop.f32.mrb[0].mxu0
        %v1957 = vadd.f32 %v1892, %v1956
        %v1958 = vpop.f32.mrb[0].mxu0
        %1959 = vmatprep.mubr.bf16.mxu0 0
        %1960 = vmatmul.mubr.bf16.gmra.mrb[0].mxu0 %v1911
        %v1961 = vpop.f32.mrb[0].mxu0
        %v1962 = vadd.f32 %v1892, %v1961
        %v1963 = vpop.f32.mrb[0].mxu0
        %v1964 = vpop.f32.mrb[0].mxu0
        %v1965 = vadd.f32 %v1892, %v1964
        %v1966 = vpop.f32.mrb[0].mxu0
        %1967 = vmatprep.mubr.bf16.mxu0 0
        %1968 = vmatmul.mubr.bf16.gmra.mrb[0].mxu0 %v1914
        %v1969 = vpop.f32.mrb[0].mxu0
        %v1970 = vadd.f32 %v1892, %v1969
        %v1971 = vpop.f32.mrb[0].mxu0
        %v1972 = vpop.f32.mrb[0].mxu0
        %v1973 = vadd.f32 %v1892, %v1972
        %v1974 = vpop.f32.mrb[0].mxu0
        %1975 = vmatprep.mubr.bf16.mxu0 0
        %1976 = vmatmul.mubr.bf16.gmra.mrb[0].mxu0 %v1917
        %v1977 = vpop.f32.mrb[0].mxu0
        %v1978 = vadd.f32 %v1892, %v1977
        %v1979 = vpop.f32.mrb[0].mxu0
        %v1980 = vpop.f32.mrb[0].mxu0
        %v1981 = vadd.f32 %v1892, %v1980
        %v1982 = vpop.f32.mrb[0].mxu0
        %1983 = vdwg.mxu0
        %v1984 = vmul.f32 %v1954, 0.35355338
        %v1985 = vmul.f32 %v1957, 0.35355338
        %v1986 = vmul.f32 %v1962, 0.35355338
        %v1987 = vmul.f32 %v1965, 0.35355338
        %v1988 = vmul.f32 %v1970, 0.35355338
        %v1989 = vmul.f32 %v1973, 0.35355338
        %v1990 = vmul.f32 %v1978, 0.35355338
        %v1991 = vmul.f32 %v1981, 0.35355338
        %v1992 = vpack.c.bf16 %v1985, %v1984
        %v1993 = vpack.c.bf16 %v1987, %v1986
        %v1994 = vpack.c.bf16 %v1989, %v1988
        %v1995 = vpack.c.bf16 %v1991, %v1990
        %v1997 = vlaneseq
        %v1998 = vshrl.u32 %v1997, 7
        %v1999 = vsub.s32 0, %v1998
        %v2000 = vrot.slane %v1873, %v1999
        %v2006 = vunpack.c.l.b16 %v1869
        %v2007 = vunpack.c.l.b16 %v1870
        %v2008 = vunpack.c.l.b16 %v1871
        %v2009 = vunpack.c.l.b16 %v1872
        %v2010 = vpack.c.b16 %v2007, %v2006
        %v2011 = vpack.c.b16 %v2009, %v2008
        %2014 = vmatprep.subr.bf16.mxu0 0
        %2015 = vmatpush1.bf16.msra.mxu0 %v2010
        %2016 = vmatprep.subr.bf16.mxu0 0
        %2017 = vmatpush1.bf16.msra.mxu0 %v2011
        %2018 = vmatprep.subr.bf16.mxu0 0
        %2019 = vmatpush1.bf16.msra.mxu0 0
        %2020 = vmatprep.subr.bf16.mxu0 0
        %2021 = vmatpush1.bf16.msra.mxu0 0
        %2022 = vmatprep.subr.bf16.mxu0 0
        %2023 = vmatpush1.bf16.msra.mxu0 0
        %2024 = vmatprep.subr.bf16.mxu0 0
        %2025 = vmatpush1.bf16.msra.mxu0 0
        %2026 = vmatprep.subr.bf16.mxu0 0
        %2027 = vmatpush1.bf16.msra.mxu0 0
        %2028 = vmatprep.subr.bf16.mxu0 0
        %2029 = vmatpush1.bf16.msra.mxu0 0
        %2030 = vmatprep.subr.bf16.mxu0 0
        %2031 = vmatpush1.bf16.msra.mxu0 0
        %2032 = vmatprep.subr.bf16.mxu0 0
        %2033 = vmatpush1.bf16.msra.mxu0 0
        %2034 = vmatprep.subr.bf16.mxu0 0
        %2035 = vmatpush1.bf16.msra.mxu0 0
        %2036 = vmatprep.subr.bf16.mxu0 0
        %2037 = vmatpush1.bf16.msra.mxu0 0
        %2038 = vmatprep.subr.bf16.mxu0 0
        %2039 = vmatpush1.bf16.msra.mxu0 0
        %2040 = vmatprep.subr.bf16.mxu0 0
        %2041 = vmatpush1.bf16.msra.mxu0 0
        %2042 = vmatprep.subr.bf16.mxu0 0
        %2043 = vmatpush1.bf16.msra.mxu0 0
        %2044 = vmatprep.subr.bf16.mxu0 0
        %2045 = vmatpush1.bf16.msra.mxu0 0
        %2046 = vmatprep.mubr.bf16.mxu0 0
        %2047 = vmatmul.mubr.bf16.gmra.mrb[0].mxu0 %v1908
        %v2048 = vpop.f32.mrb[0].mxu0
        %v2049 = vadd.f32 %v2000, %v2048
        %v2050 = vpop.f32.mrb[0].mxu0
        %v2051 = vpop.f32.mrb[0].mxu0
        %v2052 = vadd.f32 %v2000, %v2051
        %v2053 = vpop.f32.mrb[0].mxu0
        %2054 = vmatprep.mubr.bf16.mxu0 0
        %2055 = vmatmul.mubr.bf16.gmra.mrb[0].mxu0 %v1911
        %v2056 = vpop.f32.mrb[0].mxu0
        %v2057 = vadd.f32 %v2000, %v2056
        %v2058 = vpop.f32.mrb[0].mxu0
        %v2059 = vpop.f32.mrb[0].mxu0
        %v2060 = vadd.f32 %v2000, %v2059
        %v2061 = vpop.f32.mrb[0].mxu0
        %2062 = vmatprep.mubr.bf16.mxu0 0
        %2063 = vmatmul.mubr.bf16.gmra.mrb[0].mxu0 %v1914
        %v2064 = vpop.f32.mrb[0].mxu0
        %v2065 = vadd.f32 %v2000, %v2064
        %v2066 = vpop.f32.mrb[0].mxu0
        %v2067 = vpop.f32.mrb[0].mxu0
        %v2068 = vadd.f32 %v2000, %v2067
        %v2069 = vpop.f32.mrb[0].mxu0
        %2070 = vmatprep.mubr.bf16.mxu0 0
        %2071 = vmatmul.mubr.bf16.gmra.mrb[0].mxu0 %v1917
        %v2072 = vpop.f32.mrb[0].mxu0
        %v2073 = vadd.f32 %v2000, %v2072
        %v2074 = vpop.f32.mrb[0].mxu0
        %v2075 = vpop.f32.mrb[0].mxu0
        %v2076 = vadd.f32 %v2000, %v2075
        %v2077 = vpop.f32.mrb[0].mxu0
        %2078 = vdwg.mxu0
        %v2079 = vpack.c.bf16 %v2052, %v2049
        %v2080 = vpack.c.bf16 %v2060, %v2057
        %v2081 = vpack.c.bf16 %v2068, %v2065
        %v2082 = vpack.c.bf16 %v2076, %v2073
        %v2083 = vpack.c.bf16 %v1829, %v1826
        %v2084 = vpack.c.bf16 %v1837, %v1834
        %v2085 = vpack.c.bf16 %v1845, %v1842
        %v2086 = vpack.c.bf16 %v1853, %v1850
        %v2088 = vlaneseq
        %v2089 = vshrl.u32 %v2088, 7
        %v2090 = vsub.s32 0, %v2089
        %v2091 = vrot.slane %v1878, %v2090
        %v2097 = vunpack.c.l.b16 %v1874
        %v2098 = vunpack.c.l.b16 %v1875
        %v2099 = vunpack.c.l.b16 %v1876
        %v2100 = vunpack.c.l.b16 %v1877
        %v2101 = vpack.c.b16 %v2098, %v2097
        %v2102 = vpack.c.b16 %v2100, %v2099
        %v2106 = vsel %vm1906, %v2083, 0
        %v2109 = vsel %vm1906, %v2084, 0
        %v2112 = vsel %vm1906, %v2085, 0
        %v2115 = vsel %vm1906, %v2086, 0
        %2117 = vmatprep.subr.bf16.mxu0 0
        %2118 = vmatpush1.bf16.msra.mxu0 %v2101
        %2119 = vmatprep.subr.bf16.mxu0 0
        %2120 = vmatpush1.bf16.msra.mxu0 %v2102
        %2121 = vmatprep.subr.bf16.mxu0 0
        %2122 = vmatpush1.bf16.msra.mxu0 0
        %2123 = vmatprep.subr.bf16.mxu0 0
        %2124 = vmatpush1.bf16.msra.mxu0 0
        %2125 = vmatprep.subr.bf16.mxu0 0
        %2126 = vmatpush1.bf16.msra.mxu0 0
        %2127 = vmatprep.subr.bf16.mxu0 0
        %2128 = vmatpush1.bf16.msra.mxu0 0
        %2129 = vmatprep.subr.bf16.mxu0 0
        %2130 = vmatpush1.bf16.msra.mxu0 0
        %2131 = vmatprep.subr.bf16.mxu0 0
        %2132 = vmatpush1.bf16.msra.mxu0 0
        %2133 = vmatprep.subr.bf16.mxu0 0
        %2134 = vmatpush1.bf16.msra.mxu0 0
        %2135 = vmatprep.subr.bf16.mxu0 0
        %2136 = vmatpush1.bf16.msra.mxu0 0
        %2137 = vmatprep.subr.bf16.mxu0 0
        %2138 = vmatpush1.bf16.msra.mxu0 0
        %2139 = vmatprep.subr.bf16.mxu0 0
        %2140 = vmatpush1.bf16.msra.mxu0 0
        %2141 = vmatprep.subr.bf16.mxu0 0
        %2142 = vmatpush1.bf16.msra.mxu0 0
        %2143 = vmatprep.subr.bf16.mxu0 0
        %2144 = vmatpush1.bf16.msra.mxu0 0
        %2145 = vmatprep.subr.bf16.mxu0 0
        %2146 = vmatpush1.bf16.msra.mxu0 0
        %2147 = vmatprep.subr.bf16.mxu0 0
        %2148 = vmatpush1.bf16.msra.mxu0 0
        %2149 = vmatprep.mubr.bf16.mxu0 0
        %2150 = vmatmul.mubr.bf16.gmra.mrb[0].mxu0 %v2106
        %v2151 = vpop.f32.mrb[0].mxu0
        %v2152 = vadd.f32 %v2091, %v2151
        %v2153 = vpop.f32.mrb[0].mxu0
        %v2154 = vpop.f32.mrb[0].mxu0
        %v2155 = vadd.f32 %v2091, %v2154
        %v2156 = vpop.f32.mrb[0].mxu0
        %2157 = vmatprep.mubr.bf16.mxu0 0
        %2158 = vmatmul.mubr.bf16.gmra.mrb[0].mxu0 %v2109
        %v2159 = vpop.f32.mrb[0].mxu0
        %v2160 = vadd.f32 %v2091, %v2159
        %v2161 = vpop.f32.mrb[0].mxu0
        %v2162 = vpop.f32.mrb[0].mxu0
        %v2163 = vadd.f32 %v2091, %v2162
        %v2164 = vpop.f32.mrb[0].mxu0
        %2165 = vmatprep.mubr.bf16.mxu0 0
        %2166 = vmatmul.mubr.bf16.gmra.mrb[0].mxu0 %v2112
        %v2167 = vpop.f32.mrb[0].mxu0
        %v2168 = vadd.f32 %v2091, %v2167
        %v2169 = vpop.f32.mrb[0].mxu0
        %v2170 = vpop.f32.mrb[0].mxu0
        %v2171 = vadd.f32 %v2091, %v2170
        %v2172 = vpop.f32.mrb[0].mxu0
        %2173 = vmatprep.mubr.bf16.mxu0 0
        %2174 = vmatmul.mubr.bf16.gmra.mrb[0].mxu0 %v2115
        %v2175 = vpop.f32.mrb[0].mxu0
        %v2176 = vadd.f32 %v2091, %v2175
        %v2177 = vpop.f32.mrb[0].mxu0
        %v2178 = vpop.f32.mrb[0].mxu0
        %v2179 = vadd.f32 %v2091, %v2178
        %v2180 = vpop.f32.mrb[0].mxu0
        %2181 = vdwg.mxu0
        %v2182 = vpack.c.bf16 %v2155, %v2152
        %v2183 = vpack.c.bf16 %v2163, %v2160
        %v2184 = vpack.c.bf16 %v2171, %v2168
        %v2185 = vpack.c.bf16 %v2179, %v2176
        %vm2186 = vcmask 64512
        %v2188 = vsel %vm2186, %v1992, 0
        %v2191 = vsel %vm2186, %v1993, 0
        %v2194 = vsel %vm2186, %v1994, 0
        %v2197 = vsel %vm2186, %v1995, 0
        %v2200 = vsel %vm2186, %v2079, 0
        %v2203 = vsel %vm2186, %v2080, 0
        %v2206 = vsel %vm2186, %v2081, 0
        %v2209 = vsel %vm2186, %v2082, 0
        %2211 = vmatprep.subr.bf16.mxu0 0
        %2212 = vmatpush1.bf16.xpose.msra.mxu0 %v2200
        %2213 = vmatprep.subr.bf16.mxu0 0
        %2214 = vmatpush1.bf16.xpose.msra.mxu0 %v2203
        %2215 = vmatprep.subr.bf16.mxu0 0
        %2216 = vmatpush1.bf16.xpose.msra.mxu0 %v2206
        %2217 = vmatprep.subr.bf16.mxu0 0
        %2218 = vmatpush1.bf16.xpose.msra.mxu0 %v2209
        %2219 = vmatprep.subr.bf16.mxu0 0
        %2220 = vmatpush1.bf16.xpose.msra.mxu0 0
        %2221 = vmatprep.subr.bf16.mxu0 0
        %2222 = vmatpush1.bf16.xpose.msra.mxu0 0
        %2223 = vmatprep.subr.bf16.mxu0 0
        %2224 = vmatpush1.bf16.xpose.msra.mxu0 0
        %2225 = vmatprep.subr.bf16.mxu0 0
        %2226 = vmatpush1.bf16.xpose.msra.mxu0 0
        %2227 = vmatprep.subr.bf16.mxu0 0
        %2228 = vmatpush1.bf16.xpose.msra.mxu0 0
        %2229 = vmatprep.subr.bf16.mxu0 0
        %2230 = vmatpush1.bf16.xpose.msra.mxu0 0
        %2231 = vmatprep.subr.bf16.mxu0 0
        %2232 = vmatpush1.bf16.xpose.msra.mxu0 0
        %2233 = vmatprep.subr.bf16.mxu0 0
        %2234 = vmatpush1.bf16.xpose.msra.mxu0 0
        %2235 = vmatprep.subr.bf16.mxu0 0
        %2236 = vmatpush1.bf16.xpose.msra.mxu0 0
        %2237 = vmatprep.subr.bf16.mxu0 0
        %2238 = vmatpush1.bf16.xpose.msra.mxu0 0
        %2239 = vmatprep.subr.bf16.mxu0 0
        %2240 = vmatpush1.bf16.xpose.msra.mxu0 0
        %2241 = vmatprep.subr.bf16.mxu0 0
        %2242 = vmatpush1.bf16.xpose.msra.mxu0 0
        %2243 = vmatprep.mubr.bf16.mxu0 0
        %2244 = vmatmul.mubr.bf16.gmra.mrb[0].mxu0 %v2188
        %v2245 = vpop.f32.mrb[0].mxu0
        %v2246 = vadd.f32 0.0, %v2245
        %v2247 = vpop.f32.mrb[0].mxu0
        %v2248 = vpop.f32.mrb[0].mxu0
        %v2249 = vadd.f32 0.0, %v2248
        %v2250 = vpop.f32.mrb[0].mxu0
        %2251 = vmatprep.mubr.bf16.mxu0 0
        %2252 = vmatmul.mubr.bf16.gmra.mrb[0].mxu0 %v2191
        %v2253 = vpop.f32.mrb[0].mxu0
        %v2254 = vadd.f32 0.0, %v2253
        %v2255 = vpop.f32.mrb[0].mxu0
        %v2256 = vpop.f32.mrb[0].mxu0
        %v2257 = vadd.f32 0.0, %v2256
        %v2258 = vpop.f32.mrb[0].mxu0
        %2259 = vmatprep.mubr.bf16.mxu0 0
        %2260 = vmatmul.mubr.bf16.gmra.mrb[0].mxu0 %v2194
        %v2261 = vpop.f32.mrb[0].mxu0
        %v2262 = vadd.f32 0.0, %v2261
        %v2263 = vpop.f32.mrb[0].mxu0
        %v2264 = vpop.f32.mrb[0].mxu0
        %v2265 = vadd.f32 0.0, %v2264
        %v2266 = vpop.f32.mrb[0].mxu0
        %2267 = vmatprep.mubr.bf16.mxu0 0
        %2268 = vmatmul.mubr.bf16.gmra.mrb[0].mxu0 %v2197
        %v2269 = vpop.f32.mrb[0].mxu0
        %v2270 = vadd.f32 0.0, %v2269
        %v2271 = vpop.f32.mrb[0].mxu0
        %v2272 = vpop.f32.mrb[0].mxu0
        %v2273 = vadd.f32 0.0, %v2272
        %v2274 = vpop.f32.mrb[0].mxu0
        %2275 = vdwg.mxu0
        %vm2276 = vcmask 523264
        %v2277 = vsel %vm2276, %v2246, -inf
        %2278 = vmax.xlane.f32.xlu0 %v2277
        %v2279 = vpop.xlane.xlu0 %2278
        %v2280 = vsel %vm2276, %v2249, -inf
        %2281 = vmax.xlane.f32.xlu0 %v2280
        %v2282 = vpop.xlane.xlu0 %2281
        %v2283 = vsel %vm2276, %v2254, -inf
        %2284 = vmax.xlane.f32.xlu0 %v2283
        %v2285 = vpop.xlane.xlu0 %2284
        %v2286 = vsel %vm2276, %v2257, -inf
        %2287 = vmax.xlane.f32.xlu0 %v2286
        %v2288 = vpop.xlane.xlu0 %2287
        %v2289 = vsel %vm2276, %v2262, -inf
        %2290 = vmax.xlane.f32.xlu0 %v2289
        %v2291 = vpop.xlane.xlu0 %2290
        %v2292 = vsel %vm2276, %v2265, -inf
        %2293 = vmax.xlane.f32.xlu0 %v2292
        %v2294 = vpop.xlane.xlu0 %2293
        %v2295 = vsel %vm2276, %v2270, -inf
        %2296 = vmax.xlane.f32.xlu0 %v2295
        %v2297 = vpop.xlane.xlu0 %2296
        %v2298 = vsel %vm2276, %v2273, -inf
        %2299 = vmax.xlane.f32.xlu0 %v2298
        %v2300 = vpop.xlane.xlu0 %2299
        %v2301 = vsub.f32 %v2246, %v2279
        %v2302 = vsub.f32 %v2249, %v2282
        %v2303 = vsub.f32 %v2254, %v2285
        %v2304 = vsub.f32 %v2257, %v2288
        %v2305 = vsub.f32 %v2262, %v2291
        %v2306 = vsub.f32 %v2265, %v2294
        %v2307 = vsub.f32 %v2270, %v2297
        %v2308 = vsub.f32 %v2273, %v2300
        %v2309 = vmul.f32 %v2301, 1.442695
        %v2310 = vpow.pop %v2309
        %v2311 = vmul.f32 %v2302, 1.442695
        %v2312 = vpow.pop %v2311
        %v2313 = vmul.f32 %v2303, 1.442695
        %v2314 = vpow.pop %v2313
        %v2315 = vmul.f32 %v2304, 1.442695
        %v2316 = vpow.pop %v2315
        %v2317 = vmul.f32 %v2305, 1.442695
        %v2318 = vpow.pop %v2317
        %v2319 = vmul.f32 %v2306, 1.442695
        %v2320 = vpow.pop %v2319
        %v2321 = vmul.f32 %v2307, 1.442695
        %v2322 = vpow.pop %v2321
        %v2323 = vmul.f32 %v2308, 1.442695
        %v2324 = vpow.pop %v2323
        %v2325 = vsel %vm2276, %v2310, 0.0
        %2326 = vadd.xlane.f32.xlu0 %v2325
        %v2327 = vpop.xlane.xlu0 %2326
        %v2328 = vsel %vm2276, %v2312, 0.0
        %2329 = vadd.xlane.f32.xlu0 %v2328
        %v2330 = vpop.xlane.xlu0 %2329
        %v2331 = vsel %vm2276, %v2314, 0.0
        %2332 = vadd.xlane.f32.xlu0 %v2331
        %v2333 = vpop.xlane.xlu0 %2332
        %v2334 = vsel %vm2276, %v2316, 0.0
        %2335 = vadd.xlane.f32.xlu0 %v2334
        %v2336 = vpop.xlane.xlu0 %2335
        %v2337 = vsel %vm2276, %v2318, 0.0
        %2338 = vadd.xlane.f32.xlu0 %v2337
        %v2339 = vpop.xlane.xlu0 %2338
        %v2340 = vsel %vm2276, %v2320, 0.0
        %2341 = vadd.xlane.f32.xlu0 %v2340
        %v2342 = vpop.xlane.xlu0 %2341
        %v2343 = vsel %vm2276, %v2322, 0.0
        %2344 = vadd.xlane.f32.xlu0 %v2343
        %v2345 = vpop.xlane.xlu0 %2344
        %v2346 = vsel %vm2276, %v2324, 0.0
        %2347 = vadd.xlane.f32.xlu0 %v2346
        %v2348 = vpop.xlane.xlu0 %2347
        %v2349 = vrcp.pop %v2327
        %v2350 = vrcp.pop %v2330
        %v2351 = vrcp.pop %v2333
        %v2352 = vrcp.pop %v2336
        %v2353 = vrcp.pop %v2339
        %v2354 = vrcp.pop %v2342
        %v2355 = vrcp.pop %v2345
        %v2356 = vrcp.pop %v2348
        %v2357 = vmul.f32 %v2310, %v2349
        %v2358 = vmul.f32 %v2312, %v2350
        %v2359 = vmul.f32 %v2314, %v2351
        %v2360 = vmul.f32 %v2316, %v2352
        %v2361 = vmul.f32 %v2318, %v2353
        %v2362 = vmul.f32 %v2320, %v2354
        %v2363 = vmul.f32 %v2322, %v2355
        %v2364 = vmul.f32 %v2324, %v2356
        %v2365 = vpack.c.bf16 %v2358, %v2357
        %v2366 = vpack.c.bf16 %v2360, %v2359
        %v2367 = vpack.c.bf16 %v2362, %v2361
        %v2368 = vpack.c.bf16 %v2364, %v2363
        %v2370 = vsel %vm2276, %v2365, 0
        %v2373 = vsel %vm2276, %v2366, 0
        %v2376 = vsel %vm2276, %v2367, 0
        %v2379 = vsel %vm2276, %v2368, 0
        %2381 = vmatprep.subr.bf16.mxu0 0
        %2382 = vmatpush1.bf16.msra.mxu0 %v2182
        %2383 = vmatprep.subr.bf16.mxu0 0
        %2384 = vmatpush1.bf16.msra.mxu0 %v2183
        %2385 = vmatprep.subr.bf16.mxu0 0
        %2386 = vmatpush1.bf16.msra.mxu0 %v2184
        %2387 = vmatprep.subr.bf16.mxu0 0
        %2388 = vmatpush1.bf16.msra.mxu0 %v2185
        %2389 = vmatprep.subr.bf16.mxu0 0
        %2390 = vmatpush1.bf16.msra.mxu0 0
        %2391 = vmatprep.subr.bf16.mxu0 0
        %2392 = vmatpush1.bf16.msra.mxu0 0
        %2393 = vmatprep.subr.bf16.mxu0 0
        %2394 = vmatpush1.bf16.msra.mxu0 0
        %2395 = vmatprep.subr.bf16.mxu0 0
        %2396 = vmatpush1.bf16.msra.mxu0 0
        %2397 = vmatprep.subr.bf16.mxu0 0
        %2398 = vmatpush1.bf16.msra.mxu0 0
        %2399 = vmatprep.subr.bf16.mxu0 0
        %2400 = vmatpush1.bf16.msra.mxu0 0
        %2401 = vmatprep.subr.bf16.mxu0 0
        %2402 = vmatpush1.bf16.msra.mxu0 0
        %2403 = vmatprep.subr.bf16.mxu0 0
        %2404 = vmatpush1.bf16.msra.mxu0 0
        %2405 = vmatprep.subr.bf16.mxu0 0
        %2406 = vmatpush1.bf16.msra.mxu0 0
        %2407 = vmatprep.subr.bf16.mxu0 0
        %2408 = vmatpush1.bf16.msra.mxu0 0
        %2409 = vmatprep.subr.bf16.mxu0 0
        %2410 = vmatpush1.bf16.msra.mxu0 0
        %2411 = vmatprep.subr.bf16.mxu0 0
        %2412 = vmatpush1.bf16.msra.mxu0 0
        %2413 = vmatprep.mubr.bf16.mxu0 0
        %2414 = vmatmul.mubr.bf16.gmra.mrb[0].mxu0 %v2370
        %v2415 = vpop.f32.mrb[0].mxu0
        %v2416 = vadd.f32 0.0, %v2415
        %v2417 = vpop.f32.mrb[0].mxu0
        %v2418 = vpop.f32.mrb[0].mxu0
        %v2419 = vadd.f32 0.0, %v2418
        %v2420 = vpop.f32.mrb[0].mxu0
        %2421 = vmatprep.mubr.bf16.mxu0 0
        %2422 = vmatmul.mubr.bf16.gmra.mrb[0].mxu0 %v2373
        %v2423 = vpop.f32.mrb[0].mxu0
        %v2424 = vadd.f32 0.0, %v2423
        %v2425 = vpop.f32.mrb[0].mxu0
        %v2426 = vpop.f32.mrb[0].mxu0
        %v2427 = vadd.f32 0.0, %v2426
        %v2428 = vpop.f32.mrb[0].mxu0
        %2429 = vmatprep.mubr.bf16.mxu0 0
        %2430 = vmatmul.mubr.bf16.gmra.mrb[0].mxu0 %v2376
        %v2431 = vpop.f32.mrb[0].mxu0
        %v2432 = vadd.f32 0.0, %v2431
        %v2433 = vpop.f32.mrb[0].mxu0
        %v2434 = vpop.f32.mrb[0].mxu0
        %v2435 = vadd.f32 0.0, %v2434
        %v2436 = vpop.f32.mrb[0].mxu0
        %2437 = vmatprep.mubr.bf16.mxu0 0
        %2438 = vmatmul.mubr.bf16.gmra.mrb[0].mxu0 %v2379
        %v2439 = vpop.f32.mrb[0].mxu0
        %v2440 = vadd.f32 0.0, %v2439
        %v2441 = vpop.f32.mrb[0].mxu0
        %v2442 = vpop.f32.mrb[0].mxu0
        %v2443 = vadd.f32 0.0, %v2442
        %v2444 = vpop.f32.mrb[0].mxu0
        %2445 = vdwg.mxu0
        %2450 = vrot.lane.b32.xlu0 %v1992, 120
        %v2451 = vpop.permute.xlu0 %2450
        %2452 = vrot.lane.b32.xlu0 %v1993, 120
        %v2453 = vpop.permute.xlu0 %2452
        %2454 = vrot.lane.b32.xlu0 %v1994, 120
        %v2455 = vpop.permute.xlu0 %2454
        %2456 = vrot.lane.b32.xlu0 %v1995, 120
        %v2457 = vpop.permute.xlu0 %2456
        %2462 = vrot.lane.b32.xlu0 %v2079, 120
        %v2463 = vpop.permute.xlu0 %2462
        %2464 = vrot.lane.b32.xlu0 %v2080, 120
        %v2465 = vpop.permute.xlu0 %2464
        %2466 = vrot.lane.b32.xlu0 %v2081, 120
        %v2467 = vpop.permute.xlu0 %2466
        %2468 = vrot.lane.b32.xlu0 %v2082, 120
        %v2469 = vpop.permute.xlu0 %2468
        %v2471 = vsel %vm2186, %v2451, 0
        %v2474 = vsel %vm2186, %v2453, 0
        %v2477 = vsel %vm2186, %v2455, 0
        %v2480 = vsel %vm2186, %v2457, 0
        %v2483 = vsel %vm2186, %v2463, 0
        %v2486 = vsel %vm2186, %v2465, 0
        %v2489 = vsel %vm2186, %v2467, 0
        %v2492 = vsel %vm2186, %v2469, 0
        %2494 = vmatprep.subr.bf16.mxu0 0
        %2495 = vmatpush1.bf16.xpose.msra.mxu0 %v2483
        %2496 = vmatprep.subr.bf16.mxu0 0
        %2497 = vmatpush1.bf16.xpose.msra.mxu0 %v2486
        %2498 = vmatprep.subr.bf16.mxu0 0
        %2499 = vmatpush1.bf16.xpose.msra.mxu0 %v2489
        %2500 = vmatprep.subr.bf16.mxu0 0
        %2501 = vmatpush1.bf16.xpose.msra.mxu0 %v2492
        %2502 = vmatprep.subr.bf16.mxu0 0
        %2503 = vmatpush1.bf16.xpose.msra.mxu0 0
        %2504 = vmatprep.subr.bf16.mxu0 0
        %2505 = vmatpush1.bf16.xpose.msra.mxu0 0
        %2506 = vmatprep.subr.bf16.mxu0 0
        %2507 = vmatpush1.bf16.xpose.msra.mxu0 0
        %2508 = vmatprep.subr.bf16.mxu0 0
        %2509 = vmatpush1.bf16.xpose.msra.mxu0 0
        %2510 = vmatprep.subr.bf16.mxu0 0
        %2511 = vmatpush1.bf16.xpose.msra.mxu0 0
        %2512 = vmatprep.subr.bf16.mxu0 0
        %2513 = vmatpush1.bf16.xpose.msra.mxu0 0
        %2514 = vmatprep.subr.bf16.mxu0 0
        %2515 = vmatpush1.bf16.xpose.msra.mxu0 0
        %2516 = vmatprep.subr.bf16.mxu0 0
        %2517 = vmatpush1.bf16.xpose.msra.mxu0 0
        %2518 = vmatprep.subr.bf16.mxu0 0
        %2519 = vmatpush1.bf16.xpose.msra.mxu0 0
        %2520 = vmatprep.subr.bf16.mxu0 0
        %2521 = vmatpush1.bf16.xpose.msra.mxu0 0
        %2522 = vmatprep.subr.bf16.mxu0 0
        %2523 = vmatpush1.bf16.xpose.msra.mxu0 0
        %2524 = vmatprep.subr.bf16.mxu0 0
        %2525 = vmatpush1.bf16.xpose.msra.mxu0 0
        %2526 = vmatprep.mubr.bf16.mxu0 0
        %2527 = vmatmul.mubr.bf16.gmra.mrb[0].mxu0 %v2471
        %v2528 = vpop.f32.mrb[0].mxu0
        %v2529 = vadd.f32 0.0, %v2528
        %v2530 = vpop.f32.mrb[0].mxu0
        %v2531 = vpop.f32.mrb[0].mxu0
        %v2532 = vadd.f32 0.0, %v2531
        %v2533 = vpop.f32.mrb[0].mxu0
        %2534 = vmatprep.mubr.bf16.mxu0 0
        %2535 = vmatmul.mubr.bf16.gmra.mrb[0].mxu0 %v2474
        %v2536 = vpop.f32.mrb[0].mxu0
        %v2537 = vadd.f32 0.0, %v2536
        %v2538 = vpop.f32.mrb[0].mxu0
        %v2539 = vpop.f32.mrb[0].mxu0
        %v2540 = vadd.f32 0.0, %v2539
        %v2541 = vpop.f32.mrb[0].mxu0
        %2542 = vmatprep.mubr.bf16.mxu0 0
        %2543 = vmatmul.mubr.bf16.gmra.mrb[0].mxu0 %v2477
        %v2544 = vpop.f32.mrb[0].mxu0
        %v2545 = vadd.f32 0.0, %v2544
        %v2546 = vpop.f32.mrb[0].mxu0
        %v2547 = vpop.f32.mrb[0].mxu0
        %v2548 = vadd.f32 0.0, %v2547
        %v2549 = vpop.f32.mrb[0].mxu0
        %2550 = vmatprep.mubr.bf16.mxu0 0
        %2551 = vmatmul.mubr.bf16.gmra.mrb[0].mxu0 %v2480
        %v2552 = vpop.f32.mrb[0].mxu0
        %v2553 = vadd.f32 0.0, %v2552
        %v2554 = vpop.f32.mrb[0].mxu0
        %v2555 = vpop.f32.mrb[0].mxu0
        %v2556 = vadd.f32 0.0, %v2555
        %v2557 = vpop.f32.mrb[0].mxu0
        %2558 = vdwg.mxu0
        %v2559 = vsel %vm2276, %v2529, -inf
        %2560 = vmax.xlane.f32.xlu0 %v2559
        %v2561 = vpop.xlane.xlu0 %2560
        %v2562 = vsel %vm2276, %v2532, -inf
        %2563 = vmax.xlane.f32.xlu0 %v2562
        %v2564 = vpop.xlane.xlu0 %2563
        %v2565 = vsel %vm2276, %v2537, -inf
        %2566 = vmax.xlane.f32.xlu0 %v2565
        %v2567 = vpop.xlane.xlu0 %2566
        %v2568 = vsel %vm2276, %v2540, -inf
        %2569 = vmax.xlane.f32.xlu0 %v2568
        %v2570 = vpop.xlane.xlu0 %2569
        %v2571 = vsel %vm2276, %v2545, -inf
        %2572 = vmax.xlane.f32.xlu0 %v2571
        %v2573 = vpop.xlane.xlu0 %2572
        %v2574 = vsel %vm2276, %v2548, -inf
        %2575 = vmax.xlane.f32.xlu0 %v2574
        %v2576 = vpop.xlane.xlu0 %2575
        %v2577 = vsel %vm2276, %v2553, -inf
        %2578 = vmax.xlane.f32.xlu0 %v2577
        %v2579 = vpop.xlane.xlu0 %2578
        %v2580 = vsel %vm2276, %v2556, -inf
        %2581 = vmax.xlane.f32.xlu0 %v2580
        %v2582 = vpop.xlane.xlu0 %2581
        %v2583 = vsub.f32 %v2529, %v2561
        %v2584 = vsub.f32 %v2532, %v2564
        %v2585 = vsub.f32 %v2537, %v2567
        %v2586 = vsub.f32 %v2540, %v2570
        %v2587 = vsub.f32 %v2545, %v2573
        %v2588 = vsub.f32 %v2548, %v2576
        %v2589 = vsub.f32 %v2553, %v2579
        %v2590 = vsub.f32 %v2556, %v2582
        %v2591 = vmul.f32 %v2583, 1.442695
        %v2592 = vpow.pop %v2591
        %v2593 = vmul.f32 %v2584, 1.442695
        %v2594 = vpow.pop %v2593
        %v2595 = vmul.f32 %v2585, 1.442695
        %v2596 = vpow.pop %v2595
        %v2597 = vmul.f32 %v2586, 1.442695
        %v2598 = vpow.pop %v2597
        %v2599 = vmul.f32 %v2587, 1.442695
        %v2600 = vpow.pop %v2599
        %v2601 = vmul.f32 %v2588, 1.442695
        %v2602 = vpow.pop %v2601
        %v2603 = vmul.f32 %v2589, 1.442695
        %v2604 = vpow.pop %v2603
        %v2605 = vmul.f32 %v2590, 1.442695
        %v2606 = vpow.pop %v2605
        %v2607 = vsel %vm2276, %v2592, 0.0
        %2608 = vadd.xlane.f32.xlu0 %v2607
        %v2609 = vpop.xlane.xlu0 %2608
        %v2610 = vsel %vm2276, %v2594, 0.0
        %2611 = vadd.xlane.f32.xlu0 %v2610
        %v2612 = vpop.xlane.xlu0 %2611
        %v2613 = vsel %vm2276, %v2596, 0.0
        %2614 = vadd.xlane.f32.xlu0 %v2613
        %v2615 = vpop.xlane.xlu0 %2614
        %v2616 = vsel %vm2276, %v2598, 0.0
        %2617 = vadd.xlane.f32.xlu0 %v2616
        %v2618 = vpop.xlane.xlu0 %2617
        %v2619 = vsel %vm2276, %v2600, 0.0
        %2620 = vadd.xlane.f32.xlu0 %v2619
        %v2621 = vpop.xlane.xlu0 %2620
        %v2622 = vsel %vm2276, %v2602, 0.0
        %2623 = vadd.xlane.f32.xlu0 %v2622
        %v2624 = vpop.xlane.xlu0 %2623
        %v2625 = vsel %vm2276, %v2604, 0.0
        %2626 = vadd.xlane.f32.xlu0 %v2625
        %v2627 = vpop.xlane.xlu0 %2626
        %v2628 = vsel %vm2276, %v2606, 0.0
        %2629 = vadd.xlane.f32.xlu0 %v2628
        %v2630 = vpop.xlane.xlu0 %2629
        %v2631 = vrcp.pop %v2609
        %v2632 = vrcp.pop %v2612
        %v2633 = vrcp.pop %v2615
        %v2634 = vrcp.pop %v2618
        %v2635 = vrcp.pop %v2621
        %v2636 = vrcp.pop %v2624
        %v2637 = vrcp.pop %v2627
        %v2638 = vrcp.pop %v2630
        %v2639 = vmul.f32 %v2592, %v2631
        %v2640 = vmul.f32 %v2594, %v2632
        %v2641 = vmul.f32 %v2596, %v2633
        %v2642 = vmul.f32 %v2598, %v2634
        %v2643 = vmul.f32 %v2600, %v2635
        %v2644 = vmul.f32 %v2602, %v2636
        %v2645 = vmul.f32 %v2604, %v2637
        %v2646 = vmul.f32 %v2606, %v2638
        %v2647 = vpack.c.bf16 %v2640, %v2639
        %v2648 = vpack.c.bf16 %v2642, %v2641
        %v2649 = vpack.c.bf16 %v2644, %v2643
        %v2650 = vpack.c.bf16 %v2646, %v2645
        %2655 = vrot.lane.b32.xlu0 %v2182, 120
        %v2656 = vpop.permute.xlu0 %2655
        %2657 = vrot.lane.b32.xlu0 %v2183, 120
        %v2658 = vpop.permute.xlu0 %2657
        %2659 = vrot.lane.b32.xlu0 %v2184, 120
        %v2660 = vpop.permute.xlu0 %2659
        %2661 = vrot.lane.b32.xlu0 %v2185, 120
        %v2662 = vpop.permute.xlu0 %2661
        %v2668 = vsel %vm2276, %v2647, 0
        %v2671 = vsel %vm2276, %v2648, 0
        %v2674 = vsel %vm2276, %v2649, 0
        %v2677 = vsel %vm2276, %v2650, 0
        %2679 = vmatprep.subr.bf16.mxu0 0
        %2680 = vmatpush1.bf16.msra.mxu0 %v2656
        %2681 = vmatprep.subr.bf16.mxu0 0
        %2682 = vmatpush1.bf16.msra.mxu0 %v2658
        %2683 = vmatprep.subr.bf16.mxu0 0
        %2684 = vmatpush1.bf16.msra.mxu0 %v2660
        %2685 = vmatprep.subr.bf16.mxu0 0
        %2686 = vmatpush1.bf16.msra.mxu0 %v2662
        %2687 = vmatprep.subr.bf16.mxu0 0
        %2688 = vmatpush1.bf16.msra.mxu0 0
        %2689 = vmatprep.subr.bf16.mxu0 0
        %2690 = vmatpush1.bf16.msra.mxu0 0
        %2691 = vmatprep.subr.bf16.mxu0 0
        %2692 = vmatpush1.bf16.msra.mxu0 0
        %2693 = vmatprep.subr.bf16.mxu0 0
        %2694 = vmatpush1.bf16.msra.mxu0 0
        %2695 = vmatprep.subr.bf16.mxu0 0
        %2696 = vmatpush1.bf16.msra.mxu0 0
        %2697 = vmatprep.subr.bf16.mxu0 0
        %2698 = vmatpush1.bf16.msra.mxu0 0
        %2699 = vmatprep.subr.bf16.mxu0 0
        %2700 = vmatpush1.bf16.msra.mxu0 0
        %2701 = vmatprep.subr.bf16.mxu0 0
        %2702 = vmatpush1.bf16.msra.mxu0 0
        %2703 = vmatprep.subr.bf16.mxu0 0
        %2704 = vmatpush1.bf16.msra.mxu0 0
        %2705 = vmatprep.subr.bf16.mxu0 0
        %2706 = vmatpush1.bf16.msra.mxu0 0
        %2707 = vmatprep.subr.bf16.mxu0 0
        %2708 = vmatpush1.bf16.msra.mxu0 0
        %2709 = vmatprep.subr.bf16.mxu0 0
        %2710 = vmatpush1.bf16.msra.mxu0 0
        %2711 = vmatprep.mubr.bf16.mxu0 0
        %2712 = vmatmul.mubr.bf16.gmra.mrb[0].mxu0 %v2668
        %v2713 = vpop.f32.mrb[0].mxu0
        %v2714 = vadd.f32 0.0, %v2713
        %v2715 = vpop.f32.mrb[0].mxu0
        %v2716 = vpop.f32.mrb[0].mxu0
        %v2717 = vadd.f32 0.0, %v2716
        %v2718 = vpop.f32.mrb[0].mxu0
        %2719 = vmatprep.mubr.bf16.mxu0 0
        %2720 = vmatmul.mubr.bf16.gmra.mrb[0].mxu0 %v2671
        %v2721 = vpop.f32.mrb[0].mxu0
        %v2722 = vadd.f32 0.0, %v2721
        %v2723 = vpop.f32.mrb[0].mxu0
        %v2724 = vpop.f32.mrb[0].mxu0
        %v2725 = vadd.f32 0.0, %v2724
        %v2726 = vpop.f32.mrb[0].mxu0
        %2727 = vmatprep.mubr.bf16.mxu0 0
        %2728 = vmatmul.mubr.bf16.gmra.mrb[0].mxu0 %v2674
        %v2729 = vpop.f32.mrb[0].mxu0
        %v2730 = vadd.f32 0.0, %v2729
        %v2731 = vpop.f32.mrb[0].mxu0
        %v2732 = vpop.f32.mrb[0].mxu0
        %v2733 = vadd.f32 0.0, %v2732
        %v2734 = vpop.f32.mrb[0].mxu0
        %2735 = vmatprep.mubr.bf16.mxu0 0
        %2736 = vmatmul.mubr.bf16.gmra.mrb[0].mxu0 %v2677
        %v2737 = vpop.f32.mrb[0].mxu0
        %v2738 = vadd.f32 0.0, %v2737
        %v2739 = vpop.f32.mrb[0].mxu0
        %v2740 = vpop.f32.mrb[0].mxu0
        %v2741 = vadd.f32 0.0, %v2740
        %v2742 = vpop.f32.mrb[0].mxu0
        %2743 = vdwg.mxu0
        %2744 = vrot.lane.b32.xlu0 %v1992, 112
        %v2745 = vpop.permute.xlu0 %2744
        %2746 = vrot.lane.b32.xlu0 %v1993, 112
        %v2747 = vpop.permute.xlu0 %2746
        %2748 = vrot.lane.b32.xlu0 %v1994, 112
        %v2749 = vpop.permute.xlu0 %2748
        %2750 = vrot.lane.b32.xlu0 %v1995, 112
        %v2751 = vpop.permute.xlu0 %2750
        %2752 = vrot.lane.b32.xlu0 %v2079, 112
        %v2753 = vpop.permute.xlu0 %2752
        %2754 = vrot.lane.b32.xlu0 %v2080, 112
        %v2755 = vpop.permute.xlu0 %2754
        %2756 = vrot.lane.b32.xlu0 %v2081, 112
        %v2757 = vpop.permute.xlu0 %2756
        %2758 = vrot.lane.b32.xlu0 %v2082, 112
        %v2759 = vpop.permute.xlu0 %2758
        %v2761 = vsel %vm2186, %v2745, 0
        %v2764 = vsel %vm2186, %v2747, 0
        %v2767 = vsel %vm2186, %v2749, 0
        %v2770 = vsel %vm2186, %v2751, 0
        %v2773 = vsel %vm2186, %v2753, 0
        %v2776 = vsel %vm2186, %v2755, 0
        %v2779 = vsel %vm2186, %v2757, 0
        %v2782 = vsel %vm2186, %v2759, 0
        %2784 = vmatprep.subr.bf16.mxu0 0
        %2785 = vmatpush1.bf16.xpose.msra.mxu0 %v2773
        %2786 = vmatprep.subr.bf16.mxu0 0
        %2787 = vmatpush1.bf16.xpose.msra.mxu0 %v2776
        %2788 = vmatprep.subr.bf16.mxu0 0
        %2789 = vmatpush1.bf16.xpose.msra.mxu0 %v2779
        %2790 = vmatprep.subr.bf16.mxu0 0
        %2791 = vmatpush1.bf16.xpose.msra.mxu0 %v2782
        %2792 = vmatprep.subr.bf16.mxu0 0
        %2793 = vmatpush1.bf16.xpose.msra.mxu0 0
        %2794 = vmatprep.subr.bf16.mxu0 0
        %2795 = vmatpush1.bf16.xpose.msra.mxu0 0
        %2796 = vmatprep.subr.bf16.mxu0 0
        %2797 = vmatpush1.bf16.xpose.msra.mxu0 0
        %2798 = vmatprep.subr.bf16.mxu0 0
        %2799 = vmatpush1.bf16.xpose.msra.mxu0 0
        %2800 = vmatprep.subr.bf16.mxu0 0
        %2801 = vmatpush1.bf16.xpose.msra.mxu0 0
        %2802 = vmatprep.subr.bf16.mxu0 0
        %2803 = vmatpush1.bf16.xpose.msra.mxu0 0
        %2804 = vmatprep.subr.bf16.mxu0 0
        %2805 = vmatpush1.bf16.xpose.msra.mxu0 0
        %2806 = vmatprep.subr.bf16.mxu0 0
        %2807 = vmatpush1.bf16.xpose.msra.mxu0 0
        %2808 = vmatprep.subr.bf16.mxu0 0
        %2809 = vmatpush1.bf16.xpose.msra.mxu0 0
        %2810 = vmatprep.subr.bf16.mxu0 0
        %2811 = vmatpush1.bf16.xpose.msra.mxu0 0
        %2812 = vmatprep.subr.bf16.mxu0 0
        %2813 = vmatpush1.bf16.xpose.msra.mxu0 0
        %2814 = vmatprep.subr.bf16.mxu0 0
        %2815 = vmatpush1.bf16.xpose.msra.mxu0 0
        %2816 = vmatprep.mubr.bf16.mxu0 0
        %2817 = vmatmul.mubr.bf16.gmra.mrb[0].mxu0 %v2761
        %v2818 = vpop.f32.mrb[0].mxu0
        %v2819 = vadd.f32 0.0, %v2818
        %v2820 = vpop.f32.mrb[0].mxu0
        %v2821 = vpop.f32.mrb[0].mxu0
        %v2822 = vadd.f32 0.0, %v2821
        %v2823 = vpop.f32.mrb[0].mxu0
        %2824 = vmatprep.mubr.bf16.mxu0 0
        %2825 = vmatmul.mubr.bf16.gmra.mrb[0].mxu0 %v2764
        %v2826 = vpop.f32.mrb[0].mxu0
        %v2827 = vadd.f32 0.0, %v2826
        %v2828 = vpop.f32.mrb[0].mxu0
        %v2829 = vpop.f32.mrb[0].mxu0
        %v2830 = vadd.f32 0.0, %v2829
        %v2831 = vpop.f32.mrb[0].mxu0
        %2832 = vmatprep.mubr.bf16.mxu0 0
        %2833 = vmatmul.mubr.bf16.gmra.mrb[0].mxu0 %v2767
        %v2834 = vpop.f32.mrb[0].mxu0
        %v2835 = vadd.f32 0.0, %v2834
        %v2836 = vpop.f32.mrb[0].mxu0
        %v2837 = vpop.f32.mrb[0].mxu0
        %v2838 = vadd.f32 0.0, %v2837
        %v2839 = vpop.f32.mrb[0].mxu0
        %2840 = vmatprep.mubr.bf16.mxu0 0
        %2841 = vmatmul.mubr.bf16.gmra.mrb[0].mxu0 %v2770
        %v2842 = vpop.f32.mrb[0].mxu0
        %v2843 = vadd.f32 0.0, %v2842
        %v2844 = vpop.f32.mrb[0].mxu0
        %v2845 = vpop.f32.mrb[0].mxu0
        %v2846 = vadd.f32 0.0, %v2845
        %v2847 = vpop.f32.mrb[0].mxu0
        %2848 = vdwg.mxu0
        %v2849 = vsel %vm2276, %v2819, -inf
        %2850 = vmax.xlane.f32.xlu0 %v2849
        %v2851 = vpop.xlane.xlu0 %2850
        %v2852 = vsel %vm2276, %v2822, -inf
        %2853 = vmax.xlane.f32.xlu0 %v2852
        %v2854 = vpop.xlane.xlu0 %2853
        %v2855 = vsel %vm2276, %v2827, -inf
        %2856 = vmax.xlane.f32.xlu0 %v2855
        %v2857 = vpop.xlane.xlu0 %2856
        %v2858 = vsel %vm2276, %v2830, -inf
        %2859 = vmax.xlane.f32.xlu0 %v2858
        %v2860 = vpop.xlane.xlu0 %2859
        %v2861 = vsel %vm2276, %v2835, -inf
        %2862 = vmax.xlane.f32.xlu0 %v2861
        %v2863 = vpop.xlane.xlu0 %2862
        %v2864 = vsel %vm2276, %v2838, -inf
        %2865 = vmax.xlane.f32.xlu0 %v2864
        %v2866 = vpop.xlane.xlu0 %2865
        %v2867 = vsel %vm2276, %v2843, -inf
        %2868 = vmax.xlane.f32.xlu0 %v2867
        %v2869 = vpop.xlane.xlu0 %2868
        %v2870 = vsel %vm2276, %v2846, -inf
        %2871 = vmax.xlane.f32.xlu0 %v2870
        %v2872 = vpop.xlane.xlu0 %2871
        %v2873 = vsub.f32 %v2819, %v2851
        %v2874 = vsub.f32 %v2822, %v2854
        %v2875 = vsub.f32 %v2827, %v2857
        %v2876 = vsub.f32 %v2830, %v2860
        %v2877 = vsub.f32 %v2835, %v2863
        %v2878 = vsub.f32 %v2838, %v2866
        %v2879 = vsub.f32 %v2843, %v2869
        %v2880 = vsub.f32 %v2846, %v2872
        %v2881 = vmul.f32 %v2873, 1.442695
        %v2882 = vpow.pop %v2881
        %v2883 = vmul.f32 %v2874, 1.442695
        %v2884 = vpow.pop %v2883
        %v2885 = vmul.f32 %v2875, 1.442695
        %v2886 = vpow.pop %v2885
        %v2887 = vmul.f32 %v2876, 1.442695
        %v2888 = vpow.pop %v2887
        %v2889 = vmul.f32 %v2877, 1.442695
        %v2890 = vpow.pop %v2889
        %v2891 = vmul.f32 %v2878, 1.442695
        %v2892 = vpow.pop %v2891
        %v2893 = vmul.f32 %v2879, 1.442695
        %v2894 = vpow.pop %v2893
        %v2895 = vmul.f32 %v2880, 1.442695
        %v2896 = vpow.pop %v2895
        %v2897 = vsel %vm2276, %v2882, 0.0
        %2898 = vadd.xlane.f32.xlu0 %v2897
        %v2899 = vpop.xlane.xlu0 %2898
        %v2900 = vsel %vm2276, %v2884, 0.0
        %2901 = vadd.xlane.f32.xlu0 %v2900
        %v2902 = vpop.xlane.xlu0 %2901
        %v2903 = vsel %vm2276, %v2886, 0.0
        %2904 = vadd.xlane.f32.xlu0 %v2903
        %v2905 = vpop.xlane.xlu0 %2904
        %v2906 = vsel %vm2276, %v2888, 0.0
        %2907 = vadd.xlane.f32.xlu0 %v2906
        %v2908 = vpop.xlane.xlu0 %2907
        %v2909 = vsel %vm2276, %v2890, 0.0
        %2910 = vadd.xlane.f32.xlu0 %v2909
        %v2911 = vpop.xlane.xlu0 %2910
        %v2912 = vsel %vm2276, %v2892, 0.0
        %2913 = vadd.xlane.f32.xlu0 %v2912
        %v2914 = vpop.xlane.xlu0 %2913
        %v2915 = vsel %vm2276, %v2894, 0.0
        %2916 = vadd.xlane.f32.xlu0 %v2915
        %v2917 = vpop.xlane.xlu0 %2916
        %v2918 = vsel %vm2276, %v2896, 0.0
        %2919 = vadd.xlane.f32.xlu0 %v2918
        %v2920 = vpop.xlane.xlu0 %2919
        %v2921 = vrcp.pop %v2899
        %v2922 = vrcp.pop %v2902
        %v2923 = vrcp.pop %v2905
        %v2924 = vrcp.pop %v2908
        %v2925 = vrcp.pop %v2911
        %v2926 = vrcp.pop %v2914
        %v2927 = vrcp.pop %v2917
        %v2928 = vrcp.pop %v2920
        %v2929 = vmul.f32 %v2882, %v2921
        %v2930 = vmul.f32 %v2884, %v2922
        %v2931 = vmul.f32 %v2886, %v2923
        %v2932 = vmul.f32 %v2888, %v2924
        %v2933 = vmul.f32 %v2890, %v2925
        %v2934 = vmul.f32 %v2892, %v2926
        %v2935 = vmul.f32 %v2894, %v2927
        %v2936 = vmul.f32 %v2896, %v2928
        %v2937 = vpack.c.bf16 %v2930, %v2929
        %v2938 = vpack.c.bf16 %v2932, %v2931
        %v2939 = vpack.c.bf16 %v2934, %v2933
        %v2940 = vpack.c.bf16 %v2936, %v2935
        %2941 = vrot.lane.b32.xlu0 %v2182, 112
        %v2942 = vpop.permute.xlu0 %2941
        %2943 = vrot.lane.b32.xlu0 %v2183, 112
        %v2944 = vpop.permute.xlu0 %2943
        %2945 = vrot.lane.b32.xlu0 %v2184, 112
        %v2946 = vpop.permute.xlu0 %2945
        %2947 = vrot.lane.b32.xlu0 %v2185, 112
        %v2948 = vpop.permute.xlu0 %2947
        %v2954 = vsel %vm2276, %v2937, 0
        %v2957 = vsel %vm2276, %v2938, 0
        %v2960 = vsel %vm2276, %v2939, 0
        %v2963 = vsel %vm2276, %v2940, 0
        %2965 = vmatprep.subr.bf16.mxu0 0
        %2966 = vmatpush1.bf16.msra.mxu0 %v2942
        %2967 = vmatprep.subr.bf16.mxu0 0
        %2968 = vmatpush1.bf16.msra.mxu0 %v2944
        %2969 = vmatprep.subr.bf16.mxu0 0
        %2970 = vmatpush1.bf16.msra.mxu0 %v2946
        %2971 = vmatprep.subr.bf16.mxu0 0
        %2972 = vmatpush1.bf16.msra.mxu0 %v2948
        %2973 = vmatprep.subr.bf16.mxu0 0
        %2974 = vmatpush1.bf16.msra.mxu0 0
        %2975 = vmatprep.subr.bf16.mxu0 0
        %2976 = vmatpush1.bf16.msra.mxu0 0
        %2977 = vmatprep.subr.bf16.mxu0 0
        %2978 = vmatpush1.bf16.msra.mxu0 0
        %2979 = vmatprep.subr.bf16.mxu0 0
        %2980 = vmatpush1.bf16.msra.mxu0 0
        %2981 = vmatprep.subr.bf16.mxu0 0
        %2982 = vmatpush1.bf16.msra.mxu0 0
        %2983 = vmatprep.subr.bf16.mxu0 0
        %2984 = vmatpush1.bf16.msra.mxu0 0
        %2985 = vmatprep.subr.bf16.mxu0 0
        %2986 = vmatpush1.bf16.msra.mxu0 0
        %2987 = vmatprep.subr.bf16.mxu0 0
        %2988 = vmatpush1.bf16.msra.mxu0 0
        %2989 = vmatprep.subr.bf16.mxu0 0
        %2990 = vmatpush1.bf16.msra.mxu0 0
        %2991 = vmatprep.subr.bf16.mxu0 0
        %2992 = vmatpush1.bf16.msra.mxu0 0
        %2993 = vmatprep.subr.bf16.mxu0 0
        %2994 = vmatpush1.bf16.msra.mxu0 0
        %2995 = vmatprep.subr.bf16.mxu0 0
        %2996 = vmatpush1.bf16.msra.mxu0 0
        %2997 = vmatprep.mubr.bf16.mxu0 0
        %2998 = vmatmul.mubr.bf16.gmra.mrb[0].mxu0 %v2954
        %v2999 = vpop.f32.mrb[0].mxu0
        %v3000 = vadd.f32 0.0, %v2999
        %v3001 = vpop.f32.mrb[0].mxu0
        %v3002 = vpop.f32.mrb[0].mxu0
        %v3003 = vadd.f32 0.0, %v3002
        %v3004 = vpop.f32.mrb[0].mxu0
        %3005 = vmatprep.mubr.bf16.mxu0 0
        %3006 = vmatmul.mubr.bf16.gmra.mrb[0].mxu0 %v2957
        %v3007 = vpop.f32.mrb[0].mxu0
        %v3008 = vadd.f32 0.0, %v3007
        %v3009 = vpop.f32.mrb[0].mxu0
        %v3010 = vpop.f32.mrb[0].mxu0
        %v3011 = vadd.f32 0.0, %v3010
        %v3012 = vpop.f32.mrb[0].mxu0
        %3013 = vmatprep.mubr.bf16.mxu0 0
        %3014 = vmatmul.mubr.bf16.gmra.mrb[0].mxu0 %v2960
        %v3015 = vpop.f32.mrb[0].mxu0
        %v3016 = vadd.f32 0.0, %v3015
        %v3017 = vpop.f32.mrb[0].mxu0
        %v3018 = vpop.f32.mrb[0].mxu0
        %v3019 = vadd.f32 0.0, %v3018
        %v3020 = vpop.f32.mrb[0].mxu0
        %3021 = vmatprep.mubr.bf16.mxu0 0
        %3022 = vmatmul.mubr.bf16.gmra.mrb[0].mxu0 %v2963
        %v3023 = vpop.f32.mrb[0].mxu0
        %v3024 = vadd.f32 0.0, %v3023
        %v3025 = vpop.f32.mrb[0].mxu0
        %v3026 = vpop.f32.mrb[0].mxu0
        %v3027 = vadd.f32 0.0, %v3026
        %v3028 = vpop.f32.mrb[0].mxu0
        %3029 = vdwg.mxu0
        %3030 = vrot.lane.b32.xlu0 %v1992, 104
        %v3031 = vpop.permute.xlu0 %3030
        %3032 = vrot.lane.b32.xlu0 %v1993, 104
        %v3033 = vpop.permute.xlu0 %3032
        %3034 = vrot.lane.b32.xlu0 %v1994, 104
        %v3035 = vpop.permute.xlu0 %3034
        %3036 = vrot.lane.b32.xlu0 %v1995, 104
        %v3037 = vpop.permute.xlu0 %3036
        %3038 = vrot.lane.b32.xlu0 %v2079, 104
        %v3039 = vpop.permute.xlu0 %3038
        %3040 = vrot.lane.b32.xlu0 %v2080, 104
        %v3041 = vpop.permute.xlu0 %3040
        %3042 = vrot.lane.b32.xlu0 %v2081, 104
        %v3043 = vpop.permute.xlu0 %3042
        %3044 = vrot.lane.b32.xlu0 %v2082, 104
        %v3045 = vpop.permute.xlu0 %3044
        %v3047 = vsel %vm2186, %v3031, 0
        %v3050 = vsel %vm2186, %v3033, 0
        %v3053 = vsel %vm2186, %v3035, 0
        %v3056 = vsel %vm2186, %v3037, 0
        %v3059 = vsel %vm2186, %v3039, 0
        %v3062 = vsel %vm2186, %v3041, 0
        %v3065 = vsel %vm2186, %v3043, 0
        %v3068 = vsel %vm2186, %v3045, 0
        %3070 = vmatprep.subr.bf16.mxu0 0
        %3071 = vmatpush1.bf16.xpose.msra.mxu0 %v3059
        %3072 = vmatprep.subr.bf16.mxu0 0
        %3073 = vmatpush1.bf16.xpose.msra.mxu0 %v3062
        %3074 = vmatprep.subr.bf16.mxu0 0
        %3075 = vmatpush1.bf16.xpose.msra.mxu0 %v3065
        %3076 = vmatprep.subr.bf16.mxu0 0
        %3077 = vmatpush1.bf16.xpose.msra.mxu0 %v3068
        %3078 = vmatprep.subr.bf16.mxu0 0
        %3079 = vmatpush1.bf16.xpose.msra.mxu0 0
        %3080 = vmatprep.subr.bf16.mxu0 0
        %3081 = vmatpush1.bf16.xpose.msra.mxu0 0
        %3082 = vmatprep.subr.bf16.mxu0 0
        %3083 = vmatpush1.bf16.xpose.msra.mxu0 0
        %3084 = vmatprep.subr.bf16.mxu0 0
        %3085 = vmatpush1.bf16.xpose.msra.mxu0 0
        %3086 = vmatprep.subr.bf16.mxu0 0
        %3087 = vmatpush1.bf16.xpose.msra.mxu0 0
        %3088 = vmatprep.subr.bf16.mxu0 0
        %3089 = vmatpush1.bf16.xpose.msra.mxu0 0
        %3090 = vmatprep.subr.bf16.mxu0 0
        %3091 = vmatpush1.bf16.xpose.msra.mxu0 0
        %3092 = vmatprep.subr.bf16.mxu0 0
        %3093 = vmatpush1.bf16.xpose.msra.mxu0 0
        %3094 = vmatprep.subr.bf16.mxu0 0
        %3095 = vmatpush1.bf16.xpose.msra.mxu0 0
        %3096 = vmatprep.subr.bf16.mxu0 0
        %3097 = vmatpush1.bf16.xpose.msra.mxu0 0
        %3098 = vmatprep.subr.bf16.mxu0 0
        %3099 = vmatpush1.bf16.xpose.msra.mxu0 0
        %3100 = vmatprep.subr.bf16.mxu0 0
        %3101 = vmatpush1.bf16.xpose.msra.mxu0 0
        %3102 = vmatprep.mubr.bf16.mxu0 0
        %3103 = vmatmul.mubr.bf16.gmra.mrb[0].mxu0 %v3047
        %v3104 = vpop.f32.mrb[0].mxu0
        %v3105 = vadd.f32 0.0, %v3104
        %v3106 = vpop.f32.mrb[0].mxu0
        %v3107 = vpop.f32.mrb[0].mxu0
        %v3108 = vadd.f32 0.0, %v3107
        %v3109 = vpop.f32.mrb[0].mxu0
        %3110 = vmatprep.mubr.bf16.mxu0 0
        %3111 = vmatmul.mubr.bf16.gmra.mrb[0].mxu0 %v3050
        %v3112 = vpop.f32.mrb[0].mxu0
        %v3113 = vadd.f32 0.0, %v3112
        %v3114 = vpop.f32.mrb[0].mxu0
        %v3115 = vpop.f32.mrb[0].mxu0
        %v3116 = vadd.f32 0.0, %v3115
        %v3117 = vpop.f32.mrb[0].mxu0
        %3118 = vmatprep.mubr.bf16.mxu0 0
        %3119 = vmatmul.mubr.bf16.gmra.mrb[0].mxu0 %v3053
        %v3120 = vpop.f32.mrb[0].mxu0
        %v3121 = vadd.f32 0.0, %v3120
        %v3122 = vpop.f32.mrb[0].mxu0
        %v3123 = vpop.f32.mrb[0].mxu0
        %v3124 = vadd.f32 0.0, %v3123
        %v3125 = vpop.f32.mrb[0].mxu0
        %3126 = vmatprep.mubr.bf16.mxu0 0
        %3127 = vmatmul.mubr.bf16.gmra.mrb[0].mxu0 %v3056
        %v3128 = vpop.f32.mrb[0].mxu0
        %v3129 = vadd.f32 0.0, %v3128
        %v3130 = vpop.f32.mrb[0].mxu0
        %v3131 = vpop.f32.mrb[0].mxu0
        %v3132 = vadd.f32 0.0, %v3131
        %v3133 = vpop.f32.mrb[0].mxu0
        %3134 = vdwg.mxu0
        %v3135 = vsel %vm2276, %v3105, -inf
        %3136 = vmax.xlane.f32.xlu0 %v3135
        %v3137 = vpop.xlane.xlu0 %3136
        %v3138 = vsel %vm2276, %v3108, -inf
        %3139 = vmax.xlane.f32.xlu0 %v3138
        %v3140 = vpop.xlane.xlu0 %3139
        %v3141 = vsel %vm2276, %v3113, -inf
        %3142 = vmax.xlane.f32.xlu0 %v3141
        %v3143 = vpop.xlane.xlu0 %3142
        %v3144 = vsel %vm2276, %v3116, -inf
        %3145 = vmax.xlane.f32.xlu0 %v3144
        %v3146 = vpop.xlane.xlu0 %3145
        %v3147 = vsel %vm2276, %v3121, -inf
        %3148 = vmax.xlane.f32.xlu0 %v3147
        %v3149 = vpop.xlane.xlu0 %3148
        %v3150 = vsel %vm2276, %v3124, -inf
        %3151 = vmax.xlane.f32.xlu0 %v3150
        %v3152 = vpop.xlane.xlu0 %3151
        %v3153 = vsel %vm2276, %v3129, -inf
        %3154 = vmax.xlane.f32.xlu0 %v3153
        %v3155 = vpop.xlane.xlu0 %3154
        %v3156 = vsel %vm2276, %v3132, -inf
        %3157 = vmax.xlane.f32.xlu0 %v3156
        %v3158 = vpop.xlane.xlu0 %3157
        %v3159 = vsub.f32 %v3105, %v3137
        %v3160 = vsub.f32 %v3108, %v3140
        %v3161 = vsub.f32 %v3113, %v3143
        %v3162 = vsub.f32 %v3116, %v3146
        %v3163 = vsub.f32 %v3121, %v3149
        %v3164 = vsub.f32 %v3124, %v3152
        %v3165 = vsub.f32 %v3129, %v3155
        %v3166 = vsub.f32 %v3132, %v3158
        %v3167 = vmul.f32 %v3159, 1.442695
        %v3168 = vpow.pop %v3167
        %v3169 = vmul.f32 %v3160, 1.442695
        %v3170 = vpow.pop %v3169
        %v3171 = vmul.f32 %v3161, 1.442695
        %v3172 = vpow.pop %v3171
        %v3173 = vmul.f32 %v3162, 1.442695
        %v3174 = vpow.pop %v3173
        %v3175 = vmul.f32 %v3163, 1.442695
        %v3176 = vpow.pop %v3175
        %v3177 = vmul.f32 %v3164, 1.442695
        %v3178 = vpow.pop %v3177
        %v3179 = vmul.f32 %v3165, 1.442695
        %v3180 = vpow.pop %v3179
        %v3181 = vmul.f32 %v3166, 1.442695
        %v3182 = vpow.pop %v3181
        %v3183 = vsel %vm2276, %v3168, 0.0
        %3184 = vadd.xlane.f32.xlu0 %v3183
        %v3185 = vpop.xlane.xlu0 %3184
        %v3186 = vsel %vm2276, %v3170, 0.0
        %3187 = vadd.xlane.f32.xlu0 %v3186
        %v3188 = vpop.xlane.xlu0 %3187
        %v3189 = vsel %vm2276, %v3172, 0.0
        %3190 = vadd.xlane.f32.xlu0 %v3189
        %v3191 = vpop.xlane.xlu0 %3190
        %v3192 = vsel %vm2276, %v3174, 0.0
        %3193 = vadd.xlane.f32.xlu0 %v3192
        %v3194 = vpop.xlane.xlu0 %3193
        %v3195 = vsel %vm2276, %v3176, 0.0
        %3196 = vadd.xlane.f32.xlu0 %v3195
        %v3197 = vpop.xlane.xlu0 %3196
        %v3198 = vsel %vm2276, %v3178, 0.0
        %3199 = vadd.xlane.f32.xlu0 %v3198
        %v3200 = vpop.xlane.xlu0 %3199
        %v3201 = vsel %vm2276, %v3180, 0.0
        %3202 = vadd.xlane.f32.xlu0 %v3201
        %v3203 = vpop.xlane.xlu0 %3202
        %v3204 = vsel %vm2276, %v3182, 0.0
        %3205 = vadd.xlane.f32.xlu0 %v3204
        %v3206 = vpop.xlane.xlu0 %3205
        %v3207 = vrcp.pop %v3185
        %v3208 = vrcp.pop %v3188
        %v3209 = vrcp.pop %v3191
        %v3210 = vrcp.pop %v3194
        %v3211 = vrcp.pop %v3197
        %v3212 = vrcp.pop %v3200
        %v3213 = vrcp.pop %v3203
        %v3214 = vrcp.pop %v3206
        %v3215 = vmul.f32 %v3168, %v3207
        %v3216 = vmul.f32 %v3170, %v3208
        %v3217 = vmul.f32 %v3172, %v3209
        %v3218 = vmul.f32 %v3174, %v3210
        %v3219 = vmul.f32 %v3176, %v3211
        %v3220 = vmul.f32 %v3178, %v3212
        %v3221 = vmul.f32 %v3180, %v3213
        %v3222 = vmul.f32 %v3182, %v3214
        %v3223 = vpack.c.bf16 %v3216, %v3215
        %v3224 = vpack.c.bf16 %v3218, %v3217
        %v3225 = vpack.c.bf16 %v3220, %v3219
        %v3226 = vpack.c.bf16 %v3222, %v3221
        %3227 = vrot.lane.b32.xlu0 %v2182, 104
        %v3228 = vpop.permute.xlu0 %3227
        %3229 = vrot.lane.b32.xlu0 %v2183, 104
        %v3230 = vpop.permute.xlu0 %3229
        %3231 = vrot.lane.b32.xlu0 %v2184, 104
        %v3232 = vpop.permute.xlu0 %3231
        %3233 = vrot.lane.b32.xlu0 %v2185, 104
        %v3234 = vpop.permute.xlu0 %3233
        %v3240 = vsel %vm2276, %v3223, 0
        %v3243 = vsel %vm2276, %v3224, 0
        %v3246 = vsel %vm2276, %v3225, 0
        %v3249 = vsel %vm2276, %v3226, 0
        %3251 = vmatprep.subr.bf16.mxu0 0
        %3252 = vmatpush1.bf16.msra.mxu0 %v3228
        %3253 = vmatprep.subr.bf16.mxu0 0
        %3254 = vmatpush1.bf16.msra.mxu0 %v3230
        %3255 = vmatprep.subr.bf16.mxu0 0
        %3256 = vmatpush1.bf16.msra.mxu0 %v3232
        %3257 = vmatprep.subr.bf16.mxu0 0
        %3258 = vmatpush1.bf16.msra.mxu0 %v3234
        %3259 = vmatprep.subr.bf16.mxu0 0
        %3260 = vmatpush1.bf16.msra.mxu0 0
        %3261 = vmatprep.subr.bf16.mxu0 0
        %3262 = vmatpush1.bf16.msra.mxu0 0
        %3263 = vmatprep.subr.bf16.mxu0 0
        %3264 = vmatpush1.bf16.msra.mxu0 0
        %3265 = vmatprep.subr.bf16.mxu0 0
        %3266 = vmatpush1.bf16.msra.mxu0 0
        %3267 = vmatprep.subr.bf16.mxu0 0
        %3268 = vmatpush1.bf16.msra.mxu0 0
        %3269 = vmatprep.subr.bf16.mxu0 0
        %3270 = vmatpush1.bf16.msra.mxu0 0
        %3271 = vmatprep.subr.bf16.mxu0 0
        %3272 = vmatpush1.bf16.msra.mxu0 0
        %3273 = vmatprep.subr.bf16.mxu0 0
        %3274 = vmatpush1.bf16.msra.mxu0 0
        %3275 = vmatprep.subr.bf16.mxu0 0
        %3276 = vmatpush1.bf16.msra.mxu0 0
        %3277 = vmatprep.subr.bf16.mxu0 0
        %3278 = vmatpush1.bf16.msra.mxu0 0
        %3279 = vmatprep.subr.bf16.mxu0 0
        %3280 = vmatpush1.bf16.msra.mxu0 0
        %3281 = vmatprep.subr.bf16.mxu0 0
        %3282 = vmatpush1.bf16.msra.mxu0 0
        %3283 = vmatprep.mubr.bf16.mxu0 0
        %3284 = vmatmul.mubr.bf16.gmra.mrb[0].mxu0 %v3240
        %v3285 = vpop.f32.mrb[0].mxu0
        %v3286 = vadd.f32 0.0, %v3285
        %v3287 = vpop.f32.mrb[0].mxu0
        %v3288 = vpop.f32.mrb[0].mxu0
        %v3289 = vadd.f32 0.0, %v3288
        %v3290 = vpop.f32.mrb[0].mxu0
        %3291 = vmatprep.mubr.bf16.mxu0 0
        %3292 = vmatmul.mubr.bf16.gmra.mrb[0].mxu0 %v3243
        %v3293 = vpop.f32.mrb[0].mxu0
        %v3294 = vadd.f32 0.0, %v3293
        %v3295 = vpop.f32.mrb[0].mxu0
        %v3296 = vpop.f32.mrb[0].mxu0
        %v3297 = vadd.f32 0.0, %v3296
        %v3298 = vpop.f32.mrb[0].mxu0
        %3299 = vmatprep.mubr.bf16.mxu0 0
        %3300 = vmatmul.mubr.bf16.gmra.mrb[0].mxu0 %v3246
        %v3301 = vpop.f32.mrb[0].mxu0
        %v3302 = vadd.f32 0.0, %v3301
        %v3303 = vpop.f32.mrb[0].mxu0
        %v3304 = vpop.f32.mrb[0].mxu0
        %v3305 = vadd.f32 0.0, %v3304
        %v3306 = vpop.f32.mrb[0].mxu0
        %3307 = vmatprep.mubr.bf16.mxu0 0
        %3308 = vmatmul.mubr.bf16.gmra.mrb[0].mxu0 %v3249
        %v3309 = vpop.f32.mrb[0].mxu0
        %v3310 = vadd.f32 0.0, %v3309
        %v3311 = vpop.f32.mrb[0].mxu0
        %v3312 = vpop.f32.mrb[0].mxu0
        %v3313 = vadd.f32 0.0, %v3312
        %v3314 = vpop.f32.mrb[0].mxu0
        %3315 = vdwg.mxu0
        %3324 = vrot.lane.b32.xlu0 %v2714, 8
        %v3325 = vpop.permute.xlu0 %3324
        %3326 = vrot.lane.b32.xlu0 %v2717, 8
        %v3327 = vpop.permute.xlu0 %3326
        %3328 = vrot.lane.b32.xlu0 %v2722, 8
        %v3329 = vpop.permute.xlu0 %3328
        %3330 = vrot.lane.b32.xlu0 %v2725, 8
        %v3331 = vpop.permute.xlu0 %3330
        %3332 = vrot.lane.b32.xlu0 %v2730, 8
        %v3333 = vpop.permute.xlu0 %3332
        %3334 = vrot.lane.b32.xlu0 %v2733, 8
        %v3335 = vpop.permute.xlu0 %3334
        %3336 = vrot.lane.b32.xlu0 %v2738, 8
        %v3337 = vpop.permute.xlu0 %3336
        %3338 = vrot.lane.b32.xlu0 %v2741, 8
        %v3339 = vpop.permute.xlu0 %3338
        %3356 = vrot.lane.b32.xlu0 %v3000, 16
        %v3357 = vpop.permute.xlu0 %3356
        %3358 = vrot.lane.b32.xlu0 %v3003, 16
        %v3359 = vpop.permute.xlu0 %3358
        %3360 = vrot.lane.b32.xlu0 %v3008, 16
        %v3361 = vpop.permute.xlu0 %3360
        %3362 = vrot.lane.b32.xlu0 %v3011, 16
        %v3363 = vpop.permute.xlu0 %3362
        %3364 = vrot.lane.b32.xlu0 %v3016, 16
        %v3365 = vpop.permute.xlu0 %3364
        %3366 = vrot.lane.b32.xlu0 %v3019, 16
        %v3367 = vpop.permute.xlu0 %3366
        %3368 = vrot.lane.b32.xlu0 %v3024, 16
        %v3369 = vpop.permute.xlu0 %3368
        %3370 = vrot.lane.b32.xlu0 %v3027, 16
        %v3371 = vpop.permute.xlu0 %3370
        %3388 = vrot.lane.b32.xlu0 %v3286, 24
        %v3389 = vpop.permute.xlu0 %3388
        %3390 = vrot.lane.b32.xlu0 %v3289, 24
        %v3391 = vpop.permute.xlu0 %3390
        %3392 = vrot.lane.b32.xlu0 %v3294, 24
        %v3393 = vpop.permute.xlu0 %3392
        %3394 = vrot.lane.b32.xlu0 %v3297, 24
        %v3395 = vpop.permute.xlu0 %3394
        %3396 = vrot.lane.b32.xlu0 %v3302, 24
        %v3397 = vpop.permute.xlu0 %3396
        %3398 = vrot.lane.b32.xlu0 %v3305, 24
        %v3399 = vpop.permute.xlu0 %3398
        %3400 = vrot.lane.b32.xlu0 %v3310, 24
        %v3401 = vpop.permute.xlu0 %3400
        %3402 = vrot.lane.b32.xlu0 %v3313, 24
        %v3403 = vpop.permute.xlu0 %3402
        %v3412 = vsel %vm2186, %v2416, %v3325
        %v3413 = vsel %vm2186, %v2419, %v3327
        %v3414 = vsel %vm2186, %v2424, %v3329
        %v3415 = vsel %vm2186, %v2427, %v3331
        %v3416 = vsel %vm2186, %v2432, %v3333
        %v3417 = vsel %vm2186, %v2435, %v3335
        %v3418 = vsel %vm2186, %v2440, %v3337
        %v3419 = vsel %vm2186, %v2443, %v3339
        %v3420 = vsel %vm1778, %v3412, %v3357
        %v3421 = vsel %vm1778, %v3413, %v3359
        %v3422 = vsel %vm1778, %v3414, %v3361
        %v3423 = vsel %vm1778, %v3415, %v3363
        %v3424 = vsel %vm1778, %v3416, %v3365
        %v3425 = vsel %vm1778, %v3417, %v3367
        %v3426 = vsel %vm1778, %v3418, %v3369
        %v3427 = vsel %vm1778, %v3419, %v3371
        %vm3428 = vcmask 195584
        %v3429 = vsel %vm3428, %v3420, %v3389
        %v3430 = vsel %vm3428, %v3421, %v3391
        %v3431 = vsel %vm3428, %v3422, %v3393
        %v3432 = vsel %vm3428, %v3423, %v3395
        %v3433 = vsel %vm3428, %v3424, %v3397
        %v3434 = vsel %vm3428, %v3425, %v3399
        %v3435 = vsel %vm3428, %v3426, %v3401
        %v3436 = vsel %vm3428, %v3427, %v3403
        %v3437 = vpack.c.bf16 %v3430, %v3429
        %v3438 = vpack.c.bf16 %v3432, %v3431
        %v3439 = vpack.c.bf16 %v3434, %v3433
        %v3440 = vpack.c.bf16 %v3436, %v3435
        %v3442 = vlaneseq
        %v3443 = vshrl.u32 %v3442, 7
        %v3444 = vsub.s32 0, %v3443
        %v3445 = vrot.slane %v1883, %v3444
        %v3451 = vunpack.c.l.b16 %v1879
        %v3452 = vunpack.c.l.b16 %v1880
        %v3453 = vunpack.c.l.b16 %v1881
        %v3454 = vunpack.c.l.b16 %v1882
        %v3455 = vpack.c.b16 %v3452, %v3451
        %v3456 = vpack.c.b16 %v3454, %v3453
        %v3460 = vsel %vm1906, %v3437, 0
        %v3463 = vsel %vm1906, %v3438, 0
        %v3466 = vsel %vm1906, %v3439, 0
        %v3469 = vsel %vm1906, %v3440, 0
        %3471 = vmatprep.subr.bf16.mxu0 0
        %3472 = vmatpush1.bf16.msra.mxu0 %v3455
        %3473 = vmatprep.subr.bf16.mxu0 0
        %3474 = vmatpush1.bf16.msra.mxu0 %v3456
        %3475 = vmatprep.subr.bf16.mxu0 0
        %3476 = vmatpush1.bf16.msra.mxu0 0
        %3477 = vmatprep.subr.bf16.mxu0 0
        %3478 = vmatpush1.bf16.msra.mxu0 0
        %3479 = vmatprep.subr.bf16.mxu0 0
        %3480 = vmatpush1.bf16.msra.mxu0 0
        %3481 = vmatprep.subr.bf16.mxu0 0
        %3482 = vmatpush1.bf16.msra.mxu0 0
        %3483 = vmatprep.subr.bf16.mxu0 0
        %3484 = vmatpush1.bf16.msra.mxu0 0
        %3485 = vmatprep.subr.bf16.mxu0 0
        %3486 = vmatpush1.bf16.msra.mxu0 0
        %3487 = vmatprep.subr.bf16.mxu0 0
        %3488 = vmatpush1.bf16.msra.mxu0 0
        %3489 = vmatprep.subr.bf16.mxu0 0
        %3490 = vmatpush1.bf16.msra.mxu0 0
        %3491 = vmatprep.subr.bf16.mxu0 0
        %3492 = vmatpush1.bf16.msra.mxu0 0
        %3493 = vmatprep.subr.bf16.mxu0 0
        %3494 = vmatpush1.bf16.msra.mxu0 0
        %3495 = vmatprep.subr.bf16.mxu0 0
        %3496 = vmatpush1.bf16.msra.mxu0 0
        %3497 = vmatprep.subr.bf16.mxu0 0
        %3498 = vmatpush1.bf16.msra.mxu0 0
        %3499 = vmatprep.subr.bf16.mxu0 0
        %3500 = vmatpush1.bf16.msra.mxu0 0
        %3501 = vmatprep.subr.bf16.mxu0 0
        %3502 = vmatpush1.bf16.msra.mxu0 0
        %3503 = vmatprep.mubr.bf16.mxu0 0
        %3504 = vmatmul.mubr.bf16.gmra.mrb[0].mxu0 %v3460
        %v3505 = vpop.f32.mrb[0].mxu0
        %v3506 = vadd.f32 %v3445, %v3505
        %v3507 = vpop.f32.mrb[0].mxu0
        %v3508 = vpop.f32.mrb[0].mxu0
        %v3509 = vadd.f32 %v3445, %v3508
        %v3510 = vpop.f32.mrb[0].mxu0
        %3511 = vmatprep.mubr.bf16.mxu0 0
        %3512 = vmatmul.mubr.bf16.gmra.mrb[0].mxu0 %v3463
        %v3513 = vpop.f32.mrb[0].mxu0
        %v3514 = vadd.f32 %v3445, %v3513
        %v3515 = vpop.f32.mrb[0].mxu0
        %v3516 = vpop.f32.mrb[0].mxu0
        %v3517 = vadd.f32 %v3445, %v3516
        %v3518 = vpop.f32.mrb[0].mxu0
        %3519 = vmatprep.mubr.bf16.mxu0 0
        %3520 = vmatmul.mubr.bf16.gmra.mrb[0].mxu0 %v3466
        %v3521 = vpop.f32.mrb[0].mxu0
        %v3522 = vadd.f32 %v3445, %v3521
        %v3523 = vpop.f32.mrb[0].mxu0
        %v3524 = vpop.f32.mrb[0].mxu0
        %v3525 = vadd.f32 %v3445, %v3524
        %v3526 = vpop.f32.mrb[0].mxu0
        %3527 = vmatprep.mubr.bf16.mxu0 0
        %3528 = vmatmul.mubr.bf16.gmra.mrb[0].mxu0 %v3469
        %v3529 = vpop.f32.mrb[0].mxu0
        %v3530 = vadd.f32 %v3445, %v3529
        %v3531 = vpop.f32.mrb[0].mxu0
        %v3532 = vpop.f32.mrb[0].mxu0
        %v3533 = vadd.f32 %v3445, %v3532
        %v3534 = vpop.f32.mrb[0].mxu0
        %3535 = vdwg.mxu0
        %v3536 = vadd.f32 %v1826, %v3506
        %v3537 = vadd.f32 %v1829, %v3509
        %v3538 = vadd.f32 %v1834, %v3514
        %v3539 = vadd.f32 %v1837, %v3517
        %v3540 = vadd.f32 %v1842, %v3522
        %v3541 = vadd.f32 %v1845, %v3525
        %v3542 = vadd.f32 %v1850, %v3530
        %v3543 = vadd.f32 %v1853, %v3533
        %v3544 = vld [vmem:[%s29] sm:$0x3]
        %v3545 = vsel %vm1906, %v3536, 0.0
        %3546 = vadd.xlane.f32.xlu0 %v3545
        %v3547 = vpop.xlane.xlu0 %3546
        %v3548 = vsel %vm1906, %v3537, 0.0
        %3549 = vadd.xlane.f32.xlu0 %v3548
        %v3550 = vpop.xlane.xlu0 %3549
        %v3551 = vsel %vm1906, %v3538, 0.0
        %3552 = vadd.xlane.f32.xlu0 %v3551
        %v3553 = vpop.xlane.xlu0 %3552
        %v3554 = vsel %vm1906, %v3539, 0.0
        %3555 = vadd.xlane.f32.xlu0 %v3554
        %v3556 = vpop.xlane.xlu0 %3555
        %v3557 = vsel %vm1906, %v3540, 0.0
        %3558 = vadd.xlane.f32.xlu0 %v3557
        %v3559 = vpop.xlane.xlu0 %3558
        %v3560 = vsel %vm1906, %v3541, 0.0
        %3561 = vadd.xlane.f32.xlu0 %v3560
        %v3562 = vpop.xlane.xlu0 %3561
        %v3563 = vsel %vm1906, %v3542, 0.0
        %3564 = vadd.xlane.f32.xlu0 %v3563
        %v3565 = vpop.xlane.xlu0 %3564
        %v3566 = vsel %vm1906, %v3543, 0.0
        %3567 = vadd.xlane.f32.xlu0 %v3566
        %v3568 = vpop.xlane.xlu0 %3567
        %v3569 = vrcp.pop 32.0
        %v3570 = vmul.f32 %v3547, %v3569
        %v3571 = vmul.f32 %v3550, %v3569
        %v3572 = vmul.f32 %v3553, %v3569
        %v3573 = vmul.f32 %v3556, %v3569
        %v3574 = vmul.f32 %v3559, %v3569
        %v3575 = vmul.f32 %v3562, %v3569
        %v3576 = vmul.f32 %v3565, %v3569
        %v3577 = vmul.f32 %v3568, %v3569
        %v3578 = vsub.f32 %v3536, %v3570
        %v3579 = vsub.f32 %v3537, %v3571
        %v3580 = vsub.f32 %v3538, %v3572
        %v3581 = vsub.f32 %v3539, %v3573
        %v3582 = vsub.f32 %v3540, %v3574
        %v3583 = vsub.f32 %v3541, %v3575
        %v3584 = vsub.f32 %v3542, %v3576
        %v3585 = vsub.f32 %v3543, %v3577
        %v3586 = vmul.f32 %v3578, %v3578
        %v3587 = vmul.f32 %v3579, %v3579
        %v3588 = vmul.f32 %v3580, %v3580
        %v3589 = vmul.f32 %v3581, %v3581
        %v3590 = vmul.f32 %v3582, %v3582
        %v3591 = vmul.f32 %v3583, %v3583
        %v3592 = vmul.f32 %v3584, %v3584
        %v3593 = vmul.f32 %v3585, %v3585
        %v3594 = vsel %vm1906, %v3586, 0.0
        %3595 = vadd.xlane.f32.xlu0 %v3594
        %v3596 = vpop.xlane.xlu0 %3595
        %v3597 = vsel %vm1906, %v3587, 0.0
        %3598 = vadd.xlane.f32.xlu0 %v3597
        %v3599 = vpop.xlane.xlu0 %3598
        %v3600 = vsel %vm1906, %v3588, 0.0
        %3601 = vadd.xlane.f32.xlu0 %v3600
        %v3602 = vpop.xlane.xlu0 %3601
        %v3603 = vsel %vm1906, %v3589, 0.0
        %3604 = vadd.xlane.f32.xlu0 %v3603
        %v3605 = vpop.xlane.xlu0 %3604
        %v3606 = vsel %vm1906, %v3590, 0.0
        %3607 = vadd.xlane.f32.xlu0 %v3606
        %v3608 = vpop.xlane.xlu0 %3607
        %v3609 = vsel %vm1906, %v3591, 0.0
        %3610 = vadd.xlane.f32.xlu0 %v3609
        %v3611 = vpop.xlane.xlu0 %3610
        %v3612 = vsel %vm1906, %v3592, 0.0
        %3613 = vadd.xlane.f32.xlu0 %v3612
        %v3614 = vpop.xlane.xlu0 %3613
        %v3615 = vsel %vm1906, %v3593, 0.0
        %3616 = vadd.xlane.f32.xlu0 %v3615
        %v3617 = vpop.xlane.xlu0 %3616
        %v3618 = vmul.f32 %v3596, %v3569
        %v3619 = vmul.f32 %v3599, %v3569
        %v3620 = vmul.f32 %v3602, %v3569
        %v3621 = vmul.f32 %v3605, %v3569
        %v3622 = vmul.f32 %v3608, %v3569
        %v3623 = vmul.f32 %v3611, %v3569
        %v3624 = vmul.f32 %v3614, %v3569
        %v3625 = vmul.f32 %v3617, %v3569
        %v3626 = vadd.f32 %v3618, 1e-05
        %v3627 = vadd.f32 %v3619, 1e-05
        %v3628 = vadd.f32 %v3620, 1e-05
        %v3629 = vadd.f32 %v3621, 1e-05
        %v3630 = vadd.f32 %v3622, 1e-05
        %v3631 = vadd.f32 %v3623, 1e-05
        %v3632 = vadd.f32 %v3624, 1e-05
        %v3633 = vadd.f32 %v3625, 1e-05
        %v3634 = vrsqrt.pop %v3626
        %v3635 = vrsqrt.pop %v3627
        %v3636 = vrsqrt.pop %v3628
        %v3637 = vrsqrt.pop %v3629
        %v3638 = vrsqrt.pop %v3630
        %v3639 = vrsqrt.pop %v3631
        %v3640 = vrsqrt.pop %v3632
        %v3641 = vrsqrt.pop %v3633
        %v3642 = vmul.f32 %v3578, %v3634
        %v3643 = vmul.f32 %v3579, %v3635
        %v3644 = vmul.f32 %v3580, %v3636
        %v3645 = vmul.f32 %v3581, %v3637
        %v3646 = vmul.f32 %v3582, %v3638
        %v3647 = vmul.f32 %v3583, %v3639
        %v3648 = vmul.f32 %v3584, %v3640
        %v3649 = vmul.f32 %v3585, %v3641
        %v3650 = vlaneseq
        %v3651 = vshrl.u32 %v3650, 7
        %v3652 = vsub.s32 0, %v3651
        %v3653 = vrot.slane %v3544, %v3652
        %v3654 = vmul.f32 %v3642, %v3653
        %v3655 = vmul.f32 %v3643, %v3653
        %v3656 = vmul.f32 %v3644, %v3653
        %v3657 = vmul.f32 %v3645, %v3653
        %v3658 = vmul.f32 %v3646, %v3653
        %v3659 = vmul.f32 %v3647, %v3653
        %v3660 = vmul.f32 %v3648, %v3653
        %v3661 = vmul.f32 %v3649, %v3653
        %v3662 = vlaneseq
        %v3663 = vshrl.u32 %v3662, 7
        %v3664 = vsub.s32 1, %v3663
        %v3665 = vrot.slane %v3544, %v3664
        %v3666 = vadd.f32 %v3654, %v3665
        %v3667 = vadd.f32 %v3655, %v3665
        %v3668 = vadd.f32 %v3656, %v3665
        %v3669 = vadd.f32 %v3657, %v3665
        %v3670 = vadd.f32 %v3658, %v3665
        %v3671 = vadd.f32 %v3659, %v3665
        %v3672 = vadd.f32 %v3660, %v3665
        %v3673 = vadd.f32 %v3661, %v3665
        %v3674 = vld [vmem:[%s31] sm:$0xf]
        %v3675 = vld [vmem:[%s31 + $0x4] sm:$0xf]
        %v3676 = vld [vmem:[%s31 + $0x8] sm:$0xf]
        %v3677 = vld [vmem:[%s31 + $0xc] sm:$0xf]
        %v3678 = vpack.c.bf16 %v3667, %v3666
        %v3679 = vpack.c.bf16 %v3669, %v3668
        %v3680 = vpack.c.bf16 %v3671, %v3670
        %v3681 = vpack.c.bf16 %v3673, %v3672
        %v3682 = vld [vmem:[#allocation7] sm:$0x1]
        %v3684 = vlaneseq
        %v3685 = vshrl.u32 %v3684, 7
        %v3686 = vsub.s32 0, %v3685
        %v3687 = vrot.slane %v3682, %v3686
        %v3693 = vunpack.c.l.b16 %v3674
        %v3694 = vunpack.c.l.b16 %v3675
        %v3695 = vunpack.c.l.b16 %v3676
        %v3696 = vunpack.c.l.b16 %v3677
        %v3697 = vpack.c.b16 %v3694, %v3693
        %v3698 = vpack.c.b16 %v3696, %v3695
        %v3702 = vsel %vm1906, %v3678, 0
        %v3705 = vsel %vm1906, %v3679, 0
        %v3708 = vsel %vm1906, %v3680, 0
        %v3711 = vsel %vm1906, %v3681, 0
        %3713 = vmatprep.subr.bf16.mxu0 0
        %3714 = vmatpush1.bf16.msra.mxu0 %v3697
        %3715 = vmatprep.subr.bf16.mxu0 0
        %3716 = vmatpush1.bf16.msra.mxu0 %v3698
        %3717 = vmatprep.subr.bf16.mxu0 0
        %3718 = vmatpush1.bf16.msra.mxu0 0
        %3719 = vmatprep.subr.bf16.mxu0 0
        %3720 = vmatpush1.bf16.msra.mxu0 0
        %3721 = vmatprep.subr.bf16.mxu0 0
        %3722 = vmatpush1.bf16.msra.mxu0 0
        %3723 = vmatprep.subr.bf16.mxu0 0
        %3724 = vmatpush1.bf16.msra.mxu0 0
        %3725 = vmatprep.subr.bf16.mxu0 0
        %3726 = vmatpush1.bf16.msra.mxu0 0
        %3727 = vmatprep.subr.bf16.mxu0 0
        %3728 = vmatpush1.bf16.msra.mxu0 0
        %3729 = vmatprep.subr.bf16.mxu0 0
        %3730 = vmatpush1.bf16.msra.mxu0 0
        %3731 = vmatprep.subr.bf16.mxu0 0
        %3732 = vmatpush1.bf16.msra.mxu0 0
        %3733 = vmatprep.subr.bf16.mxu0 0
        %3734 = vmatpush1.bf16.msra.mxu0 0
        %3735 = vmatprep.subr.bf16.mxu0 0
        %3736 = vmatpush1.bf16.msra.mxu0 0
        %3737 = vmatprep.subr.bf16.mxu0 0
        %3738 = vmatpush1.bf16.msra.mxu0 0
        %3739 = vmatprep.subr.bf16.mxu0 0
        %3740 = vmatpush1.bf16.msra.mxu0 0
        %3741 = vmatprep.subr.bf16.mxu0 0
        %3742 = vmatpush1.bf16.msra.mxu0 0
        %3743 = vmatprep.subr.bf16.mxu0 0
        %3744 = vmatpush1.bf16.msra.mxu0 0
        %3745 = vmatprep.mubr.bf16.mxu0 0
        %3746 = vmatmul.mubr.bf16.gmra.mrb[0].mxu0 %v3702
        %v3747 = vpop.f32.mrb[0].mxu0
        %v3748 = vadd.f32 %v3687, %v3747
        %v3749 = vpop.f32.mrb[0].mxu0
        %v3750 = vpop.f32.mrb[0].mxu0
        %v3751 = vadd.f32 %v3687, %v3750
        %v3752 = vpop.f32.mrb[0].mxu0
        %3753 = vmatprep.mubr.bf16.mxu0 0
        %3754 = vmatmul.mubr.bf16.gmra.mrb[0].mxu0 %v3705
        %v3755 = vpop.f32.mrb[0].mxu0
        %v3756 = vadd.f32 %v3687, %v3755
        %v3757 = vpop.f32.mrb[0].mxu0
        %v3758 = vpop.f32.mrb[0].mxu0
        %v3759 = vadd.f32 %v3687, %v3758
        %v3760 = vpop.f32.mrb[0].mxu0
        %3761 = vmatprep.mubr.bf16.mxu0 0
        %3762 = vmatmul.mubr.bf16.gmra.mrb[0].mxu0 %v3708
        %v3763 = vpop.f32.mrb[0].mxu0
        %v3764 = vadd.f32 %v3687, %v3763
        %v3765 = vpop.f32.mrb[0].mxu0
        %v3766 = vpop.f32.mrb[0].mxu0
        %v3767 = vadd.f32 %v3687, %v3766
        %v3768 = vpop.f32.mrb[0].mxu0
        %3769 = vmatprep.mubr.bf16.mxu0 0
        %3770 = vmatmul.mubr.bf16.gmra.mrb[0].mxu0 %v3711
        %v3771 = vpop.f32.mrb[0].mxu0
        %v3772 = vadd.f32 %v3687, %v3771
        %v3773 = vpop.f32.mrb[0].mxu0
        %v3774 = vpop.f32.mrb[0].mxu0
        %v3775 = vadd.f32 %v3687, %v3774
        %v3776 = vpop.f32.mrb[0].mxu0
        %3777 = vdwg.mxu0
        %v3778 = vmax.f32 %v3748, 0.0
        %v3779 = vmax.f32 %v3751, 0.0
        %v3780 = vmax.f32 %v3756, 0.0
        %v3781 = vmax.f32 %v3759, 0.0
        %v3782 = vmax.f32 %v3764, 0.0
        %v3783 = vmax.f32 %v3767, 0.0
        %v3784 = vmax.f32 %v3772, 0.0
        %v3785 = vmax.f32 %v3775, 0.0
        %v3786 = vld [vmem:[%s35] sm:$0xf]
        %v3787 = vld [vmem:[%s35 + $0x4] sm:$0xf]
        %v3788 = vld [vmem:[%s35 + $0x8] sm:$0xf]
        %v3789 = vld [vmem:[%s35 + $0xc] sm:$0xf]
        %v3790 = vld [vmem:[%s35 + $0x10] sm:$0xf]
        %v3791 = vld [vmem:[%s35 + $0x14] sm:$0xf]
        %v3792 = vld [vmem:[%s35 + $0x18] sm:$0xf]
        %v3793 = vld [vmem:[%s35 + $0x1c] sm:$0xf]
        %v3794 = vpack.c.bf16 %v3779, %v3778
        %v3795 = vpack.c.bf16 %v3781, %v3780
        %v3796 = vpack.c.bf16 %v3783, %v3782
        %v3797 = vpack.c.bf16 %v3785, %v3784
        %v3798 = vld [vmem:[#allocation9] sm:$0x1]
        %v3800 = vlaneseq
        %v3801 = vshrl.u32 %v3800, 7
        %v3802 = vsub.s32 0, %v3801
        %v3803 = vrot.slane %v3798, %v3802
        %v3813 = vunpack.c.l.b16 %v3786
        %v3814 = vunpack.c.l.b16 %v3787
        %v3815 = vunpack.c.l.b16 %v3788
        %v3816 = vunpack.c.l.b16 %v3789
        %v3817 = vunpack.c.l.b16 %v3790
        %v3818 = vunpack.c.l.b16 %v3791
        %v3819 = vunpack.c.l.b16 %v3792
        %v3820 = vunpack.c.l.b16 %v3793
        %v3821 = vpack.c.b16 %v3814, %v3813
        %v3822 = vpack.c.b16 %v3816, %v3815
        %v3823 = vpack.c.b16 %v3818, %v3817
        %v3824 = vpack.c.b16 %v3820, %v3819
        %v3830 = vsel %vm2276, %v3794, 0
        %v3833 = vsel %vm2276, %v3795, 0
        %v3836 = vsel %vm2276, %v3796, 0
        %v3839 = vsel %vm2276, %v3797, 0
        %3841 = vmatprep.subr.bf16.mxu0 0
        %3842 = vmatpush1.bf16.msra.mxu0 %v3821
        %3843 = vmatprep.subr.bf16.mxu0 0
        %3844 = vmatpush1.bf16.msra.mxu0 %v3822
        %3845 = vmatprep.subr.bf16.mxu0 0
        %3846 = vmatpush1.bf16.msra.mxu0 %v3823
        %3847 = vmatprep.subr.bf16.mxu0 0
        %3848 = vmatpush1.bf16.msra.mxu0 %v3824
        %3849 = vmatprep.subr.bf16.mxu0 0
        %3850 = vmatpush1.bf16.msra.mxu0 0
        %3851 = vmatprep.subr.bf16.mxu0 0
        %3852 = vmatpush1.bf16.msra.mxu0 0
        %3853 = vmatprep.subr.bf16.mxu0 0
        %3854 = vmatpush1.bf16.msra.mxu0 0
        %3855 = vmatprep.subr.bf16.mxu0 0
        %3856 = vmatpush1.bf16.msra.mxu0 0
        %3857 = vmatprep.subr.bf16.mxu0 0
        %3858 = vmatpush1.bf16.msra.mxu0 0
        %3859 = vmatprep.subr.bf16.mxu0 0
        %3860 = vmatpush1.bf16.msra.mxu0 0
        %3861 = vmatprep.subr.bf16.mxu0 0
        %3862 = vmatpush1.bf16.msra.mxu0 0
        %3863 = vmatprep.subr.bf16.mxu0 0
        %3864 = vmatpush1.bf16.msra.mxu0 0
        %3865 = vmatprep.subr.bf16.mxu0 0
        %3866 = vmatpush1.bf16.msra.mxu0 0
        %3867 = vmatprep.subr.bf16.mxu0 0
        %3868 = vmatpush1.bf16.msra.mxu0 0
        %3869 = vmatprep.subr.bf16.mxu0 0
        %3870 = vmatpush1.bf16.msra.mxu0 0
        %3871 = vmatprep.subr.bf16.mxu0 0
        %3872 = vmatpush1.bf16.msra.mxu0 0
        %3873 = vmatprep.mubr.bf16.mxu0 0
        %3874 = vmatmul.mubr.bf16.gmra.mrb[0].mxu0 %v3830
        %v3875 = vpop.f32.mrb[0].mxu0
        %v3876 = vadd.f32 %v3803, %v3875
        %v3877 = vpop.f32.mrb[0].mxu0
        %v3878 = vpop.f32.mrb[0].mxu0
        %v3879 = vadd.f32 %v3803, %v3878
        %v3880 = vpop.f32.mrb[0].mxu0
        %3881 = vmatprep.mubr.bf16.mxu0 0
        %3882 = vmatmul.mubr.bf16.gmra.mrb[0].mxu0 %v3833
        %v3883 = vpop.f32.mrb[0].mxu0
        %v3884 = vadd.f32 %v3803, %v3883
        %v3885 = vpop.f32.mrb[0].mxu0
        %v3886 = vpop.f32.mrb[0].mxu0
        %v3887 = vadd.f32 %v3803, %v3886
        %v3888 = vpop.f32.mrb[0].mxu0
        %3889 = vmatprep.mubr.bf16.mxu0 0
        %3890 = vmatmul.mubr.bf16.gmra.mrb[0].mxu0 %v3836
        %v3891 = vpop.f32.mrb[0].mxu0
        %v3892 = vadd.f32 %v3803, %v3891
        %v3893 = vpop.f32.mrb[0].mxu0
        %v3894 = vpop.f32.mrb[0].mxu0
        %v3895 = vadd.f32 %v3803, %v3894
        %v3896 = vpop.f32.mrb[0].mxu0
        %3897 = vmatprep.mubr.bf16.mxu0 0
        %3898 = vmatmul.mubr.bf16.gmra.mrb[0].mxu0 %v3839
        %v3899 = vpop.f32.mrb[0].mxu0
        %v3900 = vadd.f32 %v3803, %v3899
        %v3901 = vpop.f32.mrb[0].mxu0
        %v3902 = vpop.f32.mrb[0].mxu0
        %v3903 = vadd.f32 %v3803, %v3902
        %v3904 = vpop.f32.mrb[0].mxu0
        %3905 = vdwg.mxu0
        %v3906 = vadd.f32 %v3666, %v3876
        %v3907 = vadd.f32 %v3667, %v3879
        %v3908 = vadd.f32 %v3668, %v3884
        %v3909 = vadd.f32 %v3669, %v3887
        %v3910 = vadd.f32 %v3670, %v3892
        %v3911 = vadd.f32 %v3671, %v3895
        %v3912 = vadd.f32 %v3672, %v3900
        %v3913 = vadd.f32 %v3673, %v3903
        %v3914 = vld [vmem:[%s39] sm:$0x3]
        %v3915 = vsel %vm1906, %v3906, 0.0
        %3916 = vadd.xlane.f32.xlu0 %v3915
        %v3917 = vpop.xlane.xlu0 %3916
        %v3918 = vsel %vm1906, %v3907, 0.0
        %3919 = vadd.xlane.f32.xlu0 %v3918
        %v3920 = vpop.xlane.xlu0 %3919
        %v3921 = vsel %vm1906, %v3908, 0.0
        %3922 = vadd.xlane.f32.xlu0 %v3921
        %v3923 = vpop.xlane.xlu0 %3922
        %v3924 = vsel %vm1906, %v3909, 0.0
        %3925 = vadd.xlane.f32.xlu0 %v3924
        %v3926 = vpop.xlane.xlu0 %3925
        %v3927 = vsel %vm1906, %v3910, 0.0
        %3928 = vadd.xlane.f32.xlu0 %v3927
        %v3929 = vpop.xlane.xlu0 %3928
        %v3930 = vsel %vm1906, %v3911, 0.0
        %3931 = vadd.xlane.f32.xlu0 %v3930
        %v3932 = vpop.xlane.xlu0 %3931
        %v3933 = vsel %vm1906, %v3912, 0.0
        %3934 = vadd.xlane.f32.xlu0 %v3933
        %v3935 = vpop.xlane.xlu0 %3934
        %v3936 = vsel %vm1906, %v3913, 0.0
        %3937 = vadd.xlane.f32.xlu0 %v3936
        %v3938 = vpop.xlane.xlu0 %3937
        %v3939 = vmul.f32 %v3917, %v3569
        %v3940 = vmul.f32 %v3920, %v3569
        %v3941 = vmul.f32 %v3923, %v3569
        %v3942 = vmul.f32 %v3926, %v3569
        %v3943 = vmul.f32 %v3929, %v3569
        %v3944 = vmul.f32 %v3932, %v3569
        %v3945 = vmul.f32 %v3935, %v3569
        %v3946 = vmul.f32 %v3938, %v3569
        %v3947 = vsub.f32 %v3906, %v3939
        %v3948 = vsub.f32 %v3907, %v3940
        %v3949 = vsub.f32 %v3908, %v3941
        %v3950 = vsub.f32 %v3909, %v3942
        %v3951 = vsub.f32 %v3910, %v3943
        %v3952 = vsub.f32 %v3911, %v3944
        %v3953 = vsub.f32 %v3912, %v3945
        %v3954 = vsub.f32 %v3913, %v3946
        %v3955 = vmul.f32 %v3947, %v3947
        %v3956 = vmul.f32 %v3948, %v3948
        %v3957 = vmul.f32 %v3949, %v3949
        %v3958 = vmul.f32 %v3950, %v3950
        %v3959 = vmul.f32 %v3951, %v3951
        %v3960 = vmul.f32 %v3952, %v3952
        %v3961 = vmul.f32 %v3953, %v3953
        %v3962 = vmul.f32 %v3954, %v3954
        %v3963 = vsel %vm1906, %v3955, 0.0
        %3964 = vadd.xlane.f32.xlu0 %v3963
        %v3965 = vpop.xlane.xlu0 %3964
        %v3966 = vsel %vm1906, %v3956, 0.0
        %3967 = vadd.xlane.f32.xlu0 %v3966
        %v3968 = vpop.xlane.xlu0 %3967
        %v3969 = vsel %vm1906, %v3957, 0.0
        %3970 = vadd.xlane.f32.xlu0 %v3969
        %v3971 = vpop.xlane.xlu0 %3970
        %v3972 = vsel %vm1906, %v3958, 0.0
        %3973 = vadd.xlane.f32.xlu0 %v3972
        %v3974 = vpop.xlane.xlu0 %3973
        %v3975 = vsel %vm1906, %v3959, 0.0
        %3976 = vadd.xlane.f32.xlu0 %v3975
        %v3977 = vpop.xlane.xlu0 %3976
        %v3978 = vsel %vm1906, %v3960, 0.0
        %3979 = vadd.xlane.f32.xlu0 %v3978
        %v3980 = vpop.xlane.xlu0 %3979
        %v3981 = vsel %vm1906, %v3961, 0.0
        %3982 = vadd.xlane.f32.xlu0 %v3981
        %v3983 = vpop.xlane.xlu0 %3982
        %v3984 = vsel %vm1906, %v3962, 0.0
        %3985 = vadd.xlane.f32.xlu0 %v3984
        %v3986 = vpop.xlane.xlu0 %3985
        %v3987 = vmul.f32 %v3965, %v3569
        %v3988 = vmul.f32 %v3968, %v3569
        %v3989 = vmul.f32 %v3971, %v3569
        %v3990 = vmul.f32 %v3974, %v3569
        %v3991 = vmul.f32 %v3977, %v3569
        %v3992 = vmul.f32 %v3980, %v3569
        %v3993 = vmul.f32 %v3983, %v3569
        %v3994 = vmul.f32 %v3986, %v3569
        %v3995 = vadd.f32 %v3987, 1e-05
        %v3996 = vadd.f32 %v3988, 1e-05
        %v3997 = vadd.f32 %v3989, 1e-05
        %v3998 = vadd.f32 %v3990, 1e-05
        %v3999 = vadd.f32 %v3991, 1e-05
        %v4000 = vadd.f32 %v3992, 1e-05
        %v4001 = vadd.f32 %v3993, 1e-05
        %v4002 = vadd.f32 %v3994, 1e-05
        %v4003 = vrsqrt.pop %v3995
        %v4004 = vrsqrt.pop %v3996
        %v4005 = vrsqrt.pop %v3997
        %v4006 = vrsqrt.pop %v3998
        %v4007 = vrsqrt.pop %v3999
        %v4008 = vrsqrt.pop %v4000
        %v4009 = vrsqrt.pop %v4001
        %v4010 = vrsqrt.pop %v4002
        %v4011 = vmul.f32 %v3947, %v4003
        %v4012 = vmul.f32 %v3948, %v4004
        %v4013 = vmul.f32 %v3949, %v4005
        %v4014 = vmul.f32 %v3950, %v4006
        %v4015 = vmul.f32 %v3951, %v4007
        %v4016 = vmul.f32 %v3952, %v4008
        %v4017 = vmul.f32 %v3953, %v4009
        %v4018 = vmul.f32 %v3954, %v4010
        %v4019 = vlaneseq
        %v4020 = vshrl.u32 %v4019, 7
        %v4021 = vsub.s32 0, %v4020
        %v4022 = vrot.slane %v3914, %v4021
        %v4023 = vmul.f32 %v4011, %v4022
        %v4024 = vmul.f32 %v4012, %v4022
        %v4025 = vmul.f32 %v4013, %v4022
        %v4026 = vmul.f32 %v4014, %v4022
        %v4027 = vmul.f32 %v4015, %v4022
        %v4028 = vmul.f32 %v4016, %v4022
        %v4029 = vmul.f32 %v4017, %v4022
        %v4030 = vmul.f32 %v4018, %v4022
        %v4031 = vlaneseq
        %v4032 = vshrl.u32 %v4031, 7
        %v4033 = vsub.s32 1, %v4032
        %v4034 = vrot.slane %v3914, %v4033
        %v4035 = vadd.f32 %v4023, %v4034
        %v4036 = vadd.f32 %v4024, %v4034
        %v4037 = vadd.f32 %v4025, %v4034
        %v4038 = vadd.f32 %v4026, %v4034
        %v4039 = vadd.f32 %v4027, %v4034
        %v4040 = vadd.f32 %v4028, %v4034
        %v4041 = vadd.f32 %v4029, %v4034
        %v4042 = vadd.f32 %v4030, %v4034
        %v4043 = vadd.f32 %v4035, %v1742
        %v4044 = vadd.f32 %v4036, %v1743
        %v4045 = vadd.f32 %v4037, %v1744
        %v4046 = vadd.f32 %v4038, %v1745
        %v4047 = vadd.f32 %v4039, %v1746
        %v4048 = vadd.f32 %v4040, %v1747
        %v4049 = vadd.f32 %v4041, %v1748
        %v4050 = vadd.f32 %v4042, %v1749
        %v4051 = vadd.f32 %v1750, 0.0
        %v4052 = vld [vmem:[%s41] sm:$0xf]
        %v4053 = vld [vmem:[%s41 + $0x4] sm:$0xf]
        %v4054 = vld [vmem:[%s41 + $0x8] sm:$0xf]
        %v4055 = vld [vmem:[%s41 + $0xc] sm:$0xf]
        %v4056 = vld [vmem:[%s43] sm:$0x1]
        %v4057 = vld [vmem:[%s45] sm:$0xf]
        %v4058 = vld [vmem:[%s45 + $0x4] sm:$0xf]
        %v4059 = vld [vmem:[%s45 + $0x8] sm:$0xf]
        %v4060 = vld [vmem:[%s45 + $0xc] sm:$0xf]
        %v4061 = vld [vmem:[%s47] sm:$0x1]
        %v4062 = vld [vmem:[%s49] sm:$0xf]
        %v4063 = vld [vmem:[%s49 + $0x4] sm:$0xf]
        %v4064 = vld [vmem:[%s49 + $0x8] sm:$0xf]
        %v4065 = vld [vmem:[%s49 + $0xc] sm:$0xf]
        %v4066 = vld [vmem:[%s51] sm:$0x1]
        %v4067 = vld [vmem:[%s53] sm:$0xf]
        %v4068 = vld [vmem:[%s53 + $0x4] sm:$0xf]
        %v4069 = vld [vmem:[%s53 + $0x8] sm:$0xf]
        %v4070 = vld [vmem:[%s53 + $0xc] sm:$0xf]
        %v4071 = vld [vmem:[%s55] sm:$0x1]
        %v4072 = vpack.c.bf16 %v4051, %v4051
        %v4074 = vlaneseq
        %v4075 = vshrl.u32 %v4074, 7
        %v4076 = vsub.s32 0, %v4075
        %v4077 = vrot.slane %v4056, %v4076
        %v4083 = vunpack.c.l.b16 %v4052
        %v4084 = vunpack.c.l.b16 %v4053
        %v4085 = vunpack.c.l.b16 %v4054
        %v4086 = vunpack.c.l.b16 %v4055
        %v4087 = vpack.c.b16 %v4084, %v4083
        %v4088 = vpack.c.b16 %v4086, %v4085
        %v4092 = vsel %vm1906, %v4072, 0
        %4094 = vmatprep.subr.bf16.mxu0 0
        %4095 = vmatpush1.bf16.msra.mxu0 %v4087
        %4096 = vmatprep.subr.bf16.mxu0 0
        %4097 = vmatpush1.bf16.msra.mxu0 %v4088
        %4098 = vmatprep.subr.bf16.mxu0 0
        %4099 = vmatpush1.bf16.msra.mxu0 0
        %4100 = vmatprep.subr.bf16.mxu0 0
        %4101 = vmatpush1.bf16.msra.mxu0 0
        %4102 = vmatprep.subr.bf16.mxu0 0
        %4103 = vmatpush1.bf16.msra.mxu0 0
        %4104 = vmatprep.subr.bf16.mxu0 0
        %4105 = vmatpush1.bf16.msra.mxu0 0
        %4106 = vmatprep.subr.bf16.mxu0 0
        %4107 = vmatpush1.bf16.msra.mxu0 0
        %4108 = vmatprep.subr.bf16.mxu0 0
        %4109 = vmatpush1.bf16.msra.mxu0 0
        %4110 = vmatprep.subr.bf16.mxu0 0
        %4111 = vmatpush1.bf16.msra.mxu0 0
        %4112 = vmatprep.subr.bf16.mxu0 0
        %4113 = vmatpush1.bf16.msra.mxu0 0
        %4114 = vmatprep.subr.bf16.mxu0 0
        %4115 = vmatpush1.bf16.msra.mxu0 0
        %4116 = vmatprep.subr.bf16.mxu0 0
        %4117 = vmatpush1.bf16.msra.mxu0 0
        %4118 = vmatprep.subr.bf16.mxu0 0
        %4119 = vmatpush1.bf16.msra.mxu0 0
        %4120 = vmatprep.subr.bf16.mxu0 0
        %4121 = vmatpush1.bf16.msra.mxu0 0
        %4122 = vmatprep.subr.bf16.mxu0 0
        %4123 = vmatpush1.bf16.msra.mxu0 0
        %4124 = vmatprep.subr.bf16.mxu0 0
        %4125 = vmatpush1.bf16.msra.mxu0 0
        %4126 = vmatprep.mubr.bf16.mxu0 0
        %4127 = vmatmul.mubr.bf16.gmra.mrb[0].mxu0 %v4092
        %v4128 = vpop.f32.mrb[0].mxu0
        %v4129 = vadd.f32 %v4077, %v4128
        %v4130 = vpop.f32.mrb[0].mxu0
        %v4131 = vpop.f32.mrb[0].mxu0
        %v4132 = vpop.f32.mrb[0].mxu0
        %4133 = vdwg.mxu0
        %v4134 = vmul.f32 %v4129, 0.35355338
        %v4135 = vpack.c.bf16 %v4134, %v4134
        %v4137 = vlaneseq
        %v4138 = vshrl.u32 %v4137, 7
        %v4139 = vsub.s32 0, %v4138
        %v4140 = vrot.slane %v4061, %v4139
        %v4146 = vunpack.c.l.b16 %v4057
        %v4147 = vunpack.c.l.b16 %v4058
        %v4148 = vunpack.c.l.b16 %v4059
        %v4149 = vunpack.c.l.b16 %v4060
        %v4150 = vpack.c.b16 %v4147, %v4146
        %v4151 = vpack.c.b16 %v4149, %v4148
        %4154 = vmatprep.subr.bf16.mxu0 0
        %4155 = vmatpush1.bf16.msra.mxu0 %v4150
        %4156 = vmatprep.subr.bf16.mxu0 0
        %4157 = vmatpush1.bf16.msra.mxu0 %v4151
        %4158 = vmatprep.subr.bf16.mxu0 0
        %4159 = vmatpush1.bf16.msra.mxu0 0
        %4160 = vmatprep.subr.bf16.mxu0 0
        %4161 = vmatpush1.bf16.msra.mxu0 0
        %4162 = vmatprep.subr.bf16.mxu0 0
        %4163 = vmatpush1.bf16.msra.mxu0 0
        %4164 = vmatprep.subr.bf16.mxu0 0
        %4165 = vmatpush1.bf16.msra.mxu0 0
        %4166 = vmatprep.subr.bf16.mxu0 0
        %4167 = vmatpush1.bf16.msra.mxu0 0
        %4168 = vmatprep.subr.bf16.mxu0 0
        %4169 = vmatpush1.bf16.msra.mxu0 0
        %4170 = vmatprep.subr.bf16.mxu0 0
        %4171 = vmatpush1.bf16.msra.mxu0 0
        %4172 = vmatprep.subr.bf16.mxu0 0
        %4173 = vmatpush1.bf16.msra.mxu0 0
        %4174 = vmatprep.subr.bf16.mxu0 0
        %4175 = vmatpush1.bf16.msra.mxu0 0
        %4176 = vmatprep.subr.bf16.mxu0 0
        %4177 = vmatpush1.bf16.msra.mxu0 0
        %4178 = vmatprep.subr.bf16.mxu0 0
        %4179 = vmatpush1.bf16.msra.mxu0 0
        %4180 = vmatprep.subr.bf16.mxu0 0
        %4181 = vmatpush1.bf16.msra.mxu0 0
        %4182 = vmatprep.subr.bf16.mxu0 0
        %4183 = vmatpush1.bf16.msra.mxu0 0
        %4184 = vmatprep.subr.bf16.mxu0 0
        %4185 = vmatpush1.bf16.msra.mxu0 0
        %4186 = vmatprep.mubr.bf16.mxu0 0
        %4187 = vmatmul.mubr.bf16.gmra.mrb[0].mxu0 %v4092
        %v4188 = vpop.f32.mrb[0].mxu0
        %v4189 = vadd.f32 %v4140, %v4188
        %v4190 = vpop.f32.mrb[0].mxu0
        %v4191 = vpop.f32.mrb[0].mxu0
        %v4192 = vpop.f32.mrb[0].mxu0
        %4193 = vdwg.mxu0
        %v4194 = vpack.c.bf16 %v4189, %v4189
        %v4196 = vlaneseq
        %v4197 = vshrl.u32 %v4196, 7
        %v4198 = vsub.s32 0, %v4197
        %v4199 = vrot.slane %v4066, %v4198
        %v4205 = vunpack.c.l.b16 %v4062
        %v4206 = vunpack.c.l.b16 %v4063
        %v4207 = vunpack.c.l.b16 %v4064
        %v4208 = vunpack.c.l.b16 %v4065
        %v4209 = vpack.c.b16 %v4206, %v4205
        %v4210 = vpack.c.b16 %v4208, %v4207
        %v4214 = vsel %vm1906, 0, 0
        %4216 = vmatprep.subr.bf16.mxu0 0
        %4217 = vmatpush1.bf16.msra.mxu0 %v4209
        %4218 = vmatprep.subr.bf16.mxu0 0
        %4219 = vmatpush1.bf16.msra.mxu0 %v4210
        %4220 = vmatprep.subr.bf16.mxu0 0
        %4221 = vmatpush1.bf16.msra.mxu0 0
        %4222 = vmatprep.subr.bf16.mxu0 0
        %4223 = vmatpush1.bf16.msra.mxu0 0
        %4224 = vmatprep.subr.bf16.mxu0 0
        %4225 = vmatpush1.bf16.msra.mxu0 0
        %4226 = vmatprep.subr.bf16.mxu0 0
        %4227 = vmatpush1.bf16.msra.mxu0 0
        %4228 = vmatprep.subr.bf16.mxu0 0
        %4229 = vmatpush1.bf16.msra.mxu0 0
        %4230 = vmatprep.subr.bf16.mxu0 0
        %4231 = vmatpush1.bf16.msra.mxu0 0
        %4232 = vmatprep.subr.bf16.mxu0 0
        %4233 = vmatpush1.bf16.msra.mxu0 0
        %4234 = vmatprep.subr.bf16.mxu0 0
        %4235 = vmatpush1.bf16.msra.mxu0 0
        %4236 = vmatprep.subr.bf16.mxu0 0
        %4237 = vmatpush1.bf16.msra.mxu0 0
        %4238 = vmatprep.subr.bf16.mxu0 0
        %4239 = vmatpush1.bf16.msra.mxu0 0
        %4240 = vmatprep.subr.bf16.mxu0 0
        %4241 = vmatpush1.bf16.msra.mxu0 0
        %4242 = vmatprep.subr.bf16.mxu0 0
        %4243 = vmatpush1.bf16.msra.mxu0 0
        %4244 = vmatprep.subr.bf16.mxu0 0
        %4245 = vmatpush1.bf16.msra.mxu0 0
        %4246 = vmatprep.subr.bf16.mxu0 0
        %4247 = vmatpush1.bf16.msra.mxu0 0
        %4248 = vmatprep.mubr.bf16.mxu0 0
        %4249 = vmatmul.mubr.bf16.gmra.mrb[0].mxu0 %v4214
        %v4250 = vpop.f32.mrb[0].mxu0
        %v4251 = vadd.f32 %v4199, %v4250
        %v4252 = vpop.f32.mrb[0].mxu0
        %v4253 = vpop.f32.mrb[0].mxu0
        %v4254 = vpop.f32.mrb[0].mxu0
        %4255 = vdwg.mxu0
        %v4256 = vpack.c.bf16 %v4251, %v4251
        %v4258 = vsel %vm2186, %v4135, 0
        %v4261 = vsel %vm2186, %v4194, 0
        %4263 = vmatprep.subr.bf16.mxu0 0
        %4264 = vmatpush1.bf16.xpose.msra.mxu0 %v4261
        %4265 = vmatprep.subr.bf16.mxu0 0
        %4266 = vmatpush1.bf16.xpose.msra.mxu0 0
        %4267 = vmatprep.subr.bf16.mxu0 0
        %4268 = vmatpush1.bf16.xpose.msra.mxu0 0
        %4269 = vmatprep.subr.bf16.mxu0 0
        %4270 = vmatpush1.bf16.xpose.msra.mxu0 0
        %4271 = vmatprep.subr.bf16.mxu0 0
        %4272 = vmatpush1.bf16.xpose.msra.mxu0 0
        %4273 = vmatprep.subr.bf16.mxu0 0
        %4274 = vmatpush1.bf16.xpose.msra.mxu0 0
        %4275 = vmatprep.subr.bf16.mxu0 0
        %4276 = vmatpush1.bf16.xpose.msra.mxu0 0
        %4277 = vmatprep.subr.bf16.mxu0 0
        %4278 = vmatpush1.bf16.xpose.msra.mxu0 0
        %4279 = vmatprep.subr.bf16.mxu0 0
        %4280 = vmatpush1.bf16.xpose.msra.mxu0 0
        %4281 = vmatprep.subr.bf16.mxu0 0
        %4282 = vmatpush1.bf16.xpose.msra.mxu0 0
        %4283 = vmatprep.subr.bf16.mxu0 0
        %4284 = vmatpush1.bf16.xpose.msra.mxu0 0
        %4285 = vmatprep.subr.bf16.mxu0 0
        %4286 = vmatpush1.bf16.xpose.msra.mxu0 0
        %4287 = vmatprep.subr.bf16.mxu0 0
        %4288 = vmatpush1.bf16.xpose.msra.mxu0 0
        %4289 = vmatprep.subr.bf16.mxu0 0
        %4290 = vmatpush1.bf16.xpose.msra.mxu0 0
        %4291 = vmatprep.subr.bf16.mxu0 0
        %4292 = vmatpush1.bf16.xpose.msra.mxu0 0
        %4293 = vmatprep.subr.bf16.mxu0 0
        %4294 = vmatpush1.bf16.xpose.msra.mxu0 0
        %4295 = vmatprep.mubr.bf16.mxu0 0
        %4296 = vmatmul.mubr.bf16.gmra.mrb[0].mxu0 %v4258
        %v4297 = vpop.f32.mrb[0].mxu0
        %v4298 = vadd.f32 0.0, %v4297
        %v4299 = vpop.f32.mrb[0].mxu0
        %v4300 = vpop.f32.mrb[0].mxu0
        %v4301 = vpop.f32.mrb[0].mxu0
        %4302 = vdwg.mxu0
        %v4303 = vsel %vm2186, %v4298, -inf
        %4304 = vmax.xlane.f32.xlu0 %v4303
        %v4305 = vpop.xlane.xlu0 %4304
        %v4306 = vsub.f32 %v4298, %v4305
        %v4307 = vmul.f32 %v4306, 1.442695
        %v4308 = vpow.pop %v4307
        %v4309 = vsel %vm2186, %v4308, 0.0
        %4310 = vadd.xlane.f32.xlu0 %v4309
        %v4311 = vpop.xlane.xlu0 %4310
        %v4312 = vrcp.pop %v4311
        %v4313 = vmul.f32 %v4308, %v4312
        %v4314 = vpack.c.bf16 %v4313, %v4313
        %v4316 = vsel %vm2186, %v4314, 0
        %vm4318 = vcmask 1043456
        %v4320 = vsel %vm4318, %v4256, 0
        %4322 = vmatprep.subr.bf16.mxu0 0
        %4323 = vmatpush1.bf16.msra.mxu0 %v4320
        %4324 = vmatprep.subr.bf16.mxu0 0
        %4325 = vmatpush1.bf16.msra.mxu0 0
        %4326 = vmatprep.subr.bf16.mxu0 0
        %4327 = vmatpush1.bf16.msra.mxu0 0
        %4328 = vmatprep.subr.bf16.mxu0 0
        %4329 = vmatpush1.bf16.msra.mxu0 0
        %4330 = vmatprep.subr.bf16.mxu0 0
        %4331 = vmatpush1.bf16.msra.mxu0 0
        %4332 = vmatprep.subr.bf16.mxu0 0
        %4333 = vmatpush1.bf16.msra.mxu0 0
        %4334 = vmatprep.subr.bf16.mxu0 0
        %4335 = vmatpush1.bf16.msra.mxu0 0
        %4336 = vmatprep.subr.bf16.mxu0 0
        %4337 = vmatpush1.bf16.msra.mxu0 0
        %4338 = vmatprep.subr.bf16.mxu0 0
        %4339 = vmatpush1.bf16.msra.mxu0 0
        %4340 = vmatprep.subr.bf16.mxu0 0
        %4341 = vmatpush1.bf16.msra.mxu0 0
        %4342 = vmatprep.subr.bf16.mxu0 0
        %4343 = vmatpush1.bf16.msra.mxu0 0
        %4344 = vmatprep.subr.bf16.mxu0 0
        %4345 = vmatpush1.bf16.msra.mxu0 0
        %4346 = vmatprep.subr.bf16.mxu0 0
        %4347 = vmatpush1.bf16.msra.mxu0 0
        %4348 = vmatprep.subr.bf16.mxu0 0
        %4349 = vmatpush1.bf16.msra.mxu0 0
        %4350 = vmatprep.subr.bf16.mxu0 0
        %4351 = vmatpush1.bf16.msra.mxu0 0
        %4352 = vmatprep.subr.bf16.mxu0 0
        %4353 = vmatpush1.bf16.msra.mxu0 0
        %4354 = vmatprep.mubr.bf16.mxu0 0
        %4355 = vmatmul.mubr.bf16.gmra.mrb[0].mxu0 %v4316
        %v4356 = vpop.f32.mrb[0].mxu0
        %v4357 = vadd.f32 0.0, %v4356
        %v4358 = vpop.f32.mrb[0].mxu0
        %v4359 = vpop.f32.mrb[0].mxu0
        %v4360 = vpop.f32.mrb[0].mxu0
        %4361 = vdwg.mxu0
        %4363 = vrot.lane.b32.xlu0 %v4135, 120
        %v4364 = vpop.permute.xlu0 %4363
        %4366 = vrot.lane.b32.xlu0 %v4194, 120
        %v4367 = vpop.permute.xlu0 %4366
        %v4369 = vsel %vm2186, %v4364, 0
        %v4372 = vsel %vm2186, %v4367, 0
        %4374 = vmatprep.subr.bf16.mxu0 0
        %4375 = vmatpush1.bf16.xpose.msra.mxu0 %v4372
        %4376 = vmatprep.subr.bf16.mxu0 0
        %4377 = vmatpush1.bf16.xpose.msra.mxu0 0
        %4378 = vmatprep.subr.bf16.mxu0 0
        %4379 = vmatpush1.bf16.xpose.msra.mxu0 0
        %4380 = vmatprep.subr.bf16.mxu0 0
        %4381 = vmatpush1.bf16.xpose.msra.mxu0 0
        %4382 = vmatprep.subr.bf16.mxu0 0
        %4383 = vmatpush1.bf16.xpose.msra.mxu0 0
        %4384 = vmatprep.subr.bf16.mxu0 0
        %4385 = vmatpush1.bf16.xpose.msra.mxu0 0
        %4386 = vmatprep.subr.bf16.mxu0 0
        %4387 = vmatpush1.bf16.xpose.msra.mxu0 0
        %4388 = vmatprep.subr.bf16.mxu0 0
        %4389 = vmatpush1.bf16.xpose.msra.mxu0 0
        %4390 = vmatprep.subr.bf16.mxu0 0
        %4391 = vmatpush1.bf16.xpose.msra.mxu0 0
        %4392 = vmatprep.subr.bf16.mxu0 0
        %4393 = vmatpush1.bf16.xpose.msra.mxu0 0
        %4394 = vmatprep.subr.bf16.mxu0 0
        %4395 = vmatpush1.bf16.xpose.msra.mxu0 0
        %4396 = vmatprep.subr.bf16.mxu0 0
        %4397 = vmatpush1.bf16.xpose.msra.mxu0 0
        %4398 = vmatprep.subr.bf16.mxu0 0
        %4399 = vmatpush1.bf16.xpose.msra.mxu0 0
        %4400 = vmatprep.subr.bf16.mxu0 0
        %4401 = vmatpush1.bf16.xpose.msra.mxu0 0
        %4402 = vmatprep.subr.bf16.mxu0 0
        %4403 = vmatpush1.bf16.xpose.msra.mxu0 0
        %4404 = vmatprep.subr.bf16.mxu0 0
        %4405 = vmatpush1.bf16.xpose.msra.mxu0 0
        %4406 = vmatprep.mubr.bf16.mxu0 0
        %4407 = vmatmul.mubr.bf16.gmra.mrb[0].mxu0 %v4369
        %v4408 = vpop.f32.mrb[0].mxu0
        %v4409 = vadd.f32 0.0, %v4408
        %v4410 = vpop.f32.mrb[0].mxu0
        %v4411 = vpop.f32.mrb[0].mxu0
        %v4412 = vpop.f32.mrb[0].mxu0
        %4413 = vdwg.mxu0
        %v4414 = vsel %vm2186, %v4409, -inf
        %4415 = vmax.xlane.f32.xlu0 %v4414
        %v4416 = vpop.xlane.xlu0 %4415
        %v4417 = vsub.f32 %v4409, %v4416
        %v4418 = vmul.f32 %v4417, 1.442695
        %v4419 = vpow.pop %v4418
        %v4420 = vsel %vm2186, %v4419, 0.0
        %4421 = vadd.xlane.f32.xlu0 %v4420
        %v4422 = vpop.xlane.xlu0 %4421
        %v4423 = vrcp.pop %v4422
        %v4424 = vmul.f32 %v4419, %v4423
        %v4425 = vpack.c.bf16 %v4424, %v4424
        %4427 = vrot.lane.b32.xlu0 %v4256, 120
        %v4428 = vpop.permute.xlu0 %4427
        %v4430 = vsel %vm2186, %v4425, 0
        %v4433 = vsel %vm4318, %v4428, 0
        %4435 = vmatprep.subr.bf16.mxu0 0
        %4436 = vmatpush1.bf16.msra.mxu0 %v4433
        %4437 = vmatprep.subr.bf16.mxu0 0
        %4438 = vmatpush1.bf16.msra.mxu0 0
        %4439 = vmatprep.subr.bf16.mxu0 0
        %4440 = vmatpush1.bf16.msra.mxu0 0
        %4441 = vmatprep.subr.bf16.mxu0 0
        %4442 = vmatpush1.bf16.msra.mxu0 0
        %4443 = vmatprep.subr.bf16.mxu0 0
        %4444 = vmatpush1.bf16.msra.mxu0 0
        %4445 = vmatprep.subr.bf16.mxu0 0
        %4446 = vmatpush1.bf16.msra.mxu0 0
        %4447 = vmatprep.subr.bf16.mxu0 0
        %4448 = vmatpush1.bf16.msra.mxu0 0
        %4449 = vmatprep.subr.bf16.mxu0 0
        %4450 = vmatpush1.bf16.msra.mxu0 0
        %4451 = vmatprep.subr.bf16.mxu0 0
        %4452 = vmatpush1.bf16.msra.mxu0 0
        %4453 = vmatprep.subr.bf16.mxu0 0
        %4454 = vmatpush1.bf16.msra.mxu0 0
        %4455 = vmatprep.subr.bf16.mxu0 0
        %4456 = vmatpush1.bf16.msra.mxu0 0
        %4457 = vmatprep.subr.bf16.mxu0 0
        %4458 = vmatpush1.bf16.msra.mxu0 0
        %4459 = vmatprep.subr.bf16.mxu0 0
        %4460 = vmatpush1.bf16.msra.mxu0 0
        %4461 = vmatprep.subr.bf16.mxu0 0
        %4462 = vmatpush1.bf16.msra.mxu0 0
        %4463 = vmatprep.subr.bf16.mxu0 0
        %4464 = vmatpush1.bf16.msra.mxu0 0
        %4465 = vmatprep.subr.bf16.mxu0 0
        %4466 = vmatpush1.bf16.msra.mxu0 0
        %4467 = vmatprep.mubr.bf16.mxu0 0
        %4468 = vmatmul.mubr.bf16.gmra.mrb[0].mxu0 %v4430
        %v4469 = vpop.f32.mrb[0].mxu0
        %v4470 = vadd.f32 0.0, %v4469
        %v4471 = vpop.f32.mrb[0].mxu0
        %v4472 = vpop.f32.mrb[0].mxu0
        %v4473 = vpop.f32.mrb[0].mxu0
        %4474 = vdwg.mxu0
        %4475 = vrot.lane.b32.xlu0 %v4135, 112
        %v4476 = vpop.permute.xlu0 %4475
        %4477 = vrot.lane.b32.xlu0 %v4194, 112
        %v4478 = vpop.permute.xlu0 %4477
        %v4480 = vsel %vm2186, %v4476, 0
        %v4483 = vsel %vm2186, %v4478, 0
        %4485 = vmatprep.subr.bf16.mxu0 0
        %4486 = vmatpush1.bf16.xpose.msra.mxu0 %v4483
        %4487 = vmatprep.subr.bf16.mxu0 0
        %4488 = vmatpush1.bf16.xpose.msra.mxu0 0
        %4489 = vmatprep.subr.bf16.mxu0 0
        %4490 = vmatpush1.bf16.xpose.msra.mxu0 0
        %4491 = vmatprep.subr.bf16.mxu0 0
        %4492 = vmatpush1.bf16.xpose.msra.mxu0 0
        %4493 = vmatprep.subr.bf16.mxu0 0
        %4494 = vmatpush1.bf16.xpose.msra.mxu0 0
        %4495 = vmatprep.subr.bf16.mxu0 0
        %4496 = vmatpush1.bf16.xpose.msra.mxu0 0
        %4497 = vmatprep.subr.bf16.mxu0 0
        %4498 = vmatpush1.bf16.xpose.msra.mxu0 0
        %4499 = vmatprep.subr.bf16.mxu0 0
        %4500 = vmatpush1.bf16.xpose.msra.mxu0 0
        %4501 = vmatprep.subr.bf16.mxu0 0
        %4502 = vmatpush1.bf16.xpose.msra.mxu0 0
        %4503 = vmatprep.subr.bf16.mxu0 0
        %4504 = vmatpush1.bf16.xpose.msra.mxu0 0
        %4505 = vmatprep.subr.bf16.mxu0 0
        %4506 = vmatpush1.bf16.xpose.msra.mxu0 0
        %4507 = vmatprep.subr.bf16.mxu0 0
        %4508 = vmatpush1.bf16.xpose.msra.mxu0 0
        %4509 = vmatprep.subr.bf16.mxu0 0
        %4510 = vmatpush1.bf16.xpose.msra.mxu0 0
        %4511 = vmatprep.subr.bf16.mxu0 0
        %4512 = vmatpush1.bf16.xpose.msra.mxu0 0
        %4513 = vmatprep.subr.bf16.mxu0 0
        %4514 = vmatpush1.bf16.xpose.msra.mxu0 0
        %4515 = vmatprep.subr.bf16.mxu0 0
        %4516 = vmatpush1.bf16.xpose.msra.mxu0 0
        %4517 = vmatprep.mubr.bf16.mxu0 0
        %4518 = vmatmul.mubr.bf16.gmra.mrb[0].mxu0 %v4480
        %v4519 = vpop.f32.mrb[0].mxu0
        %v4520 = vadd.f32 0.0, %v4519
        %v4521 = vpop.f32.mrb[0].mxu0
        %v4522 = vpop.f32.mrb[0].mxu0
        %v4523 = vpop.f32.mrb[0].mxu0
        %4524 = vdwg.mxu0
        %v4525 = vsel %vm2186, %v4520, -inf
        %4526 = vmax.xlane.f32.xlu0 %v4525
        %v4527 = vpop.xlane.xlu0 %4526
        %v4528 = vsub.f32 %v4520, %v4527
        %v4529 = vmul.f32 %v4528, 1.442695
        %v4530 = vpow.pop %v4529
        %v4531 = vsel %vm2186, %v4530, 0.0
        %4532 = vadd.xlane.f32.xlu0 %v4531
        %v4533 = vpop.xlane.xlu0 %4532
        %v4534 = vrcp.pop %v4533
        %v4535 = vmul.f32 %v4530, %v4534
        %v4536 = vpack.c.bf16 %v4535, %v4535
        %4537 = vrot.lane.b32.xlu0 %v4256, 112
        %v4538 = vpop.permute.xlu0 %4537
        %v4540 = vsel %vm2186, %v4536, 0
        %v4543 = vsel %vm4318, %v4538, 0
        %4545 = vmatprep.subr.bf16.mxu0 0
        %4546 = vmatpush1.bf16.msra.mxu0 %v4543
        %4547 = vmatprep.subr.bf16.mxu0 0
        %4548 = vmatpush1.bf16.msra.mxu0 0
        %4549 = vmatprep.subr.bf16.mxu0 0
        %4550 = vmatpush1.bf16.msra.mxu0 0
        %4551 = vmatprep.subr.bf16.mxu0 0
        %4552 = vmatpush1.bf16.msra.mxu0 0
        %4553 = vmatprep.subr.bf16.mxu0 0
        %4554 = vmatpush1.bf16.msra.mxu0 0
        %4555 = vmatprep.subr.bf16.mxu0 0
        %4556 = vmatpush1.bf16.msra.mxu0 0
        %4557 = vmatprep.subr.bf16.mxu0 0
        %4558 = vmatpush1.bf16.msra.mxu0 0
        %4559 = vmatprep.subr.bf16.mxu0 0
        %4560 = vmatpush1.bf16.msra.mxu0 0
        %4561 = vmatprep.subr.bf16.mxu0 0
        %4562 = vmatpush1.bf16.msra.mxu0 0
        %4563 = vmatprep.subr.bf16.mxu0 0
        %4564 = vmatpush1.bf16.msra.mxu0 0
        %4565 = vmatprep.subr.bf16.mxu0 0
        %4566 = vmatpush1.bf16.msra.mxu0 0
        %4567 = vmatprep.subr.bf16.mxu0 0
        %4568 = vmatpush1.bf16.msra.mxu0 0
        %4569 = vmatprep.subr.bf16.mxu0 0
        %4570 = vmatpush1.bf16.msra.mxu0 0
        %4571 = vmatprep.subr.bf16.mxu0 0
        %4572 = vmatpush1.bf16.msra.mxu0 0
        %4573 = vmatprep.subr.bf16.mxu0 0
        %4574 = vmatpush1.bf16.msra.mxu0 0
        %4575 = vmatprep.subr.bf16.mxu0 0
        %4576 = vmatpush1.bf16.msra.mxu0 0
        %4577 = vmatprep.mubr.bf16.mxu0 0
        %4578 = vmatmul.mubr.bf16.gmra.mrb[0].mxu0 %v4540
        %v4579 = vpop.f32.mrb[0].mxu0
        %v4580 = vadd.f32 0.0, %v4579
        %v4581 = vpop.f32.mrb[0].mxu0
        %v4582 = vpop.f32.mrb[0].mxu0
        %v4583 = vpop.f32.mrb[0].mxu0
        %4584 = vdwg.mxu0
        %4585 = vrot.lane.b32.xlu0 %v4135, 104
        %v4586 = vpop.permute.xlu0 %4585
        %4587 = vrot.lane.b32.xlu0 %v4194, 104
        %v4588 = vpop.permute.xlu0 %4587
        %v4590 = vsel %vm2186, %v4586, 0
        %v4593 = vsel %vm2186, %v4588, 0
        %4595 = vmatprep.subr.bf16.mxu0 0
        %4596 = vmatpush1.bf16.xpose.msra.mxu0 %v4593
        %4597 = vmatprep.subr.bf16.mxu0 0
        %4598 = vmatpush1.bf16.xpose.msra.mxu0 0
        %4599 = vmatprep.subr.bf16.mxu0 0
        %4600 = vmatpush1.bf16.xpose.msra.mxu0 0
        %4601 = vmatprep.subr.bf16.mxu0 0
        %4602 = vmatpush1.bf16.xpose.msra.mxu0 0
        %4603 = vmatprep.subr.bf16.mxu0 0
        %4604 = vmatpush1.bf16.xpose.msra.mxu0 0
        %4605 = vmatprep.subr.bf16.mxu0 0
        %4606 = vmatpush1.bf16.xpose.msra.mxu0 0
        %4607 = vmatprep.subr.bf16.mxu0 0
        %4608 = vmatpush1.bf16.xpose.msra.mxu0 0
        %4609 = vmatprep.subr.bf16.mxu0 0
        %4610 = vmatpush1.bf16.xpose.msra.mxu0 0
        %4611 = vmatprep.subr.bf16.mxu0 0
        %4612 = vmatpush1.bf16.xpose.msra.mxu0 0
        %4613 = vmatprep.subr.bf16.mxu0 0
        %4614 = vmatpush1.bf16.xpose.msra.mxu0 0
        %4615 = vmatprep.subr.bf16.mxu0 0
        %4616 = vmatpush1.bf16.xpose.msra.mxu0 0
        %4617 = vmatprep.subr.bf16.mxu0 0
        %4618 = vmatpush1.bf16.xpose.msra.mxu0 0
        %4619 = vmatprep.subr.bf16.mxu0 0
        %4620 = vmatpush1.bf16.xpose.msra.mxu0 0
        %4621 = vmatprep.subr.bf16.mxu0 0
        %4622 = vmatpush1.bf16.xpose.msra.mxu0 0
        %4623 = vmatprep.subr.bf16.mxu0 0
        %4624 = vmatpush1.bf16.xpose.msra.mxu0 0
        %4625 = vmatprep.subr.bf16.mxu0 0
        %4626 = vmatpush1.bf16.xpose.msra.mxu0 0
        %4627 = vmatprep.mubr.bf16.mxu0 0
        %4628 = vmatmul.mubr.bf16.gmra.mrb[0].mxu0 %v4590
        %v4629 = vpop.f32.mrb[0].mxu0
        %v4630 = vadd.f32 0.0, %v4629
        %v4631 = vpop.f32.mrb[0].mxu0
        %v4632 = vpop.f32.mrb[0].mxu0
        %v4633 = vpop.f32.mrb[0].mxu0
        %4634 = vdwg.mxu0
        %v4635 = vsel %vm2186, %v4630, -inf
        %4636 = vmax.xlane.f32.xlu0 %v4635
        %v4637 = vpop.xlane.xlu0 %4636
        %v4638 = vsub.f32 %v4630, %v4637
        %v4639 = vmul.f32 %v4638, 1.442695
        %v4640 = vpow.pop %v4639
        %v4641 = vsel %vm2186, %v4640, 0.0
        %4642 = vadd.xlane.f32.xlu0 %v4641
        %v4643 = vpop.xlane.xlu0 %4642
        %v4644 = vrcp.pop %v4643
        %v4645 = vmul.f32 %v4640, %v4644
        %v4646 = vpack.c.bf16 %v4645, %v4645
        %4647 = vrot.lane.b32.xlu0 %v4256, 104
        %v4648 = vpop.permute.xlu0 %4647
        %v4650 = vsel %vm2186, %v4646, 0
        %v4653 = vsel %vm4318, %v4648, 0
        %4655 = vmatprep.subr.bf16.mxu0 0
        %4656 = vmatpush1.bf16.msra.mxu0 %v4653
        %4657 = vmatprep.subr.bf16.mxu0 0
        %4658 = vmatpush1.bf16.msra.mxu0 0
        %4659 = vmatprep.subr.bf16.mxu0 0
        %4660 = vmatpush1.bf16.msra.mxu0 0
        %4661 = vmatprep.subr.bf16.mxu0 0
        %4662 = vmatpush1.bf16.msra.mxu0 0
        %4663 = vmatprep.subr.bf16.mxu0 0
        %4664 = vmatpush1.bf16.msra.mxu0 0
        %4665 = vmatprep.subr.bf16.mxu0 0
        %4666 = vmatpush1.bf16.msra.mxu0 0
        %4667 = vmatprep.subr.bf16.mxu0 0
        %4668 = vmatpush1.bf16.msra.mxu0 0
        %4669 = vmatprep.subr.bf16.mxu0 0
        %4670 = vmatpush1.bf16.msra.mxu0 0
        %4671 = vmatprep.subr.bf16.mxu0 0
        %4672 = vmatpush1.bf16.msra.mxu0 0
        %4673 = vmatprep.subr.bf16.mxu0 0
        %4674 = vmatpush1.bf16.msra.mxu0 0
        %4675 = vmatprep.subr.bf16.mxu0 0
        %4676 = vmatpush1.bf16.msra.mxu0 0
        %4677 = vmatprep.subr.bf16.mxu0 0
        %4678 = vmatpush1.bf16.msra.mxu0 0
        %4679 = vmatprep.subr.bf16.mxu0 0
        %4680 = vmatpush1.bf16.msra.mxu0 0
        %4681 = vmatprep.subr.bf16.mxu0 0
        %4682 = vmatpush1.bf16.msra.mxu0 0
        %4683 = vmatprep.subr.bf16.mxu0 0
        %4684 = vmatpush1.bf16.msra.mxu0 0
        %4685 = vmatprep.subr.bf16.mxu0 0
        %4686 = vmatpush1.bf16.msra.mxu0 0
        %4687 = vmatprep.mubr.bf16.mxu0 0
        %4688 = vmatmul.mubr.bf16.gmra.mrb[0].mxu0 %v4650
        %v4689 = vpop.f32.mrb[0].mxu0
        %v4690 = vadd.f32 0.0, %v4689
        %v4691 = vpop.f32.mrb[0].mxu0
        %v4692 = vpop.f32.mrb[0].mxu0
        %v4693 = vpop.f32.mrb[0].mxu0
        %4694 = vdwg.mxu0
        %4696 = vrot.lane.b32.xlu0 %v4470, 8
        %v4697 = vpop.permute.xlu0 %4696
        %4700 = vrot.lane.b32.xlu0 %v4580, 16
        %v4701 = vpop.permute.xlu0 %4700
        %4704 = vrot.lane.b32.xlu0 %v4690, 24
        %v4705 = vpop.permute.xlu0 %4704
        %v4707 = vsel %vm2186, %v4357, %v4697
        %v4708 = vsel %vm1778, %v4707, %v4701
        %v4709 = vsel %vm3428, %v4708, %v4705
        %v4710 = vpack.c.bf16 %v4709, %v4709
        %v4712 = vlaneseq
        %v4713 = vshrl.u32 %v4712, 7
        %v4714 = vsub.s32 0, %v4713
        %v4715 = vrot.slane %v4071, %v4714
        %v4721 = vunpack.c.l.b16 %v4067
        %v4722 = vunpack.c.l.b16 %v4068
        %v4723 = vunpack.c.l.b16 %v4069
        %v4724 = vunpack.c.l.b16 %v4070
        %v4725 = vpack.c.b16 %v4722, %v4721
        %v4726 = vpack.c.b16 %v4724, %v4723
        %v4730 = vsel %vm1906, %v4710, 0
        %4732 = vmatprep.subr.bf16.mxu0 0
        %4733 = vmatpush1.bf16.msra.mxu0 %v4725
        %4734 = vmatprep.subr.bf16.mxu0 0
        %4735 = vmatpush1.bf16.msra.mxu0 %v4726
        %4736 = vmatprep.subr.bf16.mxu0 0
        %4737 = vmatpush1.bf16.msra.mxu0 0
        %4738 = vmatprep.subr.bf16.mxu0 0
        %4739 = vmatpush1.bf16.msra.mxu0 0
        %4740 = vmatprep.subr.bf16.mxu0 0
        %4741 = vmatpush1.bf16.msra.mxu0 0
        %4742 = vmatprep.subr.bf16.mxu0 0
        %4743 = vmatpush1.bf16.msra.mxu0 0
        %4744 = vmatprep.subr.bf16.mxu0 0
        %4745 = vmatpush1.bf16.msra.mxu0 0
        %4746 = vmatprep.subr.bf16.mxu0 0
        %4747 = vmatpush1.bf16.msra.mxu0 0
        %4748 = vmatprep.subr.bf16.mxu0 0
        %4749 = vmatpush1.bf16.msra.mxu0 0
        %4750 = vmatprep.subr.bf16.mxu0 0
        %4751 = vmatpush1.bf16.msra.mxu0 0
        %4752 = vmatprep.subr.bf16.mxu0 0
        %4753 = vmatpush1.bf16.msra.mxu0 0
        %4754 = vmatprep.subr.bf16.mxu0 0
        %4755 = vmatpush1.bf16.msra.mxu0 0
        %4756 = vmatprep.subr.bf16.mxu0 0
        %4757 = vmatpush1.bf16.msra.mxu0 0
        %4758 = vmatprep.subr.bf16.mxu0 0
        %4759 = vmatpush1.bf16.msra.mxu0 0
        %4760 = vmatprep.subr.bf16.mxu0 0
        %4761 = vmatpush1.bf16.msra.mxu0 0
        %4762 = vmatprep.subr.bf16.mxu0 0
        %4763 = vmatpush1.bf16.msra.mxu0 0
        %4764 = vmatprep.mubr.bf16.mxu0 0
        %4765 = vmatmul.mubr.bf16.gmra.mrb[0].mxu0 %v4730
        %v4766 = vpop.f32.mrb[0].mxu0
        %v4767 = vadd.f32 %v4715, %v4766
        %v4768 = vpop.f32.mrb[0].mxu0
        %v4769 = vpop.f32.mrb[0].mxu0
        %v4770 = vpop.f32.mrb[0].mxu0
        %4771 = vdwg.mxu0
        %v4772 = vadd.f32 %v4767, 0.0
        %v4773 = vld [vmem:[%s57] sm:$0x3]
        %v4774 = vsel %vm1906, %v4772, 0.0
        %4775 = vadd.xlane.f32.xlu0 %v4774
        %v4776 = vpop.xlane.xlu0 %4775
        %v4777 = vmul.f32 %v4776, %v3569
        %v4778 = vsub.f32 %v4772, %v4777
        %v4779 = vmul.f32 %v4778, %v4778
        %v4780 = vsel %vm1906, %v4779, 0.0
        %4781 = vadd.xlane.f32.xlu0 %v4780
        %v4782 = vpop.xlane.xlu0 %4781
        %v4783 = vmul.f32 %v4782, %v3569
        %v4784 = vadd.f32 %v4783, 1e-05
        %v4785 = vrsqrt.pop %v4784
        %v4786 = vmul.f32 %v4778, %v4785
        %v4787 = vlaneseq
        %v4788 = vshrl.u32 %v4787, 7
        %v4789 = vsub.s32 0, %v4788
        %v4790 = vrot.slane %v4773, %v4789
        %v4791 = vmul.f32 %v4786, %v4790
        %v4792 = vlaneseq
        %v4793 = vshrl.u32 %v4792, 7
        %v4794 = vsub.s32 1, %v4793
        %v4795 = vrot.slane %v4773, %v4794
        %v4796 = vadd.f32 %v4791, %v4795
        %v4797 = vadd.f32 %v4796, %v1750
        %v4798 = vld [vmem:[%s59] sm:$0xf]
        %v4799 = vld [vmem:[%s59 + $0x4] sm:$0xf]
        %v4800 = vld [vmem:[%s59 + $0x8] sm:$0xf]
        %v4801 = vld [vmem:[%s59 + $0xc] sm:$0xf]
        %v4802 = vld [vmem:[%s61] sm:$0x1]
        %v4803 = vld [vmem:[%s63] sm:$0xf]
        %v4804 = vld [vmem:[%s63 + $0x4] sm:$0xf]
        %v4805 = vld [vmem:[%s63 + $0x8] sm:$0xf]
        %v4806 = vld [vmem:[%s63 + $0xc] sm:$0xf]
        %v4807 = vld [vmem:[%s65] sm:$0x1]
        %v4808 = vld [vmem:[%s67] sm:$0xf]
        %v4809 = vld [vmem:[%s67 + $0x4] sm:$0xf]
        %v4810 = vld [vmem:[%s67 + $0x8] sm:$0xf]
        %v4811 = vld [vmem:[%s67 + $0xc] sm:$0xf]
        %v4812 = vld [vmem:[%s69] sm:$0x1]
        %v4813 = vld [vmem:[%s71] sm:$0xf]
        %v4814 = vld [vmem:[%s71 + $0x4] sm:$0xf]
        %v4815 = vld [vmem:[%s71 + $0x8] sm:$0xf]
        %v4816 = vld [vmem:[%s71 + $0xc] sm:$0xf]
        %v4817 = vld [vmem:[%s73] sm:$0x1]
        %v4818 = vpack.c.bf16 %v4797, %v4797
        %v4820 = vlaneseq
        %v4821 = vshrl.u32 %v4820, 7
        %v4822 = vsub.s32 0, %v4821
        %v4823 = vrot.slane %v4802, %v4822
        %v4829 = vunpack.c.l.b16 %v4798
        %v4830 = vunpack.c.l.b16 %v4799
        %v4831 = vunpack.c.l.b16 %v4800
        %v4832 = vunpack.c.l.b16 %v4801
        %v4833 = vpack.c.b16 %v4830, %v4829
        %v4834 = vpack.c.b16 %v4832, %v4831
        %v4838 = vsel %vm1906, %v4818, 0
        %4840 = vmatprep.subr.bf16.mxu0 0
        %4841 = vmatpush1.bf16.msra.mxu0 %v4833
        %4842 = vmatprep.subr.bf16.mxu0 0
        %4843 = vmatpush1.bf16.msra.mxu0 %v4834
        %4844 = vmatprep.subr.bf16.mxu0 0
        %4845 = vmatpush1.bf16.msra.mxu0 0
        %4846 = vmatprep.subr.bf16.mxu0 0
        %4847 = vmatpush1.bf16.msra.mxu0 0
        %4848 = vmatprep.subr.bf16.mxu0 0
        %4849 = vmatpush1.bf16.msra.mxu0 0
        %4850 = vmatprep.subr.bf16.mxu0 0
        %4851 = vmatpush1.bf16.msra.mxu0 0
        %4852 = vmatprep.subr.bf16.mxu0 0
        %4853 = vmatpush1.bf16.msra.mxu0 0
        %4854 = vmatprep.subr.bf16.mxu0 0
        %4855 = vmatpush1.bf16.msra.mxu0 0
        %4856 = vmatprep.subr.bf16.mxu0 0
        %4857 = vmatpush1.bf16.msra.mxu0 0
        %4858 = vmatprep.subr.bf16.mxu0 0
        %4859 = vmatpush1.bf16.msra.mxu0 0
        %4860 = vmatprep.subr.bf16.mxu0 0
        %4861 = vmatpush1.bf16.msra.mxu0 0
        %4862 = vmatprep.subr.bf16.mxu0 0
        %4863 = vmatpush1.bf16.msra.mxu0 0
        %4864 = vmatprep.subr.bf16.mxu0 0
        %4865 = vmatpush1.bf16.msra.mxu0 0
        %4866 = vmatprep.subr.bf16.mxu0 0
        %4867 = vmatpush1.bf16.msra.mxu0 0
        %4868 = vmatprep.subr.bf16.mxu0 0
        %4869 = vmatpush1.bf16.msra.mxu0 0
        %4870 = vmatprep.subr.bf16.mxu0 0
        %4871 = vmatpush1.bf16.msra.mxu0 0
        %4872 = vmatprep.mubr.bf16.mxu0 0
        %4873 = vmatmul.mubr.bf16.gmra.mrb[0].mxu0 %v4838
        %v4874 = vpop.f32.mrb[0].mxu0
        %v4875 = vadd.f32 %v4823, %v4874
        %v4876 = vpop.f32.mrb[0].mxu0
        %v4877 = vpop.f32.mrb[0].mxu0
        %v4878 = vpop.f32.mrb[0].mxu0
        %4879 = vdwg.mxu0
        %v4880 = vmul.f32 %v4875, 0.35355338
        %v4881 = vpack.c.bf16 %v4880, %v4880
        %v4882 = vpack.c.bf16 %v4044, %v4043
        %v4883 = vpack.c.bf16 %v4046, %v4045
        %v4884 = vpack.c.bf16 %v4048, %v4047
        %v4885 = vpack.c.bf16 %v4050, %v4049
        %v4887 = vlaneseq
        %v4888 = vshrl.u32 %v4887, 7
        %v4889 = vsub.s32 0, %v4888
        %v4890 = vrot.slane %v4807, %v4889
        %v4896 = vunpack.c.l.b16 %v4803
        %v4897 = vunpack.c.l.b16 %v4804
        %v4898 = vunpack.c.l.b16 %v4805
        %v4899 = vunpack.c.l.b16 %v4806
        %v4900 = vpack.c.b16 %v4897, %v4896
        %v4901 = vpack.c.b16 %v4899, %v4898
        %v4905 = vsel %vm1906, %v4882, 0
        %v4908 = vsel %vm1906, %v4883, 0
        %v4911 = vsel %vm1906, %v4884, 0
        %v4914 = vsel %vm1906, %v4885, 0
        %4916 = vmatprep.subr.bf16.mxu0 0
        %4917 = vmatpush1.bf16.msra.mxu0 %v4900
        %4918 = vmatprep.subr.bf16.mxu0 0
        %4919 = vmatpush1.bf16.msra.mxu0 %v4901
        %4920 = vmatprep.subr.bf16.mxu0 0
        %4921 = vmatpush1.bf16.msra.mxu0 0
        %4922 = vmatprep.subr.bf16.mxu0 0
        %4923 = vmatpush1.bf16.msra.mxu0 0
        %4924 = vmatprep.subr.bf16.mxu0 0
        %4925 = vmatpush1.bf16.msra.mxu0 0
        %4926 = vmatprep.subr.bf16.mxu0 0
        %4927 = vmatpush1.bf16.msra.mxu0 0
        %4928 = vmatprep.subr.bf16.mxu0 0
        %4929 = vmatpush1.bf16.msra.mxu0 0
        %4930 = vmatprep.subr.bf16.mxu0 0
        %4931 = vmatpush1.bf16.msra.mxu0 0
        %4932 = vmatprep.subr.bf16.mxu0 0
        %4933 = vmatpush1.bf16.msra.mxu0 0
        %4934 = vmatprep.subr.bf16.mxu0 0
        %4935 = vmatpush1.bf16.msra.mxu0 0
        %4936 = vmatprep.subr.bf16.mxu0 0
        %4937 = vmatpush1.bf16.msra.mxu0 0
        %4938 = vmatprep.subr.bf16.mxu0 0
        %4939 = vmatpush1.bf16.msra.mxu0 0
        %4940 = vmatprep.subr.bf16.mxu0 0
        %4941 = vmatpush1.bf16.msra.mxu0 0
        %4942 = vmatprep.subr.bf16.mxu0 0
        %4943 = vmatpush1.bf16.msra.mxu0 0
        %4944 = vmatprep.subr.bf16.mxu0 0
        %4945 = vmatpush1.bf16.msra.mxu0 0
        %4946 = vmatprep.subr.bf16.mxu0 0
        %4947 = vmatpush1.bf16.msra.mxu0 0
        %4948 = vmatprep.mubr.bf16.mxu0 0
        %4949 = vmatmul.mubr.bf16.gmra.mrb[0].mxu0 %v4905
        %v4950 = vpop.f32.mrb[0].mxu0
        %v4951 = vadd.f32 %v4890, %v4950
        %v4952 = vpop.f32.mrb[0].mxu0
        %v4953 = vpop.f32.mrb[0].mxu0
        %v4954 = vadd.f32 %v4890, %v4953
        %v4955 = vpop.f32.mrb[0].mxu0
        %4956 = vmatprep.mubr.bf16.mxu0 0
        %4957 = vmatmul.mubr.bf16.gmra.mrb[0].mxu0 %v4908
        %v4958 = vpop.f32.mrb[0].mxu0
        %v4959 = vadd.f32 %v4890, %v4958
        %v4960 = vpop.f32.mrb[0].mxu0
        %v4961 = vpop.f32.mrb[0].mxu0
        %v4962 = vadd.f32 %v4890, %v4961
        %v4963 = vpop.f32.mrb[0].mxu0
        %4964 = vmatprep.mubr.bf16.mxu0 0
        %4965 = vmatmul.mubr.bf16.gmra.mrb[0].mxu0 %v4911
        %v4966 = vpop.f32.mrb[0].mxu0
        %v4967 = vadd.f32 %v4890, %v4966
        %v4968 = vpop.f32.mrb[0].mxu0
        %v4969 = vpop.f32.mrb[0].mxu0
        %v4970 = vadd.f32 %v4890, %v4969
        %v4971 = vpop.f32.mrb[0].mxu0
        %4972 = vmatprep.mubr.bf16.mxu0 0
        %4973 = vmatmul.mubr.bf16.gmra.mrb[0].mxu0 %v4914
        %v4974 = vpop.f32.mrb[0].mxu0
        %v4975 = vadd.f32 %v4890, %v4974
        %v4976 = vpop.f32.mrb[0].mxu0
        %v4977 = vpop.f32.mrb[0].mxu0
        %v4978 = vadd.f32 %v4890, %v4977
        %v4979 = vpop.f32.mrb[0].mxu0
        %4980 = vdwg.mxu0
        %v4981 = vpack.c.bf16 %v4954, %v4951
        %v4982 = vpack.c.bf16 %v4962, %v4959
        %v4983 = vpack.c.bf16 %v4970, %v4967
        %v4984 = vpack.c.bf16 %v4978, %v4975
        %v4985 = vpack.c.bf16 %v4036, %v4035
        %v4986 = vpack.c.bf16 %v4038, %v4037
        %v4987 = vpack.c.bf16 %v4040, %v4039
        %v4988 = vpack.c.bf16 %v4042, %v4041
        %v4990 = vlaneseq
        %v4991 = vshrl.u32 %v4990, 7
        %v4992 = vsub.s32 0, %v4991
        %v4993 = vrot.slane %v4812, %v4992
        %v4999 = vunpack.c.l.b16 %v4808
        %v5000 = vunpack.c.l.b16 %v4809
        %v5001 = vunpack.c.l.b16 %v4810
        %v5002 = vunpack.c.l.b16 %v4811
        %v5003 = vpack.c.b16 %v5000, %v4999
        %v5004 = vpack.c.b16 %v5002, %v5001
        %v5008 = vsel %vm1906, %v4985, 0
        %v5011 = vsel %vm1906, %v4986, 0
        %v5014 = vsel %vm1906, %v4987, 0
        %v5017 = vsel %vm1906, %v4988, 0
        %5019 = vmatprep.subr.bf16.mxu0 0
        %5020 = vmatpush1.bf16.msra.mxu0 %v5003
        %5021 = vmatprep.subr.bf16.mxu0 0
        %5022 = vmatpush1.bf16.msra.mxu0 %v5004
        %5023 = vmatprep.subr.bf16.mxu0 0
        %5024 = vmatpush1.bf16.msra.mxu0 0
        %5025 = vmatprep.subr.bf16.mxu0 0
        %5026 = vmatpush1.bf16.msra.mxu0 0
        %5027 = vmatprep.subr.bf16.mxu0 0
        %5028 = vmatpush1.bf16.msra.mxu0 0
        %5029 = vmatprep.subr.bf16.mxu0 0
        %5030 = vmatpush1.bf16.msra.mxu0 0
        %5031 = vmatprep.subr.bf16.mxu0 0
        %5032 = vmatpush1.bf16.msra.mxu0 0
        %5033 = vmatprep.subr.bf16.mxu0 0
        %5034 = vmatpush1.bf16.msra.mxu0 0
        %5035 = vmatprep.subr.bf16.mxu0 0
        %5036 = vmatpush1.bf16.msra.mxu0 0
        %5037 = vmatprep.subr.bf16.mxu0 0
        %5038 = vmatpush1.bf16.msra.mxu0 0
        %5039 = vmatprep.subr.bf16.mxu0 0
        %5040 = vmatpush1.bf16.msra.mxu0 0
        %5041 = vmatprep.subr.bf16.mxu0 0
        %5042 = vmatpush1.bf16.msra.mxu0 0
        %5043 = vmatprep.subr.bf16.mxu0 0
        %5044 = vmatpush1.bf16.msra.mxu0 0
        %5045 = vmatprep.subr.bf16.mxu0 0
        %5046 = vmatpush1.bf16.msra.mxu0 0
        %5047 = vmatprep.subr.bf16.mxu0 0
        %5048 = vmatpush1.bf16.msra.mxu0 0
        %5049 = vmatprep.subr.bf16.mxu0 0
        %5050 = vmatpush1.bf16.msra.mxu0 0
        %5051 = vmatprep.mubr.bf16.mxu0 0
        %5052 = vmatmul.mubr.bf16.gmra.mrb[0].mxu0 %v5008
        %v5053 = vpop.f32.mrb[0].mxu0
        %v5054 = vadd.f32 %v4993, %v5053
        %v5055 = vpop.f32.mrb[0].mxu0
        %v5056 = vpop.f32.mrb[0].mxu0
        %v5057 = vadd.f32 %v4993, %v5056
        %v5058 = vpop.f32.mrb[0].mxu0
        %5059 = vmatprep.mubr.bf16.mxu0 0
        %5060 = vmatmul.mubr.bf16.gmra.mrb[0].mxu0 %v5011
        %v5061 = vpop.f32.mrb[0].mxu0
        %v5062 = vadd.f32 %v4993, %v5061
        %v5063 = vpop.f32.mrb[0].mxu0
        %v5064 = vpop.f32.mrb[0].mxu0
        %v5065 = vadd.f32 %v4993, %v5064
        %v5066 = vpop.f32.mrb[0].mxu0
        %5067 = vmatprep.mubr.bf16.mxu0 0
        %5068 = vmatmul.mubr.bf16.gmra.mrb[0].mxu0 %v5014
        %v5069 = vpop.f32.mrb[0].mxu0
        %v5070 = vadd.f32 %v4993, %v5069
        %v5071 = vpop.f32.mrb[0].mxu0
        %v5072 = vpop.f32.mrb[0].mxu0
        %v5073 = vadd.f32 %v4993, %v5072
        %v5074 = vpop.f32.mrb[0].mxu0
        %5075 = vmatprep.mubr.bf16.mxu0 0
        %5076 = vmatmul.mubr.bf16.gmra.mrb[0].mxu0 %v5017
        %v5077 = vpop.f32.mrb[0].mxu0
        %v5078 = vadd.f32 %v4993, %v5077
        %v5079 = vpop.f32.mrb[0].mxu0
        %v5080 = vpop.f32.mrb[0].mxu0
        %v5081 = vadd.f32 %v4993, %v5080
        %v5082 = vpop.f32.mrb[0].mxu0
        %5083 = vdwg.mxu0
        %v5084 = vpack.c.bf16 %v5057, %v5054
        %v5085 = vpack.c.bf16 %v5065, %v5062
        %v5086 = vpack.c.bf16 %v5073, %v5070
        %v5087 = vpack.c.bf16 %v5081, %v5078
        %v5089 = vsel %vm2186, %v4881, 0
        %v5092 = vsel %vm2186, %v4981, 0
        %v5095 = vsel %vm2186, %v4982, 0
        %v5098 = vsel %vm2186, %v4983, 0
        %v5101 = vsel %vm2186, %v4984, 0
        %5103 = vmatprep.subr.bf16.mxu0 0
        %5104 = vmatpush1.bf16.xpose.msra.mxu0 %v5092
        %5105 = vmatprep.subr.bf16.mxu0 0
        %5106 = vmatpush1.bf16.xpose.msra.mxu0 %v5095
        %5107 = vmatprep.subr.bf16.mxu0 0
        %5108 = vmatpush1.bf16.xpose.msra.mxu0 %v5098
        %5109 = vmatprep.subr.bf16.mxu0 0
        %5110 = vmatpush1.bf16.xpose.msra.mxu0 %v5101
        %5111 = vmatprep.subr.bf16.mxu0 0
        %5112 = vmatpush1.bf16.xpose.msra.mxu0 0
        %5113 = vmatprep.subr.bf16.mxu0 0
        %5114 = vmatpush1.bf16.xpose.msra.mxu0 0
        %5115 = vmatprep.subr.bf16.mxu0 0
        %5116 = vmatpush1.bf16.xpose.msra.mxu0 0
        %5117 = vmatprep.subr.bf16.mxu0 0
        %5118 = vmatpush1.bf16.xpose.msra.mxu0 0
        %5119 = vmatprep.subr.bf16.mxu0 0
        %5120 = vmatpush1.bf16.xpose.msra.mxu0 0
        %5121 = vmatprep.subr.bf16.mxu0 0
        %5122 = vmatpush1.bf16.xpose.msra.mxu0 0
        %5123 = vmatprep.subr.bf16.mxu0 0
        %5124 = vmatpush1.bf16.xpose.msra.mxu0 0
        %5125 = vmatprep.subr.bf16.mxu0 0
        %5126 = vmatpush1.bf16.xpose.msra.mxu0 0
        %5127 = vmatprep.subr.bf16.mxu0 0
        %5128 = vmatpush1.bf16.xpose.msra.mxu0 0
        %5129 = vmatprep.subr.bf16.mxu0 0
        %5130 = vmatpush1.bf16.xpose.msra.mxu0 0
        %5131 = vmatprep.subr.bf16.mxu0 0
        %5132 = vmatpush1.bf16.xpose.msra.mxu0 0
        %5133 = vmatprep.subr.bf16.mxu0 0
        %5134 = vmatpush1.bf16.xpose.msra.mxu0 0
        %5135 = vmatprep.mubr.bf16.mxu0 0
        %5136 = vmatmul.mubr.bf16.gmra.mrb[0].mxu0 %v5089
        %v5137 = vpop.f32.mrb[0].mxu0
        %v5138 = vadd.f32 0.0, %v5137
        %v5139 = vpop.f32.mrb[0].mxu0
        %v5140 = vpop.f32.mrb[0].mxu0
        %v5141 = vpop.f32.mrb[0].mxu0
        %5142 = vdwg.mxu0
        %v5143 = vsel %vm2276, %v5138, -inf
        %5144 = vmax.xlane.f32.xlu0 %v5143
        %v5145 = vpop.xlane.xlu0 %5144
        %v5146 = vsub.f32 %v5138, %v5145
        %v5147 = vmul.f32 %v5146, 1.442695
        %v5148 = vpow.pop %v5147
        %v5149 = vsel %vm2276, %v5148, 0.0
        %5150 = vadd.xlane.f32.xlu0 %v5149
        %v5151 = vpop.xlane.xlu0 %5150
        %v5152 = vrcp.pop %v5151
        %v5153 = vmul.f32 %v5148, %v5152
        %v5154 = vpack.c.bf16 %v5153, %v5153
        %v5156 = vsel %vm2276, %v5154, 0
        %5158 = vmatprep.subr.bf16.mxu0 0
        %5159 = vmatpush1.bf16.msra.mxu0 %v5084
        %5160 = vmatprep.subr.bf16.mxu0 0
        %5161 = vmatpush1.bf16.msra.mxu0 %v5085
        %5162 = vmatprep.subr.bf16.mxu0 0
        %5163 = vmatpush1.bf16.msra.mxu0 %v5086
        %5164 = vmatprep.subr.bf16.mxu0 0
        %5165 = vmatpush1.bf16.msra.mxu0 %v5087
        %5166 = vmatprep.subr.bf16.mxu0 0
        %5167 = vmatpush1.bf16.msra.mxu0 0
        %5168 = vmatprep.subr.bf16.mxu0 0
        %5169 = vmatpush1.bf16.msra.mxu0 0
        %5170 = vmatprep.subr.bf16.mxu0 0
        %5171 = vmatpush1.bf16.msra.mxu0 0
        %5172 = vmatprep.subr.bf16.mxu0 0
        %5173 = vmatpush1.bf16.msra.mxu0 0
        %5174 = vmatprep.subr.bf16.mxu0 0
        %5175 = vmatpush1.bf16.msra.mxu0 0
        %5176 = vmatprep.subr.bf16.mxu0 0
        %5177 = vmatpush1.bf16.msra.mxu0 0
        %5178 = vmatprep.subr.bf16.mxu0 0
        %5179 = vmatpush1.bf16.msra.mxu0 0
        %5180 = vmatprep.subr.bf16.mxu0 0
        %5181 = vmatpush1.bf16.msra.mxu0 0
        %5182 = vmatprep.subr.bf16.mxu0 0
        %5183 = vmatpush1.bf16.msra.mxu0 0
        %5184 = vmatprep.subr.bf16.mxu0 0
        %5185 = vmatpush1.bf16.msra.mxu0 0
        %5186 = vmatprep.subr.bf16.mxu0 0
        %5187 = vmatpush1.bf16.msra.mxu0 0
        %5188 = vmatprep.subr.bf16.mxu0 0
        %5189 = vmatpush1.bf16.msra.mxu0 0
        %5190 = vmatprep.mubr.bf16.mxu0 0
        %5191 = vmatmul.mubr.bf16.gmra.mrb[0].mxu0 %v5156
        %v5192 = vpop.f32.mrb[0].mxu0
        %v5193 = vadd.f32 0.0, %v5192
        %v5194 = vpop.f32.mrb[0].mxu0
        %v5195 = vpop.f32.mrb[0].mxu0
        %v5196 = vpop.f32.mrb[0].mxu0
        %5197 = vdwg.mxu0
        %5199 = vrot.lane.b32.xlu0 %v4881, 120
        %v5200 = vpop.permute.xlu0 %5199
        %5205 = vrot.lane.b32.xlu0 %v4981, 120
        %v5206 = vpop.permute.xlu0 %5205
        %5207 = vrot.lane.b32.xlu0 %v4982, 120
        %v5208 = vpop.permute.xlu0 %5207
        %5209 = vrot.lane.b32.xlu0 %v4983, 120
        %v5210 = vpop.permute.xlu0 %5209
        %5211 = vrot.lane.b32.xlu0 %v4984, 120
        %v5212 = vpop.permute.xlu0 %5211
        %v5214 = vsel %vm2186, %v5200, 0
        %v5217 = vsel %vm2186, %v5206, 0
        %v5220 = vsel %vm2186, %v5208, 0
        %v5223 = vsel %vm2186, %v5210, 0
        %v5226 = vsel %vm2186, %v5212, 0
        %5228 = vmatprep.subr.bf16.mxu0 0
        %5229 = vmatpush1.bf16.xpose.msra.mxu0 %v5217
        %5230 = vmatprep.subr.bf16.mxu0 0
        %5231 = vmatpush1.bf16.xpose.msra.mxu0 %v5220
        %5232 = vmatprep.subr.bf16.mxu0 0
        %5233 = vmatpush1.bf16.xpose.msra.mxu0 %v5223
        %5234 = vmatprep.subr.bf16.mxu0 0
        %5235 = vmatpush1.bf16.xpose.msra.mxu0 %v5226
        %5236 = vmatprep.subr.bf16.mxu0 0
        %5237 = vmatpush1.bf16.xpose.msra.mxu0 0
        %5238 = vmatprep.subr.bf16.mxu0 0
        %5239 = vmatpush1.bf16.xpose.msra.mxu0 0
        %5240 = vmatprep.subr.bf16.mxu0 0
        %5241 = vmatpush1.bf16.xpose.msra.mxu0 0
        %5242 = vmatprep.subr.bf16.mxu0 0
        %5243 = vmatpush1.bf16.xpose.msra.mxu0 0
        %5244 = vmatprep.subr.bf16.mxu0 0
        %5245 = vmatpush1.bf16.xpose.msra.mxu0 0
        %5246 = vmatprep.subr.bf16.mxu0 0
        %5247 = vmatpush1.bf16.xpose.msra.mxu0 0
        %5248 = vmatprep.subr.bf16.mxu0 0
        %5249 = vmatpush1.bf16.xpose.msra.mxu0 0
        %5250 = vmatprep.subr.bf16.mxu0 0
        %5251 = vmatpush1.bf16.xpose.msra.mxu0 0
        %5252 = vmatprep.subr.bf16.mxu0 0
        %5253 = vmatpush1.bf16.xpose.msra.mxu0 0
        %5254 = vmatprep.subr.bf16.mxu0 0
        %5255 = vmatpush1.bf16.xpose.msra.mxu0 0
        %5256 = vmatprep.subr.bf16.mxu0 0
        %5257 = vmatpush1.bf16.xpose.msra.mxu0 0
        %5258 = vmatprep.subr.bf16.mxu0 0
        %5259 = vmatpush1.bf16.xpose.msra.mxu0 0
        %5260 = vmatprep.mubr.bf16.mxu0 0
        %5261 = vmatmul.mubr.bf16.gmra.mrb[0].mxu0 %v5214
        %v5262 = vpop.f32.mrb[0].mxu0
        %v5263 = vadd.f32 0.0, %v5262
        %v5264 = vpop.f32.mrb[0].mxu0
        %v5265 = vpop.f32.mrb[0].mxu0
        %v5266 = vpop.f32.mrb[0].mxu0
        %5267 = vdwg.mxu0
        %v5268 = vsel %vm2276, %v5263, -inf
        %5269 = vmax.xlane.f32.xlu0 %v5268
        %v5270 = vpop.xlane.xlu0 %5269
        %v5271 = vsub.f32 %v5263, %v5270
        %v5272 = vmul.f32 %v5271, 1.442695
        %v5273 = vpow.pop %v5272
        %v5274 = vsel %vm2276, %v5273, 0.0
        %5275 = vadd.xlane.f32.xlu0 %v5274
        %v5276 = vpop.xlane.xlu0 %5275
        %v5277 = vrcp.pop %v5276
        %v5278 = vmul.f32 %v5273, %v5277
        %v5279 = vpack.c.bf16 %v5278, %v5278
        %5284 = vrot.lane.b32.xlu0 %v5084, 120
        %v5285 = vpop.permute.xlu0 %5284
        %5286 = vrot.lane.b32.xlu0 %v5085, 120
        %v5287 = vpop.permute.xlu0 %5286
        %5288 = vrot.lane.b32.xlu0 %v5086, 120
        %v5289 = vpop.permute.xlu0 %5288
        %5290 = vrot.lane.b32.xlu0 %v5087, 120
        %v5291 = vpop.permute.xlu0 %5290
        %v5297 = vsel %vm2276, %v5279, 0
        %5299 = vmatprep.subr.bf16.mxu0 0
        %5300 = vmatpush1.bf16.msra.mxu0 %v5285
        %5301 = vmatprep.subr.bf16.mxu0 0
        %5302 = vmatpush1.bf16.msra.mxu0 %v5287
        %5303 = vmatprep.subr.bf16.mxu0 0
        %5304 = vmatpush1.bf16.msra.mxu0 %v5289
        %5305 = vmatprep.subr.bf16.mxu0 0
        %5306 = vmatpush1.bf16.msra.mxu0 %v5291
        %5307 = vmatprep.subr.bf16.mxu0 0
        %5308 = vmatpush1.bf16.msra.mxu0 0
        %5309 = vmatprep.subr.bf16.mxu0 0
        %5310 = vmatpush1.bf16.msra.mxu0 0
        %5311 = vmatprep.subr.bf16.mxu0 0
        %5312 = vmatpush1.bf16.msra.mxu0 0
        %5313 = vmatprep.subr.bf16.mxu0 0
        %5314 = vmatpush1.bf16.msra.mxu0 0
        %5315 = vmatprep.subr.bf16.mxu0 0
        %5316 = vmatpush1.bf16.msra.mxu0 0
        %5317 = vmatprep.subr.bf16.mxu0 0
        %5318 = vmatpush1.bf16.msra.mxu0 0
        %5319 = vmatprep.subr.bf16.mxu0 0
        %5320 = vmatpush1.bf16.msra.mxu0 0
        %5321 = vmatprep.subr.bf16.mxu0 0
        %5322 = vmatpush1.bf16.msra.mxu0 0
        %5323 = vmatprep.subr.bf16.mxu0 0
        %5324 = vmatpush1.bf16.msra.mxu0 0
        %5325 = vmatprep.subr.bf16.mxu0 0
        %5326 = vmatpush1.bf16.msra.mxu0 0
        %5327 = vmatprep.subr.bf16.mxu0 0
        %5328 = vmatpush1.bf16.msra.mxu0 0
        %5329 = vmatprep.subr.bf16.mxu0 0
        %5330 = vmatpush1.bf16.msra.mxu0 0
        %5331 = vmatprep.mubr.bf16.mxu0 0
        %5332 = vmatmul.mubr.bf16.gmra.mrb[0].mxu0 %v5297
        %v5333 = vpop.f32.mrb[0].mxu0
        %v5334 = vadd.f32 0.0, %v5333
        %v5335 = vpop.f32.mrb[0].mxu0
        %v5336 = vpop.f32.mrb[0].mxu0
        %v5337 = vpop.f32.mrb[0].mxu0
        %5338 = vdwg.mxu0
        %5339 = vrot.lane.b32.xlu0 %v4881, 112
        %v5340 = vpop.permute.xlu0 %5339
        %5341 = vrot.lane.b32.xlu0 %v4981, 112
        %v5342 = vpop.permute.xlu0 %5341
        %5343 = vrot.lane.b32.xlu0 %v4982, 112
        %v5344 = vpop.permute.xlu0 %5343
        %5345 = vrot.lane.b32.xlu0 %v4983, 112
        %v5346 = vpop.permute.xlu0 %5345
        %5347 = vrot.lane.b32.xlu0 %v4984, 112
        %v5348 = vpop.permute.xlu0 %5347
        %v5350 = vsel %vm2186, %v5340, 0
        %v5353 = vsel %vm2186, %v5342, 0
        %v5356 = vsel %vm2186, %v5344, 0
        %v5359 = vsel %vm2186, %v5346, 0
        %v5362 = vsel %vm2186, %v5348, 0
        %5364 = vmatprep.subr.bf16.mxu0 0
        %5365 = vmatpush1.bf16.xpose.msra.mxu0 %v5353
        %5366 = vmatprep.subr.bf16.mxu0 0
        %5367 = vmatpush1.bf16.xpose.msra.mxu0 %v5356
        %5368 = vmatprep.subr.bf16.mxu0 0
        %5369 = vmatpush1.bf16.xpose.msra.mxu0 %v5359
        %5370 = vmatprep.subr.bf16.mxu0 0
        %5371 = vmatpush1.bf16.xpose.msra.mxu0 %v5362
        %5372 = vmatprep.subr.bf16.mxu0 0
        %5373 = vmatpush1.bf16.xpose.msra.mxu0 0
        %5374 = vmatprep.subr.bf16.mxu0 0
        %5375 = vmatpush1.bf16.xpose.msra.mxu0 0
        %5376 = vmatprep.subr.bf16.mxu0 0
        %5377 = vmatpush1.bf16.xpose.msra.mxu0 0
        %5378 = vmatprep.subr.bf16.mxu0 0
        %5379 = vmatpush1.bf16.xpose.msra.mxu0 0
        %5380 = vmatprep.subr.bf16.mxu0 0
        %5381 = vmatpush1.bf16.xpose.msra.mxu0 0
        %5382 = vmatprep.subr.bf16.mxu0 0
        %5383 = vmatpush1.bf16.xpose.msra.mxu0 0
        %5384 = vmatprep.subr.bf16.mxu0 0
        %5385 = vmatpush1.bf16.xpose.msra.mxu0 0
        %5386 = vmatprep.subr.bf16.mxu0 0
        %5387 = vmatpush1.bf16.xpose.msra.mxu0 0
        %5388 = vmatprep.subr.bf16.mxu0 0
        %5389 = vmatpush1.bf16.xpose.msra.mxu0 0
        %5390 = vmatprep.subr.bf16.mxu0 0
        %5391 = vmatpush1.bf16.xpose.msra.mxu0 0
        %5392 = vmatprep.subr.bf16.mxu0 0
        %5393 = vmatpush1.bf16.xpose.msra.mxu0 0
        %5394 = vmatprep.subr.bf16.mxu0 0
        %5395 = vmatpush1.bf16.xpose.msra.mxu0 0
        %5396 = vmatprep.mubr.bf16.mxu0 0
        %5397 = vmatmul.mubr.bf16.gmra.mrb[0].mxu0 %v5350
        %v5398 = vpop.f32.mrb[0].mxu0
        %v5399 = vadd.f32 0.0, %v5398
        %v5400 = vpop.f32.mrb[0].mxu0
        %v5401 = vpop.f32.mrb[0].mxu0
        %v5402 = vpop.f32.mrb[0].mxu0
        %5403 = vdwg.mxu0
        %v5404 = vsel %vm2276, %v5399, -inf
        %5405 = vmax.xlane.f32.xlu0 %v5404
        %v5406 = vpop.xlane.xlu0 %5405
        %v5407 = vsub.f32 %v5399, %v5406
        %v5408 = vmul.f32 %v5407, 1.442695
        %v5409 = vpow.pop %v5408
        %v5410 = vsel %vm2276, %v5409, 0.0
        %5411 = vadd.xlane.f32.xlu0 %v5410
        %v5412 = vpop.xlane.xlu0 %5411
        %v5413 = vrcp.pop %v5412
        %v5414 = vmul.f32 %v5409, %v5413
        %v5415 = vpack.c.bf16 %v5414, %v5414
        %5416 = vrot.lane.b32.xlu0 %v5084, 112
        %v5417 = vpop.permute.xlu0 %5416
        %5418 = vrot.lane.b32.xlu0 %v5085, 112
        %v5419 = vpop.permute.xlu0 %5418
        %5420 = vrot.lane.b32.xlu0 %v5086, 112
        %v5421 = vpop.permute.xlu0 %5420
        %5422 = vrot.lane.b32.xlu0 %v5087, 112
        %v5423 = vpop.permute.xlu0 %5422
        %v5429 = vsel %vm2276, %v5415, 0
        %5431 = vmatprep.subr.bf16.mxu0 0
        %5432 = vmatpush1.bf16.msra.mxu0 %v5417
        %5433 = vmatprep.subr.bf16.mxu0 0
        %5434 = vmatpush1.bf16.msra.mxu0 %v5419
        %5435 = vmatprep.subr.bf16.mxu0 0
        %5436 = vmatpush1.bf16.msra.mxu0 %v5421
        %5437 = vmatprep.subr.bf16.mxu0 0
        %5438 = vmatpush1.bf16.msra.mxu0 %v5423
        %5439 = vmatprep.subr.bf16.mxu0 0
        %5440 = vmatpush1.bf16.msra.mxu0 0
        %5441 = vmatprep.subr.bf16.mxu0 0
        %5442 = vmatpush1.bf16.msra.mxu0 0
        %5443 = vmatprep.subr.bf16.mxu0 0
        %5444 = vmatpush1.bf16.msra.mxu0 0
        %5445 = vmatprep.subr.bf16.mxu0 0
        %5446 = vmatpush1.bf16.msra.mxu0 0
        %5447 = vmatprep.subr.bf16.mxu0 0
        %5448 = vmatpush1.bf16.msra.mxu0 0
        %5449 = vmatprep.subr.bf16.mxu0 0
        %5450 = vmatpush1.bf16.msra.mxu0 0
        %5451 = vmatprep.subr.bf16.mxu0 0
        %5452 = vmatpush1.bf16.msra.mxu0 0
        %5453 = vmatprep.subr.bf16.mxu0 0
        %5454 = vmatpush1.bf16.msra.mxu0 0
        %5455 = vmatprep.subr.bf16.mxu0 0
        %5456 = vmatpush1.bf16.msra.mxu0 0
        %5457 = vmatprep.subr.bf16.mxu0 0
        %5458 = vmatpush1.bf16.msra.mxu0 0
        %5459 = vmatprep.subr.bf16.mxu0 0
        %5460 = vmatpush1.bf16.msra.mxu0 0
        %5461 = vmatprep.subr.bf16.mxu0 0
        %5462 = vmatpush1.bf16.msra.mxu0 0
        %5463 = vmatprep.mubr.bf16.mxu0 0
        %5464 = vmatmul.mubr.bf16.gmra.mrb[0].mxu0 %v5429
        %v5465 = vpop.f32.mrb[0].mxu0
        %v5466 = vadd.f32 0.0, %v5465
        %v5467 = vpop.f32.mrb[0].mxu0
        %v5468 = vpop.f32.mrb[0].mxu0
        %v5469 = vpop.f32.mrb[0].mxu0
        %5470 = vdwg.mxu0
        %5471 = vrot.lane.b32.xlu0 %v4881, 104
        %v5472 = vpop.permute.xlu0 %5471
        %5473 = vrot.lane.b32.xlu0 %v4981, 104
        %v5474 = vpop.permute.xlu0 %5473
        %5475 = vrot.lane.b32.xlu0 %v4982, 104
        %v5476 = vpop.permute.xlu0 %5475
        %5477 = vrot.lane.b32.xlu0 %v4983, 104
        %v5478 = vpop.permute.xlu0 %5477
        %5479 = vrot.lane.b32.xlu0 %v4984, 104
        %v5480 = vpop.permute.xlu0 %5479
        %v5482 = vsel %vm2186, %v5472, 0
        %v5485 = vsel %vm2186, %v5474, 0
        %v5488 = vsel %vm2186, %v5476, 0
        %v5491 = vsel %vm2186, %v5478, 0
        %v5494 = vsel %vm2186, %v5480, 0
        %5496 = vmatprep.subr.bf16.mxu0 0
        %5497 = vmatpush1.bf16.xpose.msra.mxu0 %v5485
        %5498 = vmatprep.subr.bf16.mxu0 0
        %5499 = vmatpush1.bf16.xpose.msra.mxu0 %v5488
        %5500 = vmatprep.subr.bf16.mxu0 0
        %5501 = vmatpush1.bf16.xpose.msra.mxu0 %v5491
        %5502 = vmatprep.subr.bf16.mxu0 0
        %5503 = vmatpush1.bf16.xpose.msra.mxu0 %v5494
        %5504 = vmatprep.subr.bf16.mxu0 0
        %5505 = vmatpush1.bf16.xpose.msra.mxu0 0
        %5506 = vmatprep.subr.bf16.mxu0 0
        %5507 = vmatpush1.bf16.xpose.msra.mxu0 0
        %5508 = vmatprep.subr.bf16.mxu0 0
        %5509 = vmatpush1.bf16.xpose.msra.mxu0 0
        %5510 = vmatprep.subr.bf16.mxu0 0
        %5511 = vmatpush1.bf16.xpose.msra.mxu0 0
        %5512 = vmatprep.subr.bf16.mxu0 0
        %5513 = vmatpush1.bf16.xpose.msra.mxu0 0
        %5514 = vmatprep.subr.bf16.mxu0 0
        %5515 = vmatpush1.bf16.xpose.msra.mxu0 0
        %5516 = vmatprep.subr.bf16.mxu0 0
        %5517 = vmatpush1.bf16.xpose.msra.mxu0 0
        %5518 = vmatprep.subr.bf16.mxu0 0
        %5519 = vmatpush1.bf16.xpose.msra.mxu0 0
        %5520 = vmatprep.subr.bf16.mxu0 0
        %5521 = vmatpush1.bf16.xpose.msra.mxu0 0
        %5522 = vmatprep.subr.bf16.mxu0 0
        %5523 = vmatpush1.bf16.xpose.msra.mxu0 0
        %5524 = vmatprep.subr.bf16.mxu0 0
        %5525 = vmatpush1.bf16.xpose.msra.mxu0 0
        %5526 = vmatprep.subr.bf16.mxu0 0
        %5527 = vmatpush1.bf16.xpose.msra.mxu0 0
        %5528 = vmatprep.mubr.bf16.mxu0 0
        %5529 = vmatmul.mubr.bf16.gmra.mrb[0].mxu0 %v5482
        %v5530 = vpop.f32.mrb[0].mxu0
        %v5531 = vadd.f32 0.0, %v5530
        %v5532 = vpop.f32.mrb[0].mxu0
        %v5533 = vpop.f32.mrb[0].mxu0
        %v5534 = vpop.f32.mrb[0].mxu0
        %5535 = vdwg.mxu0
        %v5536 = vsel %vm2276, %v5531, -inf
        %5537 = vmax.xlane.f32.xlu0 %v5536
        %v5538 = vpop.xlane.xlu0 %5537
        %v5539 = vsub.f32 %v5531, %v5538
        %v5540 = vmul.f32 %v5539, 1.442695
        %v5541 = vpow.pop %v5540
        %v5542 = vsel %vm2276, %v5541, 0.0
        %5543 = vadd.xlane.f32.xlu0 %v5542
        %v5544 = vpop.xlane.xlu0 %5543
        %v5545 = vrcp.pop %v5544
        %v5546 = vmul.f32 %v5541, %v5545
        %v5547 = vpack.c.bf16 %v5546, %v5546
        %5548 = vrot.lane.b32.xlu0 %v5084, 104
        %v5549 = vpop.permute.xlu0 %5548
        %5550 = vrot.lane.b32.xlu0 %v5085, 104
        %v5551 = vpop.permute.xlu0 %5550
        %5552 = vrot.lane.b32.xlu0 %v5086, 104
        %v5553 = vpop.permute.xlu0 %5552
        %5554 = vrot.lane.b32.xlu0 %v5087, 104
        %v5555 = vpop.permute.xlu0 %5554
        %v5561 = vsel %vm2276, %v5547, 0
        %5563 = vmatprep.subr.bf16.mxu0 0
        %5564 = vmatpush1.bf16.msra.mxu0 %v5549
        %5565 = vmatprep.subr.bf16.mxu0 0
        %5566 = vmatpush1.bf16.msra.mxu0 %v5551
        %5567 = vmatprep.subr.bf16.mxu0 0
        %5568 = vmatpush1.bf16.msra.mxu0 %v5553
        %5569 = vmatprep.subr.bf16.mxu0 0
        %5570 = vmatpush1.bf16.msra.mxu0 %v5555
        %5571 = vmatprep.subr.bf16.mxu0 0
        %5572 = vmatpush1.bf16.msra.mxu0 0
        %5573 = vmatprep.subr.bf16.mxu0 0
        %5574 = vmatpush1.bf16.msra.mxu0 0
        %5575 = vmatprep.subr.bf16.mxu0 0
        %5576 = vmatpush1.bf16.msra.mxu0 0
        %5577 = vmatprep.subr.bf16.mxu0 0
        %5578 = vmatpush1.bf16.msra.mxu0 0
        %5579 = vmatprep.subr.bf16.mxu0 0
        %5580 = vmatpush1.bf16.msra.mxu0 0
        %5581 = vmatprep.subr.bf16.mxu0 0
        %5582 = vmatpush1.bf16.msra.mxu0 0
        %5583 = vmatprep.subr.bf16.mxu0 0
        %5584 = vmatpush1.bf16.msra.mxu0 0
        %5585 = vmatprep.subr.bf16.mxu0 0
        %5586 = vmatpush1.bf16.msra.mxu0 0
        %5587 = vmatprep.subr.bf16.mxu0 0
        %5588 = vmatpush1.bf16.msra.mxu0 0
        %5589 = vmatprep.subr.bf16.mxu0 0
        %5590 = vmatpush1.bf16.msra.mxu0 0
        %5591 = vmatprep.subr.bf16.mxu0 0
        %5592 = vmatpush1.bf16.msra.mxu0 0
        %5593 = vmatprep.subr.bf16.mxu0 0
        %5594 = vmatpush1.bf16.msra.mxu0 0
        %5595 = vmatprep.mubr.bf16.mxu0 0
        %5596 = vmatmul.mubr.bf16.gmra.mrb[0].mxu0 %v5561
        %v5597 = vpop.f32.mrb[0].mxu0
        %v5598 = vadd.f32 0.0, %v5597
        %v5599 = vpop.f32.mrb[0].mxu0
        %v5600 = vpop.f32.mrb[0].mxu0
        %v5601 = vpop.f32.mrb[0].mxu0
        %5602 = vdwg.mxu0
        %5604 = vrot.lane.b32.xlu0 %v5334, 8
        %v5605 = vpop.permute.xlu0 %5604
        %5608 = vrot.lane.b32.xlu0 %v5466, 16
        %v5609 = vpop.permute.xlu0 %5608
        %5612 = vrot.lane.b32.xlu0 %v5598, 24
        %v5613 = vpop.permute.xlu0 %5612
        %v5615 = vsel %vm2186, %v5193, %v5605
        %v5616 = vsel %vm1778, %v5615, %v5609
        %v5617 = vsel %vm3428, %v5616, %v5613
        %v5618 = vpack.c.bf16 %v5617, %v5617
        %v5620 = vlaneseq
        %v5621 = vshrl.u32 %v5620, 7
        %v5622 = vsub.s32 0, %v5621
        %v5623 = vrot.slane %v4817, %v5622
        %v5629 = vunpack.c.l.b16 %v4813
        %v5630 = vunpack.c.l.b16 %v4814
        %v5631 = vunpack.c.l.b16 %v4815
        %v5632 = vunpack.c.l.b16 %v4816
        %v5633 = vpack.c.b16 %v5630, %v5629
        %v5634 = vpack.c.b16 %v5632, %v5631
        %v5638 = vsel %vm1906, %v5618, 0
        %5640 = vmatprep.subr.bf16.mxu0 0
        %5641 = vmatpush1.bf16.msra.mxu0 %v5633
        %5642 = vmatprep.subr.bf16.mxu0 0
        %5643 = vmatpush1.bf16.msra.mxu0 %v5634
        %5644 = vmatprep.subr.bf16.mxu0 0
        %5645 = vmatpush1.bf16.msra.mxu0 0
        %5646 = vmatprep.subr.bf16.mxu0 0
        %5647 = vmatpush1.bf16.msra.mxu0 0
        %5648 = vmatprep.subr.bf16.mxu0 0
        %5649 = vmatpush1.bf16.msra.mxu0 0
        %5650 = vmatprep.subr.bf16.mxu0 0
        %5651 = vmatpush1.bf16.msra.mxu0 0
        %5652 = vmatprep.subr.bf16.mxu0 0
        %5653 = vmatpush1.bf16.msra.mxu0 0
        %5654 = vmatprep.subr.bf16.mxu0 0
        %5655 = vmatpush1.bf16.msra.mxu0 0
        %5656 = vmatprep.subr.bf16.mxu0 0
        %5657 = vmatpush1.bf16.msra.mxu0 0
        %5658 = vmatprep.subr.bf16.mxu0 0
        %5659 = vmatpush1.bf16.msra.mxu0 0
        %5660 = vmatprep.subr.bf16.mxu0 0
        %5661 = vmatpush1.bf16.msra.mxu0 0
        %5662 = vmatprep.subr.bf16.mxu0 0
        %5663 = vmatpush1.bf16.msra.mxu0 0
        %5664 = vmatprep.subr.bf16.mxu0 0
        %5665 = vmatpush1.bf16.msra.mxu0 0
        %5666 = vmatprep.subr.bf16.mxu0 0
        %5667 = vmatpush1.bf16.msra.mxu0 0
        %5668 = vmatprep.subr.bf16.mxu0 0
        %5669 = vmatpush1.bf16.msra.mxu0 0
        %5670 = vmatprep.subr.bf16.mxu0 0
        %5671 = vmatpush1.bf16.msra.mxu0 0
        %5672 = vmatprep.mubr.bf16.mxu0 0
        %5673 = vmatmul.mubr.bf16.gmra.mrb[0].mxu0 %v5638
        %v5674 = vpop.f32.mrb[0].mxu0
        %v5675 = vadd.f32 %v5623, %v5674
        %v5676 = vpop.f32.mrb[0].mxu0
        %v5677 = vpop.f32.mrb[0].mxu0
        %v5678 = vpop.f32.mrb[0].mxu0
        %5679 = vdwg.mxu0
        %v5680 = vadd.f32 %v4796, %v5675
        %v5681 = vld [vmem:[%s75] sm:$0x3]
        %v5682 = vsel %vm1906, %v5680, 0.0
        %5683 = vadd.xlane.f32.xlu0 %v5682
        %v5684 = vpop.xlane.xlu0 %5683
        %v5685 = vmul.f32 %v5684, %v3569
        %v5686 = vsub.f32 %v5680, %v5685
        %v5687 = vmul.f32 %v5686, %v5686
        %v5688 = vsel %vm1906, %v5687, 0.0
        %5689 = vadd.xlane.f32.xlu0 %v5688
        %v5690 = vpop.xlane.xlu0 %5689
        %v5691 = vmul.f32 %v5690, %v3569
        %v5692 = vadd.f32 %v5691, 1e-05
        %v5693 = vrsqrt.pop %v5692
        %v5694 = vmul.f32 %v5686, %v5693
        %v5695 = vlaneseq
        %v5696 = vshrl.u32 %v5695, 7
        %v5697 = vsub.s32 0, %v5696
        %v5698 = vrot.slane %v5681, %v5697
        %v5699 = vmul.f32 %v5694, %v5698
        %v5700 = vlaneseq
        %v5701 = vshrl.u32 %v5700, 7
        %v5702 = vsub.s32 1, %v5701
        %v5703 = vrot.slane %v5681, %v5702
        %v5704 = vadd.f32 %v5699, %v5703
        %v5705 = vld [vmem:[%s77] sm:$0xf]
        %v5706 = vld [vmem:[%s77 + $0x4] sm:$0xf]
        %v5707 = vld [vmem:[%s77 + $0x8] sm:$0xf]
        %v5708 = vld [vmem:[%s77 + $0xc] sm:$0xf]
        %v5709 = vpack.c.bf16 %v5704, %v5704
        %v5710 = vld [vmem:[%s79] sm:$0x1]
        %v5712 = vlaneseq
        %v5713 = vshrl.u32 %v5712, 7
        %v5714 = vsub.s32 0, %v5713
        %v5715 = vrot.slane %v5710, %v5714
        %v5721 = vunpack.c.l.b16 %v5705
        %v5722 = vunpack.c.l.b16 %v5706
        %v5723 = vunpack.c.l.b16 %v5707
        %v5724 = vunpack.c.l.b16 %v5708
        %v5725 = vpack.c.b16 %v5722, %v5721
        %v5726 = vpack.c.b16 %v5724, %v5723
        %v5730 = vsel %vm1906, %v5709, 0
        %5732 = vmatprep.subr.bf16.mxu0 0
        %5733 = vmatpush1.bf16.msra.mxu0 %v5725
        %5734 = vmatprep.subr.bf16.mxu0 0
        %5735 = vmatpush1.bf16.msra.mxu0 %v5726
        %5736 = vmatprep.subr.bf16.mxu0 0
        %5737 = vmatpush1.bf16.msra.mxu0 0
        %5738 = vmatprep.subr.bf16.mxu0 0
        %5739 = vmatpush1.bf16.msra.mxu0 0
        %5740 = vmatprep.subr.bf16.mxu0 0
        %5741 = vmatpush1.bf16.msra.mxu0 0
        %5742 = vmatprep.subr.bf16.mxu0 0
        %5743 = vmatpush1.bf16.msra.mxu0 0
        %5744 = vmatprep.subr.bf16.mxu0 0
        %5745 = vmatpush1.bf16.msra.mxu0 0
        %5746 = vmatprep.subr.bf16.mxu0 0
        %5747 = vmatpush1.bf16.msra.mxu0 0
        %5748 = vmatprep.subr.bf16.mxu0 0
        %5749 = vmatpush1.bf16.msra.mxu0 0
        %5750 = vmatprep.subr.bf16.mxu0 0
        %5751 = vmatpush1.bf16.msra.mxu0 0
        %5752 = vmatprep.subr.bf16.mxu0 0
        %5753 = vmatpush1.bf16.msra.mxu0 0
        %5754 = vmatprep.subr.bf16.mxu0 0
        %5755 = vmatpush1.bf16.msra.mxu0 0
        %5756 = vmatprep.subr.bf16.mxu0 0
        %5757 = vmatpush1.bf16.msra.mxu0 0
        %5758 = vmatprep.subr.bf16.mxu0 0
        %5759 = vmatpush1.bf16.msra.mxu0 0
        %5760 = vmatprep.subr.bf16.mxu0 0
        %5761 = vmatpush1.bf16.msra.mxu0 0
        %5762 = vmatprep.subr.bf16.mxu0 0
        %5763 = vmatpush1.bf16.msra.mxu0 0
        %5764 = vmatprep.mubr.bf16.mxu0 0
        %5765 = vmatmul.mubr.bf16.gmra.mrb[0].mxu0 %v5730
        %v5766 = vpop.f32.mrb[0].mxu0
        %v5767 = vadd.f32 %v5715, %v5766
        %v5768 = vpop.f32.mrb[0].mxu0
        %v5769 = vpop.f32.mrb[0].mxu0
        %v5770 = vpop.f32.mrb[0].mxu0
        %5771 = vdwg.mxu0
        %v5772 = vmax.f32 %v5767, 0.0
        %v5773 = vld [vmem:[%s81] sm:$0xf]
        %v5774 = vld [vmem:[%s81 + $0x4] sm:$0xf]
        %v5775 = vld [vmem:[%s81 + $0x8] sm:$0xf]
        %v5776 = vld [vmem:[%s81 + $0xc] sm:$0xf]
        %v5777 = vld [vmem:[%s81 + $0x10] sm:$0xf]
        %v5778 = vld [vmem:[%s81 + $0x14] sm:$0xf]
        %v5779 = vld [vmem:[%s81 + $0x18] sm:$0xf]
        %v5780 = vld [vmem:[%s81 + $0x1c] sm:$0xf]
        %v5781 = vpack.c.bf16 %v5772, %v5772
        %v5782 = vld [vmem:[%s83] sm:$0x1]
        %v5784 = vlaneseq
        %v5785 = vshrl.u32 %v5784, 7
        %v5786 = vsub.s32 0, %v5785
        %v5787 = vrot.slane %v5782, %v5786
        %v5797 = vunpack.c.l.b16 %v5773
        %v5798 = vunpack.c.l.b16 %v5774
        %v5799 = vunpack.c.l.b16 %v5775
        %v5800 = vunpack.c.l.b16 %v5776
        %v5801 = vunpack.c.l.b16 %v5777
        %v5802 = vunpack.c.l.b16 %v5778
        %v5803 = vunpack.c.l.b16 %v5779
        %v5804 = vunpack.c.l.b16 %v5780
        %v5805 = vpack.c.b16 %v5798, %v5797
        %v5806 = vpack.c.b16 %v5800, %v5799
        %v5807 = vpack.c.b16 %v5802, %v5801
        %v5808 = vpack.c.b16 %v5804, %v5803
        %v5814 = vsel %vm2276, %v5781, 0
        %5816 = vmatprep.subr.bf16.mxu0 0
        %5817 = vmatpush1.bf16.msra.mxu0 %v5805
        %5818 = vmatprep.subr.bf16.mxu0 0
        %5819 = vmatpush1.bf16.msra.mxu0 %v5806
        %5820 = vmatprep.subr.bf16.mxu0 0
        %5821 = vmatpush1.bf16.msra.mxu0 %v5807
        %5822 = vmatprep.subr.bf16.mxu0 0
        %5823 = vmatpush1.bf16.msra.mxu0 %v5808
        %5824 = vmatprep.subr.bf16.mxu0 0
        %5825 = vmatpush1.bf16.msra.mxu0 0
        %5826 = vmatprep.subr.bf16.mxu0 0
        %5827 = vmatpush1.bf16.msra.mxu0 0
        %5828 = vmatprep.subr.bf16.mxu0 0
        %5829 = vmatpush1.bf16.msra.mxu0 0
        %5830 = vmatprep.subr.bf16.mxu0 0
        %5831 = vmatpush1.bf16.msra.mxu0 0
        %5832 = vmatprep.subr.bf16.mxu0 0
        %5833 = vmatpush1.bf16.msra.mxu0 0
        %5834 = vmatprep.subr.bf16.mxu0 0
        %5835 = vmatpush1.bf16.msra.mxu0 0
        %5836 = vmatprep.subr.bf16.mxu0 0
        %5837 = vmatpush1.bf16.msra.mxu0 0
        %5838 = vmatprep.subr.bf16.mxu0 0
        %5839 = vmatpush1.bf16.msra.mxu0 0
        %5840 = vmatprep.subr.bf16.mxu0 0
        %5841 = vmatpush1.bf16.msra.mxu0 0
        %5842 = vmatprep.subr.bf16.mxu0 0
        %5843 = vmatpush1.bf16.msra.mxu0 0
        %5844 = vmatprep.subr.bf16.mxu0 0
        %5845 = vmatpush1.bf16.msra.mxu0 0
        %5846 = vmatprep.subr.bf16.mxu0 0
        %5847 = vmatpush1.bf16.msra.mxu0 0
        %5848 = vmatprep.mubr.bf16.mxu0 0
        %5849 = vmatmul.mubr.bf16.gmra.mrb[0].mxu0 %v5814
        %v5850 = vpop.f32.mrb[0].mxu0
        %v5851 = vadd.f32 %v5787, %v5850
        %v5852 = vpop.f32.mrb[0].mxu0
        %v5853 = vpop.f32.mrb[0].mxu0
        %v5854 = vpop.f32.mrb[0].mxu0
        %5855 = vdwg.mxu0
        %v5856 = vadd.f32 %v5704, %v5851
        %v5857 = vld [vmem:[%s85] sm:$0x3]
        %v5858 = vsel %vm1906, %v5856, 0.0
        %5859 = vadd.xlane.f32.xlu0 %v5858
        %v5860 = vpop.xlane.xlu0 %5859
        %v5861 = vmul.f32 %v5860, %v3569
        %v5862 = vsub.f32 %v5856, %v5861
        %v5863 = vmul.f32 %v5862, %v5862
        %v5864 = vsel %vm1906, %v5863, 0.0
        %5865 = vadd.xlane.f32.xlu0 %v5864
        %v5866 = vpop.xlane.xlu0 %5865
        %v5867 = vmul.f32 %v5866, %v3569
        %v5868 = vadd.f32 %v5867, 1e-05
        %v5869 = vrsqrt.pop %v5868
        %v5870 = vmul.f32 %v5862, %v5869
        %v5871 = vlaneseq
        %v5872 = vshrl.u32 %v5871, 7
        %v5873 = vsub.s32 0, %v5872
        %v5874 = vrot.slane %v5857, %v5873
        %v5875 = vmul.f32 %v5870, %v5874
        %v5876 = vlaneseq
        %v5877 = vshrl.u32 %v5876, 7
        %v5878 = vsub.s32 1, %v5877
        %v5879 = vrot.slane %v5857, %v5878
        %v5880 = vadd.f32 %v5875, %v5879
        %v5881 = vld [vmem:[%s87] sm:$0x3]
        %v5882 = vsel %vm1906, %v5880, 0.0
        %5883 = vadd.xlane.f32.xlu0 %v5882
        %v5884 = vpop.xlane.xlu0 %5883
        %v5885 = vmul.f32 %v5884, %v3569
        %v5886 = vsub.f32 %v5880, %v5885
        %v5887 = vmul.f32 %v5886, %v5886
        %v5888 = vsel %vm1906, %v5887, 0.0
        %5889 = vadd.xlane.f32.xlu0 %v5888
        %v5890 = vpop.xlane.xlu0 %5889
        %v5891 = vmul.f32 %v5890, %v3569
        %v5892 = vadd.f32 %v5891, 1e-05
        %v5893 = vrsqrt.pop %v5892
        %v5894 = vmul.f32 %v5886, %v5893
        %v5895 = vlaneseq
        %v5896 = vshrl.u32 %v5895, 7
        %v5897 = vsub.s32 0, %v5896
        %v5898 = vrot.slane %v5881, %v5897
        %v5899 = vmul.f32 %v5894, %v5898
        %v5900 = vlaneseq
        %v5901 = vshrl.u32 %v5900, 7
        %v5902 = vsub.s32 1, %v5901
        %v5903 = vrot.slane %v5881, %v5902
        %v5904 = vadd.f32 %v5899, %v5903
        %v5905 = vadd.f32 %v5880, %v1750
        %s5906 = scalar_lea.vmem %s41, 16
        %v5907 = vld [vmem:[%s5906] sm:$0xf]
        %v5908 = vld [vmem:[%s5906 + $0x4] sm:$0xf]
        %v5909 = vld [vmem:[%s5906 + $0x8] sm:$0xf]
        %v5910 = vld [vmem:[%s5906 + $0xc] sm:$0xf]
        %s5911 = scalar_lea.vmem %s43, 1
        %v5912 = vld [vmem:[%s5911] sm:$0x1]
        %s5913 = scalar_lea.vmem %s45, 16
        %v5914 = vld [vmem:[%s5913] sm:$0xf]
        %v5915 = vld [vmem:[%s5913 + $0x4] sm:$0xf]
        %v5916 = vld [vmem:[%s5913 + $0x8] sm:$0xf]
        %v5917 = vld [vmem:[%s5913 + $0xc] sm:$0xf]
        %s5918 = scalar_lea.vmem %s47, 1
        %v5919 = vld [vmem:[%s5918] sm:$0x1]
        %s5920 = scalar_lea.vmem %s49, 16
        %v5921 = vld [vmem:[%s5920] sm:$0xf]
        %v5922 = vld [vmem:[%s5920 + $0x4] sm:$0xf]
        %v5923 = vld [vmem:[%s5920 + $0x8] sm:$0xf]
        %v5924 = vld [vmem:[%s5920 + $0xc] sm:$0xf]
        %s5925 = scalar_lea.vmem %s51, 1
        %v5926 = vld [vmem:[%s5925] sm:$0x1]
        %s5927 = scalar_lea.vmem %s53, 16
        %v5928 = vld [vmem:[%s5927] sm:$0xf]
        %v5929 = vld [vmem:[%s5927 + $0x4] sm:$0xf]
        %v5930 = vld [vmem:[%s5927 + $0x8] sm:$0xf]
        %v5931 = vld [vmem:[%s5927 + $0xc] sm:$0xf]
        %s5932 = scalar_lea.vmem %s55, 1
        %v5933 = vld [vmem:[%s5932] sm:$0x1]
        %v5934 = vpack.c.bf16 %v5905, %v5905
        %v5936 = vlaneseq
        %v5937 = vshrl.u32 %v5936, 7
        %v5938 = vsub.s32 0, %v5937
        %v5939 = vrot.slane %v5912, %v5938
        %v5945 = vunpack.c.l.b16 %v5907
        %v5946 = vunpack.c.l.b16 %v5908
        %v5947 = vunpack.c.l.b16 %v5909
        %v5948 = vunpack.c.l.b16 %v5910
        %v5949 = vpack.c.b16 %v5946, %v5945
        %v5950 = vpack.c.b16 %v5948, %v5947
        %v5954 = vsel %vm1906, %v5934, 0
        %5956 = vmatprep.subr.bf16.mxu0 0
        %5957 = vmatpush1.bf16.msra.mxu0 %v5949
        %5958 = vmatprep.subr.bf16.mxu0 0
        %5959 = vmatpush1.bf16.msra.mxu0 %v5950
        %5960 = vmatprep.subr.bf16.mxu0 0
        %5961 = vmatpush1.bf16.msra.mxu0 0
        %5962 = vmatprep.subr.bf16.mxu0 0
        %5963 = vmatpush1.bf16.msra.mxu0 0
        %5964 = vmatprep.subr.bf16.mxu0 0
        %5965 = vmatpush1.bf16.msra.mxu0 0
        %5966 = vmatprep.subr.bf16.mxu0 0
        %5967 = vmatpush1.bf16.msra.mxu0 0
        %5968 = vmatprep.subr.bf16.mxu0 0
        %5969 = vmatpush1.bf16.msra.mxu0 0
        %5970 = vmatprep.subr.bf16.mxu0 0
        %5971 = vmatpush1.bf16.msra.mxu0 0
        %5972 = vmatprep.subr.bf16.mxu0 0
        %5973 = vmatpush1.bf16.msra.mxu0 0
        %5974 = vmatprep.subr.bf16.mxu0 0
        %5975 = vmatpush1.bf16.msra.mxu0 0
        %5976 = vmatprep.subr.bf16.mxu0 0
        %5977 = vmatpush1.bf16.msra.mxu0 0
        %5978 = vmatprep.subr.bf16.mxu0 0
        %5979 = vmatpush1.bf16.msra.mxu0 0
        %5980 = vmatprep.subr.bf16.mxu0 0
        %5981 = vmatpush1.bf16.msra.mxu0 0
        %5982 = vmatprep.subr.bf16.mxu0 0
        %5983 = vmatpush1.bf16.msra.mxu0 0
        %5984 = vmatprep.subr.bf16.mxu0 0
        %5985 = vmatpush1.bf16.msra.mxu0 0
        %5986 = vmatprep.subr.bf16.mxu0 0
        %5987 = vmatpush1.bf16.msra.mxu0 0
        %5988 = vmatprep.mubr.bf16.mxu0 0
        %5989 = vmatmul.mubr.bf16.gmra.mrb[0].mxu0 %v5954
        %v5990 = vpop.f32.mrb[0].mxu0
        %v5991 = vadd.f32 %v5939, %v5990
        %v5992 = vpop.f32.mrb[0].mxu0
        %v5993 = vpop.f32.mrb[0].mxu0
        %v5994 = vpop.f32.mrb[0].mxu0
        %5995 = vdwg.mxu0
        %v5996 = vmul.f32 %v5991, 0.35355338
        %v5997 = vpack.c.bf16 %v5996, %v5996
        %v5999 = vlaneseq
        %v6000 = vshrl.u32 %v5999, 7
        %v6001 = vsub.s32 0, %v6000
        %v6002 = vrot.slane %v5919, %v6001
        %v6008 = vunpack.c.l.b16 %v5914
        %v6009 = vunpack.c.l.b16 %v5915
        %v6010 = vunpack.c.l.b16 %v5916
        %v6011 = vunpack.c.l.b16 %v5917
        %v6012 = vpack.c.b16 %v6009, %v6008
        %v6013 = vpack.c.b16 %v6011, %v6010
        %6016 = vmatprep.subr.bf16.mxu0 0
        %6017 = vmatpush1.bf16.msra.mxu0 %v6012
        %6018 = vmatprep.subr.bf16.mxu0 0
        %6019 = vmatpush1.bf16.msra.mxu0 %v6013
        %6020 = vmatprep.subr.bf16.mxu0 0
        %6021 = vmatpush1.bf16.msra.mxu0 0
        %6022 = vmatprep.subr.bf16.mxu0 0
        %6023 = vmatpush1.bf16.msra.mxu0 0
        %6024 = vmatprep.subr.bf16.mxu0 0
        %6025 = vmatpush1.bf16.msra.mxu0 0
        %6026 = vmatprep.subr.bf16.mxu0 0
        %6027 = vmatpush1.bf16.msra.mxu0 0
        %6028 = vmatprep.subr.bf16.mxu0 0
        %6029 = vmatpush1.bf16.msra.mxu0 0
        %6030 = vmatprep.subr.bf16.mxu0 0
        %6031 = vmatpush1.bf16.msra.mxu0 0
        %6032 = vmatprep.subr.bf16.mxu0 0
        %6033 = vmatpush1.bf16.msra.mxu0 0
        %6034 = vmatprep.subr.bf16.mxu0 0
        %6035 = vmatpush1.bf16.msra.mxu0 0
        %6036 = vmatprep.subr.bf16.mxu0 0
        %6037 = vmatpush1.bf16.msra.mxu0 0
        %6038 = vmatprep.subr.bf16.mxu0 0
        %6039 = vmatpush1.bf16.msra.mxu0 0
        %6040 = vmatprep.subr.bf16.mxu0 0
        %6041 = vmatpush1.bf16.msra.mxu0 0
        %6042 = vmatprep.subr.bf16.mxu0 0
        %6043 = vmatpush1.bf16.msra.mxu0 0
        %6044 = vmatprep.subr.bf16.mxu0 0
        %6045 = vmatpush1.bf16.msra.mxu0 0
        %6046 = vmatprep.subr.bf16.mxu0 0
        %6047 = vmatpush1.bf16.msra.mxu0 0
        %6048 = vmatprep.mubr.bf16.mxu0 0
        %6049 = vmatmul.mubr.bf16.gmra.mrb[0].mxu0 %v5954
        %v6050 = vpop.f32.mrb[0].mxu0
        %v6051 = vadd.f32 %v6002, %v6050
        %v6052 = vpop.f32.mrb[0].mxu0
        %v6053 = vpop.f32.mrb[0].mxu0
        %v6054 = vpop.f32.mrb[0].mxu0
        %6055 = vdwg.mxu0
        %v6056 = vpack.c.bf16 %v6051, %v6051
        %v6057 = vpack.c.bf16 %v5880, %v5880
        %v6059 = vlaneseq
        %v6060 = vshrl.u32 %v6059, 7
        %v6061 = vsub.s32 0, %v6060
        %v6062 = vrot.slane %v5926, %v6061
        %v6068 = vunpack.c.l.b16 %v5921
        %v6069 = vunpack.c.l.b16 %v5922
        %v6070 = vunpack.c.l.b16 %v5923
        %v6071 = vunpack.c.l.b16 %v5924
        %v6072 = vpack.c.b16 %v6069, %v6068
        %v6073 = vpack.c.b16 %v6071, %v6070
        %v6077 = vsel %vm1906, %v6057, 0
        %6079 = vmatprep.subr.bf16.mxu0 0
        %6080 = vmatpush1.bf16.msra.mxu0 %v6072
        %6081 = vmatprep.subr.bf16.mxu0 0
        %6082 = vmatpush1.bf16.msra.mxu0 %v6073
        %6083 = vmatprep.subr.bf16.mxu0 0
        %6084 = vmatpush1.bf16.msra.mxu0 0
        %6085 = vmatprep.subr.bf16.mxu0 0
        %6086 = vmatpush1.bf16.msra.mxu0 0
        %6087 = vmatprep.subr.bf16.mxu0 0
        %6088 = vmatpush1.bf16.msra.mxu0 0
        %6089 = vmatprep.subr.bf16.mxu0 0
        %6090 = vmatpush1.bf16.msra.mxu0 0
        %6091 = vmatprep.subr.bf16.mxu0 0
        %6092 = vmatpush1.bf16.msra.mxu0 0
        %6093 = vmatprep.subr.bf16.mxu0 0
        %6094 = vmatpush1.bf16.msra.mxu0 0
        %6095 = vmatprep.subr.bf16.mxu0 0
        %6096 = vmatpush1.bf16.msra.mxu0 0
        %6097 = vmatprep.subr.bf16.mxu0 0
        %6098 = vmatpush1.bf16.msra.mxu0 0
        %6099 = vmatprep.subr.bf16.mxu0 0
        %6100 = vmatpush1.bf16.msra.mxu0 0
        %6101 = vmatprep.subr.bf16.mxu0 0
        %6102 = vmatpush1.bf16.msra.mxu0 0
        %6103 = vmatprep.subr.bf16.mxu0 0
        %6104 = vmatpush1.bf16.msra.mxu0 0
        %6105 = vmatprep.subr.bf16.mxu0 0
        %6106 = vmatpush1.bf16.msra.mxu0 0
        %6107 = vmatprep.subr.bf16.mxu0 0
        %6108 = vmatpush1.bf16.msra.mxu0 0
        %6109 = vmatprep.subr.bf16.mxu0 0
        %6110 = vmatpush1.bf16.msra.mxu0 0
        %6111 = vmatprep.mubr.bf16.mxu0 0
        %6112 = vmatmul.mubr.bf16.gmra.mrb[0].mxu0 %v6077
        %v6113 = vpop.f32.mrb[0].mxu0
        %v6114 = vadd.f32 %v6062, %v6113
        %v6115 = vpop.f32.mrb[0].mxu0
        %v6116 = vpop.f32.mrb[0].mxu0
        %v6117 = vpop.f32.mrb[0].mxu0
        %6118 = vdwg.mxu0
        %v6119 = vpack.c.bf16 %v6114, %v6114
        %v6121 = vsel %vm2186, %v5997, 0
        %v6124 = vsel %vm2186, %v6056, 0
        %6126 = vmatprep.subr.bf16.mxu0 0
        %6127 = vmatpush1.bf16.xpose.msra.mxu0 %v6124
        %6128 = vmatprep.subr.bf16.mxu0 0
        %6129 = vmatpush1.bf16.xpose.msra.mxu0 0
        %6130 = vmatprep.subr.bf16.mxu0 0
        %6131 = vmatpush1.bf16.xpose.msra.mxu0 0
        %6132 = vmatprep.subr.bf16.mxu0 0
        %6133 = vmatpush1.bf16.xpose.msra.mxu0 0
        %6134 = vmatprep.subr.bf16.mxu0 0
        %6135 = vmatpush1.bf16.xpose.msra.mxu0 0
        %6136 = vmatprep.subr.bf16.mxu0 0
        %6137 = vmatpush1.bf16.xpose.msra.mxu0 0
        %6138 = vmatprep.subr.bf16.mxu0 0
        %6139 = vmatpush1.bf16.xpose.msra.mxu0 0
        %6140 = vmatprep.subr.bf16.mxu0 0
        %6141 = vmatpush1.bf16.xpose.msra.mxu0 0
        %6142 = vmatprep.subr.bf16.mxu0 0
        %6143 = vmatpush1.bf16.xpose.msra.mxu0 0
        %6144 = vmatprep.subr.bf16.mxu0 0
        %6145 = vmatpush1.bf16.xpose.msra.mxu0 0
        %6146 = vmatprep.subr.bf16.mxu0 0
        %6147 = vmatpush1.bf16.xpose.msra.mxu0 0
        %6148 = vmatprep.subr.bf16.mxu0 0
        %6149 = vmatpush1.bf16.xpose.msra.mxu0 0
        %6150 = vmatprep.subr.bf16.mxu0 0
        %6151 = vmatpush1.bf16.xpose.msra.mxu0 0
        %6152 = vmatprep.subr.bf16.mxu0 0
        %6153 = vmatpush1.bf16.xpose.msra.mxu0 0
        %6154 = vmatprep.subr.bf16.mxu0 0
        %6155 = vmatpush1.bf16.xpose.msra.mxu0 0
        %6156 = vmatprep.subr.bf16.mxu0 0
        %6157 = vmatpush1.bf16.xpose.msra.mxu0 0
        %6158 = vmatprep.mubr.bf16.mxu0 0
        %6159 = vmatmul.mubr.bf16.gmra.mrb[0].mxu0 %v6121
        %v6160 = vpop.f32.mrb[0].mxu0
        %v6161 = vadd.f32 0.0, %v6160
        %v6162 = vpop.f32.mrb[0].mxu0
        %v6163 = vpop.f32.mrb[0].mxu0
        %v6164 = vpop.f32.mrb[0].mxu0
        %6165 = vdwg.mxu0
        %v6166 = vsel %vm2186, %v6161, -inf
        %6167 = vmax.xlane.f32.xlu0 %v6166
        %v6168 = vpop.xlane.xlu0 %6167
        %v6169 = vsub.f32 %v6161, %v6168
        %v6170 = vmul.f32 %v6169, 1.442695
        %v6171 = vpow.pop %v6170
        %v6172 = vsel %vm2186, %v6171, 0.0
        %6173 = vadd.xlane.f32.xlu0 %v6172
        %v6174 = vpop.xlane.xlu0 %6173
        %v6175 = vrcp.pop %v6174
        %v6176 = vmul.f32 %v6171, %v6175
        %v6177 = vpack.c.bf16 %v6176, %v6176
        %v6179 = vsel %vm2186, %v6177, 0
        %v6182 = vsel %vm4318, %v6119, 0
        %6184 = vmatprep.subr.bf16.mxu0 0
        %6185 = vmatpush1.bf16.msra.mxu0 %v6182
        %6186 = vmatprep.subr.bf16.mxu0 0
        %6187 = vmatpush1.bf16.msra.mxu0 0
        %6188 = vmatprep.subr.bf16.mxu0 0
        %6189 = vmatpush1.bf16.msra.mxu0 0
        %6190 = vmatprep.subr.bf16.mxu0 0
        %6191 = vmatpush1.bf16.msra.mxu0 0
        %6192 = vmatprep.subr.bf16.mxu0 0
        %6193 = vmatpush1.bf16.msra.mxu0 0
        %6194 = vmatprep.subr.bf16.mxu0 0
        %6195 = vmatpush1.bf16.msra.mxu0 0
        %6196 = vmatprep.subr.bf16.mxu0 0
        %6197 = vmatpush1.bf16.msra.mxu0 0
        %6198 = vmatprep.subr.bf16.mxu0 0
        %6199 = vmatpush1.bf16.msra.mxu0 0
        %6200 = vmatprep.subr.bf16.mxu0 0
        %6201 = vmatpush1.bf16.msra.mxu0 0
        %6202 = vmatprep.subr.bf16.mxu0 0
        %6203 = vmatpush1.bf16.msra.mxu0 0
        %6204 = vmatprep.subr.bf16.mxu0 0
        %6205 = vmatpush1.bf16.msra.mxu0 0
        %6206 = vmatprep.subr.bf16.mxu0 0
        %6207 = vmatpush1.bf16.msra.mxu0 0
        %6208 = vmatprep.subr.bf16.mxu0 0
        %6209 = vmatpush1.bf16.msra.mxu0 0
        %6210 = vmatprep.subr.bf16.mxu0 0
        %6211 = vmatpush1.bf16.msra.mxu0 0
        %6212 = vmatprep.subr.bf16.mxu0 0
        %6213 = vmatpush1.bf16.msra.mxu0 0
        %6214 = vmatprep.subr.bf16.mxu0 0
        %6215 = vmatpush1.bf16.msra.mxu0 0
        %6216 = vmatprep.mubr.bf16.mxu0 0
        %6217 = vmatmul.mubr.bf16.gmra.mrb[0].mxu0 %v6179
        %v6218 = vpop.f32.mrb[0].mxu0
        %v6219 = vadd.f32 0.0, %v6218
        %v6220 = vpop.f32.mrb[0].mxu0
        %v6221 = vpop.f32.mrb[0].mxu0
        %v6222 = vpop.f32.mrb[0].mxu0
        %6223 = vdwg.mxu0
        %6225 = vrot.lane.b32.xlu0 %v5997, 120
        %v6226 = vpop.permute.xlu0 %6225
        %6228 = vrot.lane.b32.xlu0 %v6056, 120
        %v6229 = vpop.permute.xlu0 %6228
        %v6231 = vsel %vm2186, %v6226, 0
        %v6234 = vsel %vm2186, %v6229, 0
        %6236 = vmatprep.subr.bf16.mxu0 0
        %6237 = vmatpush1.bf16.xpose.msra.mxu0 %v6234
        %6238 = vmatprep.subr.bf16.mxu0 0
        %6239 = vmatpush1.bf16.xpose.msra.mxu0 0
        %6240 = vmatprep.subr.bf16.mxu0 0
        %6241 = vmatpush1.bf16.xpose.msra.mxu0 0
        %6242 = vmatprep.subr.bf16.mxu0 0
        %6243 = vmatpush1.bf16.xpose.msra.mxu0 0
        %6244 = vmatprep.subr.bf16.mxu0 0
        %6245 = vmatpush1.bf16.xpose.msra.mxu0 0
        %6246 = vmatprep.subr.bf16.mxu0 0
        %6247 = vmatpush1.bf16.xpose.msra.mxu0 0
        %6248 = vmatprep.subr.bf16.mxu0 0
        %6249 = vmatpush1.bf16.xpose.msra.mxu0 0
        %6250 = vmatprep.subr.bf16.mxu0 0
        %6251 = vmatpush1.bf16.xpose.msra.mxu0 0
        %6252 = vmatprep.subr.bf16.mxu0 0
        %6253 = vmatpush1.bf16.xpose.msra.mxu0 0
        %6254 = vmatprep.subr.bf16.mxu0 0
        %6255 = vmatpush1.bf16.xpose.msra.mxu0 0
        %6256 = vmatprep.subr.bf16.mxu0 0
        %6257 = vmatpush1.bf16.xpose.msra.mxu0 0
        %6258 = vmatprep.subr.bf16.mxu0 0
        %6259 = vmatpush1.bf16.xpose.msra.mxu0 0
        %6260 = vmatprep.subr.bf16.mxu0 0
        %6261 = vmatpush1.bf16.xpose.msra.mxu0 0
        %6262 = vmatprep.subr.bf16.mxu0 0
        %6263 = vmatpush1.bf16.xpose.msra.mxu0 0
        %6264 = vmatprep.subr.bf16.mxu0 0
        %6265 = vmatpush1.bf16.xpose.msra.mxu0 0
        %6266 = vmatprep.subr.bf16.mxu0 0
        %6267 = vmatpush1.bf16.xpose.msra.mxu0 0
        %6268 = vmatprep.mubr.bf16.mxu0 0
        %6269 = vmatmul.mubr.bf16.gmra.mrb[0].mxu0 %v6231
        %v6270 = vpop.f32.mrb[0].mxu0
        %v6271 = vadd.f32 0.0, %v6270
        %v6272 = vpop.f32.mrb[0].mxu0
        %v6273 = vpop.f32.mrb[0].mxu0
        %v6274 = vpop.f32.mrb[0].mxu0
        %6275 = vdwg.mxu0
        %v6276 = vsel %vm2186, %v6271, -inf
        %6277 = vmax.xlane.f32.xlu0 %v6276
        %v6278 = vpop.xlane.xlu0 %6277
        %v6279 = vsub.f32 %v6271, %v6278
        %v6280 = vmul.f32 %v6279, 1.442695
        %v6281 = vpow.pop %v6280
        %v6282 = vsel %vm2186, %v6281, 0.0
        %6283 = vadd.xlane.f32.xlu0 %v6282
        %v6284 = vpop.xlane.xlu0 %6283
        %v6285 = vrcp.pop %v6284
        %v6286 = vmul.f32 %v6281, %v6285
        %v6287 = vpack.c.bf16 %v6286, %v6286
        %6289 = vrot.lane.b32.xlu0 %v6119, 120
        %v6290 = vpop.permute.xlu0 %6289
        %v6292 = vsel %vm2186, %v6287, 0
        %v6295 = vsel %vm4318, %v6290, 0
        %6297 = vmatprep.subr.bf16.mxu0 0
        %6298 = vmatpush1.bf16.msra.mxu0 %v6295
        %6299 = vmatprep.subr.bf16.mxu0 0
        %6300 = vmatpush1.bf16.msra.mxu0 0
        %6301 = vmatprep.subr.bf16.mxu0 0
        %6302 = vmatpush1.bf16.msra.mxu0 0
        %6303 = vmatprep.subr.bf16.mxu0 0
        %6304 = vmatpush1.bf16.msra.mxu0 0
        %6305 = vmatprep.subr.bf16.mxu0 0
        %6306 = vmatpush1.bf16.msra.mxu0 0
        %6307 = vmatprep.subr.bf16.mxu0 0
        %6308 = vmatpush1.bf16.msra.mxu0 0
        %6309 = vmatprep.subr.bf16.mxu0 0
        %6310 = vmatpush1.bf16.msra.mxu0 0
        %6311 = vmatprep.subr.bf16.mxu0 0
        %6312 = vmatpush1.bf16.msra.mxu0 0
        %6313 = vmatprep.subr.bf16.mxu0 0
        %6314 = vmatpush1.bf16.msra.mxu0 0
        %6315 = vmatprep.subr.bf16.mxu0 0
        %6316 = vmatpush1.bf16.msra.mxu0 0
        %6317 = vmatprep.subr.bf16.mxu0 0
        %6318 = vmatpush1.bf16.msra.mxu0 0
        %6319 = vmatprep.subr.bf16.mxu0 0
        %6320 = vmatpush1.bf16.msra.mxu0 0
        %6321 = vmatprep.subr.bf16.mxu0 0
        %6322 = vmatpush1.bf16.msra.mxu0 0
        %6323 = vmatprep.subr.bf16.mxu0 0
        %6324 = vmatpush1.bf16.msra.mxu0 0
        %6325 = vmatprep.subr.bf16.mxu0 0
        %6326 = vmatpush1.bf16.msra.mxu0 0
        %6327 = vmatprep.subr.bf16.mxu0 0
        %6328 = vmatpush1.bf16.msra.mxu0 0
        %6329 = vmatprep.mubr.bf16.mxu0 0
        %6330 = vmatmul.mubr.bf16.gmra.mrb[0].mxu0 %v6292
        %v6331 = vpop.f32.mrb[0].mxu0
        %v6332 = vadd.f32 0.0, %v6331
        %v6333 = vpop.f32.mrb[0].mxu0
        %v6334 = vpop.f32.mrb[0].mxu0
        %v6335 = vpop.f32.mrb[0].mxu0
        %6336 = vdwg.mxu0
        %6337 = vrot.lane.b32.xlu0 %v5997, 112
        %v6338 = vpop.permute.xlu0 %6337
        %6339 = vrot.lane.b32.xlu0 %v6056, 112
        %v6340 = vpop.permute.xlu0 %6339
        %v6342 = vsel %vm2186, %v6338, 0
        %v6345 = vsel %vm2186, %v6340, 0
        %6347 = vmatprep.subr.bf16.mxu0 0
        %6348 = vmatpush1.bf16.xpose.msra.mxu0 %v6345
        %6349 = vmatprep.subr.bf16.mxu0 0
        %6350 = vmatpush1.bf16.xpose.msra.mxu0 0
        %6351 = vmatprep.subr.bf16.mxu0 0
        %6352 = vmatpush1.bf16.xpose.msra.mxu0 0
        %6353 = vmatprep.subr.bf16.mxu0 0
        %6354 = vmatpush1.bf16.xpose.msra.mxu0 0
        %6355 = vmatprep.subr.bf16.mxu0 0
        %6356 = vmatpush1.bf16.xpose.msra.mxu0 0
        %6357 = vmatprep.subr.bf16.mxu0 0
        %6358 = vmatpush1.bf16.xpose.msra.mxu0 0
        %6359 = vmatprep.subr.bf16.mxu0 0
        %6360 = vmatpush1.bf16.xpose.msra.mxu0 0
        %6361 = vmatprep.subr.bf16.mxu0 0
        %6362 = vmatpush1.bf16.xpose.msra.mxu0 0
        %6363 = vmatprep.subr.bf16.mxu0 0
        %6364 = vmatpush1.bf16.xpose.msra.mxu0 0
        %6365 = vmatprep.subr.bf16.mxu0 0
        %6366 = vmatpush1.bf16.xpose.msra.mxu0 0
        %6367 = vmatprep.subr.bf16.mxu0 0
        %6368 = vmatpush1.bf16.xpose.msra.mxu0 0
        %6369 = vmatprep.subr.bf16.mxu0 0
        %6370 = vmatpush1.bf16.xpose.msra.mxu0 0
        %6371 = vmatprep.subr.bf16.mxu0 0
        %6372 = vmatpush1.bf16.xpose.msra.mxu0 0
        %6373 = vmatprep.subr.bf16.mxu0 0
        %6374 = vmatpush1.bf16.xpose.msra.mxu0 0
        %6375 = vmatprep.subr.bf16.mxu0 0
        %6376 = vmatpush1.bf16.xpose.msra.mxu0 0
        %6377 = vmatprep.subr.bf16.mxu0 0
        %6378 = vmatpush1.bf16.xpose.msra.mxu0 0
        %6379 = vmatprep.mubr.bf16.mxu0 0
        %6380 = vmatmul.mubr.bf16.gmra.mrb[0].mxu0 %v6342
        %v6381 = vpop.f32.mrb[0].mxu0
        %v6382 = vadd.f32 0.0, %v6381
        %v6383 = vpop.f32.mrb[0].mxu0
        %v6384 = vpop.f32.mrb[0].mxu0
        %v6385 = vpop.f32.mrb[0].mxu0
        %6386 = vdwg.mxu0
        %v6387 = vsel %vm2186, %v6382, -inf
        %6388 = vmax.xlane.f32.xlu0 %v6387
        %v6389 = vpop.xlane.xlu0 %6388
        %v6390 = vsub.f32 %v6382, %v6389
        %v6391 = vmul.f32 %v6390, 1.442695
        %v6392 = vpow.pop %v6391
        %v6393 = vsel %vm2186, %v6392, 0.0
        %6394 = vadd.xlane.f32.xlu0 %v6393
        %v6395 = vpop.xlane.xlu0 %6394
        %v6396 = vrcp.pop %v6395
        %v6397 = vmul.f32 %v6392, %v6396
        %v6398 = vpack.c.bf16 %v6397, %v6397
        %6399 = vrot.lane.b32.xlu0 %v6119, 112
        %v6400 = vpop.permute.xlu0 %6399
        %v6402 = vsel %vm2186, %v6398, 0
        %v6405 = vsel %vm4318, %v6400, 0
        %6407 = vmatprep.subr.bf16.mxu0 0
        %6408 = vmatpush1.bf16.msra.mxu0 %v6405
        %6409 = vmatprep.subr.bf16.mxu0 0
        %6410 = vmatpush1.bf16.msra.mxu0 0
        %6411 = vmatprep.subr.bf16.mxu0 0
        %6412 = vmatpush1.bf16.msra.mxu0 0
        %6413 = vmatprep.subr.bf16.mxu0 0
        %6414 = vmatpush1.bf16.msra.mxu0 0
        %6415 = vmatprep.subr.bf16.mxu0 0
        %6416 = vmatpush1.bf16.msra.mxu0 0
        %6417 = vmatprep.subr.bf16.mxu0 0
        %6418 = vmatpush1.bf16.msra.mxu0 0
        %6419 = vmatprep.subr.bf16.mxu0 0
        %6420 = vmatpush1.bf16.msra.mxu0 0
        %6421 = vmatprep.subr.bf16.mxu0 0
        %6422 = vmatpush1.bf16.msra.mxu0 0
        %6423 = vmatprep.subr.bf16.mxu0 0
        %6424 = vmatpush1.bf16.msra.mxu0 0
        %6425 = vmatprep.subr.bf16.mxu0 0
        %6426 = vmatpush1.bf16.msra.mxu0 0
        %6427 = vmatprep.subr.bf16.mxu0 0
        %6428 = vmatpush1.bf16.msra.mxu0 0
        %6429 = vmatprep.subr.bf16.mxu0 0
        %6430 = vmatpush1.bf16.msra.mxu0 0
        %6431 = vmatprep.subr.bf16.mxu0 0
        %6432 = vmatpush1.bf16.msra.mxu0 0
        %6433 = vmatprep.subr.bf16.mxu0 0
        %6434 = vmatpush1.bf16.msra.mxu0 0
        %6435 = vmatprep.subr.bf16.mxu0 0
        %6436 = vmatpush1.bf16.msra.mxu0 0
        %6437 = vmatprep.subr.bf16.mxu0 0
        %6438 = vmatpush1.bf16.msra.mxu0 0
        %6439 = vmatprep.mubr.bf16.mxu0 0
        %6440 = vmatmul.mubr.bf16.gmra.mrb[0].mxu0 %v6402
        %v6441 = vpop.f32.mrb[0].mxu0
        %v6442 = vadd.f32 0.0, %v6441
        %v6443 = vpop.f32.mrb[0].mxu0
        %v6444 = vpop.f32.mrb[0].mxu0
        %v6445 = vpop.f32.mrb[0].mxu0
        %6446 = vdwg.mxu0
        %6447 = vrot.lane.b32.xlu0 %v5997, 104
        %v6448 = vpop.permute.xlu0 %6447
        %6449 = vrot.lane.b32.xlu0 %v6056, 104
        %v6450 = vpop.permute.xlu0 %6449
        %v6452 = vsel %vm2186, %v6448, 0
        %v6455 = vsel %vm2186, %v6450, 0
        %6457 = vmatprep.subr.bf16.mxu0 0
        %6458 = vmatpush1.bf16.xpose.msra.mxu0 %v6455
        %6459 = vmatprep.subr.bf16.mxu0 0
        %6460 = vmatpush1.bf16.xpose.msra.mxu0 0
        %6461 = vmatprep.subr.bf16.mxu0 0
        %6462 = vmatpush1.bf16.xpose.msra.mxu0 0
        %6463 = vmatprep.subr.bf16.mxu0 0
        %6464 = vmatpush1.bf16.xpose.msra.mxu0 0
        %6465 = vmatprep.subr.bf16.mxu0 0
        %6466 = vmatpush1.bf16.xpose.msra.mxu0 0
        %6467 = vmatprep.subr.bf16.mxu0 0
        %6468 = vmatpush1.bf16.xpose.msra.mxu0 0
        %6469 = vmatprep.subr.bf16.mxu0 0
        %6470 = vmatpush1.bf16.xpose.msra.mxu0 0
        %6471 = vmatprep.subr.bf16.mxu0 0
        %6472 = vmatpush1.bf16.xpose.msra.mxu0 0
        %6473 = vmatprep.subr.bf16.mxu0 0
        %6474 = vmatpush1.bf16.xpose.msra.mxu0 0
        %6475 = vmatprep.subr.bf16.mxu0 0
        %6476 = vmatpush1.bf16.xpose.msra.mxu0 0
        %6477 = vmatprep.subr.bf16.mxu0 0
        %6478 = vmatpush1.bf16.xpose.msra.mxu0 0
        %6479 = vmatprep.subr.bf16.mxu0 0
        %6480 = vmatpush1.bf16.xpose.msra.mxu0 0
        %6481 = vmatprep.subr.bf16.mxu0 0
        %6482 = vmatpush1.bf16.xpose.msra.mxu0 0
        %6483 = vmatprep.subr.bf16.mxu0 0
        %6484 = vmatpush1.bf16.xpose.msra.mxu0 0
        %6485 = vmatprep.subr.bf16.mxu0 0
        %6486 = vmatpush1.bf16.xpose.msra.mxu0 0
        %6487 = vmatprep.subr.bf16.mxu0 0
        %6488 = vmatpush1.bf16.xpose.msra.mxu0 0
        %6489 = vmatprep.mubr.bf16.mxu0 0
        %6490 = vmatmul.mubr.bf16.gmra.mrb[0].mxu0 %v6452
        %v6491 = vpop.f32.mrb[0].mxu0
        %v6492 = vadd.f32 0.0, %v6491
        %v6493 = vpop.f32.mrb[0].mxu0
        %v6494 = vpop.f32.mrb[0].mxu0
        %v6495 = vpop.f32.mrb[0].mxu0
        %6496 = vdwg.mxu0
        %v6497 = vsel %vm2186, %v6492, -inf
        %6498 = vmax.xlane.f32.xlu0 %v6497
        %v6499 = vpop.xlane.xlu0 %6498
        %v6500 = vsub.f32 %v6492, %v6499
        %v6501 = vmul.f32 %v6500, 1.442695
        %v6502 = vpow.pop %v6501
        %v6503 = vsel %vm2186, %v6502, 0.0
        %6504 = vadd.xlane.f32.xlu0 %v6503
        %v6505 = vpop.xlane.xlu0 %6504
        %v6506 = vrcp.pop %v6505
        %v6507 = vmul.f32 %v6502, %v6506
        %v6508 = vpack.c.bf16 %v6507, %v6507
        %6509 = vrot.lane.b32.xlu0 %v6119, 104
        %v6510 = vpop.permute.xlu0 %6509
        %v6512 = vsel %vm2186, %v6508, 0
        %v6515 = vsel %vm4318, %v6510, 0
        %6517 = vmatprep.subr.bf16.mxu0 0
        %6518 = vmatpush1.bf16.msra.mxu0 %v6515
        %6519 = vmatprep.subr.bf16.mxu0 0
        %6520 = vmatpush1.bf16.msra.mxu0 0
        %6521 = vmatprep.subr.bf16.mxu0 0
        %6522 = vmatpush1.bf16.msra.mxu0 0
        %6523 = vmatprep.subr.bf16.mxu0 0
        %6524 = vmatpush1.bf16.msra.mxu0 0
        %6525 = vmatprep.subr.bf16.mxu0 0
        %6526 = vmatpush1.bf16.msra.mxu0 0
        %6527 = vmatprep.subr.bf16.mxu0 0
        %6528 = vmatpush1.bf16.msra.mxu0 0
        %6529 = vmatprep.subr.bf16.mxu0 0
        %6530 = vmatpush1.bf16.msra.mxu0 0
        %6531 = vmatprep.subr.bf16.mxu0 0
        %6532 = vmatpush1.bf16.msra.mxu0 0
        %6533 = vmatprep.subr.bf16.mxu0 0
        %6534 = vmatpush1.bf16.msra.mxu0 0
        %6535 = vmatprep.subr.bf16.mxu0 0
        %6536 = vmatpush1.bf16.msra.mxu0 0
        %6537 = vmatprep.subr.bf16.mxu0 0
        %6538 = vmatpush1.bf16.msra.mxu0 0
        %6539 = vmatprep.subr.bf16.mxu0 0
        %6540 = vmatpush1.bf16.msra.mxu0 0
        %6541 = vmatprep.subr.bf16.mxu0 0
        %6542 = vmatpush1.bf16.msra.mxu0 0
        %6543 = vmatprep.subr.bf16.mxu0 0
        %6544 = vmatpush1.bf16.msra.mxu0 0
        %6545 = vmatprep.subr.bf16.mxu0 0
        %6546 = vmatpush1.bf16.msra.mxu0 0
        %6547 = vmatprep.subr.bf16.mxu0 0
        %6548 = vmatpush1.bf16.msra.mxu0 0
        %6549 = vmatprep.mubr.bf16.mxu0 0
        %6550 = vmatmul.mubr.bf16.gmra.mrb[0].mxu0 %v6512
        %v6551 = vpop.f32.mrb[0].mxu0
        %v6552 = vadd.f32 0.0, %v6551
        %v6553 = vpop.f32.mrb[0].mxu0
        %v6554 = vpop.f32.mrb[0].mxu0
        %v6555 = vpop.f32.mrb[0].mxu0
        %6556 = vdwg.mxu0
        %6558 = vrot.lane.b32.xlu0 %v6332, 8
        %v6559 = vpop.permute.xlu0 %6558
        %6562 = vrot.lane.b32.xlu0 %v6442, 16
        %v6563 = vpop.permute.xlu0 %6562
        %6566 = vrot.lane.b32.xlu0 %v6552, 24
        %v6567 = vpop.permute.xlu0 %6566
        %v6569 = vsel %vm2186, %v6219, %v6559
        %v6570 = vsel %vm1778, %v6569, %v6563
        %v6571 = vsel %vm3428, %v6570, %v6567
        %v6572 = vpack.c.bf16 %v6571, %v6571
        %v6574 = vlaneseq
        %v6575 = vshrl.u32 %v6574, 7
        %v6576 = vsub.s32 0, %v6575
        %v6577 = vrot.slane %v5933, %v6576
        %v6583 = vunpack.c.l.b16 %v5928
        %v6584 = vunpack.c.l.b16 %v5929
        %v6585 = vunpack.c.l.b16 %v5930
        %v6586 = vunpack.c.l.b16 %v5931
        %v6587 = vpack.c.b16 %v6584, %v6583
        %v6588 = vpack.c.b16 %v6586, %v6585
        %v6592 = vsel %vm1906, %v6572, 0
        %6594 = vmatprep.subr.bf16.mxu0 0
        %6595 = vmatpush1.bf16.msra.mxu0 %v6587
        %6596 = vmatprep.subr.bf16.mxu0 0
        %6597 = vmatpush1.bf16.msra.mxu0 %v6588
        %6598 = vmatprep.subr.bf16.mxu0 0
        %6599 = vmatpush1.bf16.msra.mxu0 0
        %6600 = vmatprep.subr.bf16.mxu0 0
        %6601 = vmatpush1.bf16.msra.mxu0 0
        %6602 = vmatprep.subr.bf16.mxu0 0
        %6603 = vmatpush1.bf16.msra.mxu0 0
        %6604 = vmatprep.subr.bf16.mxu0 0
        %6605 = vmatpush1.bf16.msra.mxu0 0
        %6606 = vmatprep.subr.bf16.mxu0 0
        %6607 = vmatpush1.bf16.msra.mxu0 0
        %6608 = vmatprep.subr.bf16.mxu0 0
        %6609 = vmatpush1.bf16.msra.mxu0 0
        %6610 = vmatprep.subr.bf16.mxu0 0
        %6611 = vmatpush1.bf16.msra.mxu0 0
        %6612 = vmatprep.subr.bf16.mxu0 0
        %6613 = vmatpush1.bf16.msra.mxu0 0
        %6614 = vmatprep.subr.bf16.mxu0 0
        %6615 = vmatpush1.bf16.msra.mxu0 0
        %6616 = vmatprep.subr.bf16.mxu0 0
        %6617 = vmatpush1.bf16.msra.mxu0 0
        %6618 = vmatprep.subr.bf16.mxu0 0
        %6619 = vmatpush1.bf16.msra.mxu0 0
        %6620 = vmatprep.subr.bf16.mxu0 0
        %6621 = vmatpush1.bf16.msra.mxu0 0
        %6622 = vmatprep.subr.bf16.mxu0 0
        %6623 = vmatpush1.bf16.msra.mxu0 0
        %6624 = vmatprep.subr.bf16.mxu0 0
        %6625 = vmatpush1.bf16.msra.mxu0 0
        %6626 = vmatprep.mubr.bf16.mxu0 0
        %6627 = vmatmul.mubr.bf16.gmra.mrb[0].mxu0 %v6592
        %v6628 = vpop.f32.mrb[0].mxu0
        %v6629 = vadd.f32 %v6577, %v6628
        %v6630 = vpop.f32.mrb[0].mxu0
        %v6631 = vpop.f32.mrb[0].mxu0
        %v6632 = vpop.f32.mrb[0].mxu0
        %6633 = vdwg.mxu0
        %v6634 = vadd.f32 %v5880, %v6629
        %s6635 = scalar_lea.vmem %s57, 2
        %v6636 = vld [vmem:[%s6635] sm:$0x3]
        %v6637 = vsel %vm1906, %v6634, 0.0
        %6638 = vadd.xlane.f32.xlu0 %v6637
        %v6639 = vpop.xlane.xlu0 %6638
        %v6640 = vmul.f32 %v6639, %v3569
        %v6641 = vsub.f32 %v6634, %v6640
        %v6642 = vmul.f32 %v6641, %v6641
        %v6643 = vsel %vm1906, %v6642, 0.0
        %6644 = vadd.xlane.f32.xlu0 %v6643
        %v6645 = vpop.xlane.xlu0 %6644
        %v6646 = vmul.f32 %v6645, %v3569
        %v6647 = vadd.f32 %v6646, 1e-05
        %v6648 = vrsqrt.pop %v6647
        %v6649 = vmul.f32 %v6641, %v6648
        %v6650 = vlaneseq
        %v6651 = vshrl.u32 %v6650, 7
        %v6652 = vsub.s32 0, %v6651
        %v6653 = vrot.slane %v6636, %v6652
        %v6654 = vmul.f32 %v6649, %v6653
        %v6655 = vlaneseq
        %v6656 = vshrl.u32 %v6655, 7
        %v6657 = vsub.s32 1, %v6656
        %v6658 = vrot.slane %v6636, %v6657
        %v6659 = vadd.f32 %v6654, %v6658
        %v6660 = vadd.f32 %v6659, %v1750
        %s6661 = scalar_lea.vmem %s59, 16
        %v6662 = vld [vmem:[%s6661] sm:$0xf]
        %v6663 = vld [vmem:[%s6661 + $0x4] sm:$0xf]
        %v6664 = vld [vmem:[%s6661 + $0x8] sm:$0xf]
        %v6665 = vld [vmem:[%s6661 + $0xc] sm:$0xf]
        %s6666 = scalar_lea.vmem %s61, 1
        %v6667 = vld [vmem:[%s6666] sm:$0x1]
        %s6668 = scalar_lea.vmem %s63, 16
        %v6669 = vld [vmem:[%s6668] sm:$0xf]
        %v6670 = vld [vmem:[%s6668 + $0x4] sm:$0xf]
        %v6671 = vld [vmem:[%s6668 + $0x8] sm:$0xf]
        %v6672 = vld [vmem:[%s6668 + $0xc] sm:$0xf]
        %s6673 = scalar_lea.vmem %s65, 1
        %v6674 = vld [vmem:[%s6673] sm:$0x1]
        %s6675 = scalar_lea.vmem %s67, 16
        %v6676 = vld [vmem:[%s6675] sm:$0xf]
        %v6677 = vld [vmem:[%s6675 + $0x4] sm:$0xf]
        %v6678 = vld [vmem:[%s6675 + $0x8] sm:$0xf]
        %v6679 = vld [vmem:[%s6675 + $0xc] sm:$0xf]
        %s6680 = scalar_lea.vmem %s69, 1
        %v6681 = vld [vmem:[%s6680] sm:$0x1]
        %s6682 = scalar_lea.vmem %s71, 16
        %v6683 = vld [vmem:[%s6682] sm:$0xf]
        %v6684 = vld [vmem:[%s6682 + $0x4] sm:$0xf]
        %v6685 = vld [vmem:[%s6682 + $0x8] sm:$0xf]
        %v6686 = vld [vmem:[%s6682 + $0xc] sm:$0xf]
        %s6687 = scalar_lea.vmem %s73, 1
        %v6688 = vld [vmem:[%s6687] sm:$0x1]
        %v6689 = vpack.c.bf16 %v6660, %v6660
        %v6691 = vlaneseq
        %v6692 = vshrl.u32 %v6691, 7
        %v6693 = vsub.s32 0, %v6692
        %v6694 = vrot.slane %v6667, %v6693
        %v6700 = vunpack.c.l.b16 %v6662
        %v6701 = vunpack.c.l.b16 %v6663
        %v6702 = vunpack.c.l.b16 %v6664
        %v6703 = vunpack.c.l.b16 %v6665
        %v6704 = vpack.c.b16 %v6701, %v6700
        %v6705 = vpack.c.b16 %v6703, %v6702
        %v6709 = vsel %vm1906, %v6689, 0
        %6711 = vmatprep.subr.bf16.mxu0 0
        %6712 = vmatpush1.bf16.msra.mxu0 %v6704
        %6713 = vmatprep.subr.bf16.mxu0 0
        %6714 = vmatpush1.bf16.msra.mxu0 %v6705
        %6715 = vmatprep.subr.bf16.mxu0 0
        %6716 = vmatpush1.bf16.msra.mxu0 0
        %6717 = vmatprep.subr.bf16.mxu0 0
        %6718 = vmatpush1.bf16.msra.mxu0 0
        %6719 = vmatprep.subr.bf16.mxu0 0
        %6720 = vmatpush1.bf16.msra.mxu0 0
        %6721 = vmatprep.subr.bf16.mxu0 0
        %6722 = vmatpush1.bf16.msra.mxu0 0
        %6723 = vmatprep.subr.bf16.mxu0 0
        %6724 = vmatpush1.bf16.msra.mxu0 0
        %6725 = vmatprep.subr.bf16.mxu0 0
        %6726 = vmatpush1.bf16.msra.mxu0 0
        %6727 = vmatprep.subr.bf16.mxu0 0
        %6728 = vmatpush1.bf16.msra.mxu0 0
        %6729 = vmatprep.subr.bf16.mxu0 0
        %6730 = vmatpush1.bf16.msra.mxu0 0
        %6731 = vmatprep.subr.bf16.mxu0 0
        %6732 = vmatpush1.bf16.msra.mxu0 0
        %6733 = vmatprep.subr.bf16.mxu0 0
        %6734 = vmatpush1.bf16.msra.mxu0 0
        %6735 = vmatprep.subr.bf16.mxu0 0
        %6736 = vmatpush1.bf16.msra.mxu0 0
        %6737 = vmatprep.subr.bf16.mxu0 0
        %6738 = vmatpush1.bf16.msra.mxu0 0
        %6739 = vmatprep.subr.bf16.mxu0 0
        %6740 = vmatpush1.bf16.msra.mxu0 0
        %6741 = vmatprep.subr.bf16.mxu0 0
        %6742 = vmatpush1.bf16.msra.mxu0 0
        %6743 = vmatprep.mubr.bf16.mxu0 0
        %6744 = vmatmul.mubr.bf16.gmra.mrb[0].mxu0 %v6709
        %v6745 = vpop.f32.mrb[0].mxu0
        %v6746 = vadd.f32 %v6694, %v6745
        %v6747 = vpop.f32.mrb[0].mxu0
        %v6748 = vpop.f32.mrb[0].mxu0
        %v6749 = vpop.f32.mrb[0].mxu0
        %6750 = vdwg.mxu0
        %v6751 = vmul.f32 %v6746, 0.35355338
        %v6752 = vpack.c.bf16 %v6751, %v6751
        %v6754 = vlaneseq
        %v6755 = vshrl.u32 %v6754, 7
        %v6756 = vsub.s32 0, %v6755
        %v6757 = vrot.slane %v6674, %v6756
        %v6763 = vunpack.c.l.b16 %v6669
        %v6764 = vunpack.c.l.b16 %v6670
        %v6765 = vunpack.c.l.b16 %v6671
        %v6766 = vunpack.c.l.b16 %v6672
        %v6767 = vpack.c.b16 %v6764, %v6763
        %v6768 = vpack.c.b16 %v6766, %v6765
        %6771 = vmatprep.subr.bf16.mxu0 0
        %6772 = vmatpush1.bf16.msra.mxu0 %v6767
        %6773 = vmatprep.subr.bf16.mxu0 0
        %6774 = vmatpush1.bf16.msra.mxu0 %v6768
        %6775 = vmatprep.subr.bf16.mxu0 0
        %6776 = vmatpush1.bf16.msra.mxu0 0
        %6777 = vmatprep.subr.bf16.mxu0 0
        %6778 = vmatpush1.bf16.msra.mxu0 0
        %6779 = vmatprep.subr.bf16.mxu0 0
        %6780 = vmatpush1.bf16.msra.mxu0 0
        %6781 = vmatprep.subr.bf16.mxu0 0
        %6782 = vmatpush1.bf16.msra.mxu0 0
        %6783 = vmatprep.subr.bf16.mxu0 0
        %6784 = vmatpush1.bf16.msra.mxu0 0
        %6785 = vmatprep.subr.bf16.mxu0 0
        %6786 = vmatpush1.bf16.msra.mxu0 0
        %6787 = vmatprep.subr.bf16.mxu0 0
        %6788 = vmatpush1.bf16.msra.mxu0 0
        %6789 = vmatprep.subr.bf16.mxu0 0
        %6790 = vmatpush1.bf16.msra.mxu0 0
        %6791 = vmatprep.subr.bf16.mxu0 0
        %6792 = vmatpush1.bf16.msra.mxu0 0
        %6793 = vmatprep.subr.bf16.mxu0 0
        %6794 = vmatpush1.bf16.msra.mxu0 0
        %6795 = vmatprep.subr.bf16.mxu0 0
        %6796 = vmatpush1.bf16.msra.mxu0 0
        %6797 = vmatprep.subr.bf16.mxu0 0
        %6798 = vmatpush1.bf16.msra.mxu0 0
        %6799 = vmatprep.subr.bf16.mxu0 0
        %6800 = vmatpush1.bf16.msra.mxu0 0
        %6801 = vmatprep.subr.bf16.mxu0 0
        %6802 = vmatpush1.bf16.msra.mxu0 0
        %6803 = vmatprep.mubr.bf16.mxu0 0
        %6804 = vmatmul.mubr.bf16.gmra.mrb[0].mxu0 %v4905
        %v6805 = vpop.f32.mrb[0].mxu0
        %v6806 = vadd.f32 %v6757, %v6805
        %v6807 = vpop.f32.mrb[0].mxu0
        %v6808 = vpop.f32.mrb[0].mxu0
        %v6809 = vadd.f32 %v6757, %v6808
        %v6810 = vpop.f32.mrb[0].mxu0
        %6811 = vmatprep.mubr.bf16.mxu0 0
        %6812 = vmatmul.mubr.bf16.gmra.mrb[0].mxu0 %v4908
        %v6813 = vpop.f32.mrb[0].mxu0
        %v6814 = vadd.f32 %v6757, %v6813
        %v6815 = vpop.f32.mrb[0].mxu0
        %v6816 = vpop.f32.mrb[0].mxu0
        %v6817 = vadd.f32 %v6757, %v6816
        %v6818 = vpop.f32.mrb[0].mxu0
        %6819 = vmatprep.mubr.bf16.mxu0 0
        %6820 = vmatmul.mubr.bf16.gmra.mrb[0].mxu0 %v4911
        %v6821 = vpop.f32.mrb[0].mxu0
        %v6822 = vadd.f32 %v6757, %v6821
        %v6823 = vpop.f32.mrb[0].mxu0
        %v6824 = vpop.f32.mrb[0].mxu0
        %v6825 = vadd.f32 %v6757, %v6824
        %v6826 = vpop.f32.mrb[0].mxu0
        %6827 = vmatprep.mubr.bf16.mxu0 0
        %6828 = vmatmul.mubr.bf16.gmra.mrb[0].mxu0 %v4914
        %v6829 = vpop.f32.mrb[0].mxu0
        %v6830 = vadd.f32 %v6757, %v6829
        %v6831 = vpop.f32.mrb[0].mxu0
        %v6832 = vpop.f32.mrb[0].mxu0
        %v6833 = vadd.f32 %v6757, %v6832
        %v6834 = vpop.f32.mrb[0].mxu0
        %6835 = vdwg.mxu0
        %v6836 = vpack.c.bf16 %v6809, %v6806
        %v6837 = vpack.c.bf16 %v6817, %v6814
        %v6838 = vpack.c.bf16 %v6825, %v6822
        %v6839 = vpack.c.bf16 %v6833, %v6830
        %v6841 = vlaneseq
        %v6842 = vshrl.u32 %v6841, 7
        %v6843 = vsub.s32 0, %v6842
        %v6844 = vrot.slane %v6681, %v6843
        %v6850 = vunpack.c.l.b16 %v6676
        %v6851 = vunpack.c.l.b16 %v6677
        %v6852 = vunpack.c.l.b16 %v6678
        %v6853 = vunpack.c.l.b16 %v6679
        %v6854 = vpack.c.b16 %v6851, %v6850
        %v6855 = vpack.c.b16 %v6853, %v6852
        %6858 = vmatprep.subr.bf16.mxu0 0
        %6859 = vmatpush1.bf16.msra.mxu0 %v6854
        %6860 = vmatprep.subr.bf16.mxu0 0
        %6861 = vmatpush1.bf16.msra.mxu0 %v6855
        %6862 = vmatprep.subr.bf16.mxu0 0
        %6863 = vmatpush1.bf16.msra.mxu0 0
        %6864 = vmatprep.subr.bf16.mxu0 0
        %6865 = vmatpush1.bf16.msra.mxu0 0
        %6866 = vmatprep.subr.bf16.mxu0 0
        %6867 = vmatpush1.bf16.msra.mxu0 0
        %6868 = vmatprep.subr.bf16.mxu0 0
        %6869 = vmatpush1.bf16.msra.mxu0 0
        %6870 = vmatprep.subr.bf16.mxu0 0
        %6871 = vmatpush1.bf16.msra.mxu0 0
        %6872 = vmatprep.subr.bf16.mxu0 0
        %6873 = vmatpush1.bf16.msra.mxu0 0
        %6874 = vmatprep.subr.bf16.mxu0 0
        %6875 = vmatpush1.bf16.msra.mxu0 0
        %6876 = vmatprep.subr.bf16.mxu0 0
        %6877 = vmatpush1.bf16.msra.mxu0 0
        %6878 = vmatprep.subr.bf16.mxu0 0
        %6879 = vmatpush1.bf16.msra.mxu0 0
        %6880 = vmatprep.subr.bf16.mxu0 0
        %6881 = vmatpush1.bf16.msra.mxu0 0
        %6882 = vmatprep.subr.bf16.mxu0 0
        %6883 = vmatpush1.bf16.msra.mxu0 0
        %6884 = vmatprep.subr.bf16.mxu0 0
        %6885 = vmatpush1.bf16.msra.mxu0 0
        %6886 = vmatprep.subr.bf16.mxu0 0
        %6887 = vmatpush1.bf16.msra.mxu0 0
        %6888 = vmatprep.subr.bf16.mxu0 0
        %6889 = vmatpush1.bf16.msra.mxu0 0
        %6890 = vmatprep.mubr.bf16.mxu0 0
        %6891 = vmatmul.mubr.bf16.gmra.mrb[0].mxu0 %v5008
        %v6892 = vpop.f32.mrb[0].mxu0
        %v6893 = vadd.f32 %v6844, %v6892
        %v6894 = vpop.f32.mrb[0].mxu0
        %v6895 = vpop.f32.mrb[0].mxu0
        %v6896 = vadd.f32 %v6844, %v6895
        %v6897 = vpop.f32.mrb[0].mxu0
        %6898 = vmatprep.mubr.bf16.mxu0 0
        %6899 = vmatmul.mubr.bf16.gmra.mrb[0].mxu0 %v5011
        %v6900 = vpop.f32.mrb[0].mxu0
        %v6901 = vadd.f32 %v6844, %v6900
        %v6902 = vpop.f32.mrb[0].mxu0
        %v6903 = vpop.f32.mrb[0].mxu0
        %v6904 = vadd.f32 %v6844, %v6903
        %v6905 = vpop.f32.mrb[0].mxu0
        %6906 = vmatprep.mubr.bf16.mxu0 0
        %6907 = vmatmul.mubr.bf16.gmra.mrb[0].mxu0 %v5014
        %v6908 = vpop.f32.mrb[0].mxu0
        %v6909 = vadd.f32 %v6844, %v6908
        %v6910 = vpop.f32.mrb[0].mxu0
        %v6911 = vpop.f32.mrb[0].mxu0
        %v6912 = vadd.f32 %v6844, %v6911
        %v6913 = vpop.f32.mrb[0].mxu0
        %6914 = vmatprep.mubr.bf16.mxu0 0
        %6915 = vmatmul.mubr.bf16.gmra.mrb[0].mxu0 %v5017
        %v6916 = vpop.f32.mrb[0].mxu0
        %v6917 = vadd.f32 %v6844, %v6916
        %v6918 = vpop.f32.mrb[0].mxu0
        %v6919 = vpop.f32.mrb[0].mxu0
        %v6920 = vadd.f32 %v6844, %v6919
        %v6921 = vpop.f32.mrb[0].mxu0
        %6922 = vdwg.mxu0
        %v6923 = vpack.c.bf16 %v6896, %v6893
        %v6924 = vpack.c.bf16 %v6904, %v6901
        %v6925 = vpack.c.bf16 %v6912, %v6909
        %v6926 = vpack.c.bf16 %v6920, %v6917
        %v6928 = vsel %vm2186, %v6752, 0
        %v6931 = vsel %vm2186, %v6836, 0
        %v6934 = vsel %vm2186, %v6837, 0
        %v6937 = vsel %vm2186, %v6838, 0
        %v6940 = vsel %vm2186, %v6839, 0
        %6942 = vmatprep.subr.bf16.mxu0 0
        %6943 = vmatpush1.bf16.xpose.msra.mxu0 %v6931
        %6944 = vmatprep.subr.bf16.mxu0 0
        %6945 = vmatpush1.bf16.xpose.msra.mxu0 %v6934
        %6946 = vmatprep.subr.bf16.mxu0 0
        %6947 = vmatpush1.bf16.xpose.msra.mxu0 %v6937
        %6948 = vmatprep.subr.bf16.mxu0 0
        %6949 = vmatpush1.bf16.xpose.msra.mxu0 %v6940
        %6950 = vmatprep.subr.bf16.mxu0 0
        %6951 = vmatpush1.bf16.xpose.msra.mxu0 0
        %6952 = vmatprep.subr.bf16.mxu0 0
        %6953 = vmatpush1.bf16.xpose.msra.mxu0 0
        %6954 = vmatprep.subr.bf16.mxu0 0
        %6955 = vmatpush1.bf16.xpose.msra.mxu0 0
        %6956 = vmatprep.subr.bf16.mxu0 0
        %6957 = vmatpush1.bf16.xpose.msra.mxu0 0
        %6958 = vmatprep.subr.bf16.mxu0 0
        %6959 = vmatpush1.bf16.xpose.msra.mxu0 0
        %6960 = vmatprep.subr.bf16.mxu0 0
        %6961 = vmatpush1.bf16.xpose.msra.mxu0 0
        %6962 = vmatprep.subr.bf16.mxu0 0
        %6963 = vmatpush1.bf16.xpose.msra.mxu0 0
        %6964 = vmatprep.subr.bf16.mxu0 0
        %6965 = vmatpush1.bf16.xpose.msra.mxu0 0
        %6966 = vmatprep.subr.bf16.mxu0 0
        %6967 = vmatpush1.bf16.xpose.msra.mxu0 0
        %6968 = vmatprep.subr.bf16.mxu0 0
        %6969 = vmatpush1.bf16.xpose.msra.mxu0 0
        %6970 = vmatprep.subr.bf16.mxu0 0
        %6971 = vmatpush1.bf16.xpose.msra.mxu0 0
        %6972 = vmatprep.subr.bf16.mxu0 0
        %6973 = vmatpush1.bf16.xpose.msra.mxu0 0
        %6974 = vmatprep.mubr.bf16.mxu0 0
        %6975 = vmatmul.mubr.bf16.gmra.mrb[0].mxu0 %v6928
        %v6976 = vpop.f32.mrb[0].mxu0
        %v6977 = vadd.f32 0.0, %v6976
        %v6978 = vpop.f32.mrb[0].mxu0
        %v6979 = vpop.f32.mrb[0].mxu0
        %v6980 = vpop.f32.mrb[0].mxu0
        %6981 = vdwg.mxu0
        %v6982 = vsel %vm2276, %v6977, -inf
        %6983 = vmax.xlane.f32.xlu0 %v6982
        %v6984 = vpop.xlane.xlu0 %6983
        %v6985 = vsub.f32 %v6977, %v6984
        %v6986 = vmul.f32 %v6985, 1.442695
        %v6987 = vpow.pop %v6986
        %v6988 = vsel %vm2276, %v6987, 0.0
        %6989 = vadd.xlane.f32.xlu0 %v6988
        %v6990 = vpop.xlane.xlu0 %6989
        %v6991 = vrcp.pop %v6990
        %v6992 = vmul.f32 %v6987, %v6991
        %v6993 = vpack.c.bf16 %v6992, %v6992
        %v6995 = vsel %vm2276, %v6993, 0
        %6997 = vmatprep.subr.bf16.mxu0 0
        %6998 = vmatpush1.bf16.msra.mxu0 %v6923
        %6999 = vmatprep.subr.bf16.mxu0 0
        %7000 = vmatpush1.bf16.msra.mxu0 %v6924
        %7001 = vmatprep.subr.bf16.mxu0 0
        %7002 = vmatpush1.bf16.msra.mxu0 %v6925
        %7003 = vmatprep.subr.bf16.mxu0 0
        %7004 = vmatpush1.bf16.msra.mxu0 %v6926
        %7005 = vmatprep.subr.bf16.mxu0 0
        %7006 = vmatpush1.bf16.msra.mxu0 0
        %7007 = vmatprep.subr.bf16.mxu0 0
        %7008 = vmatpush1.bf16.msra.mxu0 0
        %7009 = vmatprep.subr.bf16.mxu0 0
        %7010 = vmatpush1.bf16.msra.mxu0 0
        %7011 = vmatprep.subr.bf16.mxu0 0
        %7012 = vmatpush1.bf16.msra.mxu0 0
        %7013 = vmatprep.subr.bf16.mxu0 0
        %7014 = vmatpush1.bf16.msra.mxu0 0
        %7015 = vmatprep.subr.bf16.mxu0 0
        %7016 = vmatpush1.bf16.msra.mxu0 0
        %7017 = vmatprep.subr.bf16.mxu0 0
        %7018 = vmatpush1.bf16.msra.mxu0 0
        %7019 = vmatprep.subr.bf16.mxu0 0
        %7020 = vmatpush1.bf16.msra.mxu0 0
        %7021 = vmatprep.subr.bf16.mxu0 0
        %7022 = vmatpush1.bf16.msra.mxu0 0
        %7023 = vmatprep.subr.bf16.mxu0 0
        %7024 = vmatpush1.bf16.msra.mxu0 0
        %7025 = vmatprep.subr.bf16.mxu0 0
        %7026 = vmatpush1.bf16.msra.mxu0 0
        %7027 = vmatprep.subr.bf16.mxu0 0
        %7028 = vmatpush1.bf16.msra.mxu0 0
        %7029 = vmatprep.mubr.bf16.mxu0 0
        %7030 = vmatmul.mubr.bf16.gmra.mrb[0].mxu0 %v6995
        %v7031 = vpop.f32.mrb[0].mxu0
        %v7032 = vadd.f32 0.0, %v7031
        %v7033 = vpop.f32.mrb[0].mxu0
        %v7034 = vpop.f32.mrb[0].mxu0
        %v7035 = vpop.f32.mrb[0].mxu0
        %7036 = vdwg.mxu0
        %7038 = vrot.lane.b32.xlu0 %v6752, 120
        %v7039 = vpop.permute.xlu0 %7038
        %7044 = vrot.lane.b32.xlu0 %v6836, 120
        %v7045 = vpop.permute.xlu0 %7044
        %7046 = vrot.lane.b32.xlu0 %v6837, 120
        %v7047 = vpop.permute.xlu0 %7046
        %7048 = vrot.lane.b32.xlu0 %v6838, 120
        %v7049 = vpop.permute.xlu0 %7048
        %7050 = vrot.lane.b32.xlu0 %v6839, 120
        %v7051 = vpop.permute.xlu0 %7050
        %v7053 = vsel %vm2186, %v7039, 0
        %v7056 = vsel %vm2186, %v7045, 0
        %v7059 = vsel %vm2186, %v7047, 0
        %v7062 = vsel %vm2186, %v7049, 0
        %v7065 = vsel %vm2186, %v7051, 0
        %7067 = vmatprep.subr.bf16.mxu0 0
        %7068 = vmatpush1.bf16.xpose.msra.mxu0 %v7056
        %7069 = vmatprep.subr.bf16.mxu0 0
        %7070 = vmatpush1.bf16.xpose.msra.mxu0 %v7059
        %7071 = vmatprep.subr.bf16.mxu0 0
        %7072 = vmatpush1.bf16.xpose.msra.mxu0 %v7062
        %7073 = vmatprep.subr.bf16.mxu0 0
        %7074 = vmatpush1.bf16.xpose.msra.mxu0 %v7065
        %7075 = vmatprep.subr.bf16.mxu0 0
        %7076 = vmatpush1.bf16.xpose.msra.mxu0 0
        %7077 = vmatprep.subr.bf16.mxu0 0
        %7078 = vmatpush1.bf16.xpose.msra.mxu0 0
        %7079 = vmatprep.subr.bf16.mxu0 0
        %7080 = vmatpush1.bf16.xpose.msra.mxu0 0
        %7081 = vmatprep.subr.bf16.mxu0 0
        %7082 = vmatpush1.bf16.xpose.msra.mxu0 0
        %7083 = vmatprep.subr.bf16.mxu0 0
        %7084 = vmatpush1.bf16.xpose.msra.mxu0 0
        %7085 = vmatprep.subr.bf16.mxu0 0
        %7086 = vmatpush1.bf16.xpose.msra.mxu0 0
        %7087 = vmatprep.subr.bf16.mxu0 0
        %7088 = vmatpush1.bf16.xpose.msra.mxu0 0
        %7089 = vmatprep.subr.bf16.mxu0 0
        %7090 = vmatpush1.bf16.xpose.msra.mxu0 0
        %7091 = vmatprep.subr.bf16.mxu0 0
        %7092 = vmatpush1.bf16.xpose.msra.mxu0 0
        %7093 = vmatprep.subr.bf16.mxu0 0
        %7094 = vmatpush1.bf16.xpose.msra.mxu0 0
        %7095 = vmatprep.subr.bf16.mxu0 0
        %7096 = vmatpush1.bf16.xpose.msra.mxu0 0
        %7097 = vmatprep.subr.bf16.mxu0 0
        %7098 = vmatpush1.bf16.xpose.msra.mxu0 0
        %7099 = vmatprep.mubr.bf16.mxu0 0
        %7100 = vmatmul.mubr.bf16.gmra.mrb[0].mxu0 %v7053
        %v7101 = vpop.f32.mrb[0].mxu0
        %v7102 = vadd.f32 0.0, %v7101
        %v7103 = vpop.f32.mrb[0].mxu0
        %v7104 = vpop.f32.mrb[0].mxu0
        %v7105 = vpop.f32.mrb[0].mxu0
        %7106 = vdwg.mxu0
        %v7107 = vsel %vm2276, %v7102, -inf
        %7108 = vmax.xlane.f32.xlu0 %v7107
        %v7109 = vpop.xlane.xlu0 %7108
        %v7110 = vsub.f32 %v7102, %v7109
        %v7111 = vmul.f32 %v7110, 1.442695
        %v7112 = vpow.pop %v7111
        %v7113 = vsel %vm2276, %v7112, 0.0
        %7114 = vadd.xlane.f32.xlu0 %v7113
        %v7115 = vpop.xlane.xlu0 %7114
        %v7116 = vrcp.pop %v7115
        %v7117 = vmul.f32 %v7112, %v7116
        %v7118 = vpack.c.bf16 %v7117, %v7117
        %7123 = vrot.lane.b32.xlu0 %v6923, 120
        %v7124 = vpop.permute.xlu0 %7123
        %7125 = vrot.lane.b32.xlu0 %v6924, 120
        %v7126 = vpop.permute.xlu0 %7125
        %7127 = vrot.lane.b32.xlu0 %v6925, 120
        %v7128 = vpop.permute.xlu0 %7127
        %7129 = vrot.lane.b32.xlu0 %v6926, 120
        %v7130 = vpop.permute.xlu0 %7129
        %v7136 = vsel %vm2276, %v7118, 0
        %7138 = vmatprep.subr.bf16.mxu0 0
        %7139 = vmatpush1.bf16.msra.mxu0 %v7124
        %7140 = vmatprep.subr.bf16.mxu0 0
        %7141 = vmatpush1.bf16.msra.mxu0 %v7126
        %7142 = vmatprep.subr.bf16.mxu0 0
        %7143 = vmatpush1.bf16.msra.mxu0 %v7128
        %7144 = vmatprep.subr.bf16.mxu0 0
        %7145 = vmatpush1.bf16.msra.mxu0 %v7130
        %7146 = vmatprep.subr.bf16.mxu0 0
        %7147 = vmatpush1.bf16.msra.mxu0 0
        %7148 = vmatprep.subr.bf16.mxu0 0
        %7149 = vmatpush1.bf16.msra.mxu0 0
        %7150 = vmatprep.subr.bf16.mxu0 0
        %7151 = vmatpush1.bf16.msra.mxu0 0
        %7152 = vmatprep.subr.bf16.mxu0 0
        %7153 = vmatpush1.bf16.msra.mxu0 0
        %7154 = vmatprep.subr.bf16.mxu0 0
        %7155 = vmatpush1.bf16.msra.mxu0 0
        %7156 = vmatprep.subr.bf16.mxu0 0
        %7157 = vmatpush1.bf16.msra.mxu0 0
        %7158 = vmatprep.subr.bf16.mxu0 0
        %7159 = vmatpush1.bf16.msra.mxu0 0
        %7160 = vmatprep.subr.bf16.mxu0 0
        %7161 = vmatpush1.bf16.msra.mxu0 0
        %7162 = vmatprep.subr.bf16.mxu0 0
        %7163 = vmatpush1.bf16.msra.mxu0 0
        %7164 = vmatprep.subr.bf16.mxu0 0
        %7165 = vmatpush1.bf16.msra.mxu0 0
        %7166 = vmatprep.subr.bf16.mxu0 0
        %7167 = vmatpush1.bf16.msra.mxu0 0
        %7168 = vmatprep.subr.bf16.mxu0 0
        %7169 = vmatpush1.bf16.msra.mxu0 0
        %7170 = vmatprep.mubr.bf16.mxu0 0
        %7171 = vmatmul.mubr.bf16.gmra.mrb[0].mxu0 %v7136
        %v7172 = vpop.f32.mrb[0].mxu0
        %v7173 = vadd.f32 0.0, %v7172
        %v7174 = vpop.f32.mrb[0].mxu0
        %v7175 = vpop.f32.mrb[0].mxu0
        %v7176 = vpop.f32.mrb[0].mxu0
        %7177 = vdwg.mxu0
        %7178 = vrot.lane.b32.xlu0 %v6752, 112
        %v7179 = vpop.permute.xlu0 %7178
        %7180 = vrot.lane.b32.xlu0 %v6836, 112
        %v7181 = vpop.permute.xlu0 %7180
        %7182 = vrot.lane.b32.xlu0 %v6837, 112
        %v7183 = vpop.permute.xlu0 %7182
        %7184 = vrot.lane.b32.xlu0 %v6838, 112
        %v7185 = vpop.permute.xlu0 %7184
        %7186 = vrot.lane.b32.xlu0 %v6839, 112
        %v7187 = vpop.permute.xlu0 %7186
        %v7189 = vsel %vm2186, %v7179, 0
        %v7192 = vsel %vm2186, %v7181, 0
        %v7195 = vsel %vm2186, %v7183, 0
        %v7198 = vsel %vm2186, %v7185, 0
        %v7201 = vsel %vm2186, %v7187, 0
        %7203 = vmatprep.subr.bf16.mxu0 0
        %7204 = vmatpush1.bf16.xpose.msra.mxu0 %v7192
        %7205 = vmatprep.subr.bf16.mxu0 0
        %7206 = vmatpush1.bf16.xpose.msra.mxu0 %v7195
        %7207 = vmatprep.subr.bf16.mxu0 0
        %7208 = vmatpush1.bf16.xpose.msra.mxu0 %v7198
        %7209 = vmatprep.subr.bf16.mxu0 0
        %7210 = vmatpush1.bf16.xpose.msra.mxu0 %v7201
        %7211 = vmatprep.subr.bf16.mxu0 0
        %7212 = vmatpush1.bf16.xpose.msra.mxu0 0
        %7213 = vmatprep.subr.bf16.mxu0 0
        %7214 = vmatpush1.bf16.xpose.msra.mxu0 0
        %7215 = vmatprep.subr.bf16.mxu0 0
        %7216 = vmatpush1.bf16.xpose.msra.mxu0 0
        %7217 = vmatprep.subr.bf16.mxu0 0
        %7218 = vmatpush1.bf16.xpose.msra.mxu0 0
        %7219 = vmatprep.subr.bf16.mxu0 0
        %7220 = vmatpush1.bf16.xpose.msra.mxu0 0
        %7221 = vmatprep.subr.bf16.mxu0 0
        %7222 = vmatpush1.bf16.xpose.msra.mxu0 0
        %7223 = vmatprep.subr.bf16.mxu0 0
        %7224 = vmatpush1.bf16.xpose.msra.mxu0 0
        %7225 = vmatprep.subr.bf16.mxu0 0
        %7226 = vmatpush1.bf16.xpose.msra.mxu0 0
        %7227 = vmatprep.subr.bf16.mxu0 0
        %7228 = vmatpush1.bf16.xpose.msra.mxu0 0
        %7229 = vmatprep.subr.bf16.mxu0 0
        %7230 = vmatpush1.bf16.xpose.msra.mxu0 0
        %7231 = vmatprep.subr.bf16.mxu0 0
        %7232 = vmatpush1.bf16.xpose.msra.mxu0 0
        %7233 = vmatprep.subr.bf16.mxu0 0
        %7234 = vmatpush1.bf16.xpose.msra.mxu0 0
        %7235 = vmatprep.mubr.bf16.mxu0 0
        %7236 = vmatmul.mubr.bf16.gmra.mrb[0].mxu0 %v7189
        %v7237 = vpop.f32.mrb[0].mxu0
        %v7238 = vadd.f32 0.0, %v7237
        %v7239 = vpop.f32.mrb[0].mxu0
        %v7240 = vpop.f32.mrb[0].mxu0
        %v7241 = vpop.f32.mrb[0].mxu0
        %7242 = vdwg.mxu0
        %v7243 = vsel %vm2276, %v7238, -inf
        %7244 = vmax.xlane.f32.xlu0 %v7243
        %v7245 = vpop.xlane.xlu0 %7244
        %v7246 = vsub.f32 %v7238, %v7245
        %v7247 = vmul.f32 %v7246, 1.442695
        %v7248 = vpow.pop %v7247
        %v7249 = vsel %vm2276, %v7248, 0.0
        %7250 = vadd.xlane.f32.xlu0 %v7249
        %v7251 = vpop.xlane.xlu0 %7250
        %v7252 = vrcp.pop %v7251
        %v7253 = vmul.f32 %v7248, %v7252
        %v7254 = vpack.c.bf16 %v7253, %v7253
        %7255 = vrot.lane.b32.xlu0 %v6923, 112
        %v7256 = vpop.permute.xlu0 %7255
        %7257 = vrot.lane.b32.xlu0 %v6924, 112
        %v7258 = vpop.permute.xlu0 %7257
        %7259 = vrot.lane.b32.xlu0 %v6925, 112
        %v7260 = vpop.permute.xlu0 %7259
        %7261 = vrot.lane.b32.xlu0 %v6926, 112
        %v7262 = vpop.permute.xlu0 %7261
        %v7268 = vsel %vm2276, %v7254, 0
        %7270 = vmatprep.subr.bf16.mxu0 0
        %7271 = vmatpush1.bf16.msra.mxu0 %v7256
        %7272 = vmatprep.subr.bf16.mxu0 0
        %7273 = vmatpush1.bf16.msra.mxu0 %v7258
        %7274 = vmatprep.subr.bf16.mxu0 0
        %7275 = vmatpush1.bf16.msra.mxu0 %v7260
        %7276 = vmatprep.subr.bf16.mxu0 0
        %7277 = vmatpush1.bf16.msra.mxu0 %v7262
        %7278 = vmatprep.subr.bf16.mxu0 0
        %7279 = vmatpush1.bf16.msra.mxu0 0
        %7280 = vmatprep.subr.bf16.mxu0 0
        %7281 = vmatpush1.bf16.msra.mxu0 0
        %7282 = vmatprep.subr.bf16.mxu0 0
        %7283 = vmatpush1.bf16.msra.mxu0 0
        %7284 = vmatprep.subr.bf16.mxu0 0
        %7285 = vmatpush1.bf16.msra.mxu0 0
        %7286 = vmatprep.subr.bf16.mxu0 0
        %7287 = vmatpush1.bf16.msra.mxu0 0
        %7288 = vmatprep.subr.bf16.mxu0 0
        %7289 = vmatpush1.bf16.msra.mxu0 0
        %7290 = vmatprep.subr.bf16.mxu0 0
        %7291 = vmatpush1.bf16.msra.mxu0 0
        %7292 = vmatprep.subr.bf16.mxu0 0
        %7293 = vmatpush1.bf16.msra.mxu0 0
        %7294 = vmatprep.subr.bf16.mxu0 0
        %7295 = vmatpush1.bf16.msra.mxu0 0
        %7296 = vmatprep.subr.bf16.mxu0 0
        %7297 = vmatpush1.bf16.msra.mxu0 0
        %7298 = vmatprep.subr.bf16.mxu0 0
        %7299 = vmatpush1.bf16.msra.mxu0 0
        %7300 = vmatprep.subr.bf16.mxu0 0
        %7301 = vmatpush1.bf16.msra.mxu0 0
        %7302 = vmatprep.mubr.bf16.mxu0 0
        %7303 = vmatmul.mubr.bf16.gmra.mrb[0].mxu0 %v7268
        %v7304 = vpop.f32.mrb[0].mxu0
        %v7305 = vadd.f32 0.0, %v7304
        %v7306 = vpop.f32.mrb[0].mxu0
        %v7307 = vpop.f32.mrb[0].mxu0
        %v7308 = vpop.f32.mrb[0].mxu0
        %7309 = vdwg.mxu0
        %7310 = vrot.lane.b32.xlu0 %v6752, 104
        %v7311 = vpop.permute.xlu0 %7310
        %7312 = vrot.lane.b32.xlu0 %v6836, 104
        %v7313 = vpop.permute.xlu0 %7312
        %7314 = vrot.lane.b32.xlu0 %v6837, 104
        %v7315 = vpop.permute.xlu0 %7314
        %7316 = vrot.lane.b32.xlu0 %v6838, 104
        %v7317 = vpop.permute.xlu0 %7316
        %7318 = vrot.lane.b32.xlu0 %v6839, 104
        %v7319 = vpop.permute.xlu0 %7318
        %v7321 = vsel %vm2186, %v7311, 0
        %v7324 = vsel %vm2186, %v7313, 0
        %v7327 = vsel %vm2186, %v7315, 0
        %v7330 = vsel %vm2186, %v7317, 0
        %v7333 = vsel %vm2186, %v7319, 0
        %7335 = vmatprep.subr.bf16.mxu0 0
        %7336 = vmatpush1.bf16.xpose.msra.mxu0 %v7324
        %7337 = vmatprep.subr.bf16.mxu0 0
        %7338 = vmatpush1.bf16.xpose.msra.mxu0 %v7327
        %7339 = vmatprep.subr.bf16.mxu0 0
        %7340 = vmatpush1.bf16.xpose.msra.mxu0 %v7330
        %7341 = vmatprep.subr.bf16.mxu0 0
        %7342 = vmatpush1.bf16.xpose.msra.mxu0 %v7333
        %7343 = vmatprep.subr.bf16.mxu0 0
        %7344 = vmatpush1.bf16.xpose.msra.mxu0 0
        %7345 = vmatprep.subr.bf16.mxu0 0
        %7346 = vmatpush1.bf16.xpose.msra.mxu0 0
        %7347 = vmatprep.subr.bf16.mxu0 0
        %7348 = vmatpush1.bf16.xpose.msra.mxu0 0
        %7349 = vmatprep.subr.bf16.mxu0 0
        %7350 = vmatpush1.bf16.xpose.msra.mxu0 0
        %7351 = vmatprep.subr.bf16.mxu0 0
        %7352 = vmatpush1.bf16.xpose.msra.mxu0 0
        %7353 = vmatprep.subr.bf16.mxu0 0
        %7354 = vmatpush1.bf16.xpose.msra.mxu0 0
        %7355 = vmatprep.subr.bf16.mxu0 0
        %7356 = vmatpush1.bf16.xpose.msra.mxu0 0
        %7357 = vmatprep.subr.bf16.mxu0 0
        %7358 = vmatpush1.bf16.xpose.msra.mxu0 0
        %7359 = vmatprep.subr.bf16.mxu0 0
        %7360 = vmatpush1.bf16.xpose.msra.mxu0 0
        %7361 = vmatprep.subr.bf16.mxu0 0
        %7362 = vmatpush1.bf16.xpose.msra.mxu0 0
        %7363 = vmatprep.subr.bf16.mxu0 0
        %7364 = vmatpush1.bf16.xpose.msra.mxu0 0
        %7365 = vmatprep.subr.bf16.mxu0 0
        %7366 = vmatpush1.bf16.xpose.msra.mxu0 0
        %7367 = vmatprep.mubr.bf16.mxu0 0
        %7368 = vmatmul.mubr.bf16.gmra.mrb[0].mxu0 %v7321
        %v7369 = vpop.f32.mrb[0].mxu0
        %v7370 = vadd.f32 0.0, %v7369
        %v7371 = vpop.f32.mrb[0].mxu0
        %v7372 = vpop.f32.mrb[0].mxu0
        %v7373 = vpop.f32.mrb[0].mxu0
        %7374 = vdwg.mxu0
        %v7375 = vsel %vm2276, %v7370, -inf
        %7376 = vmax.xlane.f32.xlu0 %v7375
        %v7377 = vpop.xlane.xlu0 %7376
        %v7378 = vsub.f32 %v7370, %v7377
        %v7379 = vmul.f32 %v7378, 1.442695
        %v7380 = vpow.pop %v7379
        %v7381 = vsel %vm2276, %v7380, 0.0
        %7382 = vadd.xlane.f32.xlu0 %v7381
        %v7383 = vpop.xlane.xlu0 %7382
        %v7384 = vrcp.pop %v7383
        %v7385 = vmul.f32 %v7380, %v7384
        %v7386 = vpack.c.bf16 %v7385, %v7385
        %7387 = vrot.lane.b32.xlu0 %v6923, 104
        %v7388 = vpop.permute.xlu0 %7387
        %7389 = vrot.lane.b32.xlu0 %v6924, 104
        %v7390 = vpop.permute.xlu0 %7389
        %7391 = vrot.lane.b32.xlu0 %v6925, 104
        %v7392 = vpop.permute.xlu0 %7391
        %7393 = vrot.lane.b32.xlu0 %v6926, 104
        %v7394 = vpop.permute.xlu0 %7393
        %v7400 = vsel %vm2276, %v7386, 0
        %7402 = vmatprep.subr.bf16.mxu0 0
        %7403 = vmatpush1.bf16.msra.mxu0 %v7388
        %7404 = vmatprep.subr.bf16.mxu0 0
        %7405 = vmatpush1.bf16.msra.mxu0 %v7390
        %7406 = vmatprep.subr.bf16.mxu0 0
        %7407 = vmatpush1.bf16.msra.mxu0 %v7392
        %7408 = vmatprep.subr.bf16.mxu0 0
        %7409 = vmatpush1.bf16.msra.mxu0 %v7394
        %7410 = vmatprep.subr.bf16.mxu0 0
        %7411 = vmatpush1.bf16.msra.mxu0 0
        %7412 = vmatprep.subr.bf16.mxu0 0
        %7413 = vmatpush1.bf16.msra.mxu0 0
        %7414 = vmatprep.subr.bf16.mxu0 0
        %7415 = vmatpush1.bf16.msra.mxu0 0
        %7416 = vmatprep.subr.bf16.mxu0 0
        %7417 = vmatpush1.bf16.msra.mxu0 0
        %7418 = vmatprep.subr.bf16.mxu0 0
        %7419 = vmatpush1.bf16.msra.mxu0 0
        %7420 = vmatprep.subr.bf16.mxu0 0
        %7421 = vmatpush1.bf16.msra.mxu0 0
        %7422 = vmatprep.subr.bf16.mxu0 0
        %7423 = vmatpush1.bf16.msra.mxu0 0
        %7424 = vmatprep.subr.bf16.mxu0 0
        %7425 = vmatpush1.bf16.msra.mxu0 0
        %7426 = vmatprep.subr.bf16.mxu0 0
        %7427 = vmatpush1.bf16.msra.mxu0 0
        %7428 = vmatprep.subr.bf16.mxu0 0
        %7429 = vmatpush1.bf16.msra.mxu0 0
        %7430 = vmatprep.subr.bf16.mxu0 0
        %7431 = vmatpush1.bf16.msra.mxu0 0
        %7432 = vmatprep.subr.bf16.mxu0 0
        %7433 = vmatpush1.bf16.msra.mxu0 0
        %7434 = vmatprep.mubr.bf16.mxu0 0
        %7435 = vmatmul.mubr.bf16.gmra.mrb[0].mxu0 %v7400
        %v7436 = vpop.f32.mrb[0].mxu0
        %v7437 = vadd.f32 0.0, %v7436
        %v7438 = vpop.f32.mrb[0].mxu0
        %v7439 = vpop.f32.mrb[0].mxu0
        %v7440 = vpop.f32.mrb[0].mxu0
        %7441 = vdwg.mxu0
        %7443 = vrot.lane.b32.xlu0 %v7173, 8
        %v7444 = vpop.permute.xlu0 %7443
        %7447 = vrot.lane.b32.xlu0 %v7305, 16
        %v7448 = vpop.permute.xlu0 %7447
        %7451 = vrot.lane.b32.xlu0 %v7437, 24
        %v7452 = vpop.permute.xlu0 %7451
        %v7454 = vsel %vm2186, %v7032, %v7444
        %v7455 = vsel %vm1778, %v7454, %v7448
        %v7456 = vsel %vm3428, %v7455, %v7452
        %v7457 = vpack.c.bf16 %v7456, %v7456
        %v7459 = vlaneseq
        %v7460 = vshrl.u32 %v7459, 7
        %v7461 = vsub.s32 0, %v7460
        %v7462 = vrot.slane %v6688, %v7461
        %v7468 = vunpack.c.l.b16 %v6683
        %v7469 = vunpack.c.l.b16 %v6684
        %v7470 = vunpack.c.l.b16 %v6685
        %v7471 = vunpack.c.l.b16 %v6686
        %v7472 = vpack.c.b16 %v7469, %v7468
        %v7473 = vpack.c.b16 %v7471, %v7470
        %v7477 = vsel %vm1906, %v7457, 0
        %7479 = vmatprep.subr.bf16.mxu0 0
        %7480 = vmatpush1.bf16.msra.mxu0 %v7472
        %7481 = vmatprep.subr.bf16.mxu0 0
        %7482 = vmatpush1.bf16.msra.mxu0 %v7473
        %7483 = vmatprep.subr.bf16.mxu0 0
        %7484 = vmatpush1.bf16.msra.mxu0 0
        %7485 = vmatprep.subr.bf16.mxu0 0
        %7486 = vmatpush1.bf16.msra.mxu0 0
        %7487 = vmatprep.subr.bf16.mxu0 0
        %7488 = vmatpush1.bf16.msra.mxu0 0
        %7489 = vmatprep.subr.bf16.mxu0 0
        %7490 = vmatpush1.bf16.msra.mxu0 0
        %7491 = vmatprep.subr.bf16.mxu0 0
        %7492 = vmatpush1.bf16.msra.mxu0 0
        %7493 = vmatprep.subr.bf16.mxu0 0
        %7494 = vmatpush1.bf16.msra.mxu0 0
        %7495 = vmatprep.subr.bf16.mxu0 0
        %7496 = vmatpush1.bf16.msra.mxu0 0
        %7497 = vmatprep.subr.bf16.mxu0 0
        %7498 = vmatpush1.bf16.msra.mxu0 0
        %7499 = vmatprep.subr.bf16.mxu0 0
        %7500 = vmatpush1.bf16.msra.mxu0 0
        %7501 = vmatprep.subr.bf16.mxu0 0
        %7502 = vmatpush1.bf16.msra.mxu0 0
        %7503 = vmatprep.subr.bf16.mxu0 0
        %7504 = vmatpush1.bf16.msra.mxu0 0
        %7505 = vmatprep.subr.bf16.mxu0 0
        %7506 = vmatpush1.bf16.msra.mxu0 0
        %7507 = vmatprep.subr.bf16.mxu0 0
        %7508 = vmatpush1.bf16.msra.mxu0 0
        %7509 = vmatprep.subr.bf16.mxu0 0
        %7510 = vmatpush1.bf16.msra.mxu0 0
        %7511 = vmatprep.mubr.bf16.mxu0 0
        %7512 = vmatmul.mubr.bf16.gmra.mrb[0].mxu0 %v7477
        %v7513 = vpop.f32.mrb[0].mxu0
        %v7514 = vadd.f32 %v7462, %v7513
        %v7515 = vpop.f32.mrb[0].mxu0
        %v7516 = vpop.f32.mrb[0].mxu0
        %v7517 = vpop.f32.mrb[0].mxu0
        %7518 = vdwg.mxu0
        %v7519 = vadd.f32 %v6659, %v7514
        %s7520 = scalar_lea.vmem %s75, 2
        %v7521 = vld [vmem:[%s7520] sm:$0x3]
        %v7522 = vsel %vm1906, %v7519, 0.0
        %7523 = vadd.xlane.f32.xlu0 %v7522
        %v7524 = vpop.xlane.xlu0 %7523
        %v7525 = vmul.f32 %v7524, %v3569
        %v7526 = vsub.f32 %v7519, %v7525
        %v7527 = vmul.f32 %v7526, %v7526
        %v7528 = vsel %vm1906, %v7527, 0.0
        %7529 = vadd.xlane.f32.xlu0 %v7528
        %v7530 = vpop.xlane.xlu0 %7529
        %v7531 = vmul.f32 %v7530, %v3569
        %v7532 = vadd.f32 %v7531, 1e-05
        %v7533 = vrsqrt.pop %v7532
        %v7534 = vmul.f32 %v7526, %v7533
        %v7535 = vlaneseq
        %v7536 = vshrl.u32 %v7535, 7
        %v7537 = vsub.s32 0, %v7536
        %v7538 = vrot.slane %v7521, %v7537
        %v7539 = vmul.f32 %v7534, %v7538
        %v7540 = vlaneseq
        %v7541 = vshrl.u32 %v7540, 7
        %v7542 = vsub.s32 1, %v7541
        %v7543 = vrot.slane %v7521, %v7542
        %v7544 = vadd.f32 %v7539, %v7543
        %s7545 = scalar_lea.vmem %s77, 16
        %v7546 = vld [vmem:[%s7545] sm:$0xf]
        %v7547 = vld [vmem:[%s7545 + $0x4] sm:$0xf]
        %v7548 = vld [vmem:[%s7545 + $0x8] sm:$0xf]
        %v7549 = vld [vmem:[%s7545 + $0xc] sm:$0xf]
        %v7550 = vpack.c.bf16 %v7544, %v7544
        %s7551 = scalar_lea.vmem %s79, 1
        %v7552 = vld [vmem:[%s7551] sm:$0x1]
        %v7554 = vlaneseq
        %v7555 = vshrl.u32 %v7554, 7
        %v7556 = vsub.s32 0, %v7555
        %v7557 = vrot.slane %v7552, %v7556
        %v7563 = vunpack.c.l.b16 %v7546
        %v7564 = vunpack.c.l.b16 %v7547
        %v7565 = vunpack.c.l.b16 %v7548
        %v7566 = vunpack.c.l.b16 %v7549
        %v7567 = vpack.c.b16 %v7564, %v7563
        %v7568 = vpack.c.b16 %v7566, %v7565
        %v7572 = vsel %vm1906, %v7550, 0
        %7574 = vmatprep.subr.bf16.mxu0 0
        %7575 = vmatpush1.bf16.msra.mxu0 %v7567
        %7576 = vmatprep.subr.bf16.mxu0 0
        %7577 = vmatpush1.bf16.msra.mxu0 %v7568
        %7578 = vmatprep.subr.bf16.mxu0 0
        %7579 = vmatpush1.bf16.msra.mxu0 0
        %7580 = vmatprep.subr.bf16.mxu0 0
        %7581 = vmatpush1.bf16.msra.mxu0 0
        %7582 = vmatprep.subr.bf16.mxu0 0
        %7583 = vmatpush1.bf16.msra.mxu0 0
        %7584 = vmatprep.subr.bf16.mxu0 0
        %7585 = vmatpush1.bf16.msra.mxu0 0
        %7586 = vmatprep.subr.bf16.mxu0 0
        %7587 = vmatpush1.bf16.msra.mxu0 0
        %7588 = vmatprep.subr.bf16.mxu0 0
        %7589 = vmatpush1.bf16.msra.mxu0 0
        %7590 = vmatprep.subr.bf16.mxu0 0
        %7591 = vmatpush1.bf16.msra.mxu0 0
        %7592 = vmatprep.subr.bf16.mxu0 0
        %7593 = vmatpush1.bf16.msra.mxu0 0
        %7594 = vmatprep.subr.bf16.mxu0 0
        %7595 = vmatpush1.bf16.msra.mxu0 0
        %7596 = vmatprep.subr.bf16.mxu0 0
        %7597 = vmatpush1.bf16.msra.mxu0 0
        %7598 = vmatprep.subr.bf16.mxu0 0
        %7599 = vmatpush1.bf16.msra.mxu0 0
        %7600 = vmatprep.subr.bf16.mxu0 0
        %7601 = vmatpush1.bf16.msra.mxu0 0
        %7602 = vmatprep.subr.bf16.mxu0 0
        %7603 = vmatpush1.bf16.msra.mxu0 0
        %7604 = vmatprep.subr.bf16.mxu0 0
        %7605 = vmatpush1.bf16.msra.mxu0 0
        %7606 = vmatprep.mubr.bf16.mxu0 0
        %7607 = vmatmul.mubr.bf16.gmra.mrb[0].mxu0 %v7572
        %v7608 = vpop.f32.mrb[0].mxu0
        %v7609 = vadd.f32 %v7557, %v7608
        %v7610 = vpop.f32.mrb[0].mxu0
        %v7611 = vpop.f32.mrb[0].mxu0
        %v7612 = vpop.f32.mrb[0].mxu0
        %7613 = vdwg.mxu0
        %v7614 = vmax.f32 %v7609, 0.0
        %s7615 = scalar_lea.vmem %s81, 32
        %v7616 = vld [vmem:[%s7615] sm:$0xf]
        %v7617 = vld [vmem:[%s7615 + $0x4] sm:$0xf]
        %v7618 = vld [vmem:[%s7615 + $0x8] sm:$0xf]
        %v7619 = vld [vmem:[%s7615 + $0xc] sm:$0xf]
        %v7620 = vld [vmem:[%s7615 + $0x10] sm:$0xf]
        %v7621 = vld [vmem:[%s7615 + $0x14] sm:$0xf]
        %v7622 = vld [vmem:[%s7615 + $0x18] sm:$0xf]
        %v7623 = vld [vmem:[%s7615 + $0x1c] sm:$0xf]
        %v7624 = vpack.c.bf16 %v7614, %v7614
        %s7625 = scalar_lea.vmem %s83, 1
        %v7626 = vld [vmem:[%s7625] sm:$0x1]
        %v7628 = vlaneseq
        %v7629 = vshrl.u32 %v7628, 7
        %v7630 = vsub.s32 0, %v7629
        %v7631 = vrot.slane %v7626, %v7630
        %v7641 = vunpack.c.l.b16 %v7616
        %v7642 = vunpack.c.l.b16 %v7617
        %v7643 = vunpack.c.l.b16 %v7618
        %v7644 = vunpack.c.l.b16 %v7619
        %v7645 = vunpack.c.l.b16 %v7620
        %v7646 = vunpack.c.l.b16 %v7621
        %v7647 = vunpack.c.l.b16 %v7622
        %v7648 = vunpack.c.l.b16 %v7623
        %v7649 = vpack.c.b16 %v7642, %v7641
        %v7650 = vpack.c.b16 %v7644, %v7643
        %v7651 = vpack.c.b16 %v7646, %v7645
        %v7652 = vpack.c.b16 %v7648, %v7647
        %v7658 = vsel %vm2276, %v7624, 0
        %7660 = vmatprep.subr.bf16.mxu0 0
        %7661 = vmatpush1.bf16.msra.mxu0 %v7649
        %7662 = vmatprep.subr.bf16.mxu0 0
        %7663 = vmatpush1.bf16.msra.mxu0 %v7650
        %7664 = vmatprep.subr.bf16.mxu0 0
        %7665 = vmatpush1.bf16.msra.mxu0 %v7651
        %7666 = vmatprep.subr.bf16.mxu0 0
        %7667 = vmatpush1.bf16.msra.mxu0 %v7652
        %7668 = vmatprep.subr.bf16.mxu0 0
        %7669 = vmatpush1.bf16.msra.mxu0 0
        %7670 = vmatprep.subr.bf16.mxu0 0
        %7671 = vmatpush1.bf16.msra.mxu0 0
        %7672 = vmatprep.subr.bf16.mxu0 0
        %7673 = vmatpush1.bf16.msra.mxu0 0
        %7674 = vmatprep.subr.bf16.mxu0 0
        %7675 = vmatpush1.bf16.msra.mxu0 0
        %7676 = vmatprep.subr.bf16.mxu0 0
        %7677 = vmatpush1.bf16.msra.mxu0 0
        %7678 = vmatprep.subr.bf16.mxu0 0
        %7679 = vmatpush1.bf16.msra.mxu0 0
        %7680 = vmatprep.subr.bf16.mxu0 0
        %7681 = vmatpush1.bf16.msra.mxu0 0
        %7682 = vmatprep.subr.bf16.mxu0 0
        %7683 = vmatpush1.bf16.msra.mxu0 0
        %7684 = vmatprep.subr.bf16.mxu0 0
        %7685 = vmatpush1.bf16.msra.mxu0 0
        %7686 = vmatprep.subr.bf16.mxu0 0
        %7687 = vmatpush1.bf16.msra.mxu0 0
        %7688 = vmatprep.subr.bf16.mxu0 0
        %7689 = vmatpush1.bf16.msra.mxu0 0
        %7690 = vmatprep.subr.bf16.mxu0 0
        %7691 = vmatpush1.bf16.msra.mxu0 0
        %7692 = vmatprep.mubr.bf16.mxu0 0
        %7693 = vmatmul.mubr.bf16.gmra.mrb[0].mxu0 %v7658
        %v7694 = vpop.f32.mrb[0].mxu0
        %v7695 = vadd.f32 %v7631, %v7694
        %v7696 = vpop.f32.mrb[0].mxu0
        %v7697 = vpop.f32.mrb[0].mxu0
        %v7698 = vpop.f32.mrb[0].mxu0
        %7699 = vdwg.mxu0
        %v7700 = vadd.f32 %v7544, %v7695
        %s7701 = scalar_lea.vmem %s85, 2
        %v7702 = vld [vmem:[%s7701] sm:$0x3]
        %v7703 = vsel %vm1906, %v7700, 0.0
        %7704 = vadd.xlane.f32.xlu0 %v7703
        %v7705 = vpop.xlane.xlu0 %7704
        %v7706 = vmul.f32 %v7705, %v3569
        %v7707 = vsub.f32 %v7700, %v7706
        %v7708 = vmul.f32 %v7707, %v7707
        %v7709 = vsel %vm1906, %v7708, 0.0
        %7710 = vadd.xlane.f32.xlu0 %v7709
        %v7711 = vpop.xlane.xlu0 %7710
        %v7712 = vmul.f32 %v7711, %v3569
        %v7713 = vadd.f32 %v7712, 1e-05
        %v7714 = vrsqrt.pop %v7713
        %v7715 = vmul.f32 %v7707, %v7714
        %v7716 = vlaneseq
        %v7717 = vshrl.u32 %v7716, 7
        %v7718 = vsub.s32 0, %v7717
        %v7719 = vrot.slane %v7702, %v7718
        %v7720 = vmul.f32 %v7715, %v7719
        %v7721 = vlaneseq
        %v7722 = vshrl.u32 %v7721, 7
        %v7723 = vsub.s32 1, %v7722
        %v7724 = vrot.slane %v7702, %v7723
        %v7725 = vadd.f32 %v7720, %v7724
        %v7726 = vsel %vm1906, %v7725, 0.0
        %7727 = vadd.xlane.f32.xlu0 %v7726
        %v7728 = vpop.xlane.xlu0 %7727
        %v7729 = vmul.f32 %v7728, %v3569
        %v7730 = vsub.f32 %v7725, %v7729
        %v7731 = vmul.f32 %v7730, %v7730
        %v7732 = vsel %vm1906, %v7731, 0.0
        %7733 = vadd.xlane.f32.xlu0 %v7732
        %v7734 = vpop.xlane.xlu0 %7733
        %v7735 = vmul.f32 %v7734, %v3569
        %v7736 = vadd.f32 %v7735, 1e-05
        %v7737 = vrsqrt.pop %v7736
        %v7738 = vmul.f32 %v7730, %v7737
        %v7739 = vmul.f32 %v7738, %v5898
        %v7740 = vadd.f32 %v7739, %v5903
        %v7741 = vld [vmem:[%s89] sm:$0xf]
        %v7742 = vld [vmem:[%s89 + $0x4] sm:$0xf]
        %v7743 = vld [vmem:[%s89 + $0x8] sm:$0xf]
        %v7744 = vld [vmem:[%s89 + $0xc] sm:$0xf]
        %v7745 = vpack.c.bf16 %v7740, %v5904
        %v7746 = vld [vmem:[#allocation10] sm:$0x1]
        %v7748 = vlaneseq
        %v7749 = vshrl.u32 %v7748, 7
        %v7750 = vsub.s32 0, %v7749
        %v7751 = vrot.slane %v7746, %v7750
        %v7757 = vunpack.c.l.b16 %v7741
        %v7758 = vunpack.c.l.b16 %v7742
        %v7759 = vunpack.c.l.b16 %v7743
        %v7760 = vunpack.c.l.b16 %v7744
        %v7761 = vpack.c.b16 %v7758, %v7757
        %v7762 = vpack.c.b16 %v7760, %v7759
        %v7766 = vsel %vm1906, %v7745, 0
        %7768 = vmatprep.subr.bf16.mxu0 0
        %7769 = vmatpush1.bf16.msra.mxu0 %v7761
        %7770 = vmatprep.subr.bf16.mxu0 0
        %7771 = vmatpush1.bf16.msra.mxu0 %v7762
        %7772 = vmatprep.subr.bf16.mxu0 0
        %7773 = vmatpush1.bf16.msra.mxu0 0
        %7774 = vmatprep.subr.bf16.mxu0 0
        %7775 = vmatpush1.bf16.msra.mxu0 0
        %7776 = vmatprep.subr.bf16.mxu0 0
        %7777 = vmatpush1.bf16.msra.mxu0 0
        %7778 = vmatprep.subr.bf16.mxu0 0
        %7779 = vmatpush1.bf16.msra.mxu0 0
        %7780 = vmatprep.subr.bf16.mxu0 0
        %7781 = vmatpush1.bf16.msra.mxu0 0
        %7782 = vmatprep.subr.bf16.mxu0 0
        %7783 = vmatpush1.bf16.msra.mxu0 0
        %7784 = vmatprep.subr.bf16.mxu0 0
        %7785 = vmatpush1.bf16.msra.mxu0 0
        %7786 = vmatprep.subr.bf16.mxu0 0
        %7787 = vmatpush1.bf16.msra.mxu0 0
        %7788 = vmatprep.subr.bf16.mxu0 0
        %7789 = vmatpush1.bf16.msra.mxu0 0
        %7790 = vmatprep.subr.bf16.mxu0 0
        %7791 = vmatpush1.bf16.msra.mxu0 0
        %7792 = vmatprep.subr.bf16.mxu0 0
        %7793 = vmatpush1.bf16.msra.mxu0 0
        %7794 = vmatprep.subr.bf16.mxu0 0
        %7795 = vmatpush1.bf16.msra.mxu0 0
        %7796 = vmatprep.subr.bf16.mxu0 0
        %7797 = vmatpush1.bf16.msra.mxu0 0
        %7798 = vmatprep.subr.bf16.mxu0 0
        %7799 = vmatpush1.bf16.msra.mxu0 0
        %7800 = vmatprep.mubr.bf16.mxu0 0
        %7801 = vmatmul.mubr.bf16.gmra.mrb[0].mxu0 %v7766
        %v7802 = vpop.f32.mrb[0].mxu0
        %v7803 = vadd.f32 %v7751, %v7802
        %v7804 = vpop.f32.mrb[0].mxu0
        %v7805 = vpop.f32.mrb[0].mxu0
        %v7806 = vadd.f32 %v7751, %v7805
        %v7807 = vpop.f32.mrb[0].mxu0
        %7808 = vdwg.mxu0
        %7809 = vst [vmem:[%s1735] sm:$0xff] %v7803
        %7810 = vst [vmem:[%s1735 + $0x8] sm:$0xff] %v7806
        %v7811 = vld [vmem:[%s93] sm:$0xf]
        %v7812 = vld [vmem:[%s93 + $0x4] sm:$0xf]
        %v7813 = vld [vmem:[%s93 + $0x8] sm:$0xf]
        %v7814 = vld [vmem:[%s93 + $0xc] sm:$0xf]
        %v7815 = vld [vmem:[#allocation12] sm:$0x1]
        %v7817 = vlaneseq
        %v7818 = vshrl.u32 %v7817, 7
        %v7819 = vsub.s32 0, %v7818
        %v7820 = vrot.slane %v7815, %v7819
        %v7826 = vunpack.c.l.b16 %v7811
        %v7827 = vunpack.c.l.b16 %v7812
        %v7828 = vunpack.c.l.b16 %v7813
        %v7829 = vunpack.c.l.b16 %v7814
        %v7830 = vpack.c.b16 %v7827, %v7826
        %v7831 = vpack.c.b16 %v7829, %v7828
        %7834 = vmatprep.subr.bf16.mxu0 0
        %7835 = vmatpush1.bf16.msra.mxu0 %v7830
        %7836 = vmatprep.subr.bf16.mxu0 0
        %7837 = vmatpush1.bf16.msra.mxu0 %v7831
        %7838 = vmatprep.subr.bf16.mxu0 0
        %7839 = vmatpush1.bf16.msra.mxu0 0
        %7840 = vmatprep.subr.bf16.mxu0 0
        %7841 = vmatpush1.bf16.msra.mxu0 0
        %7842 = vmatprep.subr.bf16.mxu0 0
        %7843 = vmatpush1.bf16.msra.mxu0 0
        %7844 = vmatprep.subr.bf16.mxu0 0
        %7845 = vmatpush1.bf16.msra.mxu0 0
        %7846 = vmatprep.subr.bf16.mxu0 0
        %7847 = vmatpush1.bf16.msra.mxu0 0
        %7848 = vmatprep.subr.bf16.mxu0 0
        %7849 = vmatpush1.bf16.msra.mxu0 0
        %7850 = vmatprep.subr.bf16.mxu0 0
        %7851 = vmatpush1.bf16.msra.mxu0 0
        %7852 = vmatprep.subr.bf16.mxu0 0
        %7853 = vmatpush1.bf16.msra.mxu0 0
        %7854 = vmatprep.subr.bf16.mxu0 0
        %7855 = vmatpush1.bf16.msra.mxu0 0
        %7856 = vmatprep.subr.bf16.mxu0 0
        %7857 = vmatpush1.bf16.msra.mxu0 0
        %7858 = vmatprep.subr.bf16.mxu0 0
        %7859 = vmatpush1.bf16.msra.mxu0 0
        %7860 = vmatprep.subr.bf16.mxu0 0
        %7861 = vmatpush1.bf16.msra.mxu0 0
        %7862 = vmatprep.subr.bf16.mxu0 0
        %7863 = vmatpush1.bf16.msra.mxu0 0
        %7864 = vmatprep.subr.bf16.mxu0 0
        %7865 = vmatpush1.bf16.msra.mxu0 0
        %7866 = vmatprep.mubr.bf16.mxu0 0
        %7867 = vmatmul.mubr.bf16.gmra.mrb[0].mxu0 %v7766
        %v7868 = vpop.f32.mrb[0].mxu0
        %v7869 = vadd.f32 %v7820, %v7868
        %v7870 = vpop.f32.mrb[0].mxu0
        %v7871 = vpop.f32.mrb[0].mxu0
        %v7872 = vadd.f32 %v7820, %v7871
        %v7873 = vpop.f32.mrb[0].mxu0
        %7874 = vdwg.mxu0
        %v7875 = vmax.f32 %v7869, 0.0
        %v7876 = vmax.f32 %v7872, 0.0
        %v7877 = vld [vmem:[%s97] sm:$0xf]
        %v7878 = vld [vmem:[%s97 + $0x4] sm:$0xf]
        %v7879 = vld [vmem:[%s97 + $0x8] sm:$0xf]
        %v7880 = vld [vmem:[%s97 + $0xc] sm:$0xf]
        %v7881 = vpack.c.bf16 %v7876, %v7875
        %v7882 = vld [vmem:[#allocation13] sm:$0x1]
        %v7884 = vlaneseq
        %v7885 = vshrl.u32 %v7884, 7
        %v7886 = vsub.s32 0, %v7885
        %v7887 = vrot.slane %v7882, %v7886
        %v7893 = vunpack.c.l.b16 %v7877
        %v7894 = vunpack.c.l.b16 %v7878
        %v7895 = vunpack.c.l.b16 %v7879
        %v7896 = vunpack.c.l.b16 %v7880
        %v7897 = vpack.c.b16 %v7894, %v7893
        %v7898 = vpack.c.b16 %v7896, %v7895
        %v7902 = vsel %vm1906, %v7881, 0
        %7904 = vmatprep.subr.bf16.mxu0 0
        %7905 = vmatpush1.bf16.msra.mxu0 %v7897
        %7906 = vmatprep.subr.bf16.mxu0 0
        %7907 = vmatpush1.bf16.msra.mxu0 %v7898
        %7908 = vmatprep.subr.bf16.mxu0 0
        %7909 = vmatpush1.bf16.msra.mxu0 0
        %7910 = vmatprep.subr.bf16.mxu0 0
        %7911 = vmatpush1.bf16.msra.mxu0 0
        %7912 = vmatprep.subr.bf16.mxu0 0
        %7913 = vmatpush1.bf16.msra.mxu0 0
        %7914 = vmatprep.subr.bf16.mxu0 0
        %7915 = vmatpush1.bf16.msra.mxu0 0
        %7916 = vmatprep.subr.bf16.mxu0 0
        %7917 = vmatpush1.bf16.msra.mxu0 0
        %7918 = vmatprep.subr.bf16.mxu0 0
        %7919 = vmatpush1.bf16.msra.mxu0 0
        %7920 = vmatprep.subr.bf16.mxu0 0
        %7921 = vmatpush1.bf16.msra.mxu0 0
        %7922 = vmatprep.subr.bf16.mxu0 0
        %7923 = vmatpush1.bf16.msra.mxu0 0
        %7924 = vmatprep.subr.bf16.mxu0 0
        %7925 = vmatpush1.bf16.msra.mxu0 0
        %7926 = vmatprep.subr.bf16.mxu0 0
        %7927 = vmatpush1.bf16.msra.mxu0 0
        %7928 = vmatprep.subr.bf16.mxu0 0
        %7929 = vmatpush1.bf16.msra.mxu0 0
        %7930 = vmatprep.subr.bf16.mxu0 0
        %7931 = vmatpush1.bf16.msra.mxu0 0
        %7932 = vmatprep.subr.bf16.mxu0 0
        %7933 = vmatpush1.bf16.msra.mxu0 0
        %7934 = vmatprep.subr.bf16.mxu0 0
        %7935 = vmatpush1.bf16.msra.mxu0 0
        %7936 = vmatprep.mubr.bf16.mxu0 0
        %7937 = vmatmul.mubr.bf16.gmra.mrb[0].mxu0 %v7902
        %v7938 = vpop.f32.mrb[0].mxu0
        %v7939 = vadd.f32 %v7887, %v7938
        %v7940 = vpop.f32.mrb[0].mxu0
        %v7941 = vpop.f32.mrb[0].mxu0
        %v7942 = vadd.f32 %v7887, %v7941
        %v7943 = vpop.f32.mrb[0].mxu0
        %7944 = vdwg.mxu0
        %v7945 = vmax.f32 %v7939, 0.0
        %v7946 = vmax.f32 %v7942, 0.0
        %v7947 = vld [vmem:[%s101] sm:$0xf]
        %v7948 = vld [vmem:[%s101 + $0x4] sm:$0xf]
        %v7949 = vld [vmem:[%s101 + $0x8] sm:$0xf]
        %v7950 = vld [vmem:[%s101 + $0xc] sm:$0xf]
        %v7951 = vpack.c.bf16 %v7946, %v7945
        %v7952 = vld [vmem:[#allocation15] sm:$0x1]
        %v7954 = vlaneseq
        %v7955 = vshrl.u32 %v7954, 7
        %v7956 = vsub.s32 0, %v7955
        %v7957 = vrot.slane %v7952, %v7956
        %v7963 = vunpack.c.l.b16 %v7947
        %v7964 = vunpack.c.l.b16 %v7948
        %v7965 = vunpack.c.l.b16 %v7949
        %v7966 = vunpack.c.l.b16 %v7950
        %v7967 = vpack.c.b16 %v7964, %v7963
        %v7968 = vpack.c.b16 %v7966, %v7965
        %v7972 = vsel %vm1906, %v7951, 0
        %7974 = vmatprep.subr.bf16.mxu0 0
        %7975 = vmatpush1.bf16.msra.mxu0 %v7967
        %7976 = vmatprep.subr.bf16.mxu0 0
        %7977 = vmatpush1.bf16.msra.mxu0 %v7968
        %7978 = vmatprep.subr.bf16.mxu0 0
        %7979 = vmatpush1.bf16.msra.mxu0 0
        %7980 = vmatprep.subr.bf16.mxu0 0
        %7981 = vmatpush1.bf16.msra.mxu0 0
        %7982 = vmatprep.subr.bf16.mxu0 0
        %7983 = vmatpush1.bf16.msra.mxu0 0
        %7984 = vmatprep.subr.bf16.mxu0 0
        %7985 = vmatpush1.bf16.msra.mxu0 0
        %7986 = vmatprep.subr.bf16.mxu0 0
        %7987 = vmatpush1.bf16.msra.mxu0 0
        %7988 = vmatprep.subr.bf16.mxu0 0
        %7989 = vmatpush1.bf16.msra.mxu0 0
        %7990 = vmatprep.subr.bf16.mxu0 0
        %7991 = vmatpush1.bf16.msra.mxu0 0
        %7992 = vmatprep.subr.bf16.mxu0 0
        %7993 = vmatpush1.bf16.msra.mxu0 0
        %7994 = vmatprep.subr.bf16.mxu0 0
        %7995 = vmatpush1.bf16.msra.mxu0 0
        %7996 = vmatprep.subr.bf16.mxu0 0
        %7997 = vmatpush1.bf16.msra.mxu0 0
        %7998 = vmatprep.subr.bf16.mxu0 0
        %7999 = vmatpush1.bf16.msra.mxu0 0
        %8000 = vmatprep.subr.bf16.mxu0 0
        %8001 = vmatpush1.bf16.msra.mxu0 0
        %8002 = vmatprep.subr.bf16.mxu0 0
        %8003 = vmatpush1.bf16.msra.mxu0 0
        %8004 = vmatprep.subr.bf16.mxu0 0
        %8005 = vmatpush1.bf16.msra.mxu0 0
        %8006 = vmatprep.mubr.bf16.mxu0 0
        %8007 = vmatmul.mubr.bf16.gmra.mrb[0].mxu0 %v7972
        %v8008 = vpop.f32.mrb[0].mxu0
        %v8009 = vadd.f32 %v7957, %v8008
        %v8010 = vpop.f32.mrb[0].mxu0
        %v8011 = vpop.f32.mrb[0].mxu0
        %v8012 = vadd.f32 %v7957, %v8011
        %v8013 = vpop.f32.mrb[0].mxu0
        %8014 = vdwg.mxu0
        %v8015 = vpack.c.bf16 %v8012, %v8009
        %v8016 = vld [vmem:[%s1730] sm:$0xff]
        %v8017 = vld [vmem:[%s1730 + $0x8] sm:$0xff]
        %v8020 = vunpack.c.l.b16 %v8016
        %v8021 = vunpack.c.h.b16 %v8016
        %v8022 = vunpack.c.l.b16 %v8017
        %v8023 = vunpack.c.h.b16 %v8017
        %v8024 = vpack.c.b16 %v8022, %v8020
        %v8025 = vpack.c.b16 %v8023, %v8021
        %v8029 = vsel %vm1778, %v8015, 0
        %8031 = vmatprep.subr.bf16.mxu0 %v8025
        %8032 = vmatpush1.bf16.msra.mxu0 %v8024
        %8033 = vmatprep.subr.bf16.mxu0 0
        %8034 = vmatpush1.bf16.msra.mxu0 0
        %8035 = vmatprep.subr.bf16.mxu0 0
        %8036 = vmatpush1.bf16.msra.mxu0 0
        %8037 = vmatprep.subr.bf16.mxu0 0
        %8038 = vmatpush1.bf16.msra.mxu0 0
        %8039 = vmatprep.subr.bf16.mxu0 0
        %8040 = vmatpush1.bf16.msra.mxu0 0
        %8041 = vmatprep.subr.bf16.mxu0 0
        %8042 = vmatpush1.bf16.msra.mxu0 0
        %8043 = vmatprep.subr.bf16.mxu0 0
        %8044 = vmatpush1.bf16.msra.mxu0 0
        %8045 = vmatprep.subr.bf16.mxu0 0
        %8046 = vmatpush1.bf16.msra.mxu0 0
        %8047 = vmatprep.subr.bf16.mxu0 0
        %8048 = vmatpush1.bf16.msra.mxu0 0
        %8049 = vmatprep.subr.bf16.mxu0 0
        %8050 = vmatpush1.bf16.msra.mxu0 0
        %8051 = vmatprep.subr.bf16.mxu0 0
        %8052 = vmatpush1.bf16.msra.mxu0 0
        %8053 = vmatprep.subr.bf16.mxu0 0
        %8054 = vmatpush1.bf16.msra.mxu0 0
        %8055 = vmatprep.subr.bf16.mxu0 0
        %8056 = vmatpush1.bf16.msra.mxu0 0
        %8057 = vmatprep.subr.bf16.mxu0 0
        %8058 = vmatpush1.bf16.msra.mxu0 0
        %8059 = vmatprep.subr.bf16.mxu0 0
        %8060 = vmatpush1.bf16.msra.mxu0 0
        %8061 = vmatprep.subr.bf16.mxu0 0
        %8062 = vmatpush1.bf16.msra.mxu0 0
        %8063 = vmatprep.mubr.bf16.mxu0 0
        %8064 = vmatmul.mubr.bf16.gmra.mrb[0].mxu0 %v8029
        %v8065 = vpop.f32.mrb[0].mxu0
        %v8066 = vadd.f32 0.0, %v8065
        %v8067 = vpop.f32.mrb[0].mxu0
        %v8068 = vadd.f32 0.0, %v8067
        %v8069 = vpop.f32.mrb[0].mxu0
        %v8070 = vadd.f32 0.0, %v8069
        %v8071 = vpop.f32.mrb[0].mxu0
        %v8072 = vadd.f32 0.0, %v8071
        %8073 = vdwg.mxu0
        %8074 = vst [vmem:[%s1740] sm:$0xff] %v8066
        %8075 = vst [vmem:[%s1740 + $0x8] sm:$0xff] %v8068
        %8076 = vst [vmem:[%s1740 + $0x10] sm:$0xff] %v8070
        %8077 = vst [vmem:[%s1740 + $0x18] sm:$0xff] %v8072
        %p8078 = scmp.lt.s32.totalorder %s124, 1
        %s8079 = scalar_select %p8078, %s124, 1
        %s8080 = smul.addr %s8079, 2
        %s8081 = smul.addr %s8080, 8
        %s8082 = scalar_lea.vmem %s105, %s8081
        %p8083 = scmp.lt.s32.totalorder %s124, 1
        %s8084 = scalar_select %p8083, %s124, 1
        %s8085 = smul.addr %s8084, 4
        %s8086 = smul.addr %s8085, 8
        %s8087 = scalar_lea.vmem %s107, %s8086
        // Predicated region
        $region265: #{_lambda_.1} parent=227 // pred_check
          %p8088 = pneg %p1249
        $region266: #{_lambda_.1} parent=227 // pred_check_branch
          %8090 = sbr.rel (%p8088) target = $region268
        $region267: #{_lambda_.1} parent=227 // pred_region
          _
        $region268: #{_lambda_.1} parent=227 // pred_fallthru
          _
        // Predicated region
        $region269: #{_lambda_.1} parent=227 // pred_check
          %p8091 = pneg %p1275
        $region270: #{_lambda_.1} parent=227 // pred_check_branch
          %8093 = sbr.rel (%p8091) target = $region272
        $region271: #{_lambda_.1} parent=227 // pred_region
          _
        $region272: #{_lambda_.1} parent=227 // pred_fallthru
          _
      $region228: #{_lambda_.1} parent=5 // pred_fallthru
        _
      %p8094 = scmp.le.s32.totalorder 2, %s119
      // Predicated region
      $region273: #{_lambda_.1} parent=5 // pred_check
        %p8095 = pneg %p8094
      $region274: #{_lambda_.1} parent=5 // pred_check_branch
        %8097 = sbr.rel (%p8095) target = $region276
      $region275: #{_lambda_.1} parent=5 // pred_region
        %s8098 = ssub.s32 %s119, 2
        // Predicated region
        $region277: #{_lambda_.1} parent=275 // pred_check
          %p8099 = pneg %p1255
        $region278: #{_lambda_.1} parent=275 // pred_check_branch
          %8101 = sbr.rel (%p8099) target = $region280
        $region279: #{_lambda_.1} parent=275 // pred_region
          %p8102 = scmp.lt.s32.totalorder %s125, 1
          %s8103 = scalar_select %p8102, %s125, 1
          %s8104 = smul.addr %s8103, 2
          %s8105 = smul.addr %s8104, 8
          %s8106 = scalar_lea.vmem %s105, %s8105
        $region280: #{_lambda_.1} parent=275 // pred_fallthru
          _
        // Predicated region
        $region281: #{_lambda_.1} parent=275 // pred_check
          %p8107 = pneg %p1281
        $region282: #{_lambda_.1} parent=275 // pred_check_branch
          %8109 = sbr.rel (%p8107) target = $region284
        $region283: #{_lambda_.1} parent=275 // pred_region
          %p8110 = scmp.lt.s32.totalorder %s125, 1
          %s8111 = scalar_select %p8110, %s125, 1
          %s8112 = smul.addr %s8111, 4
          %s8113 = smul.addr %s8112, 8
          %s8114 = scalar_lea.vmem %s107, %s8113
        $region284: #{_lambda_.1} parent=275 // pred_fallthru
          _
      $region276: #{_lambda_.1} parent=5 // pred_fallthru
        _
    $region6: #{_lambda_.1} parent=1 // loop_footer
      %s123 = sadd.s32 1, %s119
    $region7: #{_lambda_.1} parent=1 // loop_footer_branch
      %118 = sbr.rel target = $region3
    $region8: #{_lambda_.1} parent=1 // loop_exit
      _
    %8115 = vsyncpa [#allocation3], 1
    %s8116 = scalar_lea.sflag [#allocation3], 1
    %8117 = vsyncpa %s8116, 1
    %8118 = vsyncpa [#allocation5], 1
    %8119 = vsyncpa [#allocation8], 1
    %8120 = vsyncpa [#allocation11], 1
    %8121 = vsyncpa [#allocation14], 1

</llo_original>
